<compile_context>
chip_gen: v7x
topology: tpu7x:2x2x1
jax: 0.10.0
libtpu: 0.0.40
codegen_flags: <defaults>
</compile_context>

<pallas_src>
import functools

import jax
import jax.numpy as jnp
from jax import lax
from jax.experimental import pallas as pl
from jax.experimental.pallas import tpu as pltpu

WINDOW_SIZE = 11
SIGMA = 1.5
C1 = (0.01 * 255.0) ** 2
C2 = (0.03 * 255.0) ** 2

# dtype of the MXU operands for the first-moment (mu) Gaussian blurs.  Second
# moments (E[x^2], E[x*y]) always run in f32 (cancellation-sensitive).
_MU_BLUR_DTYPE = jnp.bfloat16


# ---------------------------------------------------------------------------
# Level-1 Haar DWT (pytorch_wavelets 'haar', J=1, mode='zero', even H/W) in
# plain JAX.  Returns (Yl, Yh[0].mean(dim=2)), each (B, C, H//2, W//2).
# ---------------------------------------------------------------------------
def haar_low_high(x):
    x = x.astype(jnp.float32)
    a = x[:, :, 0::2, 0::2]
    b = x[:, :, 0::2, 1::2]
    c = x[:, :, 1::2, 0::2]
    d = x[:, :, 1::2, 1::2]
    low = (a + b + c + d) * 0.5                   # LL band
    # NOTE: mean of (LH, HL, HH) details; assumes the standard orthonormal
    # Haar sign convention (pytorch_wavelets' per-band signs may differ).
    high = (3.0 * a - b - c - d) * (1.0 / 6.0)
    return low, high


# ---------------------------------------------------------------------------
# Gaussian "same"-convolution band matrix (zero padding, window 11, sigma 1.5).
# ---------------------------------------------------------------------------
def _gaussian_1d():
    half = WINDOW_SIZE // 2
    g = jnp.exp(-(jnp.arange(WINDOW_SIZE, dtype=jnp.float32) - half) ** 2
                / (2.0 * SIGMA ** 2))
    return g / jnp.sum(g)


def gaussian_band_matrix(size):
    """(size, size) banded matrix G with G[i, j] = g[j - i + 5] (0 off-band)."""
    half = WINDOW_SIZE // 2
    g = _gaussian_1d()
    idx = jnp.arange(size)
    off = idx[None, :] - idx[:, None] + half
    valid = (off >= 0) & (off < WINDOW_SIZE)
    return jnp.where(valid, g[jnp.clip(off, 0, WINDOW_SIZE - 1)], 0.0
                     ).astype(jnp.float32)


# ---------------------------------------------------------------------------
# Fused SSIM + L1 kernel for one frequency band and both pairs (f,i), (f,v).
# One grid step processes tb sublane-stacked image planes (block (tb, Hp, W)).
# Per-step partial sums go to a lane-dense, tile-aligned (8, 128) output block.
# ---------------------------------------------------------------------------
def _ssim_l1_band_kernel(gh_ref, gw_ref, f_ref, i_ref, v_ref, out_ref,
                         *, h_valid, with_l1_fv):
    tb, hp, w = f_ref.shape
    gh = gh_ref[...]                      # (hp, hp) f32 Gaussian band matrix
    gw = gw_ref[...]                      # (w,  w)  f32 Gaussian band matrix

    # tb planes stacked along sublanes -> one tall (tb*hp, w) slab per input.
    f = f_ref[...].reshape(tb * hp, w)
    a = i_ref[...].reshape(tb * hp, w)
    b = v_ref[...].reshape(tb * hp, w)

    f32 = jnp.float32
    mu_dt = _MU_BLUR_DTYPE
    gh_b = jnp.broadcast_to(gh, (tb, hp, hp))               # hoisted (no CSE)
    if mu_dt == jnp.float32:
        gw_mu, gh_b_mu = gw, gh_b
    else:
        gw_mu = gw.astype(mu_dt)
        gh_b_mu = jnp.broadcast_to(gh.astype(mu_dt), (tb, hp, hp))

    def wblur(x, gmat, dt):
        # Single tall matmul (tb*hp, w) @ (w, w): no block-diagonal FLOP waste.
        return jnp.dot(x.astype(dt), gmat, preferred_element_type=f32)

    def hblur(y, gmat_b, dt):
        # Per-plane (hp, hp) @ (hp, w), batched over the tb planes.
        y3 = y.reshape(tb, hp, w).astype(dt)
        r = lax.dot_general(gmat_b, y3,
                            dimension_numbers=(((2,), (1,)), ((0,), (0,))),
                            preferred_element_type=f32)
        return r.reshape(tb * hp, w)

    def blur_mu(x):   # first moments: bf16 MXU path (f32 accumulate)
        return hblur(wblur(x, gw_mu, mu_dt), gh_b_mu, mu_dt)

    def blur_e(x):    # second moments: f32 (cancellation-sensitive)
        return hblur(wblur(x, gw, f32), gh_b, f32)

    mu_f, mu_i, mu_v = blur_mu(f), blur_mu(a), blur_mu(b)
    e_ff, e_ii, e_vv = blur_e(f * f), blur_e(a * a), blur_e(b * b)
    e_fi, e_fv = blur_e(f * a), blur_e(f * b)

    if h_valid != hp:
        # Rows added to pad hp to a multiple of 8 must not enter the SSIM sum
        # (the L1 sums are unaffected because the pad rows are exactly zero).
        row = lax.broadcasted_iota(jnp.int32, (tb * hp, w), 0)
        valid = (row % hp) < h_valid
    else:
        valid = None

    def ssim_sum(mu1, mu2, e11, e22, e12):
        mu1_sq = mu1 * mu1
        mu2_sq = mu2 * mu2
        mu12 = mu1 * mu2
        s1 = e11 - mu1_sq
        s2 = e22 - mu2_sq
        s12 = e12 - mu12
        num = (2.0 * mu12 + C1) * (2.0 * s12 + C2)
        den = (mu1_sq + mu2_sq + C1) * (s1 + s2 + C2)
        # approx reciprocal on the EUP slot + one Newton step (~f32 accurate).
        r = pl.reciprocal(den, approx=True)
        r = r * (2.0 - den * r)
        smap = num * r
        if valid is not None:
            smap = jnp.where(valid, smap, 0.0)
        return jnp.sum(smap)

    ssim_fi = ssim_sum(mu_f, mu_i, e_ff, e_ii, e_fi)
    ssim_fv = ssim_sum(mu_f, mu_v, e_ff, e_vv, e_fv)
    l1_fi = jnp.sum(jnp.abs(f - a))

    # Lane-dense partial-sum output block: lanes 0..3 carry the four partials.
    lane = lax.broadcasted_iota(jnp.int32, (8, 128), 1)
    vec = (jnp.where(lane == 0, ssim_fi, 0.0)
           + jnp.where(lane == 1, l1_fi, 0.0)
           + jnp.where(lane == 2, ssim_fv, 0.0))
    if with_l1_fv:
        vec = vec + jnp.where(lane == 3, jnp.sum(jnp.abs(f - b)), 0.0)
    out_ref[0] = vec


# ---------------------------------------------------------------------------
# Wrapper: tiling choice + pallas_call.
# ---------------------------------------------------------------------------
def _vmem_budget_bytes():
    """Generation-aware per-step VMEM budget for the (very conservative)
    working-set estimate used by _pick_tb."""
    try:
        cap = int(pltpu.get_tpu_info().vmem_capacity_bytes)
    except Exception:
        cap = 64 * 1024 * 1024            # assume smallest (v7x physical VMEM)
    return max(8 * 1024 * 1024, min(cap // 4, 24 * 1024 * 1024))


def _pick_tb(n_img, hp, w, budget):
    """Largest divisor tb of n_img whose estimated per-step working set fits
    the budget, keeping ns = n_img // tb >= 2 so the ("parallel",) grid axis
    can feed both v7x TensorCores."""
    best = 1
    for tb in range(1, n_img + 1):
        if n_img % tb:
            continue
        if n_img >= 2 and n_img // tb < 2:
            continue
        per_step = 36 * tb * hp * w * 4            # dbl-buffered inputs + temps
        per_step += 3 * tb * hp * hp * 4           # broadcast (tb,hp,hp) Gaussians
        per_step += 6 * (hp * hp + w * w) * 4      # gh/gw blocks (+casts, dbl-buf)
        if per_step > budget:
            break
        best = tb
    return best


def ssim_l1_band(f, i, v, *, with_l1_fv=True):
    """Fused SSIM + L1 over one band for the pairs (f, i) and (f, v).

    f, i, v: (B, C, H, W).  Returns (ssim_fi, l1_fi, ssim_fv, l1_fv) as global
    means, matching SSIM().forward and nn.L1Loss() on equal-sized images.
    l1_fv is 0 when with_l1_fv=False (its reduction is skipped in-kernel).
    """
    B, C, H, W = f.shape
    n_img = B * C
    hp = -(-H // 8) * 8                            # pad H to a sublane multiple

    def prep(x):
        # (B,C,H,W) -> (n_img,H,W) is a free reshape (no host-side transpose).
        x = x.astype(jnp.float32).reshape(n_img, H, W)
        if hp != H:
            x = jnp.pad(x, ((0, 0), (0, hp - H), (0, 0)))
        return x

    fk, ik, vk = prep(f), prep(i), prep(v)
    gh = gaussian_band_matrix(hp)                  # zero-pad "same" conv, H axis
    gw = gaussian_band_matrix(W)                   # zero-pad "same" conv, W axis

    tb = _pick_tb(n_img, hp, W, _vmem_budget_bytes())
    ns = n_img // tb

    kernel = functools.partial(_ssim_l1_band_kernel, h_valid=H,
                               with_l1_fv=with_l1_fv)
    band_spec = pl.BlockSpec((tb, hp, W), lambda n: (n, 0, 0))
    # NOTE: gh/gw are tiny (H^2 + W^2 floats) now that the block-diagonal
    # matrix is gone, so their default double-buffering costs almost nothing.
    partials = pl.pallas_call(
        kernel,
        grid=(ns,),
        out_shape=jax.ShapeDtypeStruct((ns, 8, 128), jnp.float32),
        in_specs=[
            pl.BlockSpec((hp, hp), lambda n: (0, 0)),   # GH (constant block)
            pl.BlockSpec((W, W), lambda n: (0, 0)),     # GW (constant block)
            band_spec,                                  # fus planes
            band_spec,                                  # ir planes
            band_spec,                                  # vis planes
        ],
        out_specs=pl.BlockSpec((1, 8, 128), lambda n: (n, 0, 0)),
        compiler_params=pltpu.CompilerParams(
            dimension_semantics=("parallel",),
            vmem_limit_bytes=32 * 1024 * 1024),
    )(gh, gw, fk, ik, vk)

    sums = jnp.sum(partials[:, 0, :], axis=0)      # final reduction in plain JAX
    numel = float(n_img * H * W)
    return sums[0] / numel, sums[1] / numel, sums[2] / numel, sums[3] / numel


# ---------------------------------------------------------------------------
# FusLoss forward
# ---------------------------------------------------------------------------
def fus_loss(ir, vis, fus, alpha_low=1.0, alpha_high=1.0):
    # decompose(): low = level-1 Haar LL band; high = mean of the three
    # level-1 detail bands.
    # TODO(synk): the level-2 DWT (mid_freq) in the reference decompose() never
    # feeds the returned losses (dead code), so it is omitted.
    i_low, i_high = haar_low_high(ir)
    v_low, v_high = haar_low_high(vis)
    f_low, f_high = haar_low_high(fus)

    ssim_fi_l, l1_fi_l, ssim_fv_l, l1_fv_l = ssim_l1_band(
        f_low, i_low, v_low, with_l1_fv=True)
    # High band: l1(f_high, v_high) is never used by the loss -> skipped.
    ssim_fi_h, l1_fi_h, ssim_fv_h, _ = ssim_l1_band(
        f_high, i_high, v_high, with_l1_fv=False)

    low_loss = ((1.0 - ssim_fi_l / 2.0) + (1.0 - ssim_fv_l / 2.0)
                + l1_fi_l + l1_fv_l)
    high_loss = (2.0 * (1.0 - ssim_fi_h / 2.0) + (1.0 - ssim_fv_h / 2.0)
                 + l1_fi_h)
    total = alpha_low * low_loss + alpha_high * high_loss
    return total, alpha_low * low_loss, alpha_high * high_loss


if __name__ == "__main__":
    key = jax.random.PRNGKey(0)
    k1, k2, k3 = jax.random.split(key, 3)
    B, C, H, W = 2, 4, 16, 16
    ir = jax.random.uniform(k1, (B, C, H, W), dtype=jnp.float32)
    vis = jax.random.uniform(k2, (B, C, H, W), dtype=jnp.float32)
    fus = jax.random.uniform(k3, (B, C, H, W), dtype=jnp.float32)

    total, low, high = jax.jit(fus_loss)(ir, vis, fus)
    jax.block_until_ready((total, low, high))
    print("KERNEL_OK")
</pallas_src>

<mosaic_0001>
module attributes {stable_mosaic.version = 11 : i64} {
  func.func @_ssim_l1_band_kernel(%arg0: i32, %arg1: memref<8x8xf32, #tpu.memory_space<vmem>>, %arg2: memref<8x8xf32, #tpu.memory_space<vmem>>, %arg3: memref<4x8x8xf32, #tpu.memory_space<vmem>>, %arg4: memref<4x8x8xf32, #tpu.memory_space<vmem>>, %arg5: memref<4x8x8xf32, #tpu.memory_space<vmem>>, %arg6: memref<1x8x128xf32, #tpu.memory_space<vmem>>) attributes {dimension_semantics = [#tpu.dimension_semantics<parallel>], iteration_bounds = array<i64: 2>, scalar_prefetch = 0 : i64, scratch_operands = 0 : i64, tpu.core_type = #tpu.core_type<tc>, window_params = [{pipeline_mode = #tpu.pipeline_mode<synchronous>, transform_indices = @transform_0, window_bounds = array<i64: 8, 8>}, {pipeline_mode = #tpu.pipeline_mode<synchronous>, transform_indices = @transform_1, window_bounds = array<i64: 8, 8>}, {transform_indices = @transform_2, window_bounds = array<i64: 4, 8, 8>}, {transform_indices = @transform_3, window_bounds = array<i64: 4, 8, 8>}, {transform_indices = @transform_4, window_bounds = array<i64: 4, 8, 8>}, {transform_indices = @transform_5, window_bounds = array<i64: 1, 8, 128>}]} {
    %c0 = arith.constant 0 : index
    %c0_0 = arith.constant 0 : index
    %0 = vector.load %arg1[%c0, %c0_0] : memref<8x8xf32, #tpu.memory_space<vmem>>, vector<8x8xf32>
    %c0_1 = arith.constant 0 : index
    %c0_2 = arith.constant 0 : index
    %1 = vector.load %arg2[%c0_1, %c0_2] : memref<8x8xf32, #tpu.memory_space<vmem>>, vector<8x8xf32>
    %c0_3 = arith.constant 0 : index
    %c0_4 = arith.constant 0 : index
    %c0_5 = arith.constant 0 : index
    %2 = vector.load %arg3[%c0_3, %c0_4, %c0_5] : memref<4x8x8xf32, #tpu.memory_space<vmem>>, vector<4x8x8xf32>
    %3 = vector.shape_cast %2 : vector<4x8x8xf32> to vector<32x8xf32>
    %c0_6 = arith.constant 0 : index
    %c0_7 = arith.constant 0 : index
    %c0_8 = arith.constant 0 : index
    %4 = vector.load %arg4[%c0_6, %c0_7, %c0_8] : memref<4x8x8xf32, #tpu.memory_space<vmem>>, vector<4x8x8xf32>
    %5 = vector.shape_cast %4 : vector<4x8x8xf32> to vector<32x8xf32>
    %c0_9 = arith.constant 0 : index
    %c0_10 = arith.constant 0 : index
    %c0_11 = arith.constant 0 : index
    %6 = vector.load %arg5[%c0_9, %c0_10, %c0_11] : memref<4x8x8xf32, #tpu.memory_space<vmem>>, vector<4x8x8xf32>
    %7 = vector.shape_cast %6 : vector<4x8x8xf32> to vector<32x8xf32>
    %8 = vector.shape_cast %0 : vector<8x8xf32> to vector<1x8x8xf32>
    %9 = vector.broadcast %8 : vector<1x8x8xf32> to vector<4x8x8xf32>
    %10 = arith.truncf %1 : vector<8x8xf32> to vector<8x8xbf16>
    %11 = arith.truncf %0 : vector<8x8xf32> to vector<8x8xbf16>
    %12 = vector.shape_cast %11 : vector<8x8xbf16> to vector<1x8x8xbf16>
    %13 = vector.broadcast %12 : vector<1x8x8xbf16> to vector<4x8x8xbf16>
    %14 = arith.truncf %3 : vector<32x8xf32> to vector<32x8xbf16>
    %cst = arith.constant dense<0.000000e+00> : vector<32x8xf32>
    %15 = tpu.matmul %14, %10, %cst {dimension_numbers = #tpu.dot_dimension_numbers<[1], [0], [0], [1], [0, 0, 1, 1], [], []>} : vector<32x8xbf16>, vector<8x8xbf16>, vector<32x8xf32> -> vector<32x8xf32>
    %16 = vector.shape_cast %15 : vector<32x8xf32> to vector<4x8x8xf32>
    %17 = arith.truncf %16 : vector<4x8x8xf32> to vector<4x8x8xbf16>
    %cst_12 = arith.constant dense<0.000000e+00> : vector<4x8x8xf32>
    %18 = tpu.matmul %13, %17, %cst_12 {dimension_numbers = #tpu.dot_dimension_numbers<[2], [1], [1], [2], [0, 0, 0, 1, 1, 2], [0], [0]>} : vector<4x8x8xbf16>, vector<4x8x8xbf16>, vector<4x8x8xf32> -> vector<4x8x8xf32>
    %19 = vector.shape_cast %18 : vector<4x8x8xf32> to vector<32x8xf32>
    %20 = arith.truncf %5 : vector<32x8xf32> to vector<32x8xbf16>
    %cst_13 = arith.constant dense<0.000000e+00> : vector<32x8xf32>
    %21 = tpu.matmul %20, %10, %cst_13 {dimension_numbers = #tpu.dot_dimension_numbers<[1], [0], [0], [1], [0, 0, 1, 1], [], []>} : vector<32x8xbf16>, vector<8x8xbf16>, vector<32x8xf32> -> vector<32x8xf32>
    %22 = vector.shape_cast %21 : vector<32x8xf32> to vector<4x8x8xf32>
    %23 = arith.truncf %22 : vector<4x8x8xf32> to vector<4x8x8xbf16>
    %cst_14 = arith.constant dense<0.000000e+00> : vector<4x8x8xf32>
    %24 = tpu.matmul %13, %23, %cst_14 {dimension_numbers = #tpu.dot_dimension_numbers<[2], [1], [1], [2], [0, 0, 0, 1, 1, 2], [0], [0]>} : vector<4x8x8xbf16>, vector<4x8x8xbf16>, vector<4x8x8xf32> -> vector<4x8x8xf32>
    %25 = vector.shape_cast %24 : vector<4x8x8xf32> to vector<32x8xf32>
    %26 = arith.truncf %7 : vector<32x8xf32> to vector<32x8xbf16>
    %cst_15 = arith.constant dense<0.000000e+00> : vector<32x8xf32>
    %27 = tpu.matmul %26, %10, %cst_15 {dimension_numbers = #tpu.dot_dimension_numbers<[1], [0], [0], [1], [0, 0, 1, 1], [], []>} : vector<32x8xbf16>, vector<8x8xbf16>, vector<32x8xf32> -> vector<32x8xf32>
    %28 = vector.shape_cast %27 : vector<32x8xf32> to vector<4x8x8xf32>
    %29 = arith.truncf %28 : vector<4x8x8xf32> to vector<4x8x8xbf16>
    %cst_16 = arith.constant dense<0.000000e+00> : vector<4x8x8xf32>
    %30 = tpu.matmul %13, %29, %cst_16 {dimension_numbers = #tpu.dot_dimension_numbers<[2], [1], [1], [2], [0, 0, 0, 1, 1, 2], [0], [0]>} : vector<4x8x8xbf16>, vector<4x8x8xbf16>, vector<4x8x8xf32> -> vector<4x8x8xf32>
    %31 = vector.shape_cast %30 : vector<4x8x8xf32> to vector<32x8xf32>
    %32 = arith.mulf %3, %3 : vector<32x8xf32>
    %cst_17 = arith.constant dense<0.000000e+00> : vector<32x8xf32>
    %33 = tpu.matmul %32, %1, %cst_17 {dimension_numbers = #tpu.dot_dimension_numbers<[1], [0], [0], [1], [0, 0, 1, 1], [], []>} : vector<32x8xf32>, vector<8x8xf32>, vector<32x8xf32> -> vector<32x8xf32>
    %34 = vector.shape_cast %33 : vector<32x8xf32> to vector<4x8x8xf32>
    %cst_18 = arith.constant dense<0.000000e+00> : vector<4x8x8xf32>
    %35 = tpu.matmul %9, %34, %cst_18 {dimension_numbers = #tpu.dot_dimension_numbers<[2], [1], [1], [2], [0, 0, 0, 1, 1, 2], [0], [0]>} : vector<4x8x8xf32>, vector<4x8x8xf32>, vector<4x8x8xf32> -> vector<4x8x8xf32>
    %36 = vector.shape_cast %35 : vector<4x8x8xf32> to vector<32x8xf32>
    %37 = arith.mulf %5, %5 : vector<32x8xf32>
    %cst_19 = arith.constant dense<0.000000e+00> : vector<32x8xf32>
    %38 = tpu.matmul %37, %1, %cst_19 {dimension_numbers = #tpu.dot_dimension_numbers<[1], [0], [0], [1], [0, 0, 1, 1], [], []>} : vector<32x8xf32>, vector<8x8xf32>, vector<32x8xf32> -> vector<32x8xf32>
    %39 = vector.shape_cast %38 : vector<32x8xf32> to vector<4x8x8xf32>
    %cst_20 = arith.constant dense<0.000000e+00> : vector<4x8x8xf32>
    %40 = tpu.matmul %9, %39, %cst_20 {dimension_numbers = #tpu.dot_dimension_numbers<[2], [1], [1], [2], [0, 0, 0, 1, 1, 2], [0], [0]>} : vector<4x8x8xf32>, vector<4x8x8xf32>, vector<4x8x8xf32> -> vector<4x8x8xf32>
    %41 = vector.shape_cast %40 : vector<4x8x8xf32> to vector<32x8xf32>
    %42 = arith.mulf %7, %7 : vector<32x8xf32>
    %cst_21 = arith.constant dense<0.000000e+00> : vector<32x8xf32>
    %43 = tpu.matmul %42, %1, %cst_21 {dimension_numbers = #tpu.dot_dimension_numbers<[1], [0], [0], [1], [0, 0, 1, 1], [], []>} : vector<32x8xf32>, vector<8x8xf32>, vector<32x8xf32> -> vector<32x8xf32>
    %44 = vector.shape_cast %43 : vector<32x8xf32> to vector<4x8x8xf32>
    %cst_22 = arith.constant dense<0.000000e+00> : vector<4x8x8xf32>
    %45 = tpu.matmul %9, %44, %cst_22 {dimension_numbers = #tpu.dot_dimension_numbers<[2], [1], [1], [2], [0, 0, 0, 1, 1, 2], [0], [0]>} : vector<4x8x8xf32>, vector<4x8x8xf32>, vector<4x8x8xf32> -> vector<4x8x8xf32>
    %46 = vector.shape_cast %45 : vector<4x8x8xf32> to vector<32x8xf32>
    %47 = arith.mulf %3, %5 : vector<32x8xf32>
    %cst_23 = arith.constant dense<0.000000e+00> : vector<32x8xf32>
    %48 = tpu.matmul %47, %1, %cst_23 {dimension_numbers = #tpu.dot_dimension_numbers<[1], [0], [0], [1], [0, 0, 1, 1], [], []>} : vector<32x8xf32>, vector<8x8xf32>, vector<32x8xf32> -> vector<32x8xf32>
    %49 = vector.shape_cast %48 : vector<32x8xf32> to vector<4x8x8xf32>
    %cst_24 = arith.constant dense<0.000000e+00> : vector<4x8x8xf32>
    %50 = tpu.matmul %9, %49, %cst_24 {dimension_numbers = #tpu.dot_dimension_numbers<[2], [1], [1], [2], [0, 0, 0, 1, 1, 2], [0], [0]>} : vector<4x8x8xf32>, vector<4x8x8xf32>, vector<4x8x8xf32> -> vector<4x8x8xf32>
    %51 = vector.shape_cast %50 : vector<4x8x8xf32> to vector<32x8xf32>
    %52 = arith.mulf %3, %7 : vector<32x8xf32>
    %cst_25 = arith.constant dense<0.000000e+00> : vector<32x8xf32>
    %53 = tpu.matmul %52, %1, %cst_25 {dimension_numbers = #tpu.dot_dimension_numbers<[1], [0], [0], [1], [0, 0, 1, 1], [], []>} : vector<32x8xf32>, vector<8x8xf32>, vector<32x8xf32> -> vector<32x8xf32>
    %54 = vector.shape_cast %53 : vector<32x8xf32> to vector<4x8x8xf32>
    %cst_26 = arith.constant dense<0.000000e+00> : vector<4x8x8xf32>
    %55 = tpu.matmul %9, %54, %cst_26 {dimension_numbers = #tpu.dot_dimension_numbers<[2], [1], [1], [2], [0, 0, 0, 1, 1, 2], [0], [0]>} : vector<4x8x8xf32>, vector<4x8x8xf32>, vector<4x8x8xf32> -> vector<4x8x8xf32>
    %56 = vector.shape_cast %55 : vector<4x8x8xf32> to vector<32x8xf32>
    %57 = arith.mulf %19, %19 : vector<32x8xf32>
    %58 = arith.mulf %25, %25 : vector<32x8xf32>
    %59 = arith.mulf %19, %25 : vector<32x8xf32>
    %60 = arith.subf %36, %57 : vector<32x8xf32>
    %61 = arith.subf %41, %58 : vector<32x8xf32>
    %62 = arith.subf %51, %59 : vector<32x8xf32>
    %cst_27 = arith.constant 2.000000e+00 : f32
    %63 = vector.broadcast %cst_27 : f32 to vector<32x8xf32>
    %64 = arith.mulf %63, %59 : vector<32x8xf32>
    %cst_28 = arith.constant 6.502500e+00 : f32
    %65 = vector.broadcast %cst_28 : f32 to vector<32x8xf32>
    %66 = arith.addf %64, %65 : vector<32x8xf32>
    %cst_29 = arith.constant 2.000000e+00 : f32
    %67 = vector.broadcast %cst_29 : f32 to vector<32x8xf32>
    %68 = arith.mulf %67, %62 : vector<32x8xf32>
    %cst_30 = arith.constant 5.852250e+01 : f32
    %69 = vector.broadcast %cst_30 : f32 to vector<32x8xf32>
    %70 = arith.addf %68, %69 : vector<32x8xf32>
    %71 = arith.mulf %66, %70 : vector<32x8xf32>
    %72 = arith.addf %57, %58 : vector<32x8xf32>
    %cst_31 = arith.constant 6.502500e+00 : f32
    %73 = vector.broadcast %cst_31 : f32 to vector<32x8xf32>
    %74 = arith.addf %72, %73 : vector<32x8xf32>
    %75 = arith.addf %60, %61 : vector<32x8xf32>
    %cst_32 = arith.constant 5.852250e+01 : f32
    %76 = vector.broadcast %cst_32 : f32 to vector<32x8xf32>
    %77 = arith.addf %75, %76 : vector<32x8xf32>
    %78 = arith.mulf %74, %77 : vector<32x8xf32>
    %79 = tpu.reciprocal %78 {approx = true} : vector<32x8xf32> -> vector<32x8xf32>
    %80 = arith.mulf %78, %79 : vector<32x8xf32>
    %cst_33 = arith.constant 2.000000e+00 : f32
    %81 = vector.broadcast %cst_33 : f32 to vector<32x8xf32>
    %82 = arith.subf %81, %80 : vector<32x8xf32>
    %83 = arith.mulf %79, %82 : vector<32x8xf32>
    %84 = arith.mulf %71, %83 : vector<32x8xf32>
    %85 = vector.shape_cast %84 : vector<32x8xf32> to vector<1x32x8xf32>
    %cst_34 = arith.constant dense<0.000000e+00> : vector<1xf32>
    %86 = vector.multi_reduction <add>, %85, %cst_34 [1, 2] : vector<1x32x8xf32> to vector<1xf32>
    %87 = vector.shape_cast %86 : vector<1xf32> to vector<1x1x1xf32>
    %88 = vector.extract %87[0, 0, 0] : f32 from vector<1x1x1xf32>
    %89 = arith.mulf %19, %19 : vector<32x8xf32>
    %90 = arith.mulf %31, %31 : vector<32x8xf32>
    %91 = arith.mulf %19, %31 : vector<32x8xf32>
    %92 = arith.subf %36, %89 : vector<32x8xf32>
    %93 = arith.subf %46, %90 : vector<32x8xf32>
    %94 = arith.subf %56, %91 : vector<32x8xf32>
    %cst_35 = arith.constant 2.000000e+00 : f32
    %95 = vector.broadcast %cst_35 : f32 to vector<32x8xf32>
    %96 = arith.mulf %95, %91 : vector<32x8xf32>
    %cst_36 = arith.constant 6.502500e+00 : f32
    %97 = vector.broadcast %cst_36 : f32 to vector<32x8xf32>
    %98 = arith.addf %96, %97 : vector<32x8xf32>
    %cst_37 = arith.constant 2.000000e+00 : f32
    %99 = vector.broadcast %cst_37 : f32 to vector<32x8xf32>
    %100 = arith.mulf %99, %94 : vector<32x8xf32>
    %cst_38 = arith.constant 5.852250e+01 : f32
    %101 = vector.broadcast %cst_38 : f32 to vector<32x8xf32>
    %102 = arith.addf %100, %101 : vector<32x8xf32>
    %103 = arith.mulf %98, %102 : vector<32x8xf32>
    %104 = arith.addf %89, %90 : vector<32x8xf32>
    %cst_39 = arith.constant 6.502500e+00 : f32
    %105 = vector.broadcast %cst_39 : f32 to vector<32x8xf32>
    %106 = arith.addf %104, %105 : vector<32x8xf32>
    %107 = arith.addf %92, %93 : vector<32x8xf32>
    %cst_40 = arith.constant 5.852250e+01 : f32
    %108 = vector.broadcast %cst_40 : f32 to vector<32x8xf32>
    %109 = arith.addf %107, %108 : vector<32x8xf32>
    %110 = arith.mulf %106, %109 : vector<32x8xf32>
    %111 = tpu.reciprocal %110 {approx = true} : vector<32x8xf32> -> vector<32x8xf32>
    %112 = arith.mulf %110, %111 : vector<32x8xf32>
    %cst_41 = arith.constant 2.000000e+00 : f32
    %113 = vector.broadcast %cst_41 : f32 to vector<32x8xf32>
    %114 = arith.subf %113, %112 : vector<32x8xf32>
    %115 = arith.mulf %111, %114 : vector<32x8xf32>
    %116 = arith.mulf %103, %115 : vector<32x8xf32>
    %117 = vector.shape_cast %116 : vector<32x8xf32> to vector<1x32x8xf32>
    %cst_42 = arith.constant dense<0.000000e+00> : vector<1xf32>
    %118 = vector.multi_reduction <add>, %117, %cst_42 [1, 2] : vector<1x32x8xf32> to vector<1xf32>
    %119 = vector.shape_cast %118 : vector<1xf32> to vector<1x1x1xf32>
    %120 = vector.extract %119[0, 0, 0] : f32 from vector<1x1x1xf32>
    %121 = arith.subf %3, %5 : vector<32x8xf32>
    %122 = math.absf %121 : vector<32x8xf32>
    %123 = vector.shape_cast %122 : vector<32x8xf32> to vector<1x32x8xf32>
    %cst_43 = arith.constant dense<0.000000e+00> : vector<1xf32>
    %124 = vector.multi_reduction <add>, %123, %cst_43 [1, 2] : vector<1x32x8xf32> to vector<1xf32>
    %125 = vector.shape_cast %124 : vector<1xf32> to vector<1x1x1xf32>
    %126 = vector.extract %125[0, 0, 0] : f32 from vector<1x1x1xf32>
    %127 = tpu.iota {dimensions = array<i32: 1>} : vector<8x128xi32>
    %c0_i32 = arith.constant 0 : i32
    %128 = vector.broadcast %c0_i32 : i32 to vector<8x128xi32>
    %129 = arith.cmpi eq, %127, %128 : vector<8x128xi32>
    %cst_44 = arith.constant 0.000000e+00 : f32
    %130 = vector.broadcast %88 : f32 to vector<8x128xf32>
    %131 = vector.broadcast %cst_44 : f32 to vector<8x128xf32>
    %132 = arith.select %129, %130, %131 : vector<8x128xi1>, vector<8x128xf32>
    %c1_i32 = arith.constant 1 : i32
    %133 = vector.broadcast %c1_i32 : i32 to vector<8x128xi32>
    %134 = arith.cmpi eq, %127, %133 : vector<8x128xi32>
    %cst_45 = arith.constant 0.000000e+00 : f32
    %135 = vector.broadcast %126 : f32 to vector<8x128xf32>
    %136 = vector.broadcast %cst_45 : f32 to vector<8x128xf32>
    %137 = arith.select %134, %135, %136 : vector<8x128xi1>, vector<8x128xf32>
    %138 = arith.addf %132, %137 : vector<8x128xf32>
    %c2_i32 = arith.constant 2 : i32
    %139 = vector.broadcast %c2_i32 : i32 to vector<8x128xi32>
    %140 = arith.cmpi eq, %127, %139 : vector<8x128xi32>
    %cst_46 = arith.constant 0.000000e+00 : f32
    %141 = vector.broadcast %120 : f32 to vector<8x128xf32>
    %142 = vector.broadcast %cst_46 : f32 to vector<8x128xf32>
    %143 = arith.select %140, %141, %142 : vector<8x128xi1>, vector<8x128xf32>
    %144 = arith.addf %138, %143 : vector<8x128xf32>
    %c3_i32 = arith.constant 3 : i32
    %145 = vector.broadcast %c3_i32 : i32 to vector<8x128xi32>
    %146 = arith.cmpi eq, %127, %145 : vector<8x128xi32>
    %147 = arith.subf %3, %7 : vector<32x8xf32>
    %148 = math.absf %147 : vector<32x8xf32>
    %149 = vector.shape_cast %148 : vector<32x8xf32> to vector<1x32x8xf32>
    %cst_47 = arith.constant dense<0.000000e+00> : vector<1xf32>
    %150 = vector.multi_reduction <add>, %149, %cst_47 [1, 2] : vector<1x32x8xf32> to vector<1xf32>
    %151 = vector.shape_cast %150 : vector<1xf32> to vector<1x1x1xf32>
    %152 = vector.extract %151[0, 0, 0] : f32 from vector<1x1x1xf32>
    %cst_48 = arith.constant 0.000000e+00 : f32
    %153 = vector.broadcast %152 : f32 to vector<8x128xf32>
    %154 = vector.broadcast %cst_48 : f32 to vector<8x128xf32>
    %155 = arith.select %146, %153, %154 : vector<8x128xi1>, vector<8x128xf32>
    %156 = arith.addf %144, %155 : vector<8x128xf32>
    %c0_49 = arith.constant 0 : index
    %c0_50 = arith.constant 0 : index
    %c0_51 = arith.constant 0 : index
    %157 = vector.load %arg6[%c0_49, %c0_50, %c0_51] : memref<1x8x128xf32, #tpu.memory_space<vmem>>, vector<1x8x128xf32>
    %158 = vector.shape_cast %157 : vector<1x8x128xf32> to vector<8x128xf32>
    %159 = vector.shape_cast %156 : vector<8x128xf32> to vector<1x8x128xf32>
    tpu.vector_store %arg6[%c0_49, %c0_50, %c0_51], %159 {strides = array<i32>} : memref<1x8x128xf32, #tpu.memory_space<vmem>>, vector<1x8x128xf32>,
    return
  }
  func.func @transform_0(%arg0: i32) -> (i32, i32) {
    %c0_i32 = arith.constant 0 : i32
    %c0_i32_0 = arith.constant 0 : i32
    %c0_i32_1 = arith.constant 0 : i32
    return %c0_i32, %c0_i32_0 : i32, i32
  }
  func.func @transform_1(%arg0: i32) -> (i32, i32) {
    %c0_i32 = arith.constant 0 : i32
    %c0_i32_0 = arith.constant 0 : i32
    %c0_i32_1 = arith.constant 0 : i32
    return %c0_i32, %c0_i32_0 : i32, i32
  }
  func.func @transform_2(%arg0: i32) -> (i32, i32, i32) {
    %c0_i32 = arith.constant 0 : i32
    %c0_i32_0 = arith.constant 0 : i32
    %c0_i32_1 = arith.constant 0 : i32
    return %arg0, %c0_i32, %c0_i32_0 : i32, i32, i32
  }
  func.func @transform_3(%arg0: i32) -> (i32, i32, i32) {
    %c0_i32 = arith.constant 0 : i32
    %c0_i32_0 = arith.constant 0 : i32
    %c0_i32_1 = arith.constant 0 : i32
    return %arg0, %c0_i32, %c0_i32_0 : i32, i32, i32
  }
  func.func @transform_4(%arg0: i32) -> (i32, i32, i32) {
    %c0_i32 = arith.constant 0 : i32
    %c0_i32_0 = arith.constant 0 : i32
    %c0_i32_1 = arith.constant 0 : i32
    return %arg0, %c0_i32, %c0_i32_0 : i32, i32, i32
  }
  func.func @transform_5(%arg0: i32) -> (i32, i32, i32) {
    %c0_i32 = arith.constant 0 : i32
    %c0_i32_0 = arith.constant 0 : i32
    %c0_i32_1 = arith.constant 0 : i32
    return %arg0, %c0_i32, %c0_i32_0 : i32, i32, i32
  }
}

module attributes {stable_mosaic.version = 11 : i64} {
  func.func @_ssim_l1_band_kernel(%arg0: i32, %arg1: memref<8x8xf32, #tpu.memory_space<vmem>>, %arg2: memref<8x8xf32, #tpu.memory_space<vmem>>, %arg3: memref<4x8x8xf32, #tpu.memory_space<vmem>>, %arg4: memref<4x8x8xf32, #tpu.memory_space<vmem>>, %arg5: memref<4x8x8xf32, #tpu.memory_space<vmem>>, %arg6: memref<1x8x128xf32, #tpu.memory_space<vmem>>) attributes {dimension_semantics = [#tpu.dimension_semantics<parallel>], iteration_bounds = array<i64: 2>, scalar_prefetch = 0 : i64, scratch_operands = 0 : i64, tpu.core_type = #tpu.core_type<tc>, window_params = [{pipeline_mode = #tpu.pipeline_mode<synchronous>, transform_indices = @transform_0, window_bounds = array<i64: 8, 8>}, {pipeline_mode = #tpu.pipeline_mode<synchronous>, transform_indices = @transform_1, window_bounds = array<i64: 8, 8>}, {transform_indices = @transform_2, window_bounds = array<i64: 4, 8, 8>}, {transform_indices = @transform_3, window_bounds = array<i64: 4, 8, 8>}, {transform_indices = @transform_4, window_bounds = array<i64: 4, 8, 8>}, {transform_indices = @transform_5, window_bounds = array<i64: 1, 8, 128>}]} {
    %c0 = arith.constant 0 : index
    %c0_0 = arith.constant 0 : index
    %0 = vector.load %arg1[%c0, %c0_0] : memref<8x8xf32, #tpu.memory_space<vmem>>, vector<8x8xf32>
    %c0_1 = arith.constant 0 : index
    %c0_2 = arith.constant 0 : index
    %1 = vector.load %arg2[%c0_1, %c0_2] : memref<8x8xf32, #tpu.memory_space<vmem>>, vector<8x8xf32>
    %c0_3 = arith.constant 0 : index
    %c0_4 = arith.constant 0 : index
    %c0_5 = arith.constant 0 : index
    %2 = vector.load %arg3[%c0_3, %c0_4, %c0_5] : memref<4x8x8xf32, #tpu.memory_space<vmem>>, vector<4x8x8xf32>
    %3 = vector.shape_cast %2 : vector<4x8x8xf32> to vector<32x8xf32>
    %c0_6 = arith.constant 0 : index
    %c0_7 = arith.constant 0 : index
    %c0_8 = arith.constant 0 : index
    %4 = vector.load %arg4[%c0_6, %c0_7, %c0_8] : memref<4x8x8xf32, #tpu.memory_space<vmem>>, vector<4x8x8xf32>
    %5 = vector.shape_cast %4 : vector<4x8x8xf32> to vector<32x8xf32>
    %c0_9 = arith.constant 0 : index
    %c0_10 = arith.constant 0 : index
    %c0_11 = arith.constant 0 : index
    %6 = vector.load %arg5[%c0_9, %c0_10, %c0_11] : memref<4x8x8xf32, #tpu.memory_space<vmem>>, vector<4x8x8xf32>
    %7 = vector.shape_cast %6 : vector<4x8x8xf32> to vector<32x8xf32>
    %8 = vector.shape_cast %0 : vector<8x8xf32> to vector<1x8x8xf32>
    %9 = vector.broadcast %8 : vector<1x8x8xf32> to vector<4x8x8xf32>
    %10 = arith.truncf %1 : vector<8x8xf32> to vector<8x8xbf16>
    %11 = arith.truncf %0 : vector<8x8xf32> to vector<8x8xbf16>
    %12 = vector.shape_cast %11 : vector<8x8xbf16> to vector<1x8x8xbf16>
    %13 = vector.broadcast %12 : vector<1x8x8xbf16> to vector<4x8x8xbf16>
    %14 = arith.truncf %3 : vector<32x8xf32> to vector<32x8xbf16>
    %cst = arith.constant dense<0.000000e+00> : vector<32x8xf32>
    %15 = tpu.matmul %14, %10, %cst {dimension_numbers = #tpu.dot_dimension_numbers<[1], [0], [0], [1], [0, 0, 1, 1], [], []>} : vector<32x8xbf16>, vector<8x8xbf16>, vector<32x8xf32> -> vector<32x8xf32>
    %16 = vector.shape_cast %15 : vector<32x8xf32> to vector<4x8x8xf32>
    %17 = arith.truncf %16 : vector<4x8x8xf32> to vector<4x8x8xbf16>
    %cst_12 = arith.constant dense<0.000000e+00> : vector<4x8x8xf32>
    %18 = tpu.matmul %13, %17, %cst_12 {dimension_numbers = #tpu.dot_dimension_numbers<[2], [1], [1], [2], [0, 0, 0, 1, 1, 2], [0], [0]>} : vector<4x8x8xbf16>, vector<4x8x8xbf16>, vector<4x8x8xf32> -> vector<4x8x8xf32>
    %19 = vector.shape_cast %18 : vector<4x8x8xf32> to vector<32x8xf32>
    %20 = arith.truncf %5 : vector<32x8xf32> to vector<32x8xbf16>
    %cst_13 = arith.constant dense<0.000000e+00> : vector<32x8xf32>
    %21 = tpu.matmul %20, %10, %cst_13 {dimension_numbers = #tpu.dot_dimension_numbers<[1], [0], [0], [1], [0, 0, 1, 1], [], []>} : vector<32x8xbf16>, vector<8x8xbf16>, vector<32x8xf32> -> vector<32x8xf32>
    %22 = vector.shape_cast %21 : vector<32x8xf32> to vector<4x8x8xf32>
    %23 = arith.truncf %22 : vector<4x8x8xf32> to vector<4x8x8xbf16>
    %cst_14 = arith.constant dense<0.000000e+00> : vector<4x8x8xf32>
    %24 = tpu.matmul %13, %23, %cst_14 {dimension_numbers = #tpu.dot_dimension_numbers<[2], [1], [1], [2], [0, 0, 0, 1, 1, 2], [0], [0]>} : vector<4x8x8xbf16>, vector<4x8x8xbf16>, vector<4x8x8xf32> -> vector<4x8x8xf32>
    %25 = vector.shape_cast %24 : vector<4x8x8xf32> to vector<32x8xf32>
    %26 = arith.truncf %7 : vector<32x8xf32> to vector<32x8xbf16>
    %cst_15 = arith.constant dense<0.000000e+00> : vector<32x8xf32>
    %27 = tpu.matmul %26, %10, %cst_15 {dimension_numbers = #tpu.dot_dimension_numbers<[1], [0], [0], [1], [0, 0, 1, 1], [], []>} : vector<32x8xbf16>, vector<8x8xbf16>, vector<32x8xf32> -> vector<32x8xf32>
    %28 = vector.shape_cast %27 : vector<32x8xf32> to vector<4x8x8xf32>
    %29 = arith.truncf %28 : vector<4x8x8xf32> to vector<4x8x8xbf16>
    %cst_16 = arith.constant dense<0.000000e+00> : vector<4x8x8xf32>
    %30 = tpu.matmul %13, %29, %cst_16 {dimension_numbers = #tpu.dot_dimension_numbers<[2], [1], [1], [2], [0, 0, 0, 1, 1, 2], [0], [0]>} : vector<4x8x8xbf16>, vector<4x8x8xbf16>, vector<4x8x8xf32> -> vector<4x8x8xf32>
    %31 = vector.shape_cast %30 : vector<4x8x8xf32> to vector<32x8xf32>
    %32 = arith.mulf %3, %3 : vector<32x8xf32>
    %cst_17 = arith.constant dense<0.000000e+00> : vector<32x8xf32>
    %33 = tpu.matmul %32, %1, %cst_17 {dimension_numbers = #tpu.dot_dimension_numbers<[1], [0], [0], [1], [0, 0, 1, 1], [], []>} : vector<32x8xf32>, vector<8x8xf32>, vector<32x8xf32> -> vector<32x8xf32>
    %34 = vector.shape_cast %33 : vector<32x8xf32> to vector<4x8x8xf32>
    %cst_18 = arith.constant dense<0.000000e+00> : vector<4x8x8xf32>
    %35 = tpu.matmul %9, %34, %cst_18 {dimension_numbers = #tpu.dot_dimension_numbers<[2], [1], [1], [2], [0, 0, 0, 1, 1, 2], [0], [0]>} : vector<4x8x8xf32>, vector<4x8x8xf32>, vector<4x8x8xf32> -> vector<4x8x8xf32>
    %36 = vector.shape_cast %35 : vector<4x8x8xf32> to vector<32x8xf32>
    %37 = arith.mulf %5, %5 : vector<32x8xf32>
    %cst_19 = arith.constant dense<0.000000e+00> : vector<32x8xf32>
    %38 = tpu.matmul %37, %1, %cst_19 {dimension_numbers = #tpu.dot_dimension_numbers<[1], [0], [0], [1], [0, 0, 1, 1], [], []>} : vector<32x8xf32>, vector<8x8xf32>, vector<32x8xf32> -> vector<32x8xf32>
    %39 = vector.shape_cast %38 : vector<32x8xf32> to vector<4x8x8xf32>
    %cst_20 = arith.constant dense<0.000000e+00> : vector<4x8x8xf32>
    %40 = tpu.matmul %9, %39, %cst_20 {dimension_numbers = #tpu.dot_dimension_numbers<[2], [1], [1], [2], [0, 0, 0, 1, 1, 2], [0], [0]>} : vector<4x8x8xf32>, vector<4x8x8xf32>, vector<4x8x8xf32> -> vector<4x8x8xf32>
    %41 = vector.shape_cast %40 : vector<4x8x8xf32> to vector<32x8xf32>
    %42 = arith.mulf %7, %7 : vector<32x8xf32>
    %cst_21 = arith.constant dense<0.000000e+00> : vector<32x8xf32>
    %43 = tpu.matmul %42, %1, %cst_21 {dimension_numbers = #tpu.dot_dimension_numbers<[1], [0], [0], [1], [0, 0, 1, 1], [], []>} : vector<32x8xf32>, vector<8x8xf32>, vector<32x8xf32> -> vector<32x8xf32>
    %44 = vector.shape_cast %43 : vector<32x8xf32> to vector<4x8x8xf32>
    %cst_22 = arith.constant dense<0.000000e+00> : vector<4x8x8xf32>
    %45 = tpu.matmul %9, %44, %cst_22 {dimension_numbers = #tpu.dot_dimension_numbers<[2], [1], [1], [2], [0, 0, 0, 1, 1, 2], [0], [0]>} : vector<4x8x8xf32>, vector<4x8x8xf32>, vector<4x8x8xf32> -> vector<4x8x8xf32>
    %46 = vector.shape_cast %45 : vector<4x8x8xf32> to vector<32x8xf32>
    %47 = arith.mulf %3, %5 : vector<32x8xf32>
    %cst_23 = arith.constant dense<0.000000e+00> : vector<32x8xf32>
    %48 = tpu.matmul %47, %1, %cst_23 {dimension_numbers = #tpu.dot_dimension_numbers<[1], [0], [0], [1], [0, 0, 1, 1], [], []>} : vector<32x8xf32>, vector<8x8xf32>, vector<32x8xf32> -> vector<32x8xf32>
    %49 = vector.shape_cast %48 : vector<32x8xf32> to vector<4x8x8xf32>
    %cst_24 = arith.constant dense<0.000000e+00> : vector<4x8x8xf32>
    %50 = tpu.matmul %9, %49, %cst_24 {dimension_numbers = #tpu.dot_dimension_numbers<[2], [1], [1], [2], [0, 0, 0, 1, 1, 2], [0], [0]>} : vector<4x8x8xf32>, vector<4x8x8xf32>, vector<4x8x8xf32> -> vector<4x8x8xf32>
    %51 = vector.shape_cast %50 : vector<4x8x8xf32> to vector<32x8xf32>
    %52 = arith.mulf %3, %7 : vector<32x8xf32>
    %cst_25 = arith.constant dense<0.000000e+00> : vector<32x8xf32>
    %53 = tpu.matmul %52, %1, %cst_25 {dimension_numbers = #tpu.dot_dimension_numbers<[1], [0], [0], [1], [0, 0, 1, 1], [], []>} : vector<32x8xf32>, vector<8x8xf32>, vector<32x8xf32> -> vector<32x8xf32>
    %54 = vector.shape_cast %53 : vector<32x8xf32> to vector<4x8x8xf32>
    %cst_26 = arith.constant dense<0.000000e+00> : vector<4x8x8xf32>
    %55 = tpu.matmul %9, %54, %cst_26 {dimension_numbers = #tpu.dot_dimension_numbers<[2], [1], [1], [2], [0, 0, 0, 1, 1, 2], [0], [0]>} : vector<4x8x8xf32>, vector<4x8x8xf32>, vector<4x8x8xf32> -> vector<4x8x8xf32>
    %56 = vector.shape_cast %55 : vector<4x8x8xf32> to vector<32x8xf32>
    %57 = arith.mulf %19, %19 : vector<32x8xf32>
    %58 = arith.mulf %25, %25 : vector<32x8xf32>
    %59 = arith.mulf %19, %25 : vector<32x8xf32>
    %60 = arith.subf %36, %57 : vector<32x8xf32>
    %61 = arith.subf %41, %58 : vector<32x8xf32>
    %62 = arith.subf %51, %59 : vector<32x8xf32>
    %cst_27 = arith.constant 2.000000e+00 : f32
    %63 = vector.broadcast %cst_27 : f32 to vector<32x8xf32>
    %64 = arith.mulf %63, %59 : vector<32x8xf32>
    %cst_28 = arith.constant 6.502500e+00 : f32
    %65 = vector.broadcast %cst_28 : f32 to vector<32x8xf32>
    %66 = arith.addf %64, %65 : vector<32x8xf32>
    %cst_29 = arith.constant 2.000000e+00 : f32
    %67 = vector.broadcast %cst_29 : f32 to vector<32x8xf32>
    %68 = arith.mulf %67, %62 : vector<32x8xf32>
    %cst_30 = arith.constant 5.852250e+01 : f32
    %69 = vector.broadcast %cst_30 : f32 to vector<32x8xf32>
    %70 = arith.addf %68, %69 : vector<32x8xf32>
    %71 = arith.mulf %66, %70 : vector<32x8xf32>
    %72 = arith.addf %57, %58 : vector<32x8xf32>
    %cst_31 = arith.constant 6.502500e+00 : f32
    %73 = vector.broadcast %cst_31 : f32 to vector<32x8xf32>
    %74 = arith.addf %72, %73 : vector<32x8xf32>
    %75 = arith.addf %60, %61 : vector<32x8xf32>
    %cst_32 = arith.constant 5.852250e+01 : f32
    %76 = vector.broadcast %cst_32 : f32 to vector<32x8xf32>
    %77 = arith.addf %75, %76 : vector<32x8xf32>
    %78 = arith.mulf %74, %77 : vector<32x8xf32>
    %79 = tpu.reciprocal %78 {approx = true} : vector<32x8xf32> -> vector<32x8xf32>
    %80 = arith.mulf %78, %79 : vector<32x8xf32>
    %cst_33 = arith.constant 2.000000e+00 : f32
    %81 = vector.broadcast %cst_33 : f32 to vector<32x8xf32>
    %82 = arith.subf %81, %80 : vector<32x8xf32>
    %83 = arith.mulf %79, %82 : vector<32x8xf32>
    %84 = arith.mulf %71, %83 : vector<32x8xf32>
    %85 = vector.shape_cast %84 : vector<32x8xf32> to vector<1x32x8xf32>
    %cst_34 = arith.constant dense<0.000000e+00> : vector<1xf32>
    %86 = vector.multi_reduction <add>, %85, %cst_34 [1, 2] : vector<1x32x8xf32> to vector<1xf32>
    %87 = vector.shape_cast %86 : vector<1xf32> to vector<1x1x1xf32>
    %88 = vector.extract %87[0, 0, 0] : f32 from vector<1x1x1xf32>
    %89 = arith.mulf %19, %19 : vector<32x8xf32>
    %90 = arith.mulf %31, %31 : vector<32x8xf32>
    %91 = arith.mulf %19, %31 : vector<32x8xf32>
    %92 = arith.subf %36, %89 : vector<32x8xf32>
    %93 = arith.subf %46, %90 : vector<32x8xf32>
    %94 = arith.subf %56, %91 : vector<32x8xf32>
    %cst_35 = arith.constant 2.000000e+00 : f32
    %95 = vector.broadcast %cst_35 : f32 to vector<32x8xf32>
    %96 = arith.mulf %95, %91 : vector<32x8xf32>
    %cst_36 = arith.constant 6.502500e+00 : f32
    %97 = vector.broadcast %cst_36 : f32 to vector<32x8xf32>
    %98 = arith.addf %96, %97 : vector<32x8xf32>
    %cst_37 = arith.constant 2.000000e+00 : f32
    %99 = vector.broadcast %cst_37 : f32 to vector<32x8xf32>
    %100 = arith.mulf %99, %94 : vector<32x8xf32>
    %cst_38 = arith.constant 5.852250e+01 : f32
    %101 = vector.broadcast %cst_38 : f32 to vector<32x8xf32>
    %102 = arith.addf %100, %101 : vector<32x8xf32>
    %103 = arith.mulf %98, %102 : vector<32x8xf32>
    %104 = arith.addf %89, %90 : vector<32x8xf32>
    %cst_39 = arith.constant 6.502500e+00 : f32
    %105 = vector.broadcast %cst_39 : f32 to vector<32x8xf32>
    %106 = arith.addf %104, %105 : vector<32x8xf32>
    %107 = arith.addf %92, %93 : vector<32x8xf32>
    %cst_40 = arith.constant 5.852250e+01 : f32
    %108 = vector.broadcast %cst_40 : f32 to vector<32x8xf32>
    %109 = arith.addf %107, %108 : vector<32x8xf32>
    %110 = arith.mulf %106, %109 : vector<32x8xf32>
    %111 = tpu.reciprocal %110 {approx = true} : vector<32x8xf32> -> vector<32x8xf32>
    %112 = arith.mulf %110, %111 : vector<32x8xf32>
    %cst_41 = arith.constant 2.000000e+00 : f32
    %113 = vector.broadcast %cst_41 : f32 to vector<32x8xf32>
    %114 = arith.subf %113, %112 : vector<32x8xf32>
    %115 = arith.mulf %111, %114 : vector<32x8xf32>
    %116 = arith.mulf %103, %115 : vector<32x8xf32>
    %117 = vector.shape_cast %116 : vector<32x8xf32> to vector<1x32x8xf32>
    %cst_42 = arith.constant dense<0.000000e+00> : vector<1xf32>
    %118 = vector.multi_reduction <add>, %117, %cst_42 [1, 2] : vector<1x32x8xf32> to vector<1xf32>
    %119 = vector.shape_cast %118 : vector<1xf32> to vector<1x1x1xf32>
    %120 = vector.extract %119[0, 0, 0] : f32 from vector<1x1x1xf32>
    %121 = arith.subf %3, %5 : vector<32x8xf32>
    %122 = math.absf %121 : vector<32x8xf32>
    %123 = vector.shape_cast %122 : vector<32x8xf32> to vector<1x32x8xf32>
    %cst_43 = arith.constant dense<0.000000e+00> : vector<1xf32>
    %124 = vector.multi_reduction <add>, %123, %cst_43 [1, 2] : vector<1x32x8xf32> to vector<1xf32>
    %125 = vector.shape_cast %124 : vector<1xf32> to vector<1x1x1xf32>
    %126 = vector.extract %125[0, 0, 0] : f32 from vector<1x1x1xf32>
    %127 = tpu.iota {dimensions = array<i32: 1>} : vector<8x128xi32>
    %c0_i32 = arith.constant 0 : i32
    %128 = vector.broadcast %c0_i32 : i32 to vector<8x128xi32>
    %129 = arith.cmpi eq, %127, %128 : vector<8x128xi32>
    %cst_44 = arith.constant 0.000000e+00 : f32
    %130 = vector.broadcast %88 : f32 to vector<8x128xf32>
    %131 = vector.broadcast %cst_44 : f32 to vector<8x128xf32>
    %132 = arith.select %129, %130, %131 : vector<8x128xi1>, vector<8x128xf32>
    %c1_i32 = arith.constant 1 : i32
    %133 = vector.broadcast %c1_i32 : i32 to vector<8x128xi32>
    %134 = arith.cmpi eq, %127, %133 : vector<8x128xi32>
    %cst_45 = arith.constant 0.000000e+00 : f32
    %135 = vector.broadcast %126 : f32 to vector<8x128xf32>
    %136 = vector.broadcast %cst_45 : f32 to vector<8x128xf32>
    %137 = arith.select %134, %135, %136 : vector<8x128xi1>, vector<8x128xf32>
    %138 = arith.addf %132, %137 : vector<8x128xf32>
    %c2_i32 = arith.constant 2 : i32
    %139 = vector.broadcast %c2_i32 : i32 to vector<8x128xi32>
    %140 = arith.cmpi eq, %127, %139 : vector<8x128xi32>
    %cst_46 = arith.constant 0.000000e+00 : f32
    %141 = vector.broadcast %120 : f32 to vector<8x128xf32>
    %142 = vector.broadcast %cst_46 : f32 to vector<8x128xf32>
    %143 = arith.select %140, %141, %142 : vector<8x128xi1>, vector<8x128xf32>
    %144 = arith.addf %138, %143 : vector<8x128xf32>
    %c0_47 = arith.constant 0 : index
    %c0_48 = arith.constant 0 : index
    %c0_49 = arith.constant 0 : index
    %145 = vector.load %arg6[%c0_47, %c0_48, %c0_49] : memref<1x8x128xf32, #tpu.memory_space<vmem>>, vector<1x8x128xf32>
    %146 = vector.shape_cast %145 : vector<1x8x128xf32> to vector<8x128xf32>
    %147 = vector.shape_cast %144 : vector<8x128xf32> to vector<1x8x128xf32>
    tpu.vector_store %arg6[%c0_47, %c0_48, %c0_49], %147 {strides = array<i32>} : memref<1x8x128xf32, #tpu.memory_space<vmem>>, vector<1x8x128xf32>,
    return
  }
  func.func @transform_0(%arg0: i32) -> (i32, i32) {
    %c0_i32 = arith.constant 0 : i32
    %c0_i32_0 = arith.constant 0 : i32
    %c0_i32_1 = arith.constant 0 : i32
    return %c0_i32, %c0_i32_0 : i32, i32
  }
  func.func @transform_1(%arg0: i32) -> (i32, i32) {
    %c0_i32 = arith.constant 0 : i32
    %c0_i32_0 = arith.constant 0 : i32
    %c0_i32_1 = arith.constant 0 : i32
    return %c0_i32, %c0_i32_0 : i32, i32
  }
  func.func @transform_2(%arg0: i32) -> (i32, i32, i32) {
    %c0_i32 = arith.constant 0 : i32
    %c0_i32_0 = arith.constant 0 : i32
    %c0_i32_1 = arith.constant 0 : i32
    return %arg0, %c0_i32, %c0_i32_0 : i32, i32, i32
  }
  func.func @transform_3(%arg0: i32) -> (i32, i32, i32) {
    %c0_i32 = arith.constant 0 : i32
    %c0_i32_0 = arith.constant 0 : i32
    %c0_i32_1 = arith.constant 0 : i32
    return %arg0, %c0_i32, %c0_i32_0 : i32, i32, i32
  }
  func.func @transform_4(%arg0: i32) -> (i32, i32, i32) {
    %c0_i32 = arith.constant 0 : i32
    %c0_i32_0 = arith.constant 0 : i32
    %c0_i32_1 = arith.constant 0 : i32
    return %arg0, %c0_i32, %c0_i32_0 : i32, i32, i32
  }
  func.func @transform_5(%arg0: i32) -> (i32, i32, i32) {
    %c0_i32 = arith.constant 0 : i32
    %c0_i32_0 = arith.constant 0 : i32
    %c0_i32_1 = arith.constant 0 : i32
    return %arg0, %c0_i32, %c0_i32_0 : i32, i32, i32
  }
}

</mosaic_0001>

<llo_original>
// kernel: fus_loss.3
$region0: #{fus_loss.3}
  #allocation0 [shape = 'u32[]', space=smem, size = 0x4, offset = 0x4, fixed_abs, tag = 'smem constant byte address 0x4 - core index']
  #allocation1 [shape = 'u32[144,128]{1,0:T(1,128)}', space=vmem, size = 0x12000, scoped, tag = 'internal scratch']
  %s0 = inlined_call_operand.vmem [shape: f32[8,8], index: 0, kind: input, shape index: {}, may-alias: {0,1}]
  %s1 = inlined_call_operand.vmem [shape: f32[8,8], index: 1, kind: input, shape index: {}, may-alias: {0,1}]
  %s2 = inlined_call_operand.vmem [shape: f32[8,8,8], index: 2, kind: input, shape index: {}]
  %s3 = inlined_call_operand.vmem [shape: f32[8,8,8], index: 3, kind: input, shape index: {}]
  %s4 = inlined_call_operand.vmem [shape: f32[8,8,8], index: 4, kind: input, shape index: {}]
  %s5 = inlined_call_operand.vmem [shape: f32[2,8,128], index: 5, kind: output, shape index: {}]
  %s6 = sld [smem:[#allocation0]]
  $region53: #{fus_loss.3} parent=0
    _
  %s8 = ssub.s32 1, %s6
  %s9 = scalar_select 0, %s8, %s6
  loop: start=0, step=1, limit=4
  $region2: #{fus_loss.3} parent=0 // loop_pre_header
    _
  $region3: #{fus_loss.3} parent=0 // loop_header
    %s11 = sphi 0, %s15
    %p12 = scmp.ge.s32.totalorder %s11, 4
    %s19 = sphi 0, %s19
    %s21 = sphi 0, %s19
    %s22 = sphi 0, %s21
    %s36 = sphi 0, %s22
    %s40 = sphi 0, %s40
    %s42 = sphi 0, %s40
    %s43 = sphi 0, %s42
    %s57 = sphi 0, %s43
    %s63 = sphi 0, %s65
    %s66 = sphi 0, %s63
    %s67 = sphi 0, %s66
    %s83 = sphi 0, %s67
    %s89 = sphi 0, %s91
    %s92 = sphi 0, %s89
    %s93 = sphi 0, %s92
    %s109 = sphi 0, %s93
    %s115 = sphi 0, %s117
    %s118 = sphi 0, %s115
    %s119 = sphi 0, %s118
    %s135 = sphi 0, %s119
    %s141 = sphi 0, %s143
    %s144 = sphi 0, %s141
    %s145 = sphi 0, %s144
    %s161 = sphi 0, %s145
  $region4: #{fus_loss.3} parent=0 // loop_header_branch
    %14 = sbr.rel (%p12) target = $region8
  $region5: #{fus_loss.3} parent=0 // loop_body
    %s16 = ssub.s32 %s11, 1
    %s17 = ssub.s32 %s11, 2
    %s18 = sadd.s32 %s11, 1
    %s20 = sadd.s32 %s19, 1
    %p23 = scmp.eq.s32.totalorder %s11, 1
    %p24 = scmp.ne.s32.totalorder %s19, %s21
    %p25 = scmp.eq.s32.totalorder %s11, 0
    %p26 = por %p24, %p25
    %p27 = scmp.ne.s32.totalorder %s19, %s21
    %p28 = scmp.eq.s32.totalorder %s16, 1
    %p29 = por %p27, %p28
    %p30 = scmp.ne.s32.totalorder %s21, %s22
    %p31 = scmp.eq.s32.totalorder %s16, 0
    %p32 = por %p30, %p31
    %p33 = scmp.ne.s32.totalorder %s21, %s22
    %p34 = scmp.eq.s32.totalorder %s17, 1
    %p35 = por %p33, %p34
    %p37 = scmp.ne.s32.totalorder %s22, %s36
    %p38 = scmp.eq.s32.totalorder %s17, 0
    %p39 = por %p37, %p38
    %s41 = sadd.s32 %s40, 1
    %p44 = scmp.eq.s32.totalorder %s11, 1
    %p45 = scmp.ne.s32.totalorder %s40, %s42
    %p46 = scmp.eq.s32.totalorder %s11, 0
    %p47 = por %p45, %p46
    %p48 = scmp.ne.s32.totalorder %s40, %s42
    %p49 = scmp.eq.s32.totalorder %s16, 1
    %p50 = por %p48, %p49
    %p51 = scmp.ne.s32.totalorder %s42, %s43
    %p52 = scmp.eq.s32.totalorder %s16, 0
    %p53 = por %p51, %p52
    %p54 = scmp.ne.s32.totalorder %s42, %s43
    %p55 = scmp.eq.s32.totalorder %s17, 1
    %p56 = por %p54, %p55
    %p58 = scmp.ne.s32.totalorder %s43, %s57
    %p59 = scmp.eq.s32.totalorder %s17, 0
    %p60 = por %p58, %p59
    %s61 = ssub.s32 %s11, %s18
    %p62 = scmp.eq.s32.totalorder %s61, 0
    %s64 = sadd.s32 %s63, 1
    %s65 = scalar_select %p62, %s63, %s64
    %p68 = pneg %p62
    %p69 = scmp.eq.s32.totalorder %s11, 1
    %p70 = por %p68, %p69
    %p71 = scmp.ne.s32.totalorder %s63, %s66
    %p72 = scmp.eq.s32.totalorder %s11, 0
    %p73 = por %p71, %p72
    %p74 = scmp.ne.s32.totalorder %s63, %s66
    %p75 = scmp.eq.s32.totalorder %s16, 1
    %p76 = por %p74, %p75
    %p77 = scmp.ne.s32.totalorder %s66, %s67
    %p78 = scmp.eq.s32.totalorder %s16, 0
    %p79 = por %p77, %p78
    %p80 = scmp.ne.s32.totalorder %s66, %s67
    %p81 = scmp.eq.s32.totalorder %s17, 1
    %p82 = por %p80, %p81
    %p84 = scmp.ne.s32.totalorder %s67, %s83
    %p85 = scmp.eq.s32.totalorder %s17, 0
    %p86 = por %p84, %p85
    %s87 = ssub.s32 %s11, %s18
    %p88 = scmp.eq.s32.totalorder %s87, 0
    %s90 = sadd.s32 %s89, 1
    %s91 = scalar_select %p88, %s89, %s90
    %p94 = pneg %p88
    %p95 = scmp.eq.s32.totalorder %s11, 1
    %p96 = por %p94, %p95
    %p97 = scmp.ne.s32.totalorder %s89, %s92
    %p98 = scmp.eq.s32.totalorder %s11, 0
    %p99 = por %p97, %p98
    %p100 = scmp.ne.s32.totalorder %s89, %s92
    %p101 = scmp.eq.s32.totalorder %s16, 1
    %p102 = por %p100, %p101
    %p103 = scmp.ne.s32.totalorder %s92, %s93
    %p104 = scmp.eq.s32.totalorder %s16, 0
    %p105 = por %p103, %p104
    %p106 = scmp.ne.s32.totalorder %s92, %s93
    %p107 = scmp.eq.s32.totalorder %s17, 1
    %p108 = por %p106, %p107
    %p110 = scmp.ne.s32.totalorder %s93, %s109
    %p111 = scmp.eq.s32.totalorder %s17, 0
    %p112 = por %p110, %p111
    %s113 = ssub.s32 %s11, %s18
    %p114 = scmp.eq.s32.totalorder %s113, 0
    %s116 = sadd.s32 %s115, 1
    %s117 = scalar_select %p114, %s115, %s116
    %p120 = pneg %p114
    %p121 = scmp.eq.s32.totalorder %s11, 1
    %p122 = por %p120, %p121
    %p123 = scmp.ne.s32.totalorder %s115, %s118
    %p124 = scmp.eq.s32.totalorder %s11, 0
    %p125 = por %p123, %p124
    %p126 = scmp.ne.s32.totalorder %s115, %s118
    %p127 = scmp.eq.s32.totalorder %s16, 1
    %p128 = por %p126, %p127
    %p129 = scmp.ne.s32.totalorder %s118, %s119
    %p130 = scmp.eq.s32.totalorder %s16, 0
    %p131 = por %p129, %p130
    %p132 = scmp.ne.s32.totalorder %s118, %s119
    %p133 = scmp.eq.s32.totalorder %s17, 1
    %p134 = por %p132, %p133
    %p136 = scmp.ne.s32.totalorder %s119, %s135
    %p137 = scmp.eq.s32.totalorder %s17, 0
    %p138 = por %p136, %p137
    %s139 = ssub.s32 %s11, %s18
    %p140 = scmp.eq.s32.totalorder %s139, 0
    %s142 = sadd.s32 %s141, 1
    %s143 = scalar_select %p140, %s141, %s142
    %p146 = pneg %p140
    %p147 = scmp.eq.s32.totalorder %s11, 1
    %p148 = por %p146, %p147
    %p149 = scmp.ne.s32.totalorder %s141, %s144
    %p150 = scmp.eq.s32.totalorder %s11, 0
    %p151 = por %p149, %p150
    %p152 = scmp.ne.s32.totalorder %s141, %s144
    %p153 = scmp.eq.s32.totalorder %s16, 1
    %p154 = por %p152, %p153
    %p155 = scmp.ne.s32.totalorder %s144, %s145
    %p156 = scmp.eq.s32.totalorder %s16, 0
    %p157 = por %p155, %p156
    %p158 = scmp.ne.s32.totalorder %s144, %s145
    %p159 = scmp.eq.s32.totalorder %s17, 1
    %p160 = por %p158, %p159
    %p162 = scmp.ne.s32.totalorder %s145, %s161
    %p163 = scmp.eq.s32.totalorder %s17, 0
    %p164 = por %p162, %p163
    %p165 = scmp.le.s32.totalorder 1, %s11
    %p166 = scmp.lt.s32.totalorder %s11, 3
    %p167 = pnand %p165, %p166
    %p168 = pneg %p167
    // Predicated region
    $region9: #{fus_loss.3} parent=5 // pred_check
      _
    $region10: #{fus_loss.3} parent=5 // pred_check_branch
      %170 = sbr.rel (%p167) target = $region12
    $region11: #{fus_loss.3} parent=5 // pred_region
      %s171 = ssub.s32 %s11, 1
      // Predicated region
      $region13: #{fus_loss.3} parent=11 // pred_check
        %p172 = pneg %p32
      $region14: #{fus_loss.3} parent=11 // pred_check_branch
        %174 = sbr.rel (%p172) target = $region16
      $region15: #{fus_loss.3} parent=11 // pred_region
        _
      $region16: #{fus_loss.3} parent=11 // pred_fallthru
        _
      // Predicated region
      $region17: #{fus_loss.3} parent=11 // pred_check
        %p175 = pneg %p53
      $region18: #{fus_loss.3} parent=11 // pred_check_branch
        %177 = sbr.rel (%p175) target = $region20
      $region19: #{fus_loss.3} parent=11 // pred_region
        _
      $region20: #{fus_loss.3} parent=11 // pred_fallthru
        _
    $region12: #{fus_loss.3} parent=5 // pred_fallthru
      _
    %p178 = scmp.lt.s32.totalorder %s11, 2
    // Predicated region
    $region21: #{fus_loss.3} parent=5 // pred_check
      %p179 = pneg %p178
    $region22: #{fus_loss.3} parent=5 // pred_check_branch
      %181 = sbr.rel (%p179) target = $region24
    $region23: #{fus_loss.3} parent=5 // pred_region
      // Predicated region
      $region25: #{fus_loss.3} parent=23 // pred_check
        %p182 = pneg %p73
      $region26: #{fus_loss.3} parent=23 // pred_check_branch
        %184 = sbr.rel (%p182) target = $region28
      $region27: #{fus_loss.3} parent=23 // pred_region
        %s185 = smul.u32 4, %s11
        %p186 = scmp.lt.s32.totalorder %s185, 7
        %s187 = scalar_select %p186, %s185, 7
        %s188 = smul.addr %s187, 8
        %s189 = scalar_lea.vmem %s2, %s188
        %s190 = smul.u32 4, %s11
      $region28: #{fus_loss.3} parent=23 // pred_fallthru
        _
      // Predicated region
      $region29: #{fus_loss.3} parent=23 // pred_check
        %p191 = pneg %p99
      $region30: #{fus_loss.3} parent=23 // pred_check_branch
        %193 = sbr.rel (%p191) target = $region32
      $region31: #{fus_loss.3} parent=23 // pred_region
        %s194 = smul.u32 4, %s11
        %p195 = scmp.lt.s32.totalorder %s194, 7
        %s196 = scalar_select %p195, %s194, 7
        %s197 = smul.addr %s196, 8
        %s198 = scalar_lea.vmem %s3, %s197
        %s199 = smul.u32 4, %s11
      $region32: #{fus_loss.3} parent=23 // pred_fallthru
        _
      // Predicated region
      $region33: #{fus_loss.3} parent=23 // pred_check
        %p200 = pneg %p125
      $region34: #{fus_loss.3} parent=23 // pred_check_branch
        %202 = sbr.rel (%p200) target = $region36
      $region35: #{fus_loss.3} parent=23 // pred_region
        %s203 = smul.u32 4, %s11
        %p204 = scmp.lt.s32.totalorder %s203, 7
        %s205 = scalar_select %p204, %s203, 7
        %s206 = smul.addr %s205, 8
        %s207 = scalar_lea.vmem %s4, %s206
        %s208 = smul.u32 4, %s11
      $region36: #{fus_loss.3} parent=23 // pred_fallthru
        _
    $region24: #{fus_loss.3} parent=5 // pred_fallthru
      _
    %p209 = scmp.le.s32.totalorder 1, %s11
    %p210 = scmp.lt.s32.totalorder %s11, 3
    %p211 = pnand %p209, %p210
    %p212 = pneg %p211
    // Predicated region
    $region37: #{fus_loss.3} parent=5 // pred_check
      _
    $region38: #{fus_loss.3} parent=5 // pred_check_branch
      %214 = sbr.rel (%p211) target = $region40
    $region39: #{fus_loss.3} parent=5 // pred_region
      %s215 = ssub.s32 %s11, 1
      %p216 = pneg %p32
      %p217 = pneg %p29
      %p218 = pneg %p53
      %p219 = pneg %p50
      %s220 = smul.u32 4, %s16
      %p221 = scmp.lt.s32.totalorder %s220, 7
      %s222 = scalar_select %p221, %s220, 7
      %s223 = smul.addr %s222, 8
      %s224 = scalar_lea.vmem %s2, %s223
      %p225 = pneg %p79
      %p226 = pneg %p76
      %s227 = smul.u32 4, %s16
      %p228 = scmp.lt.s32.totalorder %s227, 7
      %s229 = scalar_select %p228, %s227, 7
      %s230 = smul.addr %s229, 8
      %s231 = scalar_lea.vmem %s3, %s230
      %p232 = pneg %p105
      %p233 = pneg %p102
      %s234 = smul.u32 4, %s16
      %p235 = scmp.lt.s32.totalorder %s234, 7
      %s236 = scalar_select %p235, %s234, 7
      %s237 = smul.addr %s236, 8
      %s238 = scalar_lea.vmem %s4, %s237
      %p239 = pneg %p131
      %p240 = pneg %p128
      %p241 = pneg %p157
      %p242 = pneg %p154
      %p243 = scmp.lt.s32.totalorder %s16, 1
      %s244 = scalar_select %p243, %s16, 1
      %s245 = smul.addr %s244, 8
      %s246 = scalar_lea.vmem %s5, %s245
      %s247 = smul.u32 4, %s16
      %p248 = scmp.lt.s32.totalorder %s247, 7
      %s249 = scalar_select %p248, %s247, 7
      %s250 = smul.addr %s249, 8
      %s251 = scalar_lea.vmem %s2, %s250
      %s252 = smul.u32 4, %s16
      %s253 = smul.u32 4, %s16
      %p254 = scmp.lt.s32.totalorder %s253, 7
      %s255 = scalar_select %p254, %s253, 7
      %s256 = smul.addr %s255, 8
      %s257 = scalar_lea.vmem %s3, %s256
      %s258 = smul.u32 4, %s16
      %s259 = smul.u32 4, %s16
      %p260 = scmp.lt.s32.totalorder %s259, 7
      %s261 = scalar_select %p260, %s259, 7
      %s262 = smul.addr %s261, 8
      %s263 = scalar_lea.vmem %s4, %s262
      %s264 = smul.u32 4, %s16
      %p265 = scmp.lt.s32.totalorder %s16, 1
      %s266 = scalar_select %p265, %s16, 1
      %s267 = smul.addr %s266, 8
      %s268 = scalar_lea.vmem %s5, %s267
      %v270 = vld [vmem:[%s0] sm:$0xff]
      %v271 = vld [vmem:[%s1] sm:$0xff]
      %v272 = vld [vmem:[%s251] sm:$0xff]
      %v273 = vld [vmem:[%s251 + $0x8] sm:$0xff]
      %v274 = vld [vmem:[%s251 + $0x10] sm:$0xff]
      %v275 = vld [vmem:[%s251 + $0x18] sm:$0xff]
      %v276 = vld [vmem:[%s257] sm:$0xff]
      %v277 = vld [vmem:[%s257 + $0x8] sm:$0xff]
      %v278 = vld [vmem:[%s257 + $0x10] sm:$0xff]
      %v279 = vld [vmem:[%s257 + $0x18] sm:$0xff]
      %v280 = vld [vmem:[%s263] sm:$0xff]
      %v281 = vld [vmem:[%s263 + $0x8] sm:$0xff]
      %v282 = vld [vmem:[%s263 + $0x10] sm:$0xff]
      %v283 = vld [vmem:[%s263 + $0x18] sm:$0xff]
      %v284 = vpack.c.bf16 %v271, %v271
      %v285 = vpack.c.bf16 %v270, %v270
      %v286 = vpack.c.bf16 %v273, %v272
      %v287 = vpack.c.bf16 %v275, %v274
      %vm288 = vcmask 64512
      %v290 = vsel %vm288, %v286, 0
      %v293 = vsel %vm288, %v287, 0
      %vm295 = vcmask 1043456
      %v297 = vsel %vm295, %v284, 0
      %299 = vmatprep.subr.bf16.mxu0 0
      %300 = vmatpush1.bf16.msra.mxu0 %v297
      %301 = vmatprep.subr.bf16.mxu0 0
      %302 = vmatpush1.bf16.msra.mxu0 0
      %303 = vmatprep.subr.bf16.mxu0 0
      %304 = vmatpush1.bf16.msra.mxu0 0
      %305 = vmatprep.subr.bf16.mxu0 0
      %306 = vmatpush1.bf16.msra.mxu0 0
      %307 = vmatprep.subr.bf16.mxu0 0
      %308 = vmatpush1.bf16.msra.mxu0 0
      %309 = vmatprep.subr.bf16.mxu0 0
      %310 = vmatpush1.bf16.msra.mxu0 0
      %311 = vmatprep.subr.bf16.mxu0 0
      %312 = vmatpush1.bf16.msra.mxu0 0
      %313 = vmatprep.subr.bf16.mxu0 0
      %314 = vmatpush1.bf16.msra.mxu0 0
      %315 = vmatprep.subr.bf16.mxu0 0
      %316 = vmatpush1.bf16.msra.mxu0 0
      %317 = vmatprep.subr.bf16.mxu0 0
      %318 = vmatpush1.bf16.msra.mxu0 0
      %319 = vmatprep.subr.bf16.mxu0 0
      %320 = vmatpush1.bf16.msra.mxu0 0
      %321 = vmatprep.subr.bf16.mxu0 0
      %322 = vmatpush1.bf16.msra.mxu0 0
      %323 = vmatprep.subr.bf16.mxu0 0
      %324 = vmatpush1.bf16.msra.mxu0 0
      %325 = vmatprep.subr.bf16.mxu0 0
      %326 = vmatpush1.bf16.msra.mxu0 0
      %327 = vmatprep.subr.bf16.mxu0 0
      %328 = vmatpush1.bf16.msra.mxu0 0
      %329 = vmatprep.subr.bf16.mxu0 0
      %330 = vmatpush1.bf16.msra.mxu0 0
      %331 = vmatprep.mubr.bf16.mxu0 0
      %332 = vmatmul.mubr.bf16.gmra.mrb[0].mxu0 %v290
      %v333 = vpop.f32.mrb[0].mxu0
      %v334 = vadd.f32 0.0, %v333
      %v335 = vpop.f32.mrb[0].mxu0
      %v336 = vpop.f32.mrb[0].mxu0
      %v337 = vadd.f32 0.0, %v336
      %v338 = vpop.f32.mrb[0].mxu0
      %339 = vmatprep.mubr.bf16.mxu0 0
      %340 = vmatmul.mubr.bf16.gmra.mrb[0].mxu0 %v293
      %v341 = vpop.f32.mrb[0].mxu0
      %v342 = vadd.f32 0.0, %v341
      %v343 = vpop.f32.mrb[0].mxu0
      %v344 = vpop.f32.mrb[0].mxu0
      %v345 = vadd.f32 0.0, %v344
      %v346 = vpop.f32.mrb[0].mxu0
      %347 = vdwg.mxu0
      %v348 = vpack.c.bf16 %v334, %v334
      %v349 = vpack.c.bf16 %v337, %v337
      %v350 = vpack.c.bf16 %v342, %v342
      %v351 = vpack.c.bf16 %v345, %v345
      %v353 = vsel %vm288, %v285, 0
      %v356 = vsel %vm295, %v348, 0
      %358 = vmatprep.subr.bf16.mxu0 0
      %359 = vmatpush1.bf16.msra.mxu0 %v356
      %360 = vmatprep.subr.bf16.mxu0 0
      %361 = vmatpush1.bf16.msra.mxu0 0
      %362 = vmatprep.subr.bf16.mxu0 0
      %363 = vmatpush1.bf16.msra.mxu0 0
      %364 = vmatprep.subr.bf16.mxu0 0
      %365 = vmatpush1.bf16.msra.mxu0 0
      %366 = vmatprep.subr.bf16.mxu0 0
      %367 = vmatpush1.bf16.msra.mxu0 0
      %368 = vmatprep.subr.bf16.mxu0 0
      %369 = vmatpush1.bf16.msra.mxu0 0
      %370 = vmatprep.subr.bf16.mxu0 0
      %371 = vmatpush1.bf16.msra.mxu0 0
      %372 = vmatprep.subr.bf16.mxu0 0
      %373 = vmatpush1.bf16.msra.mxu0 0
      %374 = vmatprep.subr.bf16.mxu0 0
      %375 = vmatpush1.bf16.msra.mxu0 0
      %376 = vmatprep.subr.bf16.mxu0 0
      %377 = vmatpush1.bf16.msra.mxu0 0
      %378 = vmatprep.subr.bf16.mxu0 0
      %379 = vmatpush1.bf16.msra.mxu0 0
      %380 = vmatprep.subr.bf16.mxu0 0
      %381 = vmatpush1.bf16.msra.mxu0 0
      %382 = vmatprep.subr.bf16.mxu0 0
      %383 = vmatpush1.bf16.msra.mxu0 0
      %384 = vmatprep.subr.bf16.mxu0 0
      %385 = vmatpush1.bf16.msra.mxu0 0
      %386 = vmatprep.subr.bf16.mxu0 0
      %387 = vmatpush1.bf16.msra.mxu0 0
      %388 = vmatprep.subr.bf16.mxu0 0
      %389 = vmatpush1.bf16.msra.mxu0 0
      %390 = vmatprep.mubr.bf16.mxu0 0
      %391 = vmatmul.mubr.bf16.gmra.mrb[0].mxu0 %v353
      %v392 = vpop.f32.mrb[0].mxu0
      %v393 = vadd.f32 0.0, %v392
      %v394 = vpop.f32.mrb[0].mxu0
      %v395 = vpop.f32.mrb[0].mxu0
      %v396 = vpop.f32.mrb[0].mxu0
      %397 = vdwg.mxu0
      %v399 = vsel %vm295, %v349, 0
      %401 = vmatprep.subr.bf16.mxu0 0
      %402 = vmatpush1.bf16.msra.mxu0 %v399
      %403 = vmatprep.subr.bf16.mxu0 0
      %404 = vmatpush1.bf16.msra.mxu0 0
      %405 = vmatprep.subr.bf16.mxu0 0
      %406 = vmatpush1.bf16.msra.mxu0 0
      %407 = vmatprep.subr.bf16.mxu0 0
      %408 = vmatpush1.bf16.msra.mxu0 0
      %409 = vmatprep.subr.bf16.mxu0 0
      %410 = vmatpush1.bf16.msra.mxu0 0
      %411 = vmatprep.subr.bf16.mxu0 0
      %412 = vmatpush1.bf16.msra.mxu0 0
      %413 = vmatprep.subr.bf16.mxu0 0
      %414 = vmatpush1.bf16.msra.mxu0 0
      %415 = vmatprep.subr.bf16.mxu0 0
      %416 = vmatpush1.bf16.msra.mxu0 0
      %417 = vmatprep.subr.bf16.mxu0 0
      %418 = vmatpush1.bf16.msra.mxu0 0
      %419 = vmatprep.subr.bf16.mxu0 0
      %420 = vmatpush1.bf16.msra.mxu0 0
      %421 = vmatprep.subr.bf16.mxu0 0
      %422 = vmatpush1.bf16.msra.mxu0 0
      %423 = vmatprep.subr.bf16.mxu0 0
      %424 = vmatpush1.bf16.msra.mxu0 0
      %425 = vmatprep.subr.bf16.mxu0 0
      %426 = vmatpush1.bf16.msra.mxu0 0
      %427 = vmatprep.subr.bf16.mxu0 0
      %428 = vmatpush1.bf16.msra.mxu0 0
      %429 = vmatprep.subr.bf16.mxu0 0
      %430 = vmatpush1.bf16.msra.mxu0 0
      %431 = vmatprep.subr.bf16.mxu0 0
      %432 = vmatpush1.bf16.msra.mxu0 0
      %433 = vmatprep.mubr.bf16.mxu0 0
      %434 = vmatmul.mubr.bf16.gmra.mrb[0].mxu0 %v353
      %v435 = vpop.f32.mrb[0].mxu0
      %v436 = vadd.f32 0.0, %v435
      %v437 = vpop.f32.mrb[0].mxu0
      %v438 = vpop.f32.mrb[0].mxu0
      %v439 = vpop.f32.mrb[0].mxu0
      %440 = vdwg.mxu0
      %v442 = vsel %vm295, %v350, 0
      %444 = vmatprep.subr.bf16.mxu0 0
      %445 = vmatpush1.bf16.msra.mxu0 %v442
      %446 = vmatprep.subr.bf16.mxu0 0
      %447 = vmatpush1.bf16.msra.mxu0 0
      %448 = vmatprep.subr.bf16.mxu0 0
      %449 = vmatpush1.bf16.msra.mxu0 0
      %450 = vmatprep.subr.bf16.mxu0 0
      %451 = vmatpush1.bf16.msra.mxu0 0
      %452 = vmatprep.subr.bf16.mxu0 0
      %453 = vmatpush1.bf16.msra.mxu0 0
      %454 = vmatprep.subr.bf16.mxu0 0
      %455 = vmatpush1.bf16.msra.mxu0 0
      %456 = vmatprep.subr.bf16.mxu0 0
      %457 = vmatpush1.bf16.msra.mxu0 0
      %458 = vmatprep.subr.bf16.mxu0 0
      %459 = vmatpush1.bf16.msra.mxu0 0
      %460 = vmatprep.subr.bf16.mxu0 0
      %461 = vmatpush1.bf16.msra.mxu0 0
      %462 = vmatprep.subr.bf16.mxu0 0
      %463 = vmatpush1.bf16.msra.mxu0 0
      %464 = vmatprep.subr.bf16.mxu0 0
      %465 = vmatpush1.bf16.msra.mxu0 0
      %466 = vmatprep.subr.bf16.mxu0 0
      %467 = vmatpush1.bf16.msra.mxu0 0
      %468 = vmatprep.subr.bf16.mxu0 0
      %469 = vmatpush1.bf16.msra.mxu0 0
      %470 = vmatprep.subr.bf16.mxu0 0
      %471 = vmatpush1.bf16.msra.mxu0 0
      %472 = vmatprep.subr.bf16.mxu0 0
      %473 = vmatpush1.bf16.msra.mxu0 0
      %474 = vmatprep.subr.bf16.mxu0 0
      %475 = vmatpush1.bf16.msra.mxu0 0
      %476 = vmatprep.mubr.bf16.mxu0 0
      %477 = vmatmul.mubr.bf16.gmra.mrb[0].mxu0 %v353
      %v478 = vpop.f32.mrb[0].mxu0
      %v479 = vadd.f32 0.0, %v478
      %v480 = vpop.f32.mrb[0].mxu0
      %v481 = vpop.f32.mrb[0].mxu0
      %v482 = vpop.f32.mrb[0].mxu0
      %483 = vdwg.mxu0
      %v485 = vsel %vm295, %v351, 0
      %487 = vmatprep.subr.bf16.mxu0 0
      %488 = vmatpush1.bf16.msra.mxu0 %v485
      %489 = vmatprep.subr.bf16.mxu0 0
      %490 = vmatpush1.bf16.msra.mxu0 0
      %491 = vmatprep.subr.bf16.mxu0 0
      %492 = vmatpush1.bf16.msra.mxu0 0
      %493 = vmatprep.subr.bf16.mxu0 0
      %494 = vmatpush1.bf16.msra.mxu0 0
      %495 = vmatprep.subr.bf16.mxu0 0
      %496 = vmatpush1.bf16.msra.mxu0 0
      %497 = vmatprep.subr.bf16.mxu0 0
      %498 = vmatpush1.bf16.msra.mxu0 0
      %499 = vmatprep.subr.bf16.mxu0 0
      %500 = vmatpush1.bf16.msra.mxu0 0
      %501 = vmatprep.subr.bf16.mxu0 0
      %502 = vmatpush1.bf16.msra.mxu0 0
      %503 = vmatprep.subr.bf16.mxu0 0
      %504 = vmatpush1.bf16.msra.mxu0 0
      %505 = vmatprep.subr.bf16.mxu0 0
      %506 = vmatpush1.bf16.msra.mxu0 0
      %507 = vmatprep.subr.bf16.mxu0 0
      %508 = vmatpush1.bf16.msra.mxu0 0
      %509 = vmatprep.subr.bf16.mxu0 0
      %510 = vmatpush1.bf16.msra.mxu0 0
      %511 = vmatprep.subr.bf16.mxu0 0
      %512 = vmatpush1.bf16.msra.mxu0 0
      %513 = vmatprep.subr.bf16.mxu0 0
      %514 = vmatpush1.bf16.msra.mxu0 0
      %515 = vmatprep.subr.bf16.mxu0 0
      %516 = vmatpush1.bf16.msra.mxu0 0
      %517 = vmatprep.subr.bf16.mxu0 0
      %518 = vmatpush1.bf16.msra.mxu0 0
      %519 = vmatprep.mubr.bf16.mxu0 0
      %520 = vmatmul.mubr.bf16.gmra.mrb[0].mxu0 %v353
      %v521 = vpop.f32.mrb[0].mxu0
      %v522 = vadd.f32 0.0, %v521
      %v523 = vpop.f32.mrb[0].mxu0
      %v524 = vpop.f32.mrb[0].mxu0
      %v525 = vpop.f32.mrb[0].mxu0
      %526 = vdwg.mxu0
      %v527 = vpack.c.bf16 %v277, %v276
      %v528 = vpack.c.bf16 %v279, %v278
      %v530 = vsel %vm288, %v527, 0
      %v533 = vsel %vm288, %v528, 0
      %535 = vmatprep.subr.bf16.mxu0 0
      %536 = vmatpush1.bf16.msra.mxu0 %v297
      %537 = vmatprep.subr.bf16.mxu0 0
      %538 = vmatpush1.bf16.msra.mxu0 0
      %539 = vmatprep.subr.bf16.mxu0 0
      %540 = vmatpush1.bf16.msra.mxu0 0
      %541 = vmatprep.subr.bf16.mxu0 0
      %542 = vmatpush1.bf16.msra.mxu0 0
      %543 = vmatprep.subr.bf16.mxu0 0
      %544 = vmatpush1.bf16.msra.mxu0 0
      %545 = vmatprep.subr.bf16.mxu0 0
      %546 = vmatpush1.bf16.msra.mxu0 0
      %547 = vmatprep.subr.bf16.mxu0 0
      %548 = vmatpush1.bf16.msra.mxu0 0
      %549 = vmatprep.subr.bf16.mxu0 0
      %550 = vmatpush1.bf16.msra.mxu0 0
      %551 = vmatprep.subr.bf16.mxu0 0
      %552 = vmatpush1.bf16.msra.mxu0 0
      %553 = vmatprep.subr.bf16.mxu0 0
      %554 = vmatpush1.bf16.msra.mxu0 0
      %555 = vmatprep.subr.bf16.mxu0 0
      %556 = vmatpush1.bf16.msra.mxu0 0
      %557 = vmatprep.subr.bf16.mxu0 0
      %558 = vmatpush1.bf16.msra.mxu0 0
      %559 = vmatprep.subr.bf16.mxu0 0
      %560 = vmatpush1.bf16.msra.mxu0 0
      %561 = vmatprep.subr.bf16.mxu0 0
      %562 = vmatpush1.bf16.msra.mxu0 0
      %563 = vmatprep.subr.bf16.mxu0 0
      %564 = vmatpush1.bf16.msra.mxu0 0
      %565 = vmatprep.subr.bf16.mxu0 0
      %566 = vmatpush1.bf16.msra.mxu0 0
      %567 = vmatprep.mubr.bf16.mxu0 0
      %568 = vmatmul.mubr.bf16.gmra.mrb[0].mxu0 %v530
      %v569 = vpop.f32.mrb[0].mxu0
      %v570 = vadd.f32 0.0, %v569
      %v571 = vpop.f32.mrb[0].mxu0
      %v572 = vpop.f32.mrb[0].mxu0
      %v573 = vadd.f32 0.0, %v572
      %v574 = vpop.f32.mrb[0].mxu0
      %575 = vmatprep.mubr.bf16.mxu0 0
      %576 = vmatmul.mubr.bf16.gmra.mrb[0].mxu0 %v533
      %v577 = vpop.f32.mrb[0].mxu0
      %v578 = vadd.f32 0.0, %v577
      %v579 = vpop.f32.mrb[0].mxu0
      %v580 = vpop.f32.mrb[0].mxu0
      %v581 = vadd.f32 0.0, %v580
      %v582 = vpop.f32.mrb[0].mxu0
      %583 = vdwg.mxu0
      %v584 = vpack.c.bf16 %v570, %v570
      %v585 = vpack.c.bf16 %v573, %v573
      %v586 = vpack.c.bf16 %v578, %v578
      %v587 = vpack.c.bf16 %v581, %v581
      %v589 = vsel %vm295, %v584, 0
      %591 = vmatprep.subr.bf16.mxu0 0
      %592 = vmatpush1.bf16.msra.mxu0 %v589
      %593 = vmatprep.subr.bf16.mxu0 0
      %594 = vmatpush1.bf16.msra.mxu0 0
      %595 = vmatprep.subr.bf16.mxu0 0
      %596 = vmatpush1.bf16.msra.mxu0 0
      %597 = vmatprep.subr.bf16.mxu0 0
      %598 = vmatpush1.bf16.msra.mxu0 0
      %599 = vmatprep.subr.bf16.mxu0 0
      %600 = vmatpush1.bf16.msra.mxu0 0
      %601 = vmatprep.subr.bf16.mxu0 0
      %602 = vmatpush1.bf16.msra.mxu0 0
      %603 = vmatprep.subr.bf16.mxu0 0
      %604 = vmatpush1.bf16.msra.mxu0 0
      %605 = vmatprep.subr.bf16.mxu0 0
      %606 = vmatpush1.bf16.msra.mxu0 0
      %607 = vmatprep.subr.bf16.mxu0 0
      %608 = vmatpush1.bf16.msra.mxu0 0
      %609 = vmatprep.subr.bf16.mxu0 0
      %610 = vmatpush1.bf16.msra.mxu0 0
      %611 = vmatprep.subr.bf16.mxu0 0
      %612 = vmatpush1.bf16.msra.mxu0 0
      %613 = vmatprep.subr.bf16.mxu0 0
      %614 = vmatpush1.bf16.msra.mxu0 0
      %615 = vmatprep.subr.bf16.mxu0 0
      %616 = vmatpush1.bf16.msra.mxu0 0
      %617 = vmatprep.subr.bf16.mxu0 0
      %618 = vmatpush1.bf16.msra.mxu0 0
      %619 = vmatprep.subr.bf16.mxu0 0
      %620 = vmatpush1.bf16.msra.mxu0 0
      %621 = vmatprep.subr.bf16.mxu0 0
      %622 = vmatpush1.bf16.msra.mxu0 0
      %623 = vmatprep.mubr.bf16.mxu0 0
      %624 = vmatmul.mubr.bf16.gmra.mrb[0].mxu0 %v353
      %v625 = vpop.f32.mrb[0].mxu0
      %v626 = vadd.f32 0.0, %v625
      %v627 = vpop.f32.mrb[0].mxu0
      %v628 = vpop.f32.mrb[0].mxu0
      %v629 = vpop.f32.mrb[0].mxu0
      %630 = vdwg.mxu0
      %v632 = vsel %vm295, %v585, 0
      %634 = vmatprep.subr.bf16.mxu0 0
      %635 = vmatpush1.bf16.msra.mxu0 %v632
      %636 = vmatprep.subr.bf16.mxu0 0
      %637 = vmatpush1.bf16.msra.mxu0 0
      %638 = vmatprep.subr.bf16.mxu0 0
      %639 = vmatpush1.bf16.msra.mxu0 0
      %640 = vmatprep.subr.bf16.mxu0 0
      %641 = vmatpush1.bf16.msra.mxu0 0
      %642 = vmatprep.subr.bf16.mxu0 0
      %643 = vmatpush1.bf16.msra.mxu0 0
      %644 = vmatprep.subr.bf16.mxu0 0
      %645 = vmatpush1.bf16.msra.mxu0 0
      %646 = vmatprep.subr.bf16.mxu0 0
      %647 = vmatpush1.bf16.msra.mxu0 0
      %648 = vmatprep.subr.bf16.mxu0 0
      %649 = vmatpush1.bf16.msra.mxu0 0
      %650 = vmatprep.subr.bf16.mxu0 0
      %651 = vmatpush1.bf16.msra.mxu0 0
      %652 = vmatprep.subr.bf16.mxu0 0
      %653 = vmatpush1.bf16.msra.mxu0 0
      %654 = vmatprep.subr.bf16.mxu0 0
      %655 = vmatpush1.bf16.msra.mxu0 0
      %656 = vmatprep.subr.bf16.mxu0 0
      %657 = vmatpush1.bf16.msra.mxu0 0
      %658 = vmatprep.subr.bf16.mxu0 0
      %659 = vmatpush1.bf16.msra.mxu0 0
      %660 = vmatprep.subr.bf16.mxu0 0
      %661 = vmatpush1.bf16.msra.mxu0 0
      %662 = vmatprep.subr.bf16.mxu0 0
      %663 = vmatpush1.bf16.msra.mxu0 0
      %664 = vmatprep.subr.bf16.mxu0 0
      %665 = vmatpush1.bf16.msra.mxu0 0
      %666 = vmatprep.mubr.bf16.mxu0 0
      %667 = vmatmul.mubr.bf16.gmra.mrb[0].mxu0 %v353
      %v668 = vpop.f32.mrb[0].mxu0
      %v669 = vadd.f32 0.0, %v668
      %v670 = vpop.f32.mrb[0].mxu0
      %v671 = vpop.f32.mrb[0].mxu0
      %v672 = vpop.f32.mrb[0].mxu0
      %673 = vdwg.mxu0
      %v675 = vsel %vm295, %v586, 0
      %677 = vmatprep.subr.bf16.mxu0 0
      %678 = vmatpush1.bf16.msra.mxu0 %v675
      %679 = vmatprep.subr.bf16.mxu0 0
      %680 = vmatpush1.bf16.msra.mxu0 0
      %681 = vmatprep.subr.bf16.mxu0 0
      %682 = vmatpush1.bf16.msra.mxu0 0
      %683 = vmatprep.subr.bf16.mxu0 0
      %684 = vmatpush1.bf16.msra.mxu0 0
      %685 = vmatprep.subr.bf16.mxu0 0
      %686 = vmatpush1.bf16.msra.mxu0 0
      %687 = vmatprep.subr.bf16.mxu0 0
      %688 = vmatpush1.bf16.msra.mxu0 0
      %689 = vmatprep.subr.bf16.mxu0 0
      %690 = vmatpush1.bf16.msra.mxu0 0
      %691 = vmatprep.subr.bf16.mxu0 0
      %692 = vmatpush1.bf16.msra.mxu0 0
      %693 = vmatprep.subr.bf16.mxu0 0
      %694 = vmatpush1.bf16.msra.mxu0 0
      %695 = vmatprep.subr.bf16.mxu0 0
      %696 = vmatpush1.bf16.msra.mxu0 0
      %697 = vmatprep.subr.bf16.mxu0 0
      %698 = vmatpush1.bf16.msra.mxu0 0
      %699 = vmatprep.subr.bf16.mxu0 0
      %700 = vmatpush1.bf16.msra.mxu0 0
      %701 = vmatprep.subr.bf16.mxu0 0
      %702 = vmatpush1.bf16.msra.mxu0 0
      %703 = vmatprep.subr.bf16.mxu0 0
      %704 = vmatpush1.bf16.msra.mxu0 0
      %705 = vmatprep.subr.bf16.mxu0 0
      %706 = vmatpush1.bf16.msra.mxu0 0
      %707 = vmatprep.subr.bf16.mxu0 0
      %708 = vmatpush1.bf16.msra.mxu0 0
      %709 = vmatprep.mubr.bf16.mxu0 0
      %710 = vmatmul.mubr.bf16.gmra.mrb[0].mxu0 %v353
      %v711 = vpop.f32.mrb[0].mxu0
      %v712 = vadd.f32 0.0, %v711
      %v713 = vpop.f32.mrb[0].mxu0
      %v714 = vpop.f32.mrb[0].mxu0
      %v715 = vpop.f32.mrb[0].mxu0
      %716 = vdwg.mxu0
      %v718 = vsel %vm295, %v587, 0
      %720 = vmatprep.subr.bf16.mxu0 0
      %721 = vmatpush1.bf16.msra.mxu0 %v718
      %722 = vmatprep.subr.bf16.mxu0 0
      %723 = vmatpush1.bf16.msra.mxu0 0
      %724 = vmatprep.subr.bf16.mxu0 0
      %725 = vmatpush1.bf16.msra.mxu0 0
      %726 = vmatprep.subr.bf16.mxu0 0
      %727 = vmatpush1.bf16.msra.mxu0 0
      %728 = vmatprep.subr.bf16.mxu0 0
      %729 = vmatpush1.bf16.msra.mxu0 0
      %730 = vmatprep.subr.bf16.mxu0 0
      %731 = vmatpush1.bf16.msra.mxu0 0
      %732 = vmatprep.subr.bf16.mxu0 0
      %733 = vmatpush1.bf16.msra.mxu0 0
      %734 = vmatprep.subr.bf16.mxu0 0
      %735 = vmatpush1.bf16.msra.mxu0 0
      %736 = vmatprep.subr.bf16.mxu0 0
      %737 = vmatpush1.bf16.msra.mxu0 0
      %738 = vmatprep.subr.bf16.mxu0 0
      %739 = vmatpush1.bf16.msra.mxu0 0
      %740 = vmatprep.subr.bf16.mxu0 0
      %741 = vmatpush1.bf16.msra.mxu0 0
      %742 = vmatprep.subr.bf16.mxu0 0
      %743 = vmatpush1.bf16.msra.mxu0 0
      %744 = vmatprep.subr.bf16.mxu0 0
      %745 = vmatpush1.bf16.msra.mxu0 0
      %746 = vmatprep.subr.bf16.mxu0 0
      %747 = vmatpush1.bf16.msra.mxu0 0
      %748 = vmatprep.subr.bf16.mxu0 0
      %749 = vmatpush1.bf16.msra.mxu0 0
      %750 = vmatprep.subr.bf16.mxu0 0
      %751 = vmatpush1.bf16.msra.mxu0 0
      %752 = vmatprep.mubr.bf16.mxu0 0
      %753 = vmatmul.mubr.bf16.gmra.mrb[0].mxu0 %v353
      %v754 = vpop.f32.mrb[0].mxu0
      %v755 = vadd.f32 0.0, %v754
      %v756 = vpop.f32.mrb[0].mxu0
      %v757 = vpop.f32.mrb[0].mxu0
      %v758 = vpop.f32.mrb[0].mxu0
      %759 = vdwg.mxu0
      %v760 = vpack.c.bf16 %v281, %v280
      %v761 = vpack.c.bf16 %v283, %v282
      %v763 = vsel %vm288, %v760, 0
      %v766 = vsel %vm288, %v761, 0
      %768 = vmatprep.subr.bf16.mxu0 0
      %769 = vmatpush1.bf16.msra.mxu0 %v297
      %770 = vmatprep.subr.bf16.mxu0 0
      %771 = vmatpush1.bf16.msra.mxu0 0
      %772 = vmatprep.subr.bf16.mxu0 0
      %773 = vmatpush1.bf16.msra.mxu0 0
      %774 = vmatprep.subr.bf16.mxu0 0
      %775 = vmatpush1.bf16.msra.mxu0 0
      %776 = vmatprep.subr.bf16.mxu0 0
      %777 = vmatpush1.bf16.msra.mxu0 0
      %778 = vmatprep.subr.bf16.mxu0 0
      %779 = vmatpush1.bf16.msra.mxu0 0
      %780 = vmatprep.subr.bf16.mxu0 0
      %781 = vmatpush1.bf16.msra.mxu0 0
      %782 = vmatprep.subr.bf16.mxu0 0
      %783 = vmatpush1.bf16.msra.mxu0 0
      %784 = vmatprep.subr.bf16.mxu0 0
      %785 = vmatpush1.bf16.msra.mxu0 0
      %786 = vmatprep.subr.bf16.mxu0 0
      %787 = vmatpush1.bf16.msra.mxu0 0
      %788 = vmatprep.subr.bf16.mxu0 0
      %789 = vmatpush1.bf16.msra.mxu0 0
      %790 = vmatprep.subr.bf16.mxu0 0
      %791 = vmatpush1.bf16.msra.mxu0 0
      %792 = vmatprep.subr.bf16.mxu0 0
      %793 = vmatpush1.bf16.msra.mxu0 0
      %794 = vmatprep.subr.bf16.mxu0 0
      %795 = vmatpush1.bf16.msra.mxu0 0
      %796 = vmatprep.subr.bf16.mxu0 0
      %797 = vmatpush1.bf16.msra.mxu0 0
      %798 = vmatprep.subr.bf16.mxu0 0
      %799 = vmatpush1.bf16.msra.mxu0 0
      %800 = vmatprep.mubr.bf16.mxu0 0
      %801 = vmatmul.mubr.bf16.gmra.mrb[0].mxu0 %v763
      %v802 = vpop.f32.mrb[0].mxu0
      %v803 = vadd.f32 0.0, %v802
      %v804 = vpop.f32.mrb[0].mxu0
      %v805 = vpop.f32.mrb[0].mxu0
      %v806 = vadd.f32 0.0, %v805
      %v807 = vpop.f32.mrb[0].mxu0
      %808 = vmatprep.mubr.bf16.mxu0 0
      %809 = vmatmul.mubr.bf16.gmra.mrb[0].mxu0 %v766
      %v810 = vpop.f32.mrb[0].mxu0
      %v811 = vadd.f32 0.0, %v810
      %v812 = vpop.f32.mrb[0].mxu0
      %v813 = vpop.f32.mrb[0].mxu0
      %v814 = vadd.f32 0.0, %v813
      %v815 = vpop.f32.mrb[0].mxu0
      %816 = vdwg.mxu0
      %v817 = vpack.c.bf16 %v803, %v803
      %v818 = vpack.c.bf16 %v806, %v806
      %v819 = vpack.c.bf16 %v811, %v811
      %v820 = vpack.c.bf16 %v814, %v814
      %v822 = vsel %vm295, %v817, 0
      %824 = vmatprep.subr.bf16.mxu0 0
      %825 = vmatpush1.bf16.msra.mxu0 %v822
      %826 = vmatprep.subr.bf16.mxu0 0
      %827 = vmatpush1.bf16.msra.mxu0 0
      %828 = vmatprep.subr.bf16.mxu0 0
      %829 = vmatpush1.bf16.msra.mxu0 0
      %830 = vmatprep.subr.bf16.mxu0 0
      %831 = vmatpush1.bf16.msra.mxu0 0
      %832 = vmatprep.subr.bf16.mxu0 0
      %833 = vmatpush1.bf16.msra.mxu0 0
      %834 = vmatprep.subr.bf16.mxu0 0
      %835 = vmatpush1.bf16.msra.mxu0 0
      %836 = vmatprep.subr.bf16.mxu0 0
      %837 = vmatpush1.bf16.msra.mxu0 0
      %838 = vmatprep.subr.bf16.mxu0 0
      %839 = vmatpush1.bf16.msra.mxu0 0
      %840 = vmatprep.subr.bf16.mxu0 0
      %841 = vmatpush1.bf16.msra.mxu0 0
      %842 = vmatprep.subr.bf16.mxu0 0
      %843 = vmatpush1.bf16.msra.mxu0 0
      %844 = vmatprep.subr.bf16.mxu0 0
      %845 = vmatpush1.bf16.msra.mxu0 0
      %846 = vmatprep.subr.bf16.mxu0 0
      %847 = vmatpush1.bf16.msra.mxu0 0
      %848 = vmatprep.subr.bf16.mxu0 0
      %849 = vmatpush1.bf16.msra.mxu0 0
      %850 = vmatprep.subr.bf16.mxu0 0
      %851 = vmatpush1.bf16.msra.mxu0 0
      %852 = vmatprep.subr.bf16.mxu0 0
      %853 = vmatpush1.bf16.msra.mxu0 0
      %854 = vmatprep.subr.bf16.mxu0 0
      %855 = vmatpush1.bf16.msra.mxu0 0
      %856 = vmatprep.mubr.bf16.mxu0 0
      %857 = vmatmul.mubr.bf16.gmra.mrb[0].mxu0 %v353
      %v858 = vpop.f32.mrb[0].mxu0
      %v859 = vadd.f32 0.0, %v858
      %v860 = vpop.f32.mrb[0].mxu0
      %v861 = vpop.f32.mrb[0].mxu0
      %v862 = vpop.f32.mrb[0].mxu0
      %863 = vdwg.mxu0
      %v865 = vsel %vm295, %v818, 0
      %867 = vmatprep.subr.bf16.mxu0 0
      %868 = vmatpush1.bf16.msra.mxu0 %v865
      %869 = vmatprep.subr.bf16.mxu0 0
      %870 = vmatpush1.bf16.msra.mxu0 0
      %871 = vmatprep.subr.bf16.mxu0 0
      %872 = vmatpush1.bf16.msra.mxu0 0
      %873 = vmatprep.subr.bf16.mxu0 0
      %874 = vmatpush1.bf16.msra.mxu0 0
      %875 = vmatprep.subr.bf16.mxu0 0
      %876 = vmatpush1.bf16.msra.mxu0 0
      %877 = vmatprep.subr.bf16.mxu0 0
      %878 = vmatpush1.bf16.msra.mxu0 0
      %879 = vmatprep.subr.bf16.mxu0 0
      %880 = vmatpush1.bf16.msra.mxu0 0
      %881 = vmatprep.subr.bf16.mxu0 0
      %882 = vmatpush1.bf16.msra.mxu0 0
      %883 = vmatprep.subr.bf16.mxu0 0
      %884 = vmatpush1.bf16.msra.mxu0 0
      %885 = vmatprep.subr.bf16.mxu0 0
      %886 = vmatpush1.bf16.msra.mxu0 0
      %887 = vmatprep.subr.bf16.mxu0 0
      %888 = vmatpush1.bf16.msra.mxu0 0
      %889 = vmatprep.subr.bf16.mxu0 0
      %890 = vmatpush1.bf16.msra.mxu0 0
      %891 = vmatprep.subr.bf16.mxu0 0
      %892 = vmatpush1.bf16.msra.mxu0 0
      %893 = vmatprep.subr.bf16.mxu0 0
      %894 = vmatpush1.bf16.msra.mxu0 0
      %895 = vmatprep.subr.bf16.mxu0 0
      %896 = vmatpush1.bf16.msra.mxu0 0
      %897 = vmatprep.subr.bf16.mxu0 0
      %898 = vmatpush1.bf16.msra.mxu0 0
      %899 = vmatprep.mubr.bf16.mxu0 0
      %900 = vmatmul.mubr.bf16.gmra.mrb[0].mxu0 %v353
      %v901 = vpop.f32.mrb[0].mxu0
      %v902 = vadd.f32 0.0, %v901
      %v903 = vpop.f32.mrb[0].mxu0
      %v904 = vpop.f32.mrb[0].mxu0
      %v905 = vpop.f32.mrb[0].mxu0
      %906 = vdwg.mxu0
      %v908 = vsel %vm295, %v819, 0
      %910 = vmatprep.subr.bf16.mxu0 0
      %911 = vmatpush1.bf16.msra.mxu0 %v908
      %912 = vmatprep.subr.bf16.mxu0 0
      %913 = vmatpush1.bf16.msra.mxu0 0
      %914 = vmatprep.subr.bf16.mxu0 0
      %915 = vmatpush1.bf16.msra.mxu0 0
      %916 = vmatprep.subr.bf16.mxu0 0
      %917 = vmatpush1.bf16.msra.mxu0 0
      %918 = vmatprep.subr.bf16.mxu0 0
      %919 = vmatpush1.bf16.msra.mxu0 0
      %920 = vmatprep.subr.bf16.mxu0 0
      %921 = vmatpush1.bf16.msra.mxu0 0
      %922 = vmatprep.subr.bf16.mxu0 0
      %923 = vmatpush1.bf16.msra.mxu0 0
      %924 = vmatprep.subr.bf16.mxu0 0
      %925 = vmatpush1.bf16.msra.mxu0 0
      %926 = vmatprep.subr.bf16.mxu0 0
      %927 = vmatpush1.bf16.msra.mxu0 0
      %928 = vmatprep.subr.bf16.mxu0 0
      %929 = vmatpush1.bf16.msra.mxu0 0
      %930 = vmatprep.subr.bf16.mxu0 0
      %931 = vmatpush1.bf16.msra.mxu0 0
      %932 = vmatprep.subr.bf16.mxu0 0
      %933 = vmatpush1.bf16.msra.mxu0 0
      %934 = vmatprep.subr.bf16.mxu0 0
      %935 = vmatpush1.bf16.msra.mxu0 0
      %936 = vmatprep.subr.bf16.mxu0 0
      %937 = vmatpush1.bf16.msra.mxu0 0
      %938 = vmatprep.subr.bf16.mxu0 0
      %939 = vmatpush1.bf16.msra.mxu0 0
      %940 = vmatprep.subr.bf16.mxu0 0
      %941 = vmatpush1.bf16.msra.mxu0 0
      %942 = vmatprep.mubr.bf16.mxu0 0
      %943 = vmatmul.mubr.bf16.gmra.mrb[0].mxu0 %v353
      %v944 = vpop.f32.mrb[0].mxu0
      %v945 = vadd.f32 0.0, %v944
      %v946 = vpop.f32.mrb[0].mxu0
      %v947 = vpop.f32.mrb[0].mxu0
      %v948 = vpop.f32.mrb[0].mxu0
      %949 = vdwg.mxu0
      %v951 = vsel %vm295, %v820, 0
      %953 = vmatprep.subr.bf16.mxu0 0
      %954 = vmatpush1.bf16.msra.mxu0 %v951
      %955 = vmatprep.subr.bf16.mxu0 0
      %956 = vmatpush1.bf16.msra.mxu0 0
      %957 = vmatprep.subr.bf16.mxu0 0
      %958 = vmatpush1.bf16.msra.mxu0 0
      %959 = vmatprep.subr.bf16.mxu0 0
      %960 = vmatpush1.bf16.msra.mxu0 0
      %961 = vmatprep.subr.bf16.mxu0 0
      %962 = vmatpush1.bf16.msra.mxu0 0
      %963 = vmatprep.subr.bf16.mxu0 0
      %964 = vmatpush1.bf16.msra.mxu0 0
      %965 = vmatprep.subr.bf16.mxu0 0
      %966 = vmatpush1.bf16.msra.mxu0 0
      %967 = vmatprep.subr.bf16.mxu0 0
      %968 = vmatpush1.bf16.msra.mxu0 0
      %969 = vmatprep.subr.bf16.mxu0 0
      %970 = vmatpush1.bf16.msra.mxu0 0
      %971 = vmatprep.subr.bf16.mxu0 0
      %972 = vmatpush1.bf16.msra.mxu0 0
      %973 = vmatprep.subr.bf16.mxu0 0
      %974 = vmatpush1.bf16.msra.mxu0 0
      %975 = vmatprep.subr.bf16.mxu0 0
      %976 = vmatpush1.bf16.msra.mxu0 0
      %977 = vmatprep.subr.bf16.mxu0 0
      %978 = vmatpush1.bf16.msra.mxu0 0
      %979 = vmatprep.subr.bf16.mxu0 0
      %980 = vmatpush1.bf16.msra.mxu0 0
      %981 = vmatprep.subr.bf16.mxu0 0
      %982 = vmatpush1.bf16.msra.mxu0 0
      %983 = vmatprep.subr.bf16.mxu0 0
      %984 = vmatpush1.bf16.msra.mxu0 0
      %985 = vmatprep.mubr.bf16.mxu0 0
      %986 = vmatmul.mubr.bf16.gmra.mrb[0].mxu0 %v353
      %v987 = vpop.f32.mrb[0].mxu0
      %v988 = vadd.f32 0.0, %v987
      %v989 = vpop.f32.mrb[0].mxu0
      %v990 = vpop.f32.mrb[0].mxu0
      %v991 = vpop.f32.mrb[0].mxu0
      %992 = vdwg.mxu0
      %v993 = vmul.f32 %v272, %v272
      %v994 = vmul.f32 %v273, %v273
      %v995 = vmul.f32 %v274, %v274
      %v996 = vmul.f32 %v275, %v275
      %v998 = vsel %vm288, %v993, 0
      %v1001 = vsel %vm288, %v994, 0
      %v1004 = vsel %vm288, %v995, 0
      %v1007 = vsel %vm288, %v996, 0
      %1009 = vmatprep.subr.mxu0 0.0
      %1010 = vmatpush1.msra.mxu0 %v271
      %1011 = vmatprep.subr.mxu0 0.0
      %1012 = vmatpush1.msra.mxu0 0.0
      %1013 = vmatprep.subr.mxu0 0.0
      %1014 = vmatpush1.msra.mxu0 0.0
      %1015 = vmatprep.subr.mxu0 0.0
      %1016 = vmatpush1.msra.mxu0 0.0
      %1017 = vmatprep.subr.mxu0 0.0
      %1018 = vmatpush1.msra.mxu0 0.0
      %1019 = vmatprep.subr.mxu0 0.0
      %1020 = vmatpush1.msra.mxu0 0.0
      %1021 = vmatprep.subr.mxu0 0.0
      %1022 = vmatpush1.msra.mxu0 0.0
      %1023 = vmatprep.subr.mxu0 0.0
      %1024 = vmatpush1.msra.mxu0 0.0
      %1025 = vmatprep.subr.mxu0 0.0
      %1026 = vmatpush1.msra.mxu0 0.0
      %1027 = vmatprep.subr.mxu0 0.0
      %1028 = vmatpush1.msra.mxu0 0.0
      %1029 = vmatprep.subr.mxu0 0.0
      %1030 = vmatpush1.msra.mxu0 0.0
      %1031 = vmatprep.subr.mxu0 0.0
      %1032 = vmatpush1.msra.mxu0 0.0
      %1033 = vmatprep.subr.mxu0 0.0
      %1034 = vmatpush1.msra.mxu0 0.0
      %1035 = vmatprep.subr.mxu0 0.0
      %1036 = vmatpush1.msra.mxu0 0.0
      %1037 = vmatprep.subr.mxu0 0.0
      %1038 = vmatpush1.msra.mxu0 0.0
      %1039 = vmatprep.subr.mxu0 0.0
      %1040 = vmatpush1.msra.mxu0 0.0
      %1041 = vmatprep.subr.mxu0 0.0
      %1042 = vmatpush1.msra.mxu0 0.0
      %1043 = vmatprep.subr.mxu0 0.0
      %1044 = vmatpush1.msra.mxu0 0.0
      %1045 = vmatprep.subr.mxu0 0.0
      %1046 = vmatpush1.msra.mxu0 0.0
      %1047 = vmatprep.subr.mxu0 0.0
      %1048 = vmatpush1.msra.mxu0 0.0
      %1049 = vmatprep.subr.mxu0 0.0
      %1050 = vmatpush1.msra.mxu0 0.0
      %1051 = vmatprep.subr.mxu0 0.0
      %1052 = vmatpush1.msra.mxu0 0.0
      %1053 = vmatprep.subr.mxu0 0.0
      %1054 = vmatpush1.msra.mxu0 0.0
      %1055 = vmatprep.subr.mxu0 0.0
      %1056 = vmatpush1.msra.mxu0 0.0
      %1057 = vmatprep.subr.mxu0 0.0
      %1058 = vmatpush1.msra.mxu0 0.0
      %1059 = vmatprep.subr.mxu0 0.0
      %1060 = vmatpush1.msra.mxu0 0.0
      %1061 = vmatprep.subr.mxu0 0.0
      %1062 = vmatpush1.msra.mxu0 0.0
      %1063 = vmatprep.subr.mxu0 0.0
      %1064 = vmatpush1.msra.mxu0 0.0
      %1065 = vmatprep.subr.mxu0 0.0
      %1066 = vmatpush1.msra.mxu0 0.0
      %1067 = vmatprep.subr.mxu0 0.0
      %1068 = vmatpush1.msra.mxu0 0.0
      %1069 = vmatprep.subr.mxu0 0.0
      %1070 = vmatpush1.msra.mxu0 0.0
      %1071 = vmatprep.subr.mxu0 0.0
      %1072 = vmatpush1.msra.mxu0 0.0
      %1073 = vmatprep.mubr.f32.mxu0 0.0
      %1074 = vmatmul.mubr.f32.gmra.mrb[0].mxu0 %v998
      %v1075 = vpop.f32.mrb[0].mxu0
      %v1076 = vadd.f32 0.0, %v1075
      %v1077 = vpop.f32.mrb[0].mxu0
      %1078 = vmatprep.mubr.f32.mxu0 0.0
      %1079 = vmatmul.mubr.f32.gmra.mrb[0].mxu0 %v1001
      %v1080 = vpop.f32.mrb[0].mxu0
      %v1081 = vadd.f32 0.0, %v1080
      %v1082 = vpop.f32.mrb[0].mxu0
      %1083 = vmatprep.mubr.f32.mxu0 0.0
      %1084 = vmatmul.mubr.f32.gmra.mrb[0].mxu0 %v1004
      %v1085 = vpop.f32.mrb[0].mxu0
      %v1086 = vadd.f32 0.0, %v1085
      %v1087 = vpop.f32.mrb[0].mxu0
      %1088 = vmatprep.mubr.f32.mxu0 0.0
      %1089 = vmatmul.mubr.f32.gmra.mrb[0].mxu0 %v1007
      %v1090 = vpop.f32.mrb[0].mxu0
      %v1091 = vadd.f32 0.0, %v1090
      %v1092 = vpop.f32.mrb[0].mxu0
      %1093 = vdwg.mxu0
      %v1095 = vsel %vm288, %v270, 0
      %1097 = vmatprep.subr.mxu0 0.0
      %1098 = vmatpush1.msra.mxu0 %v1076
      %1099 = vmatprep.subr.mxu0 0.0
      %1100 = vmatpush1.msra.mxu0 0.0
      %1101 = vmatprep.subr.mxu0 0.0
      %1102 = vmatpush1.msra.mxu0 0.0
      %1103 = vmatprep.subr.mxu0 0.0
      %1104 = vmatpush1.msra.mxu0 0.0
      %1105 = vmatprep.subr.mxu0 0.0
      %1106 = vmatpush1.msra.mxu0 0.0
      %1107 = vmatprep.subr.mxu0 0.0
      %1108 = vmatpush1.msra.mxu0 0.0
      %1109 = vmatprep.subr.mxu0 0.0
      %1110 = vmatpush1.msra.mxu0 0.0
      %1111 = vmatprep.subr.mxu0 0.0
      %1112 = vmatpush1.msra.mxu0 0.0
      %1113 = vmatprep.subr.mxu0 0.0
      %1114 = vmatpush1.msra.mxu0 0.0
      %1115 = vmatprep.subr.mxu0 0.0
      %1116 = vmatpush1.msra.mxu0 0.0
      %1117 = vmatprep.subr.mxu0 0.0
      %1118 = vmatpush1.msra.mxu0 0.0
      %1119 = vmatprep.subr.mxu0 0.0
      %1120 = vmatpush1.msra.mxu0 0.0
      %1121 = vmatprep.subr.mxu0 0.0
      %1122 = vmatpush1.msra.mxu0 0.0
      %1123 = vmatprep.subr.mxu0 0.0
      %1124 = vmatpush1.msra.mxu0 0.0
      %1125 = vmatprep.subr.mxu0 0.0
      %1126 = vmatpush1.msra.mxu0 0.0
      %1127 = vmatprep.subr.mxu0 0.0
      %1128 = vmatpush1.msra.mxu0 0.0
      %1129 = vmatprep.subr.mxu0 0.0
      %1130 = vmatpush1.msra.mxu0 0.0
      %1131 = vmatprep.subr.mxu0 0.0
      %1132 = vmatpush1.msra.mxu0 0.0
      %1133 = vmatprep.subr.mxu0 0.0
      %1134 = vmatpush1.msra.mxu0 0.0
      %1135 = vmatprep.subr.mxu0 0.0
      %1136 = vmatpush1.msra.mxu0 0.0
      %1137 = vmatprep.subr.mxu0 0.0
      %1138 = vmatpush1.msra.mxu0 0.0
      %1139 = vmatprep.subr.mxu0 0.0
      %1140 = vmatpush1.msra.mxu0 0.0
      %1141 = vmatprep.subr.mxu0 0.0
      %1142 = vmatpush1.msra.mxu0 0.0
      %1143 = vmatprep.subr.mxu0 0.0
      %1144 = vmatpush1.msra.mxu0 0.0
      %1145 = vmatprep.subr.mxu0 0.0
      %1146 = vmatpush1.msra.mxu0 0.0
      %1147 = vmatprep.subr.mxu0 0.0
      %1148 = vmatpush1.msra.mxu0 0.0
      %1149 = vmatprep.subr.mxu0 0.0
      %1150 = vmatpush1.msra.mxu0 0.0
      %1151 = vmatprep.subr.mxu0 0.0
      %1152 = vmatpush1.msra.mxu0 0.0
      %1153 = vmatprep.subr.mxu0 0.0
      %1154 = vmatpush1.msra.mxu0 0.0
      %1155 = vmatprep.subr.mxu0 0.0
      %1156 = vmatpush1.msra.mxu0 0.0
      %1157 = vmatprep.subr.mxu0 0.0
      %1158 = vmatpush1.msra.mxu0 0.0
      %1159 = vmatprep.subr.mxu0 0.0
      %1160 = vmatpush1.msra.mxu0 0.0
      %1161 = vmatprep.mubr.f32.mxu0 0.0
      %1162 = vmatmul.mubr.f32.gmra.mrb[0].mxu0 %v1095
      %v1163 = vpop.f32.mrb[0].mxu0
      %v1164 = vadd.f32 0.0, %v1163
      %v1165 = vpop.f32.mrb[0].mxu0
      %1166 = vdwg.mxu0
      %1167 = vmatprep.subr.mxu0 0.0
      %1168 = vmatpush1.msra.mxu0 %v1081
      %1169 = vmatprep.subr.mxu0 0.0
      %1170 = vmatpush1.msra.mxu0 0.0
      %1171 = vmatprep.subr.mxu0 0.0
      %1172 = vmatpush1.msra.mxu0 0.0
      %1173 = vmatprep.subr.mxu0 0.0
      %1174 = vmatpush1.msra.mxu0 0.0
      %1175 = vmatprep.subr.mxu0 0.0
      %1176 = vmatpush1.msra.mxu0 0.0
      %1177 = vmatprep.subr.mxu0 0.0
      %1178 = vmatpush1.msra.mxu0 0.0
      %1179 = vmatprep.subr.mxu0 0.0
      %1180 = vmatpush1.msra.mxu0 0.0
      %1181 = vmatprep.subr.mxu0 0.0
      %1182 = vmatpush1.msra.mxu0 0.0
      %1183 = vmatprep.subr.mxu0 0.0
      %1184 = vmatpush1.msra.mxu0 0.0
      %1185 = vmatprep.subr.mxu0 0.0
      %1186 = vmatpush1.msra.mxu0 0.0
      %1187 = vmatprep.subr.mxu0 0.0
      %1188 = vmatpush1.msra.mxu0 0.0
      %1189 = vmatprep.subr.mxu0 0.0
      %1190 = vmatpush1.msra.mxu0 0.0
      %1191 = vmatprep.subr.mxu0 0.0
      %1192 = vmatpush1.msra.mxu0 0.0
      %1193 = vmatprep.subr.mxu0 0.0
      %1194 = vmatpush1.msra.mxu0 0.0
      %1195 = vmatprep.subr.mxu0 0.0
      %1196 = vmatpush1.msra.mxu0 0.0
      %1197 = vmatprep.subr.mxu0 0.0
      %1198 = vmatpush1.msra.mxu0 0.0
      %1199 = vmatprep.subr.mxu0 0.0
      %1200 = vmatpush1.msra.mxu0 0.0
      %1201 = vmatprep.subr.mxu0 0.0
      %1202 = vmatpush1.msra.mxu0 0.0
      %1203 = vmatprep.subr.mxu0 0.0
      %1204 = vmatpush1.msra.mxu0 0.0
      %1205 = vmatprep.subr.mxu0 0.0
      %1206 = vmatpush1.msra.mxu0 0.0
      %1207 = vmatprep.subr.mxu0 0.0
      %1208 = vmatpush1.msra.mxu0 0.0
      %1209 = vmatprep.subr.mxu0 0.0
      %1210 = vmatpush1.msra.mxu0 0.0
      %1211 = vmatprep.subr.mxu0 0.0
      %1212 = vmatpush1.msra.mxu0 0.0
      %1213 = vmatprep.subr.mxu0 0.0
      %1214 = vmatpush1.msra.mxu0 0.0
      %1215 = vmatprep.subr.mxu0 0.0
      %1216 = vmatpush1.msra.mxu0 0.0
      %1217 = vmatprep.subr.mxu0 0.0
      %1218 = vmatpush1.msra.mxu0 0.0
      %1219 = vmatprep.subr.mxu0 0.0
      %1220 = vmatpush1.msra.mxu0 0.0
      %1221 = vmatprep.subr.mxu0 0.0
      %1222 = vmatpush1.msra.mxu0 0.0
      %1223 = vmatprep.subr.mxu0 0.0
      %1224 = vmatpush1.msra.mxu0 0.0
      %1225 = vmatprep.subr.mxu0 0.0
      %1226 = vmatpush1.msra.mxu0 0.0
      %1227 = vmatprep.subr.mxu0 0.0
      %1228 = vmatpush1.msra.mxu0 0.0
      %1229 = vmatprep.subr.mxu0 0.0
      %1230 = vmatpush1.msra.mxu0 0.0
      %1231 = vmatprep.mubr.f32.mxu0 0.0
      %1232 = vmatmul.mubr.f32.gmra.mrb[0].mxu0 %v1095
      %v1233 = vpop.f32.mrb[0].mxu0
      %v1234 = vadd.f32 0.0, %v1233
      %v1235 = vpop.f32.mrb[0].mxu0
      %1236 = vdwg.mxu0
      %1237 = vmatprep.subr.mxu0 0.0
      %1238 = vmatpush1.msra.mxu0 %v1086
      %1239 = vmatprep.subr.mxu0 0.0
      %1240 = vmatpush1.msra.mxu0 0.0
      %1241 = vmatprep.subr.mxu0 0.0
      %1242 = vmatpush1.msra.mxu0 0.0
      %1243 = vmatprep.subr.mxu0 0.0
      %1244 = vmatpush1.msra.mxu0 0.0
      %1245 = vmatprep.subr.mxu0 0.0
      %1246 = vmatpush1.msra.mxu0 0.0
      %1247 = vmatprep.subr.mxu0 0.0
      %1248 = vmatpush1.msra.mxu0 0.0
      %1249 = vmatprep.subr.mxu0 0.0
      %1250 = vmatpush1.msra.mxu0 0.0
      %1251 = vmatprep.subr.mxu0 0.0
      %1252 = vmatpush1.msra.mxu0 0.0
      %1253 = vmatprep.subr.mxu0 0.0
      %1254 = vmatpush1.msra.mxu0 0.0
      %1255 = vmatprep.subr.mxu0 0.0
      %1256 = vmatpush1.msra.mxu0 0.0
      %1257 = vmatprep.subr.mxu0 0.0
      %1258 = vmatpush1.msra.mxu0 0.0
      %1259 = vmatprep.subr.mxu0 0.0
      %1260 = vmatpush1.msra.mxu0 0.0
      %1261 = vmatprep.subr.mxu0 0.0
      %1262 = vmatpush1.msra.mxu0 0.0
      %1263 = vmatprep.subr.mxu0 0.0
      %1264 = vmatpush1.msra.mxu0 0.0
      %1265 = vmatprep.subr.mxu0 0.0
      %1266 = vmatpush1.msra.mxu0 0.0
      %1267 = vmatprep.subr.mxu0 0.0
      %1268 = vmatpush1.msra.mxu0 0.0
      %1269 = vmatprep.subr.mxu0 0.0
      %1270 = vmatpush1.msra.mxu0 0.0
      %1271 = vmatprep.subr.mxu0 0.0
      %1272 = vmatpush1.msra.mxu0 0.0
      %1273 = vmatprep.subr.mxu0 0.0
      %1274 = vmatpush1.msra.mxu0 0.0
      %1275 = vmatprep.subr.mxu0 0.0
      %1276 = vmatpush1.msra.mxu0 0.0
      %1277 = vmatprep.subr.mxu0 0.0
      %1278 = vmatpush1.msra.mxu0 0.0
      %1279 = vmatprep.subr.mxu0 0.0
      %1280 = vmatpush1.msra.mxu0 0.0
      %1281 = vmatprep.subr.mxu0 0.0
      %1282 = vmatpush1.msra.mxu0 0.0
      %1283 = vmatprep.subr.mxu0 0.0
      %1284 = vmatpush1.msra.mxu0 0.0
      %1285 = vmatprep.subr.mxu0 0.0
      %1286 = vmatpush1.msra.mxu0 0.0
      %1287 = vmatprep.subr.mxu0 0.0
      %1288 = vmatpush1.msra.mxu0 0.0
      %1289 = vmatprep.subr.mxu0 0.0
      %1290 = vmatpush1.msra.mxu0 0.0
      %1291 = vmatprep.subr.mxu0 0.0
      %1292 = vmatpush1.msra.mxu0 0.0
      %1293 = vmatprep.subr.mxu0 0.0
      %1294 = vmatpush1.msra.mxu0 0.0
      %1295 = vmatprep.subr.mxu0 0.0
      %1296 = vmatpush1.msra.mxu0 0.0
      %1297 = vmatprep.subr.mxu0 0.0
      %1298 = vmatpush1.msra.mxu0 0.0
      %1299 = vmatprep.subr.mxu0 0.0
      %1300 = vmatpush1.msra.mxu0 0.0
      %1301 = vmatprep.mubr.f32.mxu0 0.0
      %1302 = vmatmul.mubr.f32.gmra.mrb[0].mxu0 %v1095
      %v1303 = vpop.f32.mrb[0].mxu0
      %v1304 = vadd.f32 0.0, %v1303
      %v1305 = vpop.f32.mrb[0].mxu0
      %1306 = vdwg.mxu0
      %1307 = vmatprep.subr.mxu0 0.0
      %1308 = vmatpush1.msra.mxu0 %v1091
      %1309 = vmatprep.subr.mxu0 0.0
      %1310 = vmatpush1.msra.mxu0 0.0
      %1311 = vmatprep.subr.mxu0 0.0
      %1312 = vmatpush1.msra.mxu0 0.0
      %1313 = vmatprep.subr.mxu0 0.0
      %1314 = vmatpush1.msra.mxu0 0.0
      %1315 = vmatprep.subr.mxu0 0.0
      %1316 = vmatpush1.msra.mxu0 0.0
      %1317 = vmatprep.subr.mxu0 0.0
      %1318 = vmatpush1.msra.mxu0 0.0
      %1319 = vmatprep.subr.mxu0 0.0
      %1320 = vmatpush1.msra.mxu0 0.0
      %1321 = vmatprep.subr.mxu0 0.0
      %1322 = vmatpush1.msra.mxu0 0.0
      %1323 = vmatprep.subr.mxu0 0.0
      %1324 = vmatpush1.msra.mxu0 0.0
      %1325 = vmatprep.subr.mxu0 0.0
      %1326 = vmatpush1.msra.mxu0 0.0
      %1327 = vmatprep.subr.mxu0 0.0
      %1328 = vmatpush1.msra.mxu0 0.0
      %1329 = vmatprep.subr.mxu0 0.0
      %1330 = vmatpush1.msra.mxu0 0.0
      %1331 = vmatprep.subr.mxu0 0.0
      %1332 = vmatpush1.msra.mxu0 0.0
      %1333 = vmatprep.subr.mxu0 0.0
      %1334 = vmatpush1.msra.mxu0 0.0
      %1335 = vmatprep.subr.mxu0 0.0
      %1336 = vmatpush1.msra.mxu0 0.0
      %1337 = vmatprep.subr.mxu0 0.0
      %1338 = vmatpush1.msra.mxu0 0.0
      %1339 = vmatprep.subr.mxu0 0.0
      %1340 = vmatpush1.msra.mxu0 0.0
      %1341 = vmatprep.subr.mxu0 0.0
      %1342 = vmatpush1.msra.mxu0 0.0
      %1343 = vmatprep.subr.mxu0 0.0
      %1344 = vmatpush1.msra.mxu0 0.0
      %1345 = vmatprep.subr.mxu0 0.0
      %1346 = vmatpush1.msra.mxu0 0.0
      %1347 = vmatprep.subr.mxu0 0.0
      %1348 = vmatpush1.msra.mxu0 0.0
      %1349 = vmatprep.subr.mxu0 0.0
      %1350 = vmatpush1.msra.mxu0 0.0
      %1351 = vmatprep.subr.mxu0 0.0
      %1352 = vmatpush1.msra.mxu0 0.0
      %1353 = vmatprep.subr.mxu0 0.0
      %1354 = vmatpush1.msra.mxu0 0.0
      %1355 = vmatprep.subr.mxu0 0.0
      %1356 = vmatpush1.msra.mxu0 0.0
      %1357 = vmatprep.subr.mxu0 0.0
      %1358 = vmatpush1.msra.mxu0 0.0
      %1359 = vmatprep.subr.mxu0 0.0
      %1360 = vmatpush1.msra.mxu0 0.0
      %1361 = vmatprep.subr.mxu0 0.0
      %1362 = vmatpush1.msra.mxu0 0.0
      %1363 = vmatprep.subr.mxu0 0.0
      %1364 = vmatpush1.msra.mxu0 0.0
      %1365 = vmatprep.subr.mxu0 0.0
      %1366 = vmatpush1.msra.mxu0 0.0
      %1367 = vmatprep.subr.mxu0 0.0
      %1368 = vmatpush1.msra.mxu0 0.0
      %1369 = vmatprep.subr.mxu0 0.0
      %1370 = vmatpush1.msra.mxu0 0.0
      %1371 = vmatprep.mubr.f32.mxu0 0.0
      %1372 = vmatmul.mubr.f32.gmra.mrb[0].mxu0 %v1095
      %v1373 = vpop.f32.mrb[0].mxu0
      %v1374 = vadd.f32 0.0, %v1373
      %v1375 = vpop.f32.mrb[0].mxu0
      %1376 = vdwg.mxu0
      %v1377 = vmul.f32 %v276, %v276
      %v1378 = vmul.f32 %v277, %v277
      %v1379 = vmul.f32 %v278, %v278
      %v1380 = vmul.f32 %v279, %v279
      %v1382 = vsel %vm288, %v1377, 0
      %v1385 = vsel %vm288, %v1378, 0
      %v1388 = vsel %vm288, %v1379, 0
      %v1391 = vsel %vm288, %v1380, 0
      %1393 = vmatprep.subr.mxu0 0.0
      %1394 = vmatpush1.msra.mxu0 %v271
      %1395 = vmatprep.subr.mxu0 0.0
      %1396 = vmatpush1.msra.mxu0 0.0
      %1397 = vmatprep.subr.mxu0 0.0
      %1398 = vmatpush1.msra.mxu0 0.0
      %1399 = vmatprep.subr.mxu0 0.0
      %1400 = vmatpush1.msra.mxu0 0.0
      %1401 = vmatprep.subr.mxu0 0.0
      %1402 = vmatpush1.msra.mxu0 0.0
      %1403 = vmatprep.subr.mxu0 0.0
      %1404 = vmatpush1.msra.mxu0 0.0
      %1405 = vmatprep.subr.mxu0 0.0
      %1406 = vmatpush1.msra.mxu0 0.0
      %1407 = vmatprep.subr.mxu0 0.0
      %1408 = vmatpush1.msra.mxu0 0.0
      %1409 = vmatprep.subr.mxu0 0.0
      %1410 = vmatpush1.msra.mxu0 0.0
      %1411 = vmatprep.subr.mxu0 0.0
      %1412 = vmatpush1.msra.mxu0 0.0
      %1413 = vmatprep.subr.mxu0 0.0
      %1414 = vmatpush1.msra.mxu0 0.0
      %1415 = vmatprep.subr.mxu0 0.0
      %1416 = vmatpush1.msra.mxu0 0.0
      %1417 = vmatprep.subr.mxu0 0.0
      %1418 = vmatpush1.msra.mxu0 0.0
      %1419 = vmatprep.subr.mxu0 0.0
      %1420 = vmatpush1.msra.mxu0 0.0
      %1421 = vmatprep.subr.mxu0 0.0
      %1422 = vmatpush1.msra.mxu0 0.0
      %1423 = vmatprep.subr.mxu0 0.0
      %1424 = vmatpush1.msra.mxu0 0.0
      %1425 = vmatprep.subr.mxu0 0.0
      %1426 = vmatpush1.msra.mxu0 0.0
      %1427 = vmatprep.subr.mxu0 0.0
      %1428 = vmatpush1.msra.mxu0 0.0
      %1429 = vmatprep.subr.mxu0 0.0
      %1430 = vmatpush1.msra.mxu0 0.0
      %1431 = vmatprep.subr.mxu0 0.0
      %1432 = vmatpush1.msra.mxu0 0.0
      %1433 = vmatprep.subr.mxu0 0.0
      %1434 = vmatpush1.msra.mxu0 0.0
      %1435 = vmatprep.subr.mxu0 0.0
      %1436 = vmatpush1.msra.mxu0 0.0
      %1437 = vmatprep.subr.mxu0 0.0
      %1438 = vmatpush1.msra.mxu0 0.0
      %1439 = vmatprep.subr.mxu0 0.0
      %1440 = vmatpush1.msra.mxu0 0.0
      %1441 = vmatprep.subr.mxu0 0.0
      %1442 = vmatpush1.msra.mxu0 0.0
      %1443 = vmatprep.subr.mxu0 0.0
      %1444 = vmatpush1.msra.mxu0 0.0
      %1445 = vmatprep.subr.mxu0 0.0
      %1446 = vmatpush1.msra.mxu0 0.0
      %1447 = vmatprep.subr.mxu0 0.0
      %1448 = vmatpush1.msra.mxu0 0.0
      %1449 = vmatprep.subr.mxu0 0.0
      %1450 = vmatpush1.msra.mxu0 0.0
      %1451 = vmatprep.subr.mxu0 0.0
      %1452 = vmatpush1.msra.mxu0 0.0
      %1453 = vmatprep.subr.mxu0 0.0
      %1454 = vmatpush1.msra.mxu0 0.0
      %1455 = vmatprep.subr.mxu0 0.0
      %1456 = vmatpush1.msra.mxu0 0.0
      %1457 = vmatprep.mubr.f32.mxu0 0.0
      %1458 = vmatmul.mubr.f32.gmra.mrb[0].mxu0 %v1382
      %v1459 = vpop.f32.mrb[0].mxu0
      %v1460 = vadd.f32 0.0, %v1459
      %v1461 = vpop.f32.mrb[0].mxu0
      %1462 = vmatprep.mubr.f32.mxu0 0.0
      %1463 = vmatmul.mubr.f32.gmra.mrb[0].mxu0 %v1385
      %v1464 = vpop.f32.mrb[0].mxu0
      %v1465 = vadd.f32 0.0, %v1464
      %v1466 = vpop.f32.mrb[0].mxu0
      %1467 = vmatprep.mubr.f32.mxu0 0.0
      %1468 = vmatmul.mubr.f32.gmra.mrb[0].mxu0 %v1388
      %v1469 = vpop.f32.mrb[0].mxu0
      %v1470 = vadd.f32 0.0, %v1469
      %v1471 = vpop.f32.mrb[0].mxu0
      %1472 = vmatprep.mubr.f32.mxu0 0.0
      %1473 = vmatmul.mubr.f32.gmra.mrb[0].mxu0 %v1391
      %v1474 = vpop.f32.mrb[0].mxu0
      %v1475 = vadd.f32 0.0, %v1474
      %v1476 = vpop.f32.mrb[0].mxu0
      %1477 = vdwg.mxu0
      %1478 = vmatprep.subr.mxu0 0.0
      %1479 = vmatpush1.msra.mxu0 %v1460
      %1480 = vmatprep.subr.mxu0 0.0
      %1481 = vmatpush1.msra.mxu0 0.0
      %1482 = vmatprep.subr.mxu0 0.0
      %1483 = vmatpush1.msra.mxu0 0.0
      %1484 = vmatprep.subr.mxu0 0.0
      %1485 = vmatpush1.msra.mxu0 0.0
      %1486 = vmatprep.subr.mxu0 0.0
      %1487 = vmatpush1.msra.mxu0 0.0
      %1488 = vmatprep.subr.mxu0 0.0
      %1489 = vmatpush1.msra.mxu0 0.0
      %1490 = vmatprep.subr.mxu0 0.0
      %1491 = vmatpush1.msra.mxu0 0.0
      %1492 = vmatprep.subr.mxu0 0.0
      %1493 = vmatpush1.msra.mxu0 0.0
      %1494 = vmatprep.subr.mxu0 0.0
      %1495 = vmatpush1.msra.mxu0 0.0
      %1496 = vmatprep.subr.mxu0 0.0
      %1497 = vmatpush1.msra.mxu0 0.0
      %1498 = vmatprep.subr.mxu0 0.0
      %1499 = vmatpush1.msra.mxu0 0.0
      %1500 = vmatprep.subr.mxu0 0.0
      %1501 = vmatpush1.msra.mxu0 0.0
      %1502 = vmatprep.subr.mxu0 0.0
      %1503 = vmatpush1.msra.mxu0 0.0
      %1504 = vmatprep.subr.mxu0 0.0
      %1505 = vmatpush1.msra.mxu0 0.0
      %1506 = vmatprep.subr.mxu0 0.0
      %1507 = vmatpush1.msra.mxu0 0.0
      %1508 = vmatprep.subr.mxu0 0.0
      %1509 = vmatpush1.msra.mxu0 0.0
      %1510 = vmatprep.subr.mxu0 0.0
      %1511 = vmatpush1.msra.mxu0 0.0
      %1512 = vmatprep.subr.mxu0 0.0
      %1513 = vmatpush1.msra.mxu0 0.0
      %1514 = vmatprep.subr.mxu0 0.0
      %1515 = vmatpush1.msra.mxu0 0.0
      %1516 = vmatprep.subr.mxu0 0.0
      %1517 = vmatpush1.msra.mxu0 0.0
      %1518 = vmatprep.subr.mxu0 0.0
      %1519 = vmatpush1.msra.mxu0 0.0
      %1520 = vmatprep.subr.mxu0 0.0
      %1521 = vmatpush1.msra.mxu0 0.0
      %1522 = vmatprep.subr.mxu0 0.0
      %1523 = vmatpush1.msra.mxu0 0.0
      %1524 = vmatprep.subr.mxu0 0.0
      %1525 = vmatpush1.msra.mxu0 0.0
      %1526 = vmatprep.subr.mxu0 0.0
      %1527 = vmatpush1.msra.mxu0 0.0
      %1528 = vmatprep.subr.mxu0 0.0
      %1529 = vmatpush1.msra.mxu0 0.0
      %1530 = vmatprep.subr.mxu0 0.0
      %1531 = vmatpush1.msra.mxu0 0.0
      %1532 = vmatprep.subr.mxu0 0.0
      %1533 = vmatpush1.msra.mxu0 0.0
      %1534 = vmatprep.subr.mxu0 0.0
      %1535 = vmatpush1.msra.mxu0 0.0
      %1536 = vmatprep.subr.mxu0 0.0
      %1537 = vmatpush1.msra.mxu0 0.0
      %1538 = vmatprep.subr.mxu0 0.0
      %1539 = vmatpush1.msra.mxu0 0.0
      %1540 = vmatprep.subr.mxu0 0.0
      %1541 = vmatpush1.msra.mxu0 0.0
      %1542 = vmatprep.mubr.f32.mxu0 0.0
      %1543 = vmatmul.mubr.f32.gmra.mrb[0].mxu0 %v1095
      %v1544 = vpop.f32.mrb[0].mxu0
      %v1545 = vadd.f32 0.0, %v1544
      %v1546 = vpop.f32.mrb[0].mxu0
      %1547 = vdwg.mxu0
      %1548 = vmatprep.subr.mxu0 0.0
      %1549 = vmatpush1.msra.mxu0 %v1465
      %1550 = vmatprep.subr.mxu0 0.0
      %1551 = vmatpush1.msra.mxu0 0.0
      %1552 = vmatprep.subr.mxu0 0.0
      %1553 = vmatpush1.msra.mxu0 0.0
      %1554 = vmatprep.subr.mxu0 0.0
      %1555 = vmatpush1.msra.mxu0 0.0
      %1556 = vmatprep.subr.mxu0 0.0
      %1557 = vmatpush1.msra.mxu0 0.0
      %1558 = vmatprep.subr.mxu0 0.0
      %1559 = vmatpush1.msra.mxu0 0.0
      %1560 = vmatprep.subr.mxu0 0.0
      %1561 = vmatpush1.msra.mxu0 0.0
      %1562 = vmatprep.subr.mxu0 0.0
      %1563 = vmatpush1.msra.mxu0 0.0
      %1564 = vmatprep.subr.mxu0 0.0
      %1565 = vmatpush1.msra.mxu0 0.0
      %1566 = vmatprep.subr.mxu0 0.0
      %1567 = vmatpush1.msra.mxu0 0.0
      %1568 = vmatprep.subr.mxu0 0.0
      %1569 = vmatpush1.msra.mxu0 0.0
      %1570 = vmatprep.subr.mxu0 0.0
      %1571 = vmatpush1.msra.mxu0 0.0
      %1572 = vmatprep.subr.mxu0 0.0
      %1573 = vmatpush1.msra.mxu0 0.0
      %1574 = vmatprep.subr.mxu0 0.0
      %1575 = vmatpush1.msra.mxu0 0.0
      %1576 = vmatprep.subr.mxu0 0.0
      %1577 = vmatpush1.msra.mxu0 0.0
      %1578 = vmatprep.subr.mxu0 0.0
      %1579 = vmatpush1.msra.mxu0 0.0
      %1580 = vmatprep.subr.mxu0 0.0
      %1581 = vmatpush1.msra.mxu0 0.0
      %1582 = vmatprep.subr.mxu0 0.0
      %1583 = vmatpush1.msra.mxu0 0.0
      %1584 = vmatprep.subr.mxu0 0.0
      %1585 = vmatpush1.msra.mxu0 0.0
      %1586 = vmatprep.subr.mxu0 0.0
      %1587 = vmatpush1.msra.mxu0 0.0
      %1588 = vmatprep.subr.mxu0 0.0
      %1589 = vmatpush1.msra.mxu0 0.0
      %1590 = vmatprep.subr.mxu0 0.0
      %1591 = vmatpush1.msra.mxu0 0.0
      %1592 = vmatprep.subr.mxu0 0.0
      %1593 = vmatpush1.msra.mxu0 0.0
      %1594 = vmatprep.subr.mxu0 0.0
      %1595 = vmatpush1.msra.mxu0 0.0
      %1596 = vmatprep.subr.mxu0 0.0
      %1597 = vmatpush1.msra.mxu0 0.0
      %1598 = vmatprep.subr.mxu0 0.0
      %1599 = vmatpush1.msra.mxu0 0.0
      %1600 = vmatprep.subr.mxu0 0.0
      %1601 = vmatpush1.msra.mxu0 0.0
      %1602 = vmatprep.subr.mxu0 0.0
      %1603 = vmatpush1.msra.mxu0 0.0
      %1604 = vmatprep.subr.mxu0 0.0
      %1605 = vmatpush1.msra.mxu0 0.0
      %1606 = vmatprep.subr.mxu0 0.0
      %1607 = vmatpush1.msra.mxu0 0.0
      %1608 = vmatprep.subr.mxu0 0.0
      %1609 = vmatpush1.msra.mxu0 0.0
      %1610 = vmatprep.subr.mxu0 0.0
      %1611 = vmatpush1.msra.mxu0 0.0
      %1612 = vmatprep.mubr.f32.mxu0 0.0
      %1613 = vmatmul.mubr.f32.gmra.mrb[0].mxu0 %v1095
      %v1614 = vpop.f32.mrb[0].mxu0
      %v1615 = vadd.f32 0.0, %v1614
      %v1616 = vpop.f32.mrb[0].mxu0
      %1617 = vdwg.mxu0
      %1618 = vmatprep.subr.mxu0 0.0
      %1619 = vmatpush1.msra.mxu0 %v1470
      %1620 = vmatprep.subr.mxu0 0.0
      %1621 = vmatpush1.msra.mxu0 0.0
      %1622 = vmatprep.subr.mxu0 0.0
      %1623 = vmatpush1.msra.mxu0 0.0
      %1624 = vmatprep.subr.mxu0 0.0
      %1625 = vmatpush1.msra.mxu0 0.0
      %1626 = vmatprep.subr.mxu0 0.0
      %1627 = vmatpush1.msra.mxu0 0.0
      %1628 = vmatprep.subr.mxu0 0.0
      %1629 = vmatpush1.msra.mxu0 0.0
      %1630 = vmatprep.subr.mxu0 0.0
      %1631 = vmatpush1.msra.mxu0 0.0
      %1632 = vmatprep.subr.mxu0 0.0
      %1633 = vmatpush1.msra.mxu0 0.0
      %1634 = vmatprep.subr.mxu0 0.0
      %1635 = vmatpush1.msra.mxu0 0.0
      %1636 = vmatprep.subr.mxu0 0.0
      %1637 = vmatpush1.msra.mxu0 0.0
      %1638 = vmatprep.subr.mxu0 0.0
      %1639 = vmatpush1.msra.mxu0 0.0
      %1640 = vmatprep.subr.mxu0 0.0
      %1641 = vmatpush1.msra.mxu0 0.0
      %1642 = vmatprep.subr.mxu0 0.0
      %1643 = vmatpush1.msra.mxu0 0.0
      %1644 = vmatprep.subr.mxu0 0.0
      %1645 = vmatpush1.msra.mxu0 0.0
      %1646 = vmatprep.subr.mxu0 0.0
      %1647 = vmatpush1.msra.mxu0 0.0
      %1648 = vmatprep.subr.mxu0 0.0
      %1649 = vmatpush1.msra.mxu0 0.0
      %1650 = vmatprep.subr.mxu0 0.0
      %1651 = vmatpush1.msra.mxu0 0.0
      %1652 = vmatprep.subr.mxu0 0.0
      %1653 = vmatpush1.msra.mxu0 0.0
      %1654 = vmatprep.subr.mxu0 0.0
      %1655 = vmatpush1.msra.mxu0 0.0
      %1656 = vmatprep.subr.mxu0 0.0
      %1657 = vmatpush1.msra.mxu0 0.0
      %1658 = vmatprep.subr.mxu0 0.0
      %1659 = vmatpush1.msra.mxu0 0.0
      %1660 = vmatprep.subr.mxu0 0.0
      %1661 = vmatpush1.msra.mxu0 0.0
      %1662 = vmatprep.subr.mxu0 0.0
      %1663 = vmatpush1.msra.mxu0 0.0
      %1664 = vmatprep.subr.mxu0 0.0
      %1665 = vmatpush1.msra.mxu0 0.0
      %1666 = vmatprep.subr.mxu0 0.0
      %1667 = vmatpush1.msra.mxu0 0.0
      %1668 = vmatprep.subr.mxu0 0.0
      %1669 = vmatpush1.msra.mxu0 0.0
      %1670 = vmatprep.subr.mxu0 0.0
      %1671 = vmatpush1.msra.mxu0 0.0
      %1672 = vmatprep.subr.mxu0 0.0
      %1673 = vmatpush1.msra.mxu0 0.0
      %1674 = vmatprep.subr.mxu0 0.0
      %1675 = vmatpush1.msra.mxu0 0.0
      %1676 = vmatprep.subr.mxu0 0.0
      %1677 = vmatpush1.msra.mxu0 0.0
      %1678 = vmatprep.subr.mxu0 0.0
      %1679 = vmatpush1.msra.mxu0 0.0
      %1680 = vmatprep.subr.mxu0 0.0
      %1681 = vmatpush1.msra.mxu0 0.0
      %1682 = vmatprep.mubr.f32.mxu0 0.0
      %1683 = vmatmul.mubr.f32.gmra.mrb[0].mxu0 %v1095
      %v1684 = vpop.f32.mrb[0].mxu0
      %v1685 = vadd.f32 0.0, %v1684
      %v1686 = vpop.f32.mrb[0].mxu0
      %1687 = vdwg.mxu0
      %1688 = vmatprep.subr.mxu0 0.0
      %1689 = vmatpush1.msra.mxu0 %v1475
      %1690 = vmatprep.subr.mxu0 0.0
      %1691 = vmatpush1.msra.mxu0 0.0
      %1692 = vmatprep.subr.mxu0 0.0
      %1693 = vmatpush1.msra.mxu0 0.0
      %1694 = vmatprep.subr.mxu0 0.0
      %1695 = vmatpush1.msra.mxu0 0.0
      %1696 = vmatprep.subr.mxu0 0.0
      %1697 = vmatpush1.msra.mxu0 0.0
      %1698 = vmatprep.subr.mxu0 0.0
      %1699 = vmatpush1.msra.mxu0 0.0
      %1700 = vmatprep.subr.mxu0 0.0
      %1701 = vmatpush1.msra.mxu0 0.0
      %1702 = vmatprep.subr.mxu0 0.0
      %1703 = vmatpush1.msra.mxu0 0.0
      %1704 = vmatprep.subr.mxu0 0.0
      %1705 = vmatpush1.msra.mxu0 0.0
      %1706 = vmatprep.subr.mxu0 0.0
      %1707 = vmatpush1.msra.mxu0 0.0
      %1708 = vmatprep.subr.mxu0 0.0
      %1709 = vmatpush1.msra.mxu0 0.0
      %1710 = vmatprep.subr.mxu0 0.0
      %1711 = vmatpush1.msra.mxu0 0.0
      %1712 = vmatprep.subr.mxu0 0.0
      %1713 = vmatpush1.msra.mxu0 0.0
      %1714 = vmatprep.subr.mxu0 0.0
      %1715 = vmatpush1.msra.mxu0 0.0
      %1716 = vmatprep.subr.mxu0 0.0
      %1717 = vmatpush1.msra.mxu0 0.0
      %1718 = vmatprep.subr.mxu0 0.0
      %1719 = vmatpush1.msra.mxu0 0.0
      %1720 = vmatprep.subr.mxu0 0.0
      %1721 = vmatpush1.msra.mxu0 0.0
      %1722 = vmatprep.subr.mxu0 0.0
      %1723 = vmatpush1.msra.mxu0 0.0
      %1724 = vmatprep.subr.mxu0 0.0
      %1725 = vmatpush1.msra.mxu0 0.0
      %1726 = vmatprep.subr.mxu0 0.0
      %1727 = vmatpush1.msra.mxu0 0.0
      %1728 = vmatprep.subr.mxu0 0.0
      %1729 = vmatpush1.msra.mxu0 0.0
      %1730 = vmatprep.subr.mxu0 0.0
      %1731 = vmatpush1.msra.mxu0 0.0
      %1732 = vmatprep.subr.mxu0 0.0
      %1733 = vmatpush1.msra.mxu0 0.0
      %1734 = vmatprep.subr.mxu0 0.0
      %1735 = vmatpush1.msra.mxu0 0.0
      %1736 = vmatprep.subr.mxu0 0.0
      %1737 = vmatpush1.msra.mxu0 0.0
      %1738 = vmatprep.subr.mxu0 0.0
      %1739 = vmatpush1.msra.mxu0 0.0
      %1740 = vmatprep.subr.mxu0 0.0
      %1741 = vmatpush1.msra.mxu0 0.0
      %1742 = vmatprep.subr.mxu0 0.0
      %1743 = vmatpush1.msra.mxu0 0.0
      %1744 = vmatprep.subr.mxu0 0.0
      %1745 = vmatpush1.msra.mxu0 0.0
      %1746 = vmatprep.subr.mxu0 0.0
      %1747 = vmatpush1.msra.mxu0 0.0
      %1748 = vmatprep.subr.mxu0 0.0
      %1749 = vmatpush1.msra.mxu0 0.0
      %1750 = vmatprep.subr.mxu0 0.0
      %1751 = vmatpush1.msra.mxu0 0.0
      %1752 = vmatprep.mubr.f32.mxu0 0.0
      %1753 = vmatmul.mubr.f32.gmra.mrb[0].mxu0 %v1095
      %v1754 = vpop.f32.mrb[0].mxu0
      %v1755 = vadd.f32 0.0, %v1754
      %v1756 = vpop.f32.mrb[0].mxu0
      %1757 = vdwg.mxu0
      %v1758 = vmul.f32 %v280, %v280
      %v1759 = vmul.f32 %v281, %v281
      %v1760 = vmul.f32 %v282, %v282
      %v1761 = vmul.f32 %v283, %v283
      %v1763 = vsel %vm288, %v1758, 0
      %v1766 = vsel %vm288, %v1759, 0
      %v1769 = vsel %vm288, %v1760, 0
      %v1772 = vsel %vm288, %v1761, 0
      %1774 = vmatprep.subr.mxu0 0.0
      %1775 = vmatpush1.msra.mxu0 %v271
      %1776 = vmatprep.subr.mxu0 0.0
      %1777 = vmatpush1.msra.mxu0 0.0
      %1778 = vmatprep.subr.mxu0 0.0
      %1779 = vmatpush1.msra.mxu0 0.0
      %1780 = vmatprep.subr.mxu0 0.0
      %1781 = vmatpush1.msra.mxu0 0.0
      %1782 = vmatprep.subr.mxu0 0.0
      %1783 = vmatpush1.msra.mxu0 0.0
      %1784 = vmatprep.subr.mxu0 0.0
      %1785 = vmatpush1.msra.mxu0 0.0
      %1786 = vmatprep.subr.mxu0 0.0
      %1787 = vmatpush1.msra.mxu0 0.0
      %1788 = vmatprep.subr.mxu0 0.0
      %1789 = vmatpush1.msra.mxu0 0.0
      %1790 = vmatprep.subr.mxu0 0.0
      %1791 = vmatpush1.msra.mxu0 0.0
      %1792 = vmatprep.subr.mxu0 0.0
      %1793 = vmatpush1.msra.mxu0 0.0
      %1794 = vmatprep.subr.mxu0 0.0
      %1795 = vmatpush1.msra.mxu0 0.0
      %1796 = vmatprep.subr.mxu0 0.0
      %1797 = vmatpush1.msra.mxu0 0.0
      %1798 = vmatprep.subr.mxu0 0.0
      %1799 = vmatpush1.msra.mxu0 0.0
      %1800 = vmatprep.subr.mxu0 0.0
      %1801 = vmatpush1.msra.mxu0 0.0
      %1802 = vmatprep.subr.mxu0 0.0
      %1803 = vmatpush1.msra.mxu0 0.0
      %1804 = vmatprep.subr.mxu0 0.0
      %1805 = vmatpush1.msra.mxu0 0.0
      %1806 = vmatprep.subr.mxu0 0.0
      %1807 = vmatpush1.msra.mxu0 0.0
      %1808 = vmatprep.subr.mxu0 0.0
      %1809 = vmatpush1.msra.mxu0 0.0
      %1810 = vmatprep.subr.mxu0 0.0
      %1811 = vmatpush1.msra.mxu0 0.0
      %1812 = vmatprep.subr.mxu0 0.0
      %1813 = vmatpush1.msra.mxu0 0.0
      %1814 = vmatprep.subr.mxu0 0.0
      %1815 = vmatpush1.msra.mxu0 0.0
      %1816 = vmatprep.subr.mxu0 0.0
      %1817 = vmatpush1.msra.mxu0 0.0
      %1818 = vmatprep.subr.mxu0 0.0
      %1819 = vmatpush1.msra.mxu0 0.0
      %1820 = vmatprep.subr.mxu0 0.0
      %1821 = vmatpush1.msra.mxu0 0.0
      %1822 = vmatprep.subr.mxu0 0.0
      %1823 = vmatpush1.msra.mxu0 0.0
      %1824 = vmatprep.subr.mxu0 0.0
      %1825 = vmatpush1.msra.mxu0 0.0
      %1826 = vmatprep.subr.mxu0 0.0
      %1827 = vmatpush1.msra.mxu0 0.0
      %1828 = vmatprep.subr.mxu0 0.0
      %1829 = vmatpush1.msra.mxu0 0.0
      %1830 = vmatprep.subr.mxu0 0.0
      %1831 = vmatpush1.msra.mxu0 0.0
      %1832 = vmatprep.subr.mxu0 0.0
      %1833 = vmatpush1.msra.mxu0 0.0
      %1834 = vmatprep.subr.mxu0 0.0
      %1835 = vmatpush1.msra.mxu0 0.0
      %1836 = vmatprep.subr.mxu0 0.0
      %1837 = vmatpush1.msra.mxu0 0.0
      %1838 = vmatprep.mubr.f32.mxu0 0.0
      %1839 = vmatmul.mubr.f32.gmra.mrb[0].mxu0 %v1763
      %v1840 = vpop.f32.mrb[0].mxu0
      %v1841 = vadd.f32 0.0, %v1840
      %v1842 = vpop.f32.mrb[0].mxu0
      %1843 = vmatprep.mubr.f32.mxu0 0.0
      %1844 = vmatmul.mubr.f32.gmra.mrb[0].mxu0 %v1766
      %v1845 = vpop.f32.mrb[0].mxu0
      %v1846 = vadd.f32 0.0, %v1845
      %v1847 = vpop.f32.mrb[0].mxu0
      %1848 = vmatprep.mubr.f32.mxu0 0.0
      %1849 = vmatmul.mubr.f32.gmra.mrb[0].mxu0 %v1769
      %v1850 = vpop.f32.mrb[0].mxu0
      %v1851 = vadd.f32 0.0, %v1850
      %v1852 = vpop.f32.mrb[0].mxu0
      %1853 = vmatprep.mubr.f32.mxu0 0.0
      %1854 = vmatmul.mubr.f32.gmra.mrb[0].mxu0 %v1772
      %v1855 = vpop.f32.mrb[0].mxu0
      %v1856 = vadd.f32 0.0, %v1855
      %v1857 = vpop.f32.mrb[0].mxu0
      %1858 = vdwg.mxu0
      %1859 = vmatprep.subr.mxu0 0.0
      %1860 = vmatpush1.msra.mxu0 %v1841
      %1861 = vmatprep.subr.mxu0 0.0
      %1862 = vmatpush1.msra.mxu0 0.0
      %1863 = vmatprep.subr.mxu0 0.0
      %1864 = vmatpush1.msra.mxu0 0.0
      %1865 = vmatprep.subr.mxu0 0.0
      %1866 = vmatpush1.msra.mxu0 0.0
      %1867 = vmatprep.subr.mxu0 0.0
      %1868 = vmatpush1.msra.mxu0 0.0
      %1869 = vmatprep.subr.mxu0 0.0
      %1870 = vmatpush1.msra.mxu0 0.0
      %1871 = vmatprep.subr.mxu0 0.0
      %1872 = vmatpush1.msra.mxu0 0.0
      %1873 = vmatprep.subr.mxu0 0.0
      %1874 = vmatpush1.msra.mxu0 0.0
      %1875 = vmatprep.subr.mxu0 0.0
      %1876 = vmatpush1.msra.mxu0 0.0
      %1877 = vmatprep.subr.mxu0 0.0
      %1878 = vmatpush1.msra.mxu0 0.0
      %1879 = vmatprep.subr.mxu0 0.0
      %1880 = vmatpush1.msra.mxu0 0.0
      %1881 = vmatprep.subr.mxu0 0.0
      %1882 = vmatpush1.msra.mxu0 0.0
      %1883 = vmatprep.subr.mxu0 0.0
      %1884 = vmatpush1.msra.mxu0 0.0
      %1885 = vmatprep.subr.mxu0 0.0
      %1886 = vmatpush1.msra.mxu0 0.0
      %1887 = vmatprep.subr.mxu0 0.0
      %1888 = vmatpush1.msra.mxu0 0.0
      %1889 = vmatprep.subr.mxu0 0.0
      %1890 = vmatpush1.msra.mxu0 0.0
      %1891 = vmatprep.subr.mxu0 0.0
      %1892 = vmatpush1.msra.mxu0 0.0
      %1893 = vmatprep.subr.mxu0 0.0
      %1894 = vmatpush1.msra.mxu0 0.0
      %1895 = vmatprep.subr.mxu0 0.0
      %1896 = vmatpush1.msra.mxu0 0.0
      %1897 = vmatprep.subr.mxu0 0.0
      %1898 = vmatpush1.msra.mxu0 0.0
      %1899 = vmatprep.subr.mxu0 0.0
      %1900 = vmatpush1.msra.mxu0 0.0
      %1901 = vmatprep.subr.mxu0 0.0
      %1902 = vmatpush1.msra.mxu0 0.0
      %1903 = vmatprep.subr.mxu0 0.0
      %1904 = vmatpush1.msra.mxu0 0.0
      %1905 = vmatprep.subr.mxu0 0.0
      %1906 = vmatpush1.msra.mxu0 0.0
      %1907 = vmatprep.subr.mxu0 0.0
      %1908 = vmatpush1.msra.mxu0 0.0
      %1909 = vmatprep.subr.mxu0 0.0
      %1910 = vmatpush1.msra.mxu0 0.0
      %1911 = vmatprep.subr.mxu0 0.0
      %1912 = vmatpush1.msra.mxu0 0.0
      %1913 = vmatprep.subr.mxu0 0.0
      %1914 = vmatpush1.msra.mxu0 0.0
      %1915 = vmatprep.subr.mxu0 0.0
      %1916 = vmatpush1.msra.mxu0 0.0
      %1917 = vmatprep.subr.mxu0 0.0
      %1918 = vmatpush1.msra.mxu0 0.0
      %1919 = vmatprep.subr.mxu0 0.0
      %1920 = vmatpush1.msra.mxu0 0.0
      %1921 = vmatprep.subr.mxu0 0.0
      %1922 = vmatpush1.msra.mxu0 0.0
      %1923 = vmatprep.mubr.f32.mxu0 0.0
      %1924 = vmatmul.mubr.f32.gmra.mrb[0].mxu0 %v1095
      %v1925 = vpop.f32.mrb[0].mxu0
      %v1926 = vadd.f32 0.0, %v1925
      %v1927 = vpop.f32.mrb[0].mxu0
      %1928 = vdwg.mxu0
      %1929 = vmatprep.subr.mxu0 0.0
      %1930 = vmatpush1.msra.mxu0 %v1846
      %1931 = vmatprep.subr.mxu0 0.0
      %1932 = vmatpush1.msra.mxu0 0.0
      %1933 = vmatprep.subr.mxu0 0.0
      %1934 = vmatpush1.msra.mxu0 0.0
      %1935 = vmatprep.subr.mxu0 0.0
      %1936 = vmatpush1.msra.mxu0 0.0
      %1937 = vmatprep.subr.mxu0 0.0
      %1938 = vmatpush1.msra.mxu0 0.0
      %1939 = vmatprep.subr.mxu0 0.0
      %1940 = vmatpush1.msra.mxu0 0.0
      %1941 = vmatprep.subr.mxu0 0.0
      %1942 = vmatpush1.msra.mxu0 0.0
      %1943 = vmatprep.subr.mxu0 0.0
      %1944 = vmatpush1.msra.mxu0 0.0
      %1945 = vmatprep.subr.mxu0 0.0
      %1946 = vmatpush1.msra.mxu0 0.0
      %1947 = vmatprep.subr.mxu0 0.0
      %1948 = vmatpush1.msra.mxu0 0.0
      %1949 = vmatprep.subr.mxu0 0.0
      %1950 = vmatpush1.msra.mxu0 0.0
      %1951 = vmatprep.subr.mxu0 0.0
      %1952 = vmatpush1.msra.mxu0 0.0
      %1953 = vmatprep.subr.mxu0 0.0
      %1954 = vmatpush1.msra.mxu0 0.0
      %1955 = vmatprep.subr.mxu0 0.0
      %1956 = vmatpush1.msra.mxu0 0.0
      %1957 = vmatprep.subr.mxu0 0.0
      %1958 = vmatpush1.msra.mxu0 0.0
      %1959 = vmatprep.subr.mxu0 0.0
      %1960 = vmatpush1.msra.mxu0 0.0
      %1961 = vmatprep.subr.mxu0 0.0
      %1962 = vmatpush1.msra.mxu0 0.0
      %1963 = vmatprep.subr.mxu0 0.0
      %1964 = vmatpush1.msra.mxu0 0.0
      %1965 = vmatprep.subr.mxu0 0.0
      %1966 = vmatpush1.msra.mxu0 0.0
      %1967 = vmatprep.subr.mxu0 0.0
      %1968 = vmatpush1.msra.mxu0 0.0
      %1969 = vmatprep.subr.mxu0 0.0
      %1970 = vmatpush1.msra.mxu0 0.0
      %1971 = vmatprep.subr.mxu0 0.0
      %1972 = vmatpush1.msra.mxu0 0.0
      %1973 = vmatprep.subr.mxu0 0.0
      %1974 = vmatpush1.msra.mxu0 0.0
      %1975 = vmatprep.subr.mxu0 0.0
      %1976 = vmatpush1.msra.mxu0 0.0
      %1977 = vmatprep.subr.mxu0 0.0
      %1978 = vmatpush1.msra.mxu0 0.0
      %1979 = vmatprep.subr.mxu0 0.0
      %1980 = vmatpush1.msra.mxu0 0.0
      %1981 = vmatprep.subr.mxu0 0.0
      %1982 = vmatpush1.msra.mxu0 0.0
      %1983 = vmatprep.subr.mxu0 0.0
      %1984 = vmatpush1.msra.mxu0 0.0
      %1985 = vmatprep.subr.mxu0 0.0
      %1986 = vmatpush1.msra.mxu0 0.0
      %1987 = vmatprep.subr.mxu0 0.0
      %1988 = vmatpush1.msra.mxu0 0.0
      %1989 = vmatprep.subr.mxu0 0.0
      %1990 = vmatpush1.msra.mxu0 0.0
      %1991 = vmatprep.subr.mxu0 0.0
      %1992 = vmatpush1.msra.mxu0 0.0
      %1993 = vmatprep.mubr.f32.mxu0 0.0
      %1994 = vmatmul.mubr.f32.gmra.mrb[0].mxu0 %v1095
      %v1995 = vpop.f32.mrb[0].mxu0
      %v1996 = vadd.f32 0.0, %v1995
      %v1997 = vpop.f32.mrb[0].mxu0
      %1998 = vdwg.mxu0
      %1999 = vmatprep.subr.mxu0 0.0
      %2000 = vmatpush1.msra.mxu0 %v1851
      %2001 = vmatprep.subr.mxu0 0.0
      %2002 = vmatpush1.msra.mxu0 0.0
      %2003 = vmatprep.subr.mxu0 0.0
      %2004 = vmatpush1.msra.mxu0 0.0
      %2005 = vmatprep.subr.mxu0 0.0
      %2006 = vmatpush1.msra.mxu0 0.0
      %2007 = vmatprep.subr.mxu0 0.0
      %2008 = vmatpush1.msra.mxu0 0.0
      %2009 = vmatprep.subr.mxu0 0.0
      %2010 = vmatpush1.msra.mxu0 0.0
      %2011 = vmatprep.subr.mxu0 0.0
      %2012 = vmatpush1.msra.mxu0 0.0
      %2013 = vmatprep.subr.mxu0 0.0
      %2014 = vmatpush1.msra.mxu0 0.0
      %2015 = vmatprep.subr.mxu0 0.0
      %2016 = vmatpush1.msra.mxu0 0.0
      %2017 = vmatprep.subr.mxu0 0.0
      %2018 = vmatpush1.msra.mxu0 0.0
      %2019 = vmatprep.subr.mxu0 0.0
      %2020 = vmatpush1.msra.mxu0 0.0
      %2021 = vmatprep.subr.mxu0 0.0
      %2022 = vmatpush1.msra.mxu0 0.0
      %2023 = vmatprep.subr.mxu0 0.0
      %2024 = vmatpush1.msra.mxu0 0.0
      %2025 = vmatprep.subr.mxu0 0.0
      %2026 = vmatpush1.msra.mxu0 0.0
      %2027 = vmatprep.subr.mxu0 0.0
      %2028 = vmatpush1.msra.mxu0 0.0
      %2029 = vmatprep.subr.mxu0 0.0
      %2030 = vmatpush1.msra.mxu0 0.0
      %2031 = vmatprep.subr.mxu0 0.0
      %2032 = vmatpush1.msra.mxu0 0.0
      %2033 = vmatprep.subr.mxu0 0.0
      %2034 = vmatpush1.msra.mxu0 0.0
      %2035 = vmatprep.subr.mxu0 0.0
      %2036 = vmatpush1.msra.mxu0 0.0
      %2037 = vmatprep.subr.mxu0 0.0
      %2038 = vmatpush1.msra.mxu0 0.0
      %2039 = vmatprep.subr.mxu0 0.0
      %2040 = vmatpush1.msra.mxu0 0.0
      %2041 = vmatprep.subr.mxu0 0.0
      %2042 = vmatpush1.msra.mxu0 0.0
      %2043 = vmatprep.subr.mxu0 0.0
      %2044 = vmatpush1.msra.mxu0 0.0
      %2045 = vmatprep.subr.mxu0 0.0
      %2046 = vmatpush1.msra.mxu0 0.0
      %2047 = vmatprep.subr.mxu0 0.0
      %2048 = vmatpush1.msra.mxu0 0.0
      %2049 = vmatprep.subr.mxu0 0.0
      %2050 = vmatpush1.msra.mxu0 0.0
      %2051 = vmatprep.subr.mxu0 0.0
      %2052 = vmatpush1.msra.mxu0 0.0
      %2053 = vmatprep.subr.mxu0 0.0
      %2054 = vmatpush1.msra.mxu0 0.0
      %2055 = vmatprep.subr.mxu0 0.0
      %2056 = vmatpush1.msra.mxu0 0.0
      %2057 = vmatprep.subr.mxu0 0.0
      %2058 = vmatpush1.msra.mxu0 0.0
      %2059 = vmatprep.subr.mxu0 0.0
      %2060 = vmatpush1.msra.mxu0 0.0
      %2061 = vmatprep.subr.mxu0 0.0
      %2062 = vmatpush1.msra.mxu0 0.0
      %2063 = vmatprep.mubr.f32.mxu0 0.0
      %2064 = vmatmul.mubr.f32.gmra.mrb[0].mxu0 %v1095
      %v2065 = vpop.f32.mrb[0].mxu0
      %v2066 = vadd.f32 0.0, %v2065
      %v2067 = vpop.f32.mrb[0].mxu0
      %2068 = vdwg.mxu0
      %2069 = vmatprep.subr.mxu0 0.0
      %2070 = vmatpush1.msra.mxu0 %v1856
      %2071 = vmatprep.subr.mxu0 0.0
      %2072 = vmatpush1.msra.mxu0 0.0
      %2073 = vmatprep.subr.mxu0 0.0
      %2074 = vmatpush1.msra.mxu0 0.0
      %2075 = vmatprep.subr.mxu0 0.0
      %2076 = vmatpush1.msra.mxu0 0.0
      %2077 = vmatprep.subr.mxu0 0.0
      %2078 = vmatpush1.msra.mxu0 0.0
      %2079 = vmatprep.subr.mxu0 0.0
      %2080 = vmatpush1.msra.mxu0 0.0
      %2081 = vmatprep.subr.mxu0 0.0
      %2082 = vmatpush1.msra.mxu0 0.0
      %2083 = vmatprep.subr.mxu0 0.0
      %2084 = vmatpush1.msra.mxu0 0.0
      %2085 = vmatprep.subr.mxu0 0.0
      %2086 = vmatpush1.msra.mxu0 0.0
      %2087 = vmatprep.subr.mxu0 0.0
      %2088 = vmatpush1.msra.mxu0 0.0
      %2089 = vmatprep.subr.mxu0 0.0
      %2090 = vmatpush1.msra.mxu0 0.0
      %2091 = vmatprep.subr.mxu0 0.0
      %2092 = vmatpush1.msra.mxu0 0.0
      %2093 = vmatprep.subr.mxu0 0.0
      %2094 = vmatpush1.msra.mxu0 0.0
      %2095 = vmatprep.subr.mxu0 0.0
      %2096 = vmatpush1.msra.mxu0 0.0
      %2097 = vmatprep.subr.mxu0 0.0
      %2098 = vmatpush1.msra.mxu0 0.0
      %2099 = vmatprep.subr.mxu0 0.0
      %2100 = vmatpush1.msra.mxu0 0.0
      %2101 = vmatprep.subr.mxu0 0.0
      %2102 = vmatpush1.msra.mxu0 0.0
      %2103 = vmatprep.subr.mxu0 0.0
      %2104 = vmatpush1.msra.mxu0 0.0
      %2105 = vmatprep.subr.mxu0 0.0
      %2106 = vmatpush1.msra.mxu0 0.0
      %2107 = vmatprep.subr.mxu0 0.0
      %2108 = vmatpush1.msra.mxu0 0.0
      %2109 = vmatprep.subr.mxu0 0.0
      %2110 = vmatpush1.msra.mxu0 0.0
      %2111 = vmatprep.subr.mxu0 0.0
      %2112 = vmatpush1.msra.mxu0 0.0
      %2113 = vmatprep.subr.mxu0 0.0
      %2114 = vmatpush1.msra.mxu0 0.0
      %2115 = vmatprep.subr.mxu0 0.0
      %2116 = vmatpush1.msra.mxu0 0.0
      %2117 = vmatprep.subr.mxu0 0.0
      %2118 = vmatpush1.msra.mxu0 0.0
      %2119 = vmatprep.subr.mxu0 0.0
      %2120 = vmatpush1.msra.mxu0 0.0
      %2121 = vmatprep.subr.mxu0 0.0
      %2122 = vmatpush1.msra.mxu0 0.0
      %2123 = vmatprep.subr.mxu0 0.0
      %2124 = vmatpush1.msra.mxu0 0.0
      %2125 = vmatprep.subr.mxu0 0.0
      %2126 = vmatpush1.msra.mxu0 0.0
      %2127 = vmatprep.subr.mxu0 0.0
      %2128 = vmatpush1.msra.mxu0 0.0
      %2129 = vmatprep.subr.mxu0 0.0
      %2130 = vmatpush1.msra.mxu0 0.0
      %2131 = vmatprep.subr.mxu0 0.0
      %2132 = vmatpush1.msra.mxu0 0.0
      %2133 = vmatprep.mubr.f32.mxu0 0.0
      %2134 = vmatmul.mubr.f32.gmra.mrb[0].mxu0 %v1095
      %v2135 = vpop.f32.mrb[0].mxu0
      %v2136 = vadd.f32 0.0, %v2135
      %v2137 = vpop.f32.mrb[0].mxu0
      %2138 = vdwg.mxu0
      %v2139 = vmul.f32 %v272, %v276
      %v2140 = vmul.f32 %v273, %v277
      %v2141 = vmul.f32 %v274, %v278
      %v2142 = vmul.f32 %v275, %v279
      %v2144 = vsel %vm288, %v2139, 0
      %v2147 = vsel %vm288, %v2140, 0
      %v2150 = vsel %vm288, %v2141, 0
      %v2153 = vsel %vm288, %v2142, 0
      %2155 = vmatprep.subr.mxu0 0.0
      %2156 = vmatpush1.msra.mxu0 %v271
      %2157 = vmatprep.subr.mxu0 0.0
      %2158 = vmatpush1.msra.mxu0 0.0
      %2159 = vmatprep.subr.mxu0 0.0
      %2160 = vmatpush1.msra.mxu0 0.0
      %2161 = vmatprep.subr.mxu0 0.0
      %2162 = vmatpush1.msra.mxu0 0.0
      %2163 = vmatprep.subr.mxu0 0.0
      %2164 = vmatpush1.msra.mxu0 0.0
      %2165 = vmatprep.subr.mxu0 0.0
      %2166 = vmatpush1.msra.mxu0 0.0
      %2167 = vmatprep.subr.mxu0 0.0
      %2168 = vmatpush1.msra.mxu0 0.0
      %2169 = vmatprep.subr.mxu0 0.0
      %2170 = vmatpush1.msra.mxu0 0.0
      %2171 = vmatprep.subr.mxu0 0.0
      %2172 = vmatpush1.msra.mxu0 0.0
      %2173 = vmatprep.subr.mxu0 0.0
      %2174 = vmatpush1.msra.mxu0 0.0
      %2175 = vmatprep.subr.mxu0 0.0
      %2176 = vmatpush1.msra.mxu0 0.0
      %2177 = vmatprep.subr.mxu0 0.0
      %2178 = vmatpush1.msra.mxu0 0.0
      %2179 = vmatprep.subr.mxu0 0.0
      %2180 = vmatpush1.msra.mxu0 0.0
      %2181 = vmatprep.subr.mxu0 0.0
      %2182 = vmatpush1.msra.mxu0 0.0
      %2183 = vmatprep.subr.mxu0 0.0
      %2184 = vmatpush1.msra.mxu0 0.0
      %2185 = vmatprep.subr.mxu0 0.0
      %2186 = vmatpush1.msra.mxu0 0.0
      %2187 = vmatprep.subr.mxu0 0.0
      %2188 = vmatpush1.msra.mxu0 0.0
      %2189 = vmatprep.subr.mxu0 0.0
      %2190 = vmatpush1.msra.mxu0 0.0
      %2191 = vmatprep.subr.mxu0 0.0
      %2192 = vmatpush1.msra.mxu0 0.0
      %2193 = vmatprep.subr.mxu0 0.0
      %2194 = vmatpush1.msra.mxu0 0.0
      %2195 = vmatprep.subr.mxu0 0.0
      %2196 = vmatpush1.msra.mxu0 0.0
      %2197 = vmatprep.subr.mxu0 0.0
      %2198 = vmatpush1.msra.mxu0 0.0
      %2199 = vmatprep.subr.mxu0 0.0
      %2200 = vmatpush1.msra.mxu0 0.0
      %2201 = vmatprep.subr.mxu0 0.0
      %2202 = vmatpush1.msra.mxu0 0.0
      %2203 = vmatprep.subr.mxu0 0.0
      %2204 = vmatpush1.msra.mxu0 0.0
      %2205 = vmatprep.subr.mxu0 0.0
      %2206 = vmatpush1.msra.mxu0 0.0
      %2207 = vmatprep.subr.mxu0 0.0
      %2208 = vmatpush1.msra.mxu0 0.0
      %2209 = vmatprep.subr.mxu0 0.0
      %2210 = vmatpush1.msra.mxu0 0.0
      %2211 = vmatprep.subr.mxu0 0.0
      %2212 = vmatpush1.msra.mxu0 0.0
      %2213 = vmatprep.subr.mxu0 0.0
      %2214 = vmatpush1.msra.mxu0 0.0
      %2215 = vmatprep.subr.mxu0 0.0
      %2216 = vmatpush1.msra.mxu0 0.0
      %2217 = vmatprep.subr.mxu0 0.0
      %2218 = vmatpush1.msra.mxu0 0.0
      %2219 = vmatprep.mubr.f32.mxu0 0.0
      %2220 = vmatmul.mubr.f32.gmra.mrb[0].mxu0 %v2144
      %v2221 = vpop.f32.mrb[0].mxu0
      %v2222 = vadd.f32 0.0, %v2221
      %v2223 = vpop.f32.mrb[0].mxu0
      %2224 = vmatprep.mubr.f32.mxu0 0.0
      %2225 = vmatmul.mubr.f32.gmra.mrb[0].mxu0 %v2147
      %v2226 = vpop.f32.mrb[0].mxu0
      %v2227 = vadd.f32 0.0, %v2226
      %v2228 = vpop.f32.mrb[0].mxu0
      %2229 = vmatprep.mubr.f32.mxu0 0.0
      %2230 = vmatmul.mubr.f32.gmra.mrb[0].mxu0 %v2150
      %v2231 = vpop.f32.mrb[0].mxu0
      %v2232 = vadd.f32 0.0, %v2231
      %v2233 = vpop.f32.mrb[0].mxu0
      %2234 = vmatprep.mubr.f32.mxu0 0.0
      %2235 = vmatmul.mubr.f32.gmra.mrb[0].mxu0 %v2153
      %v2236 = vpop.f32.mrb[0].mxu0
      %v2237 = vadd.f32 0.0, %v2236
      %v2238 = vpop.f32.mrb[0].mxu0
      %2239 = vdwg.mxu0
      %2240 = vmatprep.subr.mxu0 0.0
      %2241 = vmatpush1.msra.mxu0 %v2222
      %2242 = vmatprep.subr.mxu0 0.0
      %2243 = vmatpush1.msra.mxu0 0.0
      %2244 = vmatprep.subr.mxu0 0.0
      %2245 = vmatpush1.msra.mxu0 0.0
      %2246 = vmatprep.subr.mxu0 0.0
      %2247 = vmatpush1.msra.mxu0 0.0
      %2248 = vmatprep.subr.mxu0 0.0
      %2249 = vmatpush1.msra.mxu0 0.0
      %2250 = vmatprep.subr.mxu0 0.0
      %2251 = vmatpush1.msra.mxu0 0.0
      %2252 = vmatprep.subr.mxu0 0.0
      %2253 = vmatpush1.msra.mxu0 0.0
      %2254 = vmatprep.subr.mxu0 0.0
      %2255 = vmatpush1.msra.mxu0 0.0
      %2256 = vmatprep.subr.mxu0 0.0
      %2257 = vmatpush1.msra.mxu0 0.0
      %2258 = vmatprep.subr.mxu0 0.0
      %2259 = vmatpush1.msra.mxu0 0.0
      %2260 = vmatprep.subr.mxu0 0.0
      %2261 = vmatpush1.msra.mxu0 0.0
      %2262 = vmatprep.subr.mxu0 0.0
      %2263 = vmatpush1.msra.mxu0 0.0
      %2264 = vmatprep.subr.mxu0 0.0
      %2265 = vmatpush1.msra.mxu0 0.0
      %2266 = vmatprep.subr.mxu0 0.0
      %2267 = vmatpush1.msra.mxu0 0.0
      %2268 = vmatprep.subr.mxu0 0.0
      %2269 = vmatpush1.msra.mxu0 0.0
      %2270 = vmatprep.subr.mxu0 0.0
      %2271 = vmatpush1.msra.mxu0 0.0
      %2272 = vmatprep.subr.mxu0 0.0
      %2273 = vmatpush1.msra.mxu0 0.0
      %2274 = vmatprep.subr.mxu0 0.0
      %2275 = vmatpush1.msra.mxu0 0.0
      %2276 = vmatprep.subr.mxu0 0.0
      %2277 = vmatpush1.msra.mxu0 0.0
      %2278 = vmatprep.subr.mxu0 0.0
      %2279 = vmatpush1.msra.mxu0 0.0
      %2280 = vmatprep.subr.mxu0 0.0
      %2281 = vmatpush1.msra.mxu0 0.0
      %2282 = vmatprep.subr.mxu0 0.0
      %2283 = vmatpush1.msra.mxu0 0.0
      %2284 = vmatprep.subr.mxu0 0.0
      %2285 = vmatpush1.msra.mxu0 0.0
      %2286 = vmatprep.subr.mxu0 0.0
      %2287 = vmatpush1.msra.mxu0 0.0
      %2288 = vmatprep.subr.mxu0 0.0
      %2289 = vmatpush1.msra.mxu0 0.0
      %2290 = vmatprep.subr.mxu0 0.0
      %2291 = vmatpush1.msra.mxu0 0.0
      %2292 = vmatprep.subr.mxu0 0.0
      %2293 = vmatpush1.msra.mxu0 0.0
      %2294 = vmatprep.subr.mxu0 0.0
      %2295 = vmatpush1.msra.mxu0 0.0
      %2296 = vmatprep.subr.mxu0 0.0
      %2297 = vmatpush1.msra.mxu0 0.0
      %2298 = vmatprep.subr.mxu0 0.0
      %2299 = vmatpush1.msra.mxu0 0.0
      %2300 = vmatprep.subr.mxu0 0.0
      %2301 = vmatpush1.msra.mxu0 0.0
      %2302 = vmatprep.subr.mxu0 0.0
      %2303 = vmatpush1.msra.mxu0 0.0
      %2304 = vmatprep.mubr.f32.mxu0 0.0
      %2305 = vmatmul.mubr.f32.gmra.mrb[0].mxu0 %v1095
      %v2306 = vpop.f32.mrb[0].mxu0
      %v2307 = vadd.f32 0.0, %v2306
      %v2308 = vpop.f32.mrb[0].mxu0
      %2309 = vdwg.mxu0
      %2310 = vmatprep.subr.mxu0 0.0
      %2311 = vmatpush1.msra.mxu0 %v2227
      %2312 = vmatprep.subr.mxu0 0.0
      %2313 = vmatpush1.msra.mxu0 0.0
      %2314 = vmatprep.subr.mxu0 0.0
      %2315 = vmatpush1.msra.mxu0 0.0
      %2316 = vmatprep.subr.mxu0 0.0
      %2317 = vmatpush1.msra.mxu0 0.0
      %2318 = vmatprep.subr.mxu0 0.0
      %2319 = vmatpush1.msra.mxu0 0.0
      %2320 = vmatprep.subr.mxu0 0.0
      %2321 = vmatpush1.msra.mxu0 0.0
      %2322 = vmatprep.subr.mxu0 0.0
      %2323 = vmatpush1.msra.mxu0 0.0
      %2324 = vmatprep.subr.mxu0 0.0
      %2325 = vmatpush1.msra.mxu0 0.0
      %2326 = vmatprep.subr.mxu0 0.0
      %2327 = vmatpush1.msra.mxu0 0.0
      %2328 = vmatprep.subr.mxu0 0.0
      %2329 = vmatpush1.msra.mxu0 0.0
      %2330 = vmatprep.subr.mxu0 0.0
      %2331 = vmatpush1.msra.mxu0 0.0
      %2332 = vmatprep.subr.mxu0 0.0
      %2333 = vmatpush1.msra.mxu0 0.0
      %2334 = vmatprep.subr.mxu0 0.0
      %2335 = vmatpush1.msra.mxu0 0.0
      %2336 = vmatprep.subr.mxu0 0.0
      %2337 = vmatpush1.msra.mxu0 0.0
      %2338 = vmatprep.subr.mxu0 0.0
      %2339 = vmatpush1.msra.mxu0 0.0
      %2340 = vmatprep.subr.mxu0 0.0
      %2341 = vmatpush1.msra.mxu0 0.0
      %2342 = vmatprep.subr.mxu0 0.0
      %2343 = vmatpush1.msra.mxu0 0.0
      %2344 = vmatprep.subr.mxu0 0.0
      %2345 = vmatpush1.msra.mxu0 0.0
      %2346 = vmatprep.subr.mxu0 0.0
      %2347 = vmatpush1.msra.mxu0 0.0
      %2348 = vmatprep.subr.mxu0 0.0
      %2349 = vmatpush1.msra.mxu0 0.0
      %2350 = vmatprep.subr.mxu0 0.0
      %2351 = vmatpush1.msra.mxu0 0.0
      %2352 = vmatprep.subr.mxu0 0.0
      %2353 = vmatpush1.msra.mxu0 0.0
      %2354 = vmatprep.subr.mxu0 0.0
      %2355 = vmatpush1.msra.mxu0 0.0
      %2356 = vmatprep.subr.mxu0 0.0
      %2357 = vmatpush1.msra.mxu0 0.0
      %2358 = vmatprep.subr.mxu0 0.0
      %2359 = vmatpush1.msra.mxu0 0.0
      %2360 = vmatprep.subr.mxu0 0.0
      %2361 = vmatpush1.msra.mxu0 0.0
      %2362 = vmatprep.subr.mxu0 0.0
      %2363 = vmatpush1.msra.mxu0 0.0
      %2364 = vmatprep.subr.mxu0 0.0
      %2365 = vmatpush1.msra.mxu0 0.0
      %2366 = vmatprep.subr.mxu0 0.0
      %2367 = vmatpush1.msra.mxu0 0.0
      %2368 = vmatprep.subr.mxu0 0.0
      %2369 = vmatpush1.msra.mxu0 0.0
      %2370 = vmatprep.subr.mxu0 0.0
      %2371 = vmatpush1.msra.mxu0 0.0
      %2372 = vmatprep.subr.mxu0 0.0
      %2373 = vmatpush1.msra.mxu0 0.0
      %2374 = vmatprep.mubr.f32.mxu0 0.0
      %2375 = vmatmul.mubr.f32.gmra.mrb[0].mxu0 %v1095
      %v2376 = vpop.f32.mrb[0].mxu0
      %v2377 = vadd.f32 0.0, %v2376
      %v2378 = vpop.f32.mrb[0].mxu0
      %2379 = vdwg.mxu0
      %2380 = vmatprep.subr.mxu0 0.0
      %2381 = vmatpush1.msra.mxu0 %v2232
      %2382 = vmatprep.subr.mxu0 0.0
      %2383 = vmatpush1.msra.mxu0 0.0
      %2384 = vmatprep.subr.mxu0 0.0
      %2385 = vmatpush1.msra.mxu0 0.0
      %2386 = vmatprep.subr.mxu0 0.0
      %2387 = vmatpush1.msra.mxu0 0.0
      %2388 = vmatprep.subr.mxu0 0.0
      %2389 = vmatpush1.msra.mxu0 0.0
      %2390 = vmatprep.subr.mxu0 0.0
      %2391 = vmatpush1.msra.mxu0 0.0
      %2392 = vmatprep.subr.mxu0 0.0
      %2393 = vmatpush1.msra.mxu0 0.0
      %2394 = vmatprep.subr.mxu0 0.0
      %2395 = vmatpush1.msra.mxu0 0.0
      %2396 = vmatprep.subr.mxu0 0.0
      %2397 = vmatpush1.msra.mxu0 0.0
      %2398 = vmatprep.subr.mxu0 0.0
      %2399 = vmatpush1.msra.mxu0 0.0
      %2400 = vmatprep.subr.mxu0 0.0
      %2401 = vmatpush1.msra.mxu0 0.0
      %2402 = vmatprep.subr.mxu0 0.0
      %2403 = vmatpush1.msra.mxu0 0.0
      %2404 = vmatprep.subr.mxu0 0.0
      %2405 = vmatpush1.msra.mxu0 0.0
      %2406 = vmatprep.subr.mxu0 0.0
      %2407 = vmatpush1.msra.mxu0 0.0
      %2408 = vmatprep.subr.mxu0 0.0
      %2409 = vmatpush1.msra.mxu0 0.0
      %2410 = vmatprep.subr.mxu0 0.0
      %2411 = vmatpush1.msra.mxu0 0.0
      %2412 = vmatprep.subr.mxu0 0.0
      %2413 = vmatpush1.msra.mxu0 0.0
      %2414 = vmatprep.subr.mxu0 0.0
      %2415 = vmatpush1.msra.mxu0 0.0
      %2416 = vmatprep.subr.mxu0 0.0
      %2417 = vmatpush1.msra.mxu0 0.0
      %2418 = vmatprep.subr.mxu0 0.0
      %2419 = vmatpush1.msra.mxu0 0.0
      %2420 = vmatprep.subr.mxu0 0.0
      %2421 = vmatpush1.msra.mxu0 0.0
      %2422 = vmatprep.subr.mxu0 0.0
      %2423 = vmatpush1.msra.mxu0 0.0
      %2424 = vmatprep.subr.mxu0 0.0
      %2425 = vmatpush1.msra.mxu0 0.0
      %2426 = vmatprep.subr.mxu0 0.0
      %2427 = vmatpush1.msra.mxu0 0.0
      %2428 = vmatprep.subr.mxu0 0.0
      %2429 = vmatpush1.msra.mxu0 0.0
      %2430 = vmatprep.subr.mxu0 0.0
      %2431 = vmatpush1.msra.mxu0 0.0
      %2432 = vmatprep.subr.mxu0 0.0
      %2433 = vmatpush1.msra.mxu0 0.0
      %2434 = vmatprep.subr.mxu0 0.0
      %2435 = vmatpush1.msra.mxu0 0.0
      %2436 = vmatprep.subr.mxu0 0.0
      %2437 = vmatpush1.msra.mxu0 0.0
      %2438 = vmatprep.subr.mxu0 0.0
      %2439 = vmatpush1.msra.mxu0 0.0
      %2440 = vmatprep.subr.mxu0 0.0
      %2441 = vmatpush1.msra.mxu0 0.0
      %2442 = vmatprep.subr.mxu0 0.0
      %2443 = vmatpush1.msra.mxu0 0.0
      %2444 = vmatprep.mubr.f32.mxu0 0.0
      %2445 = vmatmul.mubr.f32.gmra.mrb[0].mxu0 %v1095
      %v2446 = vpop.f32.mrb[0].mxu0
      %v2447 = vadd.f32 0.0, %v2446
      %v2448 = vpop.f32.mrb[0].mxu0
      %2449 = vdwg.mxu0
      %2450 = vmatprep.subr.mxu0 0.0
      %2451 = vmatpush1.msra.mxu0 %v2237
      %2452 = vmatprep.subr.mxu0 0.0
      %2453 = vmatpush1.msra.mxu0 0.0
      %2454 = vmatprep.subr.mxu0 0.0
      %2455 = vmatpush1.msra.mxu0 0.0
      %2456 = vmatprep.subr.mxu0 0.0
      %2457 = vmatpush1.msra.mxu0 0.0
      %2458 = vmatprep.subr.mxu0 0.0
      %2459 = vmatpush1.msra.mxu0 0.0
      %2460 = vmatprep.subr.mxu0 0.0
      %2461 = vmatpush1.msra.mxu0 0.0
      %2462 = vmatprep.subr.mxu0 0.0
      %2463 = vmatpush1.msra.mxu0 0.0
      %2464 = vmatprep.subr.mxu0 0.0
      %2465 = vmatpush1.msra.mxu0 0.0
      %2466 = vmatprep.subr.mxu0 0.0
      %2467 = vmatpush1.msra.mxu0 0.0
      %2468 = vmatprep.subr.mxu0 0.0
      %2469 = vmatpush1.msra.mxu0 0.0
      %2470 = vmatprep.subr.mxu0 0.0
      %2471 = vmatpush1.msra.mxu0 0.0
      %2472 = vmatprep.subr.mxu0 0.0
      %2473 = vmatpush1.msra.mxu0 0.0
      %2474 = vmatprep.subr.mxu0 0.0
      %2475 = vmatpush1.msra.mxu0 0.0
      %2476 = vmatprep.subr.mxu0 0.0
      %2477 = vmatpush1.msra.mxu0 0.0
      %2478 = vmatprep.subr.mxu0 0.0
      %2479 = vmatpush1.msra.mxu0 0.0
      %2480 = vmatprep.subr.mxu0 0.0
      %2481 = vmatpush1.msra.mxu0 0.0
      %2482 = vmatprep.subr.mxu0 0.0
      %2483 = vmatpush1.msra.mxu0 0.0
      %2484 = vmatprep.subr.mxu0 0.0
      %2485 = vmatpush1.msra.mxu0 0.0
      %2486 = vmatprep.subr.mxu0 0.0
      %2487 = vmatpush1.msra.mxu0 0.0
      %2488 = vmatprep.subr.mxu0 0.0
      %2489 = vmatpush1.msra.mxu0 0.0
      %2490 = vmatprep.subr.mxu0 0.0
      %2491 = vmatpush1.msra.mxu0 0.0
      %2492 = vmatprep.subr.mxu0 0.0
      %2493 = vmatpush1.msra.mxu0 0.0
      %2494 = vmatprep.subr.mxu0 0.0
      %2495 = vmatpush1.msra.mxu0 0.0
      %2496 = vmatprep.subr.mxu0 0.0
      %2497 = vmatpush1.msra.mxu0 0.0
      %2498 = vmatprep.subr.mxu0 0.0
      %2499 = vmatpush1.msra.mxu0 0.0
      %2500 = vmatprep.subr.mxu0 0.0
      %2501 = vmatpush1.msra.mxu0 0.0
      %2502 = vmatprep.subr.mxu0 0.0
      %2503 = vmatpush1.msra.mxu0 0.0
      %2504 = vmatprep.subr.mxu0 0.0
      %2505 = vmatpush1.msra.mxu0 0.0
      %2506 = vmatprep.subr.mxu0 0.0
      %2507 = vmatpush1.msra.mxu0 0.0
      %2508 = vmatprep.subr.mxu0 0.0
      %2509 = vmatpush1.msra.mxu0 0.0
      %2510 = vmatprep.subr.mxu0 0.0
      %2511 = vmatpush1.msra.mxu0 0.0
      %2512 = vmatprep.subr.mxu0 0.0
      %2513 = vmatpush1.msra.mxu0 0.0
      %2514 = vmatprep.mubr.f32.mxu0 0.0
      %2515 = vmatmul.mubr.f32.gmra.mrb[0].mxu0 %v1095
      %v2516 = vpop.f32.mrb[0].mxu0
      %v2517 = vadd.f32 0.0, %v2516
      %v2518 = vpop.f32.mrb[0].mxu0
      %2519 = vdwg.mxu0
      %v2520 = vmul.f32 %v272, %v280
      %v2521 = vmul.f32 %v273, %v281
      %v2522 = vmul.f32 %v274, %v282
      %v2523 = vmul.f32 %v275, %v283
      %v2525 = vsel %vm288, %v2520, 0
      %v2528 = vsel %vm288, %v2521, 0
      %v2531 = vsel %vm288, %v2522, 0
      %v2534 = vsel %vm288, %v2523, 0
      %2536 = vmatprep.subr.mxu0 0.0
      %2537 = vmatpush1.msra.mxu0 %v271
      %2538 = vmatprep.subr.mxu0 0.0
      %2539 = vmatpush1.msra.mxu0 0.0
      %2540 = vmatprep.subr.mxu0 0.0
      %2541 = vmatpush1.msra.mxu0 0.0
      %2542 = vmatprep.subr.mxu0 0.0
      %2543 = vmatpush1.msra.mxu0 0.0
      %2544 = vmatprep.subr.mxu0 0.0
      %2545 = vmatpush1.msra.mxu0 0.0
      %2546 = vmatprep.subr.mxu0 0.0
      %2547 = vmatpush1.msra.mxu0 0.0
      %2548 = vmatprep.subr.mxu0 0.0
      %2549 = vmatpush1.msra.mxu0 0.0
      %2550 = vmatprep.subr.mxu0 0.0
      %2551 = vmatpush1.msra.mxu0 0.0
      %2552 = vmatprep.subr.mxu0 0.0
      %2553 = vmatpush1.msra.mxu0 0.0
      %2554 = vmatprep.subr.mxu0 0.0
      %2555 = vmatpush1.msra.mxu0 0.0
      %2556 = vmatprep.subr.mxu0 0.0
      %2557 = vmatpush1.msra.mxu0 0.0
      %2558 = vmatprep.subr.mxu0 0.0
      %2559 = vmatpush1.msra.mxu0 0.0
      %2560 = vmatprep.subr.mxu0 0.0
      %2561 = vmatpush1.msra.mxu0 0.0
      %2562 = vmatprep.subr.mxu0 0.0
      %2563 = vmatpush1.msra.mxu0 0.0
      %2564 = vmatprep.subr.mxu0 0.0
      %2565 = vmatpush1.msra.mxu0 0.0
      %2566 = vmatprep.subr.mxu0 0.0
      %2567 = vmatpush1.msra.mxu0 0.0
      %2568 = vmatprep.subr.mxu0 0.0
      %2569 = vmatpush1.msra.mxu0 0.0
      %2570 = vmatprep.subr.mxu0 0.0
      %2571 = vmatpush1.msra.mxu0 0.0
      %2572 = vmatprep.subr.mxu0 0.0
      %2573 = vmatpush1.msra.mxu0 0.0
      %2574 = vmatprep.subr.mxu0 0.0
      %2575 = vmatpush1.msra.mxu0 0.0
      %2576 = vmatprep.subr.mxu0 0.0
      %2577 = vmatpush1.msra.mxu0 0.0
      %2578 = vmatprep.subr.mxu0 0.0
      %2579 = vmatpush1.msra.mxu0 0.0
      %2580 = vmatprep.subr.mxu0 0.0
      %2581 = vmatpush1.msra.mxu0 0.0
      %2582 = vmatprep.subr.mxu0 0.0
      %2583 = vmatpush1.msra.mxu0 0.0
      %2584 = vmatprep.subr.mxu0 0.0
      %2585 = vmatpush1.msra.mxu0 0.0
      %2586 = vmatprep.subr.mxu0 0.0
      %2587 = vmatpush1.msra.mxu0 0.0
      %2588 = vmatprep.subr.mxu0 0.0
      %2589 = vmatpush1.msra.mxu0 0.0
      %2590 = vmatprep.subr.mxu0 0.0
      %2591 = vmatpush1.msra.mxu0 0.0
      %2592 = vmatprep.subr.mxu0 0.0
      %2593 = vmatpush1.msra.mxu0 0.0
      %2594 = vmatprep.subr.mxu0 0.0
      %2595 = vmatpush1.msra.mxu0 0.0
      %2596 = vmatprep.subr.mxu0 0.0
      %2597 = vmatpush1.msra.mxu0 0.0
      %2598 = vmatprep.subr.mxu0 0.0
      %2599 = vmatpush1.msra.mxu0 0.0
      %2600 = vmatprep.mubr.f32.mxu0 0.0
      %2601 = vmatmul.mubr.f32.gmra.mrb[0].mxu0 %v2525
      %v2602 = vpop.f32.mrb[0].mxu0
      %v2603 = vadd.f32 0.0, %v2602
      %v2604 = vpop.f32.mrb[0].mxu0
      %2605 = vmatprep.mubr.f32.mxu0 0.0
      %2606 = vmatmul.mubr.f32.gmra.mrb[0].mxu0 %v2528
      %v2607 = vpop.f32.mrb[0].mxu0
      %v2608 = vadd.f32 0.0, %v2607
      %v2609 = vpop.f32.mrb[0].mxu0
      %2610 = vmatprep.mubr.f32.mxu0 0.0
      %2611 = vmatmul.mubr.f32.gmra.mrb[0].mxu0 %v2531
      %v2612 = vpop.f32.mrb[0].mxu0
      %v2613 = vadd.f32 0.0, %v2612
      %v2614 = vpop.f32.mrb[0].mxu0
      %2615 = vmatprep.mubr.f32.mxu0 0.0
      %2616 = vmatmul.mubr.f32.gmra.mrb[0].mxu0 %v2534
      %v2617 = vpop.f32.mrb[0].mxu0
      %v2618 = vadd.f32 0.0, %v2617
      %v2619 = vpop.f32.mrb[0].mxu0
      %2620 = vdwg.mxu0
      %2621 = vmatprep.subr.mxu0 0.0
      %2622 = vmatpush1.msra.mxu0 %v2603
      %2623 = vmatprep.subr.mxu0 0.0
      %2624 = vmatpush1.msra.mxu0 0.0
      %2625 = vmatprep.subr.mxu0 0.0
      %2626 = vmatpush1.msra.mxu0 0.0
      %2627 = vmatprep.subr.mxu0 0.0
      %2628 = vmatpush1.msra.mxu0 0.0
      %2629 = vmatprep.subr.mxu0 0.0
      %2630 = vmatpush1.msra.mxu0 0.0
      %2631 = vmatprep.subr.mxu0 0.0
      %2632 = vmatpush1.msra.mxu0 0.0
      %2633 = vmatprep.subr.mxu0 0.0
      %2634 = vmatpush1.msra.mxu0 0.0
      %2635 = vmatprep.subr.mxu0 0.0
      %2636 = vmatpush1.msra.mxu0 0.0
      %2637 = vmatprep.subr.mxu0 0.0
      %2638 = vmatpush1.msra.mxu0 0.0
      %2639 = vmatprep.subr.mxu0 0.0
      %2640 = vmatpush1.msra.mxu0 0.0
      %2641 = vmatprep.subr.mxu0 0.0
      %2642 = vmatpush1.msra.mxu0 0.0
      %2643 = vmatprep.subr.mxu0 0.0
      %2644 = vmatpush1.msra.mxu0 0.0
      %2645 = vmatprep.subr.mxu0 0.0
      %2646 = vmatpush1.msra.mxu0 0.0
      %2647 = vmatprep.subr.mxu0 0.0
      %2648 = vmatpush1.msra.mxu0 0.0
      %2649 = vmatprep.subr.mxu0 0.0
      %2650 = vmatpush1.msra.mxu0 0.0
      %2651 = vmatprep.subr.mxu0 0.0
      %2652 = vmatpush1.msra.mxu0 0.0
      %2653 = vmatprep.subr.mxu0 0.0
      %2654 = vmatpush1.msra.mxu0 0.0
      %2655 = vmatprep.subr.mxu0 0.0
      %2656 = vmatpush1.msra.mxu0 0.0
      %2657 = vmatprep.subr.mxu0 0.0
      %2658 = vmatpush1.msra.mxu0 0.0
      %2659 = vmatprep.subr.mxu0 0.0
      %2660 = vmatpush1.msra.mxu0 0.0
      %2661 = vmatprep.subr.mxu0 0.0
      %2662 = vmatpush1.msra.mxu0 0.0
      %2663 = vmatprep.subr.mxu0 0.0
      %2664 = vmatpush1.msra.mxu0 0.0
      %2665 = vmatprep.subr.mxu0 0.0
      %2666 = vmatpush1.msra.mxu0 0.0
      %2667 = vmatprep.subr.mxu0 0.0
      %2668 = vmatpush1.msra.mxu0 0.0
      %2669 = vmatprep.subr.mxu0 0.0
      %2670 = vmatpush1.msra.mxu0 0.0
      %2671 = vmatprep.subr.mxu0 0.0
      %2672 = vmatpush1.msra.mxu0 0.0
      %2673 = vmatprep.subr.mxu0 0.0
      %2674 = vmatpush1.msra.mxu0 0.0
      %2675 = vmatprep.subr.mxu0 0.0
      %2676 = vmatpush1.msra.mxu0 0.0
      %2677 = vmatprep.subr.mxu0 0.0
      %2678 = vmatpush1.msra.mxu0 0.0
      %2679 = vmatprep.subr.mxu0 0.0
      %2680 = vmatpush1.msra.mxu0 0.0
      %2681 = vmatprep.subr.mxu0 0.0
      %2682 = vmatpush1.msra.mxu0 0.0
      %2683 = vmatprep.subr.mxu0 0.0
      %2684 = vmatpush1.msra.mxu0 0.0
      %2685 = vmatprep.mubr.f32.mxu0 0.0
      %2686 = vmatmul.mubr.f32.gmra.mrb[0].mxu0 %v1095
      %v2687 = vpop.f32.mrb[0].mxu0
      %v2688 = vadd.f32 0.0, %v2687
      %v2689 = vpop.f32.mrb[0].mxu0
      %2690 = vdwg.mxu0
      %2691 = vmatprep.subr.mxu0 0.0
      %2692 = vmatpush1.msra.mxu0 %v2608
      %2693 = vmatprep.subr.mxu0 0.0
      %2694 = vmatpush1.msra.mxu0 0.0
      %2695 = vmatprep.subr.mxu0 0.0
      %2696 = vmatpush1.msra.mxu0 0.0
      %2697 = vmatprep.subr.mxu0 0.0
      %2698 = vmatpush1.msra.mxu0 0.0
      %2699 = vmatprep.subr.mxu0 0.0
      %2700 = vmatpush1.msra.mxu0 0.0
      %2701 = vmatprep.subr.mxu0 0.0
      %2702 = vmatpush1.msra.mxu0 0.0
      %2703 = vmatprep.subr.mxu0 0.0
      %2704 = vmatpush1.msra.mxu0 0.0
      %2705 = vmatprep.subr.mxu0 0.0
      %2706 = vmatpush1.msra.mxu0 0.0
      %2707 = vmatprep.subr.mxu0 0.0
      %2708 = vmatpush1.msra.mxu0 0.0
      %2709 = vmatprep.subr.mxu0 0.0
      %2710 = vmatpush1.msra.mxu0 0.0
      %2711 = vmatprep.subr.mxu0 0.0
      %2712 = vmatpush1.msra.mxu0 0.0
      %2713 = vmatprep.subr.mxu0 0.0
      %2714 = vmatpush1.msra.mxu0 0.0
      %2715 = vmatprep.subr.mxu0 0.0
      %2716 = vmatpush1.msra.mxu0 0.0
      %2717 = vmatprep.subr.mxu0 0.0
      %2718 = vmatpush1.msra.mxu0 0.0
      %2719 = vmatprep.subr.mxu0 0.0
      %2720 = vmatpush1.msra.mxu0 0.0
      %2721 = vmatprep.subr.mxu0 0.0
      %2722 = vmatpush1.msra.mxu0 0.0
      %2723 = vmatprep.subr.mxu0 0.0
      %2724 = vmatpush1.msra.mxu0 0.0
      %2725 = vmatprep.subr.mxu0 0.0
      %2726 = vmatpush1.msra.mxu0 0.0
      %2727 = vmatprep.subr.mxu0 0.0
      %2728 = vmatpush1.msra.mxu0 0.0
      %2729 = vmatprep.subr.mxu0 0.0
      %2730 = vmatpush1.msra.mxu0 0.0
      %2731 = vmatprep.subr.mxu0 0.0
      %2732 = vmatpush1.msra.mxu0 0.0
      %2733 = vmatprep.subr.mxu0 0.0
      %2734 = vmatpush1.msra.mxu0 0.0
      %2735 = vmatprep.subr.mxu0 0.0
      %2736 = vmatpush1.msra.mxu0 0.0
      %2737 = vmatprep.subr.mxu0 0.0
      %2738 = vmatpush1.msra.mxu0 0.0
      %2739 = vmatprep.subr.mxu0 0.0
      %2740 = vmatpush1.msra.mxu0 0.0
      %2741 = vmatprep.subr.mxu0 0.0
      %2742 = vmatpush1.msra.mxu0 0.0
      %2743 = vmatprep.subr.mxu0 0.0
      %2744 = vmatpush1.msra.mxu0 0.0
      %2745 = vmatprep.subr.mxu0 0.0
      %2746 = vmatpush1.msra.mxu0 0.0
      %2747 = vmatprep.subr.mxu0 0.0
      %2748 = vmatpush1.msra.mxu0 0.0
      %2749 = vmatprep.subr.mxu0 0.0
      %2750 = vmatpush1.msra.mxu0 0.0
      %2751 = vmatprep.subr.mxu0 0.0
      %2752 = vmatpush1.msra.mxu0 0.0
      %2753 = vmatprep.subr.mxu0 0.0
      %2754 = vmatpush1.msra.mxu0 0.0
      %2755 = vmatprep.mubr.f32.mxu0 0.0
      %2756 = vmatmul.mubr.f32.gmra.mrb[0].mxu0 %v1095
      %v2757 = vpop.f32.mrb[0].mxu0
      %v2758 = vadd.f32 0.0, %v2757
      %v2759 = vpop.f32.mrb[0].mxu0
      %2760 = vdwg.mxu0
      %2761 = vmatprep.subr.mxu0 0.0
      %2762 = vmatpush1.msra.mxu0 %v2613
      %2763 = vmatprep.subr.mxu0 0.0
      %2764 = vmatpush1.msra.mxu0 0.0
      %2765 = vmatprep.subr.mxu0 0.0
      %2766 = vmatpush1.msra.mxu0 0.0
      %2767 = vmatprep.subr.mxu0 0.0
      %2768 = vmatpush1.msra.mxu0 0.0
      %2769 = vmatprep.subr.mxu0 0.0
      %2770 = vmatpush1.msra.mxu0 0.0
      %2771 = vmatprep.subr.mxu0 0.0
      %2772 = vmatpush1.msra.mxu0 0.0
      %2773 = vmatprep.subr.mxu0 0.0
      %2774 = vmatpush1.msra.mxu0 0.0
      %2775 = vmatprep.subr.mxu0 0.0
      %2776 = vmatpush1.msra.mxu0 0.0
      %2777 = vmatprep.subr.mxu0 0.0
      %2778 = vmatpush1.msra.mxu0 0.0
      %2779 = vmatprep.subr.mxu0 0.0
      %2780 = vmatpush1.msra.mxu0 0.0
      %2781 = vmatprep.subr.mxu0 0.0
      %2782 = vmatpush1.msra.mxu0 0.0
      %2783 = vmatprep.subr.mxu0 0.0
      %2784 = vmatpush1.msra.mxu0 0.0
      %2785 = vmatprep.subr.mxu0 0.0
      %2786 = vmatpush1.msra.mxu0 0.0
      %2787 = vmatprep.subr.mxu0 0.0
      %2788 = vmatpush1.msra.mxu0 0.0
      %2789 = vmatprep.subr.mxu0 0.0
      %2790 = vmatpush1.msra.mxu0 0.0
      %2791 = vmatprep.subr.mxu0 0.0
      %2792 = vmatpush1.msra.mxu0 0.0
      %2793 = vmatprep.subr.mxu0 0.0
      %2794 = vmatpush1.msra.mxu0 0.0
      %2795 = vmatprep.subr.mxu0 0.0
      %2796 = vmatpush1.msra.mxu0 0.0
      %2797 = vmatprep.subr.mxu0 0.0
      %2798 = vmatpush1.msra.mxu0 0.0
      %2799 = vmatprep.subr.mxu0 0.0
      %2800 = vmatpush1.msra.mxu0 0.0
      %2801 = vmatprep.subr.mxu0 0.0
      %2802 = vmatpush1.msra.mxu0 0.0
      %2803 = vmatprep.subr.mxu0 0.0
      %2804 = vmatpush1.msra.mxu0 0.0
      %2805 = vmatprep.subr.mxu0 0.0
      %2806 = vmatpush1.msra.mxu0 0.0
      %2807 = vmatprep.subr.mxu0 0.0
      %2808 = vmatpush1.msra.mxu0 0.0
      %2809 = vmatprep.subr.mxu0 0.0
      %2810 = vmatpush1.msra.mxu0 0.0
      %2811 = vmatprep.subr.mxu0 0.0
      %2812 = vmatpush1.msra.mxu0 0.0
      %2813 = vmatprep.subr.mxu0 0.0
      %2814 = vmatpush1.msra.mxu0 0.0
      %2815 = vmatprep.subr.mxu0 0.0
      %2816 = vmatpush1.msra.mxu0 0.0
      %2817 = vmatprep.subr.mxu0 0.0
      %2818 = vmatpush1.msra.mxu0 0.0
      %2819 = vmatprep.subr.mxu0 0.0
      %2820 = vmatpush1.msra.mxu0 0.0
      %2821 = vmatprep.subr.mxu0 0.0
      %2822 = vmatpush1.msra.mxu0 0.0
      %2823 = vmatprep.subr.mxu0 0.0
      %2824 = vmatpush1.msra.mxu0 0.0
      %2825 = vmatprep.mubr.f32.mxu0 0.0
      %2826 = vmatmul.mubr.f32.gmra.mrb[0].mxu0 %v1095
      %v2827 = vpop.f32.mrb[0].mxu0
      %v2828 = vadd.f32 0.0, %v2827
      %v2829 = vpop.f32.mrb[0].mxu0
      %2830 = vdwg.mxu0
      %2831 = vmatprep.subr.mxu0 0.0
      %2832 = vmatpush1.msra.mxu0 %v2618
      %2833 = vmatprep.subr.mxu0 0.0
      %2834 = vmatpush1.msra.mxu0 0.0
      %2835 = vmatprep.subr.mxu0 0.0
      %2836 = vmatpush1.msra.mxu0 0.0
      %2837 = vmatprep.subr.mxu0 0.0
      %2838 = vmatpush1.msra.mxu0 0.0
      %2839 = vmatprep.subr.mxu0 0.0
      %2840 = vmatpush1.msra.mxu0 0.0
      %2841 = vmatprep.subr.mxu0 0.0
      %2842 = vmatpush1.msra.mxu0 0.0
      %2843 = vmatprep.subr.mxu0 0.0
      %2844 = vmatpush1.msra.mxu0 0.0
      %2845 = vmatprep.subr.mxu0 0.0
      %2846 = vmatpush1.msra.mxu0 0.0
      %2847 = vmatprep.subr.mxu0 0.0
      %2848 = vmatpush1.msra.mxu0 0.0
      %2849 = vmatprep.subr.mxu0 0.0
      %2850 = vmatpush1.msra.mxu0 0.0
      %2851 = vmatprep.subr.mxu0 0.0
      %2852 = vmatpush1.msra.mxu0 0.0
      %2853 = vmatprep.subr.mxu0 0.0
      %2854 = vmatpush1.msra.mxu0 0.0
      %2855 = vmatprep.subr.mxu0 0.0
      %2856 = vmatpush1.msra.mxu0 0.0
      %2857 = vmatprep.subr.mxu0 0.0
      %2858 = vmatpush1.msra.mxu0 0.0
      %2859 = vmatprep.subr.mxu0 0.0
      %2860 = vmatpush1.msra.mxu0 0.0
      %2861 = vmatprep.subr.mxu0 0.0
      %2862 = vmatpush1.msra.mxu0 0.0
      %2863 = vmatprep.subr.mxu0 0.0
      %2864 = vmatpush1.msra.mxu0 0.0
      %2865 = vmatprep.subr.mxu0 0.0
      %2866 = vmatpush1.msra.mxu0 0.0
      %2867 = vmatprep.subr.mxu0 0.0
      %2868 = vmatpush1.msra.mxu0 0.0
      %2869 = vmatprep.subr.mxu0 0.0
      %2870 = vmatpush1.msra.mxu0 0.0
      %2871 = vmatprep.subr.mxu0 0.0
      %2872 = vmatpush1.msra.mxu0 0.0
      %2873 = vmatprep.subr.mxu0 0.0
      %2874 = vmatpush1.msra.mxu0 0.0
      %2875 = vmatprep.subr.mxu0 0.0
      %2876 = vmatpush1.msra.mxu0 0.0
      %2877 = vmatprep.subr.mxu0 0.0
      %2878 = vmatpush1.msra.mxu0 0.0
      %2879 = vmatprep.subr.mxu0 0.0
      %2880 = vmatpush1.msra.mxu0 0.0
      %2881 = vmatprep.subr.mxu0 0.0
      %2882 = vmatpush1.msra.mxu0 0.0
      %2883 = vmatprep.subr.mxu0 0.0
      %2884 = vmatpush1.msra.mxu0 0.0
      %2885 = vmatprep.subr.mxu0 0.0
      %2886 = vmatpush1.msra.mxu0 0.0
      %2887 = vmatprep.subr.mxu0 0.0
      %2888 = vmatpush1.msra.mxu0 0.0
      %2889 = vmatprep.subr.mxu0 0.0
      %2890 = vmatpush1.msra.mxu0 0.0
      %2891 = vmatprep.subr.mxu0 0.0
      %2892 = vmatpush1.msra.mxu0 0.0
      %2893 = vmatprep.subr.mxu0 0.0
      %2894 = vmatpush1.msra.mxu0 0.0
      %2895 = vmatprep.mubr.f32.mxu0 0.0
      %2896 = vmatmul.mubr.f32.gmra.mrb[0].mxu0 %v1095
      %v2897 = vpop.f32.mrb[0].mxu0
      %v2898 = vadd.f32 0.0, %v2897
      %v2899 = vpop.f32.mrb[0].mxu0
      %2900 = vdwg.mxu0
      %v2901 = vmul.f32 %v393, %v393
      %v2902 = vmul.f32 %v436, %v436
      %v2903 = vmul.f32 %v479, %v479
      %v2904 = vmul.f32 %v522, %v522
      %v2905 = vmul.f32 %v626, %v626
      %v2906 = vmul.f32 %v669, %v669
      %v2907 = vmul.f32 %v712, %v712
      %v2908 = vmul.f32 %v755, %v755
      %v2909 = vmul.f32 %v393, %v626
      %v2910 = vmul.f32 %v436, %v669
      %v2911 = vmul.f32 %v479, %v712
      %v2912 = vmul.f32 %v522, %v755
      %v2913 = vsub.f32 %v1164, %v2901
      %v2914 = vsub.f32 %v1234, %v2902
      %v2915 = vsub.f32 %v1304, %v2903
      %v2916 = vsub.f32 %v1374, %v2904
      %v2917 = vsub.f32 %v1545, %v2905
      %v2918 = vsub.f32 %v1615, %v2906
      %v2919 = vsub.f32 %v1685, %v2907
      %v2920 = vsub.f32 %v1755, %v2908
      %v2921 = vsub.f32 %v2307, %v2909
      %v2922 = vsub.f32 %v2377, %v2910
      %v2923 = vsub.f32 %v2447, %v2911
      %v2924 = vsub.f32 %v2517, %v2912
      %v2925 = vmul.f32 %v2909, 2.0
      %v2926 = vmul.f32 %v2910, 2.0
      %v2927 = vmul.f32 %v2911, 2.0
      %v2928 = vmul.f32 %v2912, 2.0
      %v2929 = vadd.f32 %v2925, 6.5025
      %v2930 = vadd.f32 %v2926, 6.5025
      %v2931 = vadd.f32 %v2927, 6.5025
      %v2932 = vadd.f32 %v2928, 6.5025
      %v2933 = vmul.f32 %v2921, 2.0
      %v2934 = vmul.f32 %v2922, 2.0
      %v2935 = vmul.f32 %v2923, 2.0
      %v2936 = vmul.f32 %v2924, 2.0
      %v2937 = vadd.f32 %v2933, 58.5225
      %v2938 = vadd.f32 %v2934, 58.5225
      %v2939 = vadd.f32 %v2935, 58.5225
      %v2940 = vadd.f32 %v2936, 58.5225
      %v2941 = vmul.f32 %v2929, %v2937
      %v2942 = vmul.f32 %v2930, %v2938
      %v2943 = vmul.f32 %v2931, %v2939
      %v2944 = vmul.f32 %v2932, %v2940
      %v2945 = vadd.f32 %v2901, %v2905
      %v2946 = vadd.f32 %v2902, %v2906
      %v2947 = vadd.f32 %v2903, %v2907
      %v2948 = vadd.f32 %v2904, %v2908
      %v2949 = vadd.f32 %v2945, 6.5025
      %v2950 = vadd.f32 %v2946, 6.5025
      %v2951 = vadd.f32 %v2947, 6.5025
      %v2952 = vadd.f32 %v2948, 6.5025
      %v2953 = vadd.f32 %v2913, %v2917
      %v2954 = vadd.f32 %v2914, %v2918
      %v2955 = vadd.f32 %v2915, %v2919
      %v2956 = vadd.f32 %v2916, %v2920
      %v2957 = vadd.f32 %v2953, 58.5225
      %v2958 = vadd.f32 %v2954, 58.5225
      %v2959 = vadd.f32 %v2955, 58.5225
      %v2960 = vadd.f32 %v2956, 58.5225
      %v2961 = vmul.f32 %v2949, %v2957
      %v2962 = vmul.f32 %v2950, %v2958
      %v2963 = vmul.f32 %v2951, %v2959
      %v2964 = vmul.f32 %v2952, %v2960
      %v2965 = vrcp.pop %v2961
      %v2966 = vrcp.pop %v2962
      %v2967 = vrcp.pop %v2963
      %v2968 = vrcp.pop %v2964
      %v2969 = vmul.f32 %v2961, %v2965
      %v2970 = vmul.f32 %v2962, %v2966
      %v2971 = vmul.f32 %v2963, %v2967
      %v2972 = vmul.f32 %v2964, %v2968
      %v2973 = vsub.f32 2.0, %v2969
      %v2974 = vsub.f32 2.0, %v2970
      %v2975 = vsub.f32 2.0, %v2971
      %v2976 = vsub.f32 2.0, %v2972
      %v2977 = vmul.f32 %v2965, %v2973
      %v2978 = vmul.f32 %v2966, %v2974
      %v2979 = vmul.f32 %v2967, %v2975
      %v2980 = vmul.f32 %v2968, %v2976
      %v2981 = vmul.f32 %v2941, %v2977
      %v2982 = vmul.f32 %v2942, %v2978
      %v2983 = vmul.f32 %v2943, %v2979
      %v2984 = vmul.f32 %v2944, %v2980
      %v2985 = vsel %vm288, %v2981, 0.0
      %v2986 = vsel %vm288, %v2982, 0.0
      %v2987 = vadd.f32 %v2985, %v2986
      %v2988 = vsel %vm288, %v2983, 0.0
      %v2989 = vadd.f32 %v2987, %v2988
      %v2990 = vsel %vm288, %v2984, 0.0
      %v2991 = vadd.f32 %v2989, %v2990
      %2992 = vadd.xlane.f32.xlu0 %v2991
      %v2993 = vpop.xlane.xlu0 %2992
      %v2994 = vrot.slane %v2993, 4
      %v2995 = vadd.f32 %v2993, %v2994
      %v2996 = vrot.slane %v2995, 2
      %v2997 = vadd.f32 %v2995, %v2996
      %v2998 = vrot.slane %v2997, 1
      %v2999 = vadd.f32 %v2997, %v2998
      %s3000 = vtos %v2999
      %v3001 = vmul.f32 %v859, %v859
      %v3002 = vmul.f32 %v902, %v902
      %v3003 = vmul.f32 %v945, %v945
      %v3004 = vmul.f32 %v988, %v988
      %v3005 = vmul.f32 %v393, %v859
      %v3006 = vmul.f32 %v436, %v902
      %v3007 = vmul.f32 %v479, %v945
      %v3008 = vmul.f32 %v522, %v988
      %v3009 = vsub.f32 %v1926, %v3001
      %v3010 = vsub.f32 %v1996, %v3002
      %v3011 = vsub.f32 %v2066, %v3003
      %v3012 = vsub.f32 %v2136, %v3004
      %v3013 = vsub.f32 %v2688, %v3005
      %v3014 = vsub.f32 %v2758, %v3006
      %v3015 = vsub.f32 %v2828, %v3007
      %v3016 = vsub.f32 %v2898, %v3008
      %v3017 = vmul.f32 %v3005, 2.0
      %v3018 = vmul.f32 %v3006, 2.0
      %v3019 = vmul.f32 %v3007, 2.0
      %v3020 = vmul.f32 %v3008, 2.0
      %v3021 = vadd.f32 %v3017, 6.5025
      %v3022 = vadd.f32 %v3018, 6.5025
      %v3023 = vadd.f32 %v3019, 6.5025
      %v3024 = vadd.f32 %v3020, 6.5025
      %v3025 = vmul.f32 %v3013, 2.0
      %v3026 = vmul.f32 %v3014, 2.0
      %v3027 = vmul.f32 %v3015, 2.0
      %v3028 = vmul.f32 %v3016, 2.0
      %v3029 = vadd.f32 %v3025, 58.5225
      %v3030 = vadd.f32 %v3026, 58.5225
      %v3031 = vadd.f32 %v3027, 58.5225
      %v3032 = vadd.f32 %v3028, 58.5225
      %v3033 = vmul.f32 %v3021, %v3029
      %v3034 = vmul.f32 %v3022, %v3030
      %v3035 = vmul.f32 %v3023, %v3031
      %v3036 = vmul.f32 %v3024, %v3032
      %v3037 = vadd.f32 %v2901, %v3001
      %v3038 = vadd.f32 %v2902, %v3002
      %v3039 = vadd.f32 %v2903, %v3003
      %v3040 = vadd.f32 %v2904, %v3004
      %v3041 = vadd.f32 %v3037, 6.5025
      %v3042 = vadd.f32 %v3038, 6.5025
      %v3043 = vadd.f32 %v3039, 6.5025
      %v3044 = vadd.f32 %v3040, 6.5025
      %v3045 = vadd.f32 %v2913, %v3009
      %v3046 = vadd.f32 %v2914, %v3010
      %v3047 = vadd.f32 %v2915, %v3011
      %v3048 = vadd.f32 %v2916, %v3012
      %v3049 = vadd.f32 %v3045, 58.5225
      %v3050 = vadd.f32 %v3046, 58.5225
      %v3051 = vadd.f32 %v3047, 58.5225
      %v3052 = vadd.f32 %v3048, 58.5225
      %v3053 = vmul.f32 %v3041, %v3049
      %v3054 = vmul.f32 %v3042, %v3050
      %v3055 = vmul.f32 %v3043, %v3051
      %v3056 = vmul.f32 %v3044, %v3052
      %v3057 = vrcp.pop %v3053
      %v3058 = vrcp.pop %v3054
      %v3059 = vrcp.pop %v3055
      %v3060 = vrcp.pop %v3056
      %v3061 = vmul.f32 %v3053, %v3057
      %v3062 = vmul.f32 %v3054, %v3058
      %v3063 = vmul.f32 %v3055, %v3059
      %v3064 = vmul.f32 %v3056, %v3060
      %v3065 = vsub.f32 2.0, %v3061
      %v3066 = vsub.f32 2.0, %v3062
      %v3067 = vsub.f32 2.0, %v3063
      %v3068 = vsub.f32 2.0, %v3064
      %v3069 = vmul.f32 %v3057, %v3065
      %v3070 = vmul.f32 %v3058, %v3066
      %v3071 = vmul.f32 %v3059, %v3067
      %v3072 = vmul.f32 %v3060, %v3068
      %v3073 = vmul.f32 %v3033, %v3069
      %v3074 = vmul.f32 %v3034, %v3070
      %v3075 = vmul.f32 %v3035, %v3071
      %v3076 = vmul.f32 %v3036, %v3072
      %v3077 = vsel %vm288, %v3073, 0.0
      %v3078 = vsel %vm288, %v3074, 0.0
      %v3079 = vadd.f32 %v3077, %v3078
      %v3080 = vsel %vm288, %v3075, 0.0
      %v3081 = vadd.f32 %v3079, %v3080
      %v3082 = vsel %vm288, %v3076, 0.0
      %v3083 = vadd.f32 %v3081, %v3082
      %3084 = vadd.xlane.f32.xlu0 %v3083
      %v3085 = vpop.xlane.xlu0 %3084
      %v3086 = vrot.slane %v3085, 4
      %v3087 = vadd.f32 %v3085, %v3086
      %v3088 = vrot.slane %v3087, 2
      %v3089 = vadd.f32 %v3087, %v3088
      %v3090 = vrot.slane %v3089, 1
      %v3091 = vadd.f32 %v3089, %v3090
      %s3092 = vtos %v3091
      %v3093 = vsub.f32 %v272, %v276
      %v3094 = vsub.f32 %v273, %v277
      %v3095 = vsub.f32 %v274, %v278
      %v3096 = vsub.f32 %v275, %v279
      %v3097 = vand.u32 2147483647, %v3093
      %v3098 = vand.u32 2147483647, %v3094
      %v3099 = vand.u32 2147483647, %v3095
      %v3100 = vand.u32 2147483647, %v3096
      %v3101 = vsel %vm288, %v3097, 0.0
      %v3102 = vsel %vm288, %v3098, 0.0
      %v3103 = vadd.f32 %v3101, %v3102
      %v3104 = vsel %vm288, %v3099, 0.0
      %v3105 = vadd.f32 %v3103, %v3104
      %v3106 = vsel %vm288, %v3100, 0.0
      %v3107 = vadd.f32 %v3105, %v3106
      %3108 = vadd.xlane.f32.xlu0 %v3107
      %v3109 = vpop.xlane.xlu0 %3108
      %v3110 = vrot.slane %v3109, 4
      %v3111 = vadd.f32 %v3109, %v3110
      %v3112 = vrot.slane %v3111, 2
      %v3113 = vadd.f32 %v3111, %v3112
      %v3114 = vrot.slane %v3113, 1
      %v3115 = vadd.f32 %v3113, %v3114
      %s3116 = vtos %v3115
      %v3117 = vlaneseq
      %v3118 = vand.u32 %v3117, 127
      %vm3119 = vcmp.eq.s32.totalorder %v3118, 0
      %v3120 = vstv %s3000
      %v3121 = vsel %vm3119, %v3120, 0.0
      %vm3122 = vcmp.eq.s32.totalorder %v3118, 1
      %v3123 = vstv %s3116
      %v3124 = vsel %vm3122, %v3123, 0.0
      %v3125 = vadd.f32 %v3121, %v3124
      %vm3126 = vcmp.eq.s32.totalorder %v3118, 2
      %v3127 = vstv %s3092
      %v3128 = vsel %vm3126, %v3127, 0.0
      %v3129 = vadd.f32 %v3125, %v3128
      %3130 = vst [vmem:[%s268] sm:$0xff] %v3129
      %p3131 = scmp.lt.s32.totalorder %s16, 1
      %s3132 = scalar_select %p3131, %s16, 1
      %s3133 = smul.addr %s3132, 8
      %s3134 = scalar_lea.vmem %s5, %s3133
      // Predicated region
      $region41: #{fus_loss.3} parent=39 // pred_check
        %p3135 = pneg %p154
      $region42: #{fus_loss.3} parent=39 // pred_check_branch
        %3137 = sbr.rel (%p3135) target = $region44
      $region43: #{fus_loss.3} parent=39 // pred_region
        _
      $region44: #{fus_loss.3} parent=39 // pred_fallthru
        _
    $region40: #{fus_loss.3} parent=5 // pred_fallthru
      _
    %p3138 = scmp.le.s32.totalorder 2, %s11
    // Predicated region
    $region45: #{fus_loss.3} parent=5 // pred_check
      %p3139 = pneg %p3138
    $region46: #{fus_loss.3} parent=5 // pred_check_branch
      %3141 = sbr.rel (%p3139) target = $region48
    $region47: #{fus_loss.3} parent=5 // pred_region
      %s3142 = ssub.s32 %s11, 2
      // Predicated region
      $region49: #{fus_loss.3} parent=47 // pred_check
        %p3143 = pneg %p160
      $region50: #{fus_loss.3} parent=47 // pred_check_branch
        %3145 = sbr.rel (%p3143) target = $region52
      $region51: #{fus_loss.3} parent=47 // pred_region
        %p3146 = scmp.lt.s32.totalorder %s17, 1
        %s3147 = scalar_select %p3146, %s17, 1
        %s3148 = smul.addr %s3147, 8
        %s3149 = scalar_lea.vmem %s5, %s3148
      $region52: #{fus_loss.3} parent=47 // pred_fallthru
        _
    $region48: #{fus_loss.3} parent=5 // pred_fallthru
      _
  $region6: #{fus_loss.3} parent=0 // loop_footer
    %s15 = sadd.s32 1, %s11
  $region7: #{fus_loss.3} parent=0 // loop_footer_branch
    %10 = sbr.rel target = $region3
  $region8: #{fus_loss.3} parent=0 // loop_exit
    _

// kernel: fus_loss.2
$region0: #{fus_loss.2}
  #allocation0 [shape = 'u32[]', space=smem, size = 0x4, offset = 0x4, fixed_abs, tag = 'smem constant byte address 0x4 - core index']
  #allocation1 [shape = 'u32[144,128]{1,0:T(1,128)}', space=vmem, size = 0x12000, scoped, tag = 'internal scratch']
  %s0 = inlined_call_operand.vmem [shape: f32[8,8], index: 0, kind: input, shape index: {}, may-alias: {0,1}]
  %s1 = inlined_call_operand.vmem [shape: f32[8,8], index: 1, kind: input, shape index: {}, may-alias: {0,1}]
  %s2 = inlined_call_operand.vmem [shape: f32[8,8,8], index: 2, kind: input, shape index: {}]
  %s3 = inlined_call_operand.vmem [shape: f32[8,8,8], index: 3, kind: input, shape index: {}]
  %s4 = inlined_call_operand.vmem [shape: f32[8,8,8], index: 4, kind: input, shape index: {}]
  %s5 = inlined_call_operand.vmem [shape: f32[2,8,128], index: 5, kind: output, shape index: {}]
  %s6 = sld [smem:[#allocation0]]
  $region53: #{fus_loss.2} parent=0
    _
  %s8 = ssub.s32 1, %s6
  %s9 = scalar_select 0, %s8, %s6
  loop: start=0, step=1, limit=4
  $region2: #{fus_loss.2} parent=0 // loop_pre_header
    _
  $region3: #{fus_loss.2} parent=0 // loop_header
    %s11 = sphi 0, %s15
    %p12 = scmp.ge.s32.totalorder %s11, 4
    %s19 = sphi 0, %s19
    %s21 = sphi 0, %s19
    %s22 = sphi 0, %s21
    %s36 = sphi 0, %s22
    %s40 = sphi 0, %s40
    %s42 = sphi 0, %s40
    %s43 = sphi 0, %s42
    %s57 = sphi 0, %s43
    %s63 = sphi 0, %s65
    %s66 = sphi 0, %s63
    %s67 = sphi 0, %s66
    %s83 = sphi 0, %s67
    %s89 = sphi 0, %s91
    %s92 = sphi 0, %s89
    %s93 = sphi 0, %s92
    %s109 = sphi 0, %s93
    %s115 = sphi 0, %s117
    %s118 = sphi 0, %s115
    %s119 = sphi 0, %s118
    %s135 = sphi 0, %s119
    %s141 = sphi 0, %s143
    %s144 = sphi 0, %s141
    %s145 = sphi 0, %s144
    %s161 = sphi 0, %s145
  $region4: #{fus_loss.2} parent=0 // loop_header_branch
    %14 = sbr.rel (%p12) target = $region8
  $region5: #{fus_loss.2} parent=0 // loop_body
    %s16 = ssub.s32 %s11, 1
    %s17 = ssub.s32 %s11, 2
    %s18 = sadd.s32 %s11, 1
    %s20 = sadd.s32 %s19, 1
    %p23 = scmp.eq.s32.totalorder %s11, 1
    %p24 = scmp.ne.s32.totalorder %s19, %s21
    %p25 = scmp.eq.s32.totalorder %s11, 0
    %p26 = por %p24, %p25
    %p27 = scmp.ne.s32.totalorder %s19, %s21
    %p28 = scmp.eq.s32.totalorder %s16, 1
    %p29 = por %p27, %p28
    %p30 = scmp.ne.s32.totalorder %s21, %s22
    %p31 = scmp.eq.s32.totalorder %s16, 0
    %p32 = por %p30, %p31
    %p33 = scmp.ne.s32.totalorder %s21, %s22
    %p34 = scmp.eq.s32.totalorder %s17, 1
    %p35 = por %p33, %p34
    %p37 = scmp.ne.s32.totalorder %s22, %s36
    %p38 = scmp.eq.s32.totalorder %s17, 0
    %p39 = por %p37, %p38
    %s41 = sadd.s32 %s40, 1
    %p44 = scmp.eq.s32.totalorder %s11, 1
    %p45 = scmp.ne.s32.totalorder %s40, %s42
    %p46 = scmp.eq.s32.totalorder %s11, 0
    %p47 = por %p45, %p46
    %p48 = scmp.ne.s32.totalorder %s40, %s42
    %p49 = scmp.eq.s32.totalorder %s16, 1
    %p50 = por %p48, %p49
    %p51 = scmp.ne.s32.totalorder %s42, %s43
    %p52 = scmp.eq.s32.totalorder %s16, 0
    %p53 = por %p51, %p52
    %p54 = scmp.ne.s32.totalorder %s42, %s43
    %p55 = scmp.eq.s32.totalorder %s17, 1
    %p56 = por %p54, %p55
    %p58 = scmp.ne.s32.totalorder %s43, %s57
    %p59 = scmp.eq.s32.totalorder %s17, 0
    %p60 = por %p58, %p59
    %s61 = ssub.s32 %s11, %s18
    %p62 = scmp.eq.s32.totalorder %s61, 0
    %s64 = sadd.s32 %s63, 1
    %s65 = scalar_select %p62, %s63, %s64
    %p68 = pneg %p62
    %p69 = scmp.eq.s32.totalorder %s11, 1
    %p70 = por %p68, %p69
    %p71 = scmp.ne.s32.totalorder %s63, %s66
    %p72 = scmp.eq.s32.totalorder %s11, 0
    %p73 = por %p71, %p72
    %p74 = scmp.ne.s32.totalorder %s63, %s66
    %p75 = scmp.eq.s32.totalorder %s16, 1
    %p76 = por %p74, %p75
    %p77 = scmp.ne.s32.totalorder %s66, %s67
    %p78 = scmp.eq.s32.totalorder %s16, 0
    %p79 = por %p77, %p78
    %p80 = scmp.ne.s32.totalorder %s66, %s67
    %p81 = scmp.eq.s32.totalorder %s17, 1
    %p82 = por %p80, %p81
    %p84 = scmp.ne.s32.totalorder %s67, %s83
    %p85 = scmp.eq.s32.totalorder %s17, 0
    %p86 = por %p84, %p85
    %s87 = ssub.s32 %s11, %s18
    %p88 = scmp.eq.s32.totalorder %s87, 0
    %s90 = sadd.s32 %s89, 1
    %s91 = scalar_select %p88, %s89, %s90
    %p94 = pneg %p88
    %p95 = scmp.eq.s32.totalorder %s11, 1
    %p96 = por %p94, %p95
    %p97 = scmp.ne.s32.totalorder %s89, %s92
    %p98 = scmp.eq.s32.totalorder %s11, 0
    %p99 = por %p97, %p98
    %p100 = scmp.ne.s32.totalorder %s89, %s92
    %p101 = scmp.eq.s32.totalorder %s16, 1
    %p102 = por %p100, %p101
    %p103 = scmp.ne.s32.totalorder %s92, %s93
    %p104 = scmp.eq.s32.totalorder %s16, 0
    %p105 = por %p103, %p104
    %p106 = scmp.ne.s32.totalorder %s92, %s93
    %p107 = scmp.eq.s32.totalorder %s17, 1
    %p108 = por %p106, %p107
    %p110 = scmp.ne.s32.totalorder %s93, %s109
    %p111 = scmp.eq.s32.totalorder %s17, 0
    %p112 = por %p110, %p111
    %s113 = ssub.s32 %s11, %s18
    %p114 = scmp.eq.s32.totalorder %s113, 0
    %s116 = sadd.s32 %s115, 1
    %s117 = scalar_select %p114, %s115, %s116
    %p120 = pneg %p114
    %p121 = scmp.eq.s32.totalorder %s11, 1
    %p122 = por %p120, %p121
    %p123 = scmp.ne.s32.totalorder %s115, %s118
    %p124 = scmp.eq.s32.totalorder %s11, 0
    %p125 = por %p123, %p124
    %p126 = scmp.ne.s32.totalorder %s115, %s118
    %p127 = scmp.eq.s32.totalorder %s16, 1
    %p128 = por %p126, %p127
    %p129 = scmp.ne.s32.totalorder %s118, %s119
    %p130 = scmp.eq.s32.totalorder %s16, 0
    %p131 = por %p129, %p130
    %p132 = scmp.ne.s32.totalorder %s118, %s119
    %p133 = scmp.eq.s32.totalorder %s17, 1
    %p134 = por %p132, %p133
    %p136 = scmp.ne.s32.totalorder %s119, %s135
    %p137 = scmp.eq.s32.totalorder %s17, 0
    %p138 = por %p136, %p137
    %s139 = ssub.s32 %s11, %s18
    %p140 = scmp.eq.s32.totalorder %s139, 0
    %s142 = sadd.s32 %s141, 1
    %s143 = scalar_select %p140, %s141, %s142
    %p146 = pneg %p140
    %p147 = scmp.eq.s32.totalorder %s11, 1
    %p148 = por %p146, %p147
    %p149 = scmp.ne.s32.totalorder %s141, %s144
    %p150 = scmp.eq.s32.totalorder %s11, 0
    %p151 = por %p149, %p150
    %p152 = scmp.ne.s32.totalorder %s141, %s144
    %p153 = scmp.eq.s32.totalorder %s16, 1
    %p154 = por %p152, %p153
    %p155 = scmp.ne.s32.totalorder %s144, %s145
    %p156 = scmp.eq.s32.totalorder %s16, 0
    %p157 = por %p155, %p156
    %p158 = scmp.ne.s32.totalorder %s144, %s145
    %p159 = scmp.eq.s32.totalorder %s17, 1
    %p160 = por %p158, %p159
    %p162 = scmp.ne.s32.totalorder %s145, %s161
    %p163 = scmp.eq.s32.totalorder %s17, 0
    %p164 = por %p162, %p163
    %p165 = scmp.le.s32.totalorder 1, %s11
    %p166 = scmp.lt.s32.totalorder %s11, 3
    %p167 = pnand %p165, %p166
    %p168 = pneg %p167
    // Predicated region
    $region9: #{fus_loss.2} parent=5 // pred_check
      _
    $region10: #{fus_loss.2} parent=5 // pred_check_branch
      %170 = sbr.rel (%p167) target = $region12
    $region11: #{fus_loss.2} parent=5 // pred_region
      %s171 = ssub.s32 %s11, 1
      // Predicated region
      $region13: #{fus_loss.2} parent=11 // pred_check
        %p172 = pneg %p32
      $region14: #{fus_loss.2} parent=11 // pred_check_branch
        %174 = sbr.rel (%p172) target = $region16
      $region15: #{fus_loss.2} parent=11 // pred_region
        _
      $region16: #{fus_loss.2} parent=11 // pred_fallthru
        _
      // Predicated region
      $region17: #{fus_loss.2} parent=11 // pred_check
        %p175 = pneg %p53
      $region18: #{fus_loss.2} parent=11 // pred_check_branch
        %177 = sbr.rel (%p175) target = $region20
      $region19: #{fus_loss.2} parent=11 // pred_region
        _
      $region20: #{fus_loss.2} parent=11 // pred_fallthru
        _
    $region12: #{fus_loss.2} parent=5 // pred_fallthru
      _
    %p178 = scmp.lt.s32.totalorder %s11, 2
    // Predicated region
    $region21: #{fus_loss.2} parent=5 // pred_check
      %p179 = pneg %p178
    $region22: #{fus_loss.2} parent=5 // pred_check_branch
      %181 = sbr.rel (%p179) target = $region24
    $region23: #{fus_loss.2} parent=5 // pred_region
      // Predicated region
      $region25: #{fus_loss.2} parent=23 // pred_check
        %p182 = pneg %p73
      $region26: #{fus_loss.2} parent=23 // pred_check_branch
        %184 = sbr.rel (%p182) target = $region28
      $region27: #{fus_loss.2} parent=23 // pred_region
        %s185 = smul.u32 4, %s11
        %p186 = scmp.lt.s32.totalorder %s185, 7
        %s187 = scalar_select %p186, %s185, 7
        %s188 = smul.addr %s187, 8
        %s189 = scalar_lea.vmem %s2, %s188
        %s190 = smul.u32 4, %s11
      $region28: #{fus_loss.2} parent=23 // pred_fallthru
        _
      // Predicated region
      $region29: #{fus_loss.2} parent=23 // pred_check
        %p191 = pneg %p99
      $region30: #{fus_loss.2} parent=23 // pred_check_branch
        %193 = sbr.rel (%p191) target = $region32
      $region31: #{fus_loss.2} parent=23 // pred_region
        %s194 = smul.u32 4, %s11
        %p195 = scmp.lt.s32.totalorder %s194, 7
        %s196 = scalar_select %p195, %s194, 7
        %s197 = smul.addr %s196, 8
        %s198 = scalar_lea.vmem %s3, %s197
        %s199 = smul.u32 4, %s11
      $region32: #{fus_loss.2} parent=23 // pred_fallthru
        _
      // Predicated region
      $region33: #{fus_loss.2} parent=23 // pred_check
        %p200 = pneg %p125
      $region34: #{fus_loss.2} parent=23 // pred_check_branch
        %202 = sbr.rel (%p200) target = $region36
      $region35: #{fus_loss.2} parent=23 // pred_region
        %s203 = smul.u32 4, %s11
        %p204 = scmp.lt.s32.totalorder %s203, 7
        %s205 = scalar_select %p204, %s203, 7
        %s206 = smul.addr %s205, 8
        %s207 = scalar_lea.vmem %s4, %s206
        %s208 = smul.u32 4, %s11
      $region36: #{fus_loss.2} parent=23 // pred_fallthru
        _
    $region24: #{fus_loss.2} parent=5 // pred_fallthru
      _
    %p209 = scmp.le.s32.totalorder 1, %s11
    %p210 = scmp.lt.s32.totalorder %s11, 3
    %p211 = pnand %p209, %p210
    %p212 = pneg %p211
    // Predicated region
    $region37: #{fus_loss.2} parent=5 // pred_check
      _
    $region38: #{fus_loss.2} parent=5 // pred_check_branch
      %214 = sbr.rel (%p211) target = $region40
    $region39: #{fus_loss.2} parent=5 // pred_region
      %s215 = ssub.s32 %s11, 1
      %p216 = pneg %p32
      %p217 = pneg %p29
      %p218 = pneg %p53
      %p219 = pneg %p50
      %s220 = smul.u32 4, %s16
      %p221 = scmp.lt.s32.totalorder %s220, 7
      %s222 = scalar_select %p221, %s220, 7
      %s223 = smul.addr %s222, 8
      %s224 = scalar_lea.vmem %s2, %s223
      %p225 = pneg %p79
      %p226 = pneg %p76
      %s227 = smul.u32 4, %s16
      %p228 = scmp.lt.s32.totalorder %s227, 7
      %s229 = scalar_select %p228, %s227, 7
      %s230 = smul.addr %s229, 8
      %s231 = scalar_lea.vmem %s3, %s230
      %p232 = pneg %p105
      %p233 = pneg %p102
      %s234 = smul.u32 4, %s16
      %p235 = scmp.lt.s32.totalorder %s234, 7
      %s236 = scalar_select %p235, %s234, 7
      %s237 = smul.addr %s236, 8
      %s238 = scalar_lea.vmem %s4, %s237
      %p239 = pneg %p131
      %p240 = pneg %p128
      %p241 = pneg %p157
      %p242 = pneg %p154
      %p243 = scmp.lt.s32.totalorder %s16, 1
      %s244 = scalar_select %p243, %s16, 1
      %s245 = smul.addr %s244, 8
      %s246 = scalar_lea.vmem %s5, %s245
      %s247 = smul.u32 4, %s16
      %p248 = scmp.lt.s32.totalorder %s247, 7
      %s249 = scalar_select %p248, %s247, 7
      %s250 = smul.addr %s249, 8
      %s251 = scalar_lea.vmem %s2, %s250
      %s252 = smul.u32 4, %s16
      %s253 = smul.u32 4, %s16
      %p254 = scmp.lt.s32.totalorder %s253, 7
      %s255 = scalar_select %p254, %s253, 7
      %s256 = smul.addr %s255, 8
      %s257 = scalar_lea.vmem %s3, %s256
      %s258 = smul.u32 4, %s16
      %s259 = smul.u32 4, %s16
      %p260 = scmp.lt.s32.totalorder %s259, 7
      %s261 = scalar_select %p260, %s259, 7
      %s262 = smul.addr %s261, 8
      %s263 = scalar_lea.vmem %s4, %s262
      %s264 = smul.u32 4, %s16
      %p265 = scmp.lt.s32.totalorder %s16, 1
      %s266 = scalar_select %p265, %s16, 1
      %s267 = smul.addr %s266, 8
      %s268 = scalar_lea.vmem %s5, %s267
      %v270 = vld [vmem:[%s0] sm:$0xff]
      %v271 = vld [vmem:[%s1] sm:$0xff]
      %v272 = vld [vmem:[%s251] sm:$0xff]
      %v273 = vld [vmem:[%s251 + $0x8] sm:$0xff]
      %v274 = vld [vmem:[%s251 + $0x10] sm:$0xff]
      %v275 = vld [vmem:[%s251 + $0x18] sm:$0xff]
      %v276 = vld [vmem:[%s257] sm:$0xff]
      %v277 = vld [vmem:[%s257 + $0x8] sm:$0xff]
      %v278 = vld [vmem:[%s257 + $0x10] sm:$0xff]
      %v279 = vld [vmem:[%s257 + $0x18] sm:$0xff]
      %v280 = vld [vmem:[%s263] sm:$0xff]
      %v281 = vld [vmem:[%s263 + $0x8] sm:$0xff]
      %v282 = vld [vmem:[%s263 + $0x10] sm:$0xff]
      %v283 = vld [vmem:[%s263 + $0x18] sm:$0xff]
      %v284 = vpack.c.bf16 %v271, %v271
      %v285 = vpack.c.bf16 %v270, %v270
      %v286 = vpack.c.bf16 %v273, %v272
      %v287 = vpack.c.bf16 %v275, %v274
      %vm288 = vcmask 64512
      %v290 = vsel %vm288, %v286, 0
      %v293 = vsel %vm288, %v287, 0
      %vm295 = vcmask 1043456
      %v297 = vsel %vm295, %v284, 0
      %299 = vmatprep.subr.bf16.mxu0 0
      %300 = vmatpush1.bf16.msra.mxu0 %v297
      %301 = vmatprep.subr.bf16.mxu0 0
      %302 = vmatpush1.bf16.msra.mxu0 0
      %303 = vmatprep.subr.bf16.mxu0 0
      %304 = vmatpush1.bf16.msra.mxu0 0
      %305 = vmatprep.subr.bf16.mxu0 0
      %306 = vmatpush1.bf16.msra.mxu0 0
      %307 = vmatprep.subr.bf16.mxu0 0
      %308 = vmatpush1.bf16.msra.mxu0 0
      %309 = vmatprep.subr.bf16.mxu0 0
      %310 = vmatpush1.bf16.msra.mxu0 0
      %311 = vmatprep.subr.bf16.mxu0 0
      %312 = vmatpush1.bf16.msra.mxu0 0
      %313 = vmatprep.subr.bf16.mxu0 0
      %314 = vmatpush1.bf16.msra.mxu0 0
      %315 = vmatprep.subr.bf16.mxu0 0
      %316 = vmatpush1.bf16.msra.mxu0 0
      %317 = vmatprep.subr.bf16.mxu0 0
      %318 = vmatpush1.bf16.msra.mxu0 0
      %319 = vmatprep.subr.bf16.mxu0 0
      %320 = vmatpush1.bf16.msra.mxu0 0
      %321 = vmatprep.subr.bf16.mxu0 0
      %322 = vmatpush1.bf16.msra.mxu0 0
      %323 = vmatprep.subr.bf16.mxu0 0
      %324 = vmatpush1.bf16.msra.mxu0 0
      %325 = vmatprep.subr.bf16.mxu0 0
      %326 = vmatpush1.bf16.msra.mxu0 0
      %327 = vmatprep.subr.bf16.mxu0 0
      %328 = vmatpush1.bf16.msra.mxu0 0
      %329 = vmatprep.subr.bf16.mxu0 0
      %330 = vmatpush1.bf16.msra.mxu0 0
      %331 = vmatprep.mubr.bf16.mxu0 0
      %332 = vmatmul.mubr.bf16.gmra.mrb[0].mxu0 %v290
      %v333 = vpop.f32.mrb[0].mxu0
      %v334 = vadd.f32 0.0, %v333
      %v335 = vpop.f32.mrb[0].mxu0
      %v336 = vpop.f32.mrb[0].mxu0
      %v337 = vadd.f32 0.0, %v336
      %v338 = vpop.f32.mrb[0].mxu0
      %339 = vmatprep.mubr.bf16.mxu0 0
      %340 = vmatmul.mubr.bf16.gmra.mrb[0].mxu0 %v293
      %v341 = vpop.f32.mrb[0].mxu0
      %v342 = vadd.f32 0.0, %v341
      %v343 = vpop.f32.mrb[0].mxu0
      %v344 = vpop.f32.mrb[0].mxu0
      %v345 = vadd.f32 0.0, %v344
      %v346 = vpop.f32.mrb[0].mxu0
      %347 = vdwg.mxu0
      %v348 = vpack.c.bf16 %v334, %v334
      %v349 = vpack.c.bf16 %v337, %v337
      %v350 = vpack.c.bf16 %v342, %v342
      %v351 = vpack.c.bf16 %v345, %v345
      %v353 = vsel %vm288, %v285, 0
      %v356 = vsel %vm295, %v348, 0
      %358 = vmatprep.subr.bf16.mxu0 0
      %359 = vmatpush1.bf16.msra.mxu0 %v356
      %360 = vmatprep.subr.bf16.mxu0 0
      %361 = vmatpush1.bf16.msra.mxu0 0
      %362 = vmatprep.subr.bf16.mxu0 0
      %363 = vmatpush1.bf16.msra.mxu0 0
      %364 = vmatprep.subr.bf16.mxu0 0
      %365 = vmatpush1.bf16.msra.mxu0 0
      %366 = vmatprep.subr.bf16.mxu0 0
      %367 = vmatpush1.bf16.msra.mxu0 0
      %368 = vmatprep.subr.bf16.mxu0 0
      %369 = vmatpush1.bf16.msra.mxu0 0
      %370 = vmatprep.subr.bf16.mxu0 0
      %371 = vmatpush1.bf16.msra.mxu0 0
      %372 = vmatprep.subr.bf16.mxu0 0
      %373 = vmatpush1.bf16.msra.mxu0 0
      %374 = vmatprep.subr.bf16.mxu0 0
      %375 = vmatpush1.bf16.msra.mxu0 0
      %376 = vmatprep.subr.bf16.mxu0 0
      %377 = vmatpush1.bf16.msra.mxu0 0
      %378 = vmatprep.subr.bf16.mxu0 0
      %379 = vmatpush1.bf16.msra.mxu0 0
      %380 = vmatprep.subr.bf16.mxu0 0
      %381 = vmatpush1.bf16.msra.mxu0 0
      %382 = vmatprep.subr.bf16.mxu0 0
      %383 = vmatpush1.bf16.msra.mxu0 0
      %384 = vmatprep.subr.bf16.mxu0 0
      %385 = vmatpush1.bf16.msra.mxu0 0
      %386 = vmatprep.subr.bf16.mxu0 0
      %387 = vmatpush1.bf16.msra.mxu0 0
      %388 = vmatprep.subr.bf16.mxu0 0
      %389 = vmatpush1.bf16.msra.mxu0 0
      %390 = vmatprep.mubr.bf16.mxu0 0
      %391 = vmatmul.mubr.bf16.gmra.mrb[0].mxu0 %v353
      %v392 = vpop.f32.mrb[0].mxu0
      %v393 = vadd.f32 0.0, %v392
      %v394 = vpop.f32.mrb[0].mxu0
      %v395 = vpop.f32.mrb[0].mxu0
      %v396 = vpop.f32.mrb[0].mxu0
      %397 = vdwg.mxu0
      %v399 = vsel %vm295, %v349, 0
      %401 = vmatprep.subr.bf16.mxu0 0
      %402 = vmatpush1.bf16.msra.mxu0 %v399
      %403 = vmatprep.subr.bf16.mxu0 0
      %404 = vmatpush1.bf16.msra.mxu0 0
      %405 = vmatprep.subr.bf16.mxu0 0
      %406 = vmatpush1.bf16.msra.mxu0 0
      %407 = vmatprep.subr.bf16.mxu0 0
      %408 = vmatpush1.bf16.msra.mxu0 0
      %409 = vmatprep.subr.bf16.mxu0 0
      %410 = vmatpush1.bf16.msra.mxu0 0
      %411 = vmatprep.subr.bf16.mxu0 0
      %412 = vmatpush1.bf16.msra.mxu0 0
      %413 = vmatprep.subr.bf16.mxu0 0
      %414 = vmatpush1.bf16.msra.mxu0 0
      %415 = vmatprep.subr.bf16.mxu0 0
      %416 = vmatpush1.bf16.msra.mxu0 0
      %417 = vmatprep.subr.bf16.mxu0 0
      %418 = vmatpush1.bf16.msra.mxu0 0
      %419 = vmatprep.subr.bf16.mxu0 0
      %420 = vmatpush1.bf16.msra.mxu0 0
      %421 = vmatprep.subr.bf16.mxu0 0
      %422 = vmatpush1.bf16.msra.mxu0 0
      %423 = vmatprep.subr.bf16.mxu0 0
      %424 = vmatpush1.bf16.msra.mxu0 0
      %425 = vmatprep.subr.bf16.mxu0 0
      %426 = vmatpush1.bf16.msra.mxu0 0
      %427 = vmatprep.subr.bf16.mxu0 0
      %428 = vmatpush1.bf16.msra.mxu0 0
      %429 = vmatprep.subr.bf16.mxu0 0
      %430 = vmatpush1.bf16.msra.mxu0 0
      %431 = vmatprep.subr.bf16.mxu0 0
      %432 = vmatpush1.bf16.msra.mxu0 0
      %433 = vmatprep.mubr.bf16.mxu0 0
      %434 = vmatmul.mubr.bf16.gmra.mrb[0].mxu0 %v353
      %v435 = vpop.f32.mrb[0].mxu0
      %v436 = vadd.f32 0.0, %v435
      %v437 = vpop.f32.mrb[0].mxu0
      %v438 = vpop.f32.mrb[0].mxu0
      %v439 = vpop.f32.mrb[0].mxu0
      %440 = vdwg.mxu0
      %v442 = vsel %vm295, %v350, 0
      %444 = vmatprep.subr.bf16.mxu0 0
      %445 = vmatpush1.bf16.msra.mxu0 %v442
      %446 = vmatprep.subr.bf16.mxu0 0
      %447 = vmatpush1.bf16.msra.mxu0 0
      %448 = vmatprep.subr.bf16.mxu0 0
      %449 = vmatpush1.bf16.msra.mxu0 0
      %450 = vmatprep.subr.bf16.mxu0 0
      %451 = vmatpush1.bf16.msra.mxu0 0
      %452 = vmatprep.subr.bf16.mxu0 0
      %453 = vmatpush1.bf16.msra.mxu0 0
      %454 = vmatprep.subr.bf16.mxu0 0
      %455 = vmatpush1.bf16.msra.mxu0 0
      %456 = vmatprep.subr.bf16.mxu0 0
      %457 = vmatpush1.bf16.msra.mxu0 0
      %458 = vmatprep.subr.bf16.mxu0 0
      %459 = vmatpush1.bf16.msra.mxu0 0
      %460 = vmatprep.subr.bf16.mxu0 0
      %461 = vmatpush1.bf16.msra.mxu0 0
      %462 = vmatprep.subr.bf16.mxu0 0
      %463 = vmatpush1.bf16.msra.mxu0 0
      %464 = vmatprep.subr.bf16.mxu0 0
      %465 = vmatpush1.bf16.msra.mxu0 0
      %466 = vmatprep.subr.bf16.mxu0 0
      %467 = vmatpush1.bf16.msra.mxu0 0
      %468 = vmatprep.subr.bf16.mxu0 0
      %469 = vmatpush1.bf16.msra.mxu0 0
      %470 = vmatprep.subr.bf16.mxu0 0
      %471 = vmatpush1.bf16.msra.mxu0 0
      %472 = vmatprep.subr.bf16.mxu0 0
      %473 = vmatpush1.bf16.msra.mxu0 0
      %474 = vmatprep.subr.bf16.mxu0 0
      %475 = vmatpush1.bf16.msra.mxu0 0
      %476 = vmatprep.mubr.bf16.mxu0 0
      %477 = vmatmul.mubr.bf16.gmra.mrb[0].mxu0 %v353
      %v478 = vpop.f32.mrb[0].mxu0
      %v479 = vadd.f32 0.0, %v478
      %v480 = vpop.f32.mrb[0].mxu0
      %v481 = vpop.f32.mrb[0].mxu0
      %v482 = vpop.f32.mrb[0].mxu0
      %483 = vdwg.mxu0
      %v485 = vsel %vm295, %v351, 0
      %487 = vmatprep.subr.bf16.mxu0 0
      %488 = vmatpush1.bf16.msra.mxu0 %v485
      %489 = vmatprep.subr.bf16.mxu0 0
      %490 = vmatpush1.bf16.msra.mxu0 0
      %491 = vmatprep.subr.bf16.mxu0 0
      %492 = vmatpush1.bf16.msra.mxu0 0
      %493 = vmatprep.subr.bf16.mxu0 0
      %494 = vmatpush1.bf16.msra.mxu0 0
      %495 = vmatprep.subr.bf16.mxu0 0
      %496 = vmatpush1.bf16.msra.mxu0 0
      %497 = vmatprep.subr.bf16.mxu0 0
      %498 = vmatpush1.bf16.msra.mxu0 0
      %499 = vmatprep.subr.bf16.mxu0 0
      %500 = vmatpush1.bf16.msra.mxu0 0
      %501 = vmatprep.subr.bf16.mxu0 0
      %502 = vmatpush1.bf16.msra.mxu0 0
      %503 = vmatprep.subr.bf16.mxu0 0
      %504 = vmatpush1.bf16.msra.mxu0 0
      %505 = vmatprep.subr.bf16.mxu0 0
      %506 = vmatpush1.bf16.msra.mxu0 0
      %507 = vmatprep.subr.bf16.mxu0 0
      %508 = vmatpush1.bf16.msra.mxu0 0
      %509 = vmatprep.subr.bf16.mxu0 0
      %510 = vmatpush1.bf16.msra.mxu0 0
      %511 = vmatprep.subr.bf16.mxu0 0
      %512 = vmatpush1.bf16.msra.mxu0 0
      %513 = vmatprep.subr.bf16.mxu0 0
      %514 = vmatpush1.bf16.msra.mxu0 0
      %515 = vmatprep.subr.bf16.mxu0 0
      %516 = vmatpush1.bf16.msra.mxu0 0
      %517 = vmatprep.subr.bf16.mxu0 0
      %518 = vmatpush1.bf16.msra.mxu0 0
      %519 = vmatprep.mubr.bf16.mxu0 0
      %520 = vmatmul.mubr.bf16.gmra.mrb[0].mxu0 %v353
      %v521 = vpop.f32.mrb[0].mxu0
      %v522 = vadd.f32 0.0, %v521
      %v523 = vpop.f32.mrb[0].mxu0
      %v524 = vpop.f32.mrb[0].mxu0
      %v525 = vpop.f32.mrb[0].mxu0
      %526 = vdwg.mxu0
      %v527 = vpack.c.bf16 %v277, %v276
      %v528 = vpack.c.bf16 %v279, %v278
      %v530 = vsel %vm288, %v527, 0
      %v533 = vsel %vm288, %v528, 0
      %535 = vmatprep.subr.bf16.mxu0 0
      %536 = vmatpush1.bf16.msra.mxu0 %v297
      %537 = vmatprep.subr.bf16.mxu0 0
      %538 = vmatpush1.bf16.msra.mxu0 0
      %539 = vmatprep.subr.bf16.mxu0 0
      %540 = vmatpush1.bf16.msra.mxu0 0
      %541 = vmatprep.subr.bf16.mxu0 0
      %542 = vmatpush1.bf16.msra.mxu0 0
      %543 = vmatprep.subr.bf16.mxu0 0
      %544 = vmatpush1.bf16.msra.mxu0 0
      %545 = vmatprep.subr.bf16.mxu0 0
      %546 = vmatpush1.bf16.msra.mxu0 0
      %547 = vmatprep.subr.bf16.mxu0 0
      %548 = vmatpush1.bf16.msra.mxu0 0
      %549 = vmatprep.subr.bf16.mxu0 0
      %550 = vmatpush1.bf16.msra.mxu0 0
      %551 = vmatprep.subr.bf16.mxu0 0
      %552 = vmatpush1.bf16.msra.mxu0 0
      %553 = vmatprep.subr.bf16.mxu0 0
      %554 = vmatpush1.bf16.msra.mxu0 0
      %555 = vmatprep.subr.bf16.mxu0 0
      %556 = vmatpush1.bf16.msra.mxu0 0
      %557 = vmatprep.subr.bf16.mxu0 0
      %558 = vmatpush1.bf16.msra.mxu0 0
      %559 = vmatprep.subr.bf16.mxu0 0
      %560 = vmatpush1.bf16.msra.mxu0 0
      %561 = vmatprep.subr.bf16.mxu0 0
      %562 = vmatpush1.bf16.msra.mxu0 0
      %563 = vmatprep.subr.bf16.mxu0 0
      %564 = vmatpush1.bf16.msra.mxu0 0
      %565 = vmatprep.subr.bf16.mxu0 0
      %566 = vmatpush1.bf16.msra.mxu0 0
      %567 = vmatprep.mubr.bf16.mxu0 0
      %568 = vmatmul.mubr.bf16.gmra.mrb[0].mxu0 %v530
      %v569 = vpop.f32.mrb[0].mxu0
      %v570 = vadd.f32 0.0, %v569
      %v571 = vpop.f32.mrb[0].mxu0
      %v572 = vpop.f32.mrb[0].mxu0
      %v573 = vadd.f32 0.0, %v572
      %v574 = vpop.f32.mrb[0].mxu0
      %575 = vmatprep.mubr.bf16.mxu0 0
      %576 = vmatmul.mubr.bf16.gmra.mrb[0].mxu0 %v533
      %v577 = vpop.f32.mrb[0].mxu0
      %v578 = vadd.f32 0.0, %v577
      %v579 = vpop.f32.mrb[0].mxu0
      %v580 = vpop.f32.mrb[0].mxu0
      %v581 = vadd.f32 0.0, %v580
      %v582 = vpop.f32.mrb[0].mxu0
      %583 = vdwg.mxu0
      %v584 = vpack.c.bf16 %v570, %v570
      %v585 = vpack.c.bf16 %v573, %v573
      %v586 = vpack.c.bf16 %v578, %v578
      %v587 = vpack.c.bf16 %v581, %v581
      %v589 = vsel %vm295, %v584, 0
      %591 = vmatprep.subr.bf16.mxu0 0
      %592 = vmatpush1.bf16.msra.mxu0 %v589
      %593 = vmatprep.subr.bf16.mxu0 0
      %594 = vmatpush1.bf16.msra.mxu0 0
      %595 = vmatprep.subr.bf16.mxu0 0
      %596 = vmatpush1.bf16.msra.mxu0 0
      %597 = vmatprep.subr.bf16.mxu0 0
      %598 = vmatpush1.bf16.msra.mxu0 0
      %599 = vmatprep.subr.bf16.mxu0 0
      %600 = vmatpush1.bf16.msra.mxu0 0
      %601 = vmatprep.subr.bf16.mxu0 0
      %602 = vmatpush1.bf16.msra.mxu0 0
      %603 = vmatprep.subr.bf16.mxu0 0
      %604 = vmatpush1.bf16.msra.mxu0 0
      %605 = vmatprep.subr.bf16.mxu0 0
      %606 = vmatpush1.bf16.msra.mxu0 0
      %607 = vmatprep.subr.bf16.mxu0 0
      %608 = vmatpush1.bf16.msra.mxu0 0
      %609 = vmatprep.subr.bf16.mxu0 0
      %610 = vmatpush1.bf16.msra.mxu0 0
      %611 = vmatprep.subr.bf16.mxu0 0
      %612 = vmatpush1.bf16.msra.mxu0 0
      %613 = vmatprep.subr.bf16.mxu0 0
      %614 = vmatpush1.bf16.msra.mxu0 0
      %615 = vmatprep.subr.bf16.mxu0 0
      %616 = vmatpush1.bf16.msra.mxu0 0
      %617 = vmatprep.subr.bf16.mxu0 0
      %618 = vmatpush1.bf16.msra.mxu0 0
      %619 = vmatprep.subr.bf16.mxu0 0
      %620 = vmatpush1.bf16.msra.mxu0 0
      %621 = vmatprep.subr.bf16.mxu0 0
      %622 = vmatpush1.bf16.msra.mxu0 0
      %623 = vmatprep.mubr.bf16.mxu0 0
      %624 = vmatmul.mubr.bf16.gmra.mrb[0].mxu0 %v353
      %v625 = vpop.f32.mrb[0].mxu0
      %v626 = vadd.f32 0.0, %v625
      %v627 = vpop.f32.mrb[0].mxu0
      %v628 = vpop.f32.mrb[0].mxu0
      %v629 = vpop.f32.mrb[0].mxu0
      %630 = vdwg.mxu0
      %v632 = vsel %vm295, %v585, 0
      %634 = vmatprep.subr.bf16.mxu0 0
      %635 = vmatpush1.bf16.msra.mxu0 %v632
      %636 = vmatprep.subr.bf16.mxu0 0
      %637 = vmatpush1.bf16.msra.mxu0 0
      %638 = vmatprep.subr.bf16.mxu0 0
      %639 = vmatpush1.bf16.msra.mxu0 0
      %640 = vmatprep.subr.bf16.mxu0 0
      %641 = vmatpush1.bf16.msra.mxu0 0
      %642 = vmatprep.subr.bf16.mxu0 0
      %643 = vmatpush1.bf16.msra.mxu0 0
      %644 = vmatprep.subr.bf16.mxu0 0
      %645 = vmatpush1.bf16.msra.mxu0 0
      %646 = vmatprep.subr.bf16.mxu0 0
      %647 = vmatpush1.bf16.msra.mxu0 0
      %648 = vmatprep.subr.bf16.mxu0 0
      %649 = vmatpush1.bf16.msra.mxu0 0
      %650 = vmatprep.subr.bf16.mxu0 0
      %651 = vmatpush1.bf16.msra.mxu0 0
      %652 = vmatprep.subr.bf16.mxu0 0
      %653 = vmatpush1.bf16.msra.mxu0 0
      %654 = vmatprep.subr.bf16.mxu0 0
      %655 = vmatpush1.bf16.msra.mxu0 0
      %656 = vmatprep.subr.bf16.mxu0 0
      %657 = vmatpush1.bf16.msra.mxu0 0
      %658 = vmatprep.subr.bf16.mxu0 0
      %659 = vmatpush1.bf16.msra.mxu0 0
      %660 = vmatprep.subr.bf16.mxu0 0
      %661 = vmatpush1.bf16.msra.mxu0 0
      %662 = vmatprep.subr.bf16.mxu0 0
      %663 = vmatpush1.bf16.msra.mxu0 0
      %664 = vmatprep.subr.bf16.mxu0 0
      %665 = vmatpush1.bf16.msra.mxu0 0
      %666 = vmatprep.mubr.bf16.mxu0 0
      %667 = vmatmul.mubr.bf16.gmra.mrb[0].mxu0 %v353
      %v668 = vpop.f32.mrb[0].mxu0
      %v669 = vadd.f32 0.0, %v668
      %v670 = vpop.f32.mrb[0].mxu0
      %v671 = vpop.f32.mrb[0].mxu0
      %v672 = vpop.f32.mrb[0].mxu0
      %673 = vdwg.mxu0
      %v675 = vsel %vm295, %v586, 0
      %677 = vmatprep.subr.bf16.mxu0 0
      %678 = vmatpush1.bf16.msra.mxu0 %v675
      %679 = vmatprep.subr.bf16.mxu0 0
      %680 = vmatpush1.bf16.msra.mxu0 0
      %681 = vmatprep.subr.bf16.mxu0 0
      %682 = vmatpush1.bf16.msra.mxu0 0
      %683 = vmatprep.subr.bf16.mxu0 0
      %684 = vmatpush1.bf16.msra.mxu0 0
      %685 = vmatprep.subr.bf16.mxu0 0
      %686 = vmatpush1.bf16.msra.mxu0 0
      %687 = vmatprep.subr.bf16.mxu0 0
      %688 = vmatpush1.bf16.msra.mxu0 0
      %689 = vmatprep.subr.bf16.mxu0 0
      %690 = vmatpush1.bf16.msra.mxu0 0
      %691 = vmatprep.subr.bf16.mxu0 0
      %692 = vmatpush1.bf16.msra.mxu0 0
      %693 = vmatprep.subr.bf16.mxu0 0
      %694 = vmatpush1.bf16.msra.mxu0 0
      %695 = vmatprep.subr.bf16.mxu0 0
      %696 = vmatpush1.bf16.msra.mxu0 0
      %697 = vmatprep.subr.bf16.mxu0 0
      %698 = vmatpush1.bf16.msra.mxu0 0
      %699 = vmatprep.subr.bf16.mxu0 0
      %700 = vmatpush1.bf16.msra.mxu0 0
      %701 = vmatprep.subr.bf16.mxu0 0
      %702 = vmatpush1.bf16.msra.mxu0 0
      %703 = vmatprep.subr.bf16.mxu0 0
      %704 = vmatpush1.bf16.msra.mxu0 0
      %705 = vmatprep.subr.bf16.mxu0 0
      %706 = vmatpush1.bf16.msra.mxu0 0
      %707 = vmatprep.subr.bf16.mxu0 0
      %708 = vmatpush1.bf16.msra.mxu0 0
      %709 = vmatprep.mubr.bf16.mxu0 0
      %710 = vmatmul.mubr.bf16.gmra.mrb[0].mxu0 %v353
      %v711 = vpop.f32.mrb[0].mxu0
      %v712 = vadd.f32 0.0, %v711
      %v713 = vpop.f32.mrb[0].mxu0
      %v714 = vpop.f32.mrb[0].mxu0
      %v715 = vpop.f32.mrb[0].mxu0
      %716 = vdwg.mxu0
      %v718 = vsel %vm295, %v587, 0
      %720 = vmatprep.subr.bf16.mxu0 0
      %721 = vmatpush1.bf16.msra.mxu0 %v718
      %722 = vmatprep.subr.bf16.mxu0 0
      %723 = vmatpush1.bf16.msra.mxu0 0
      %724 = vmatprep.subr.bf16.mxu0 0
      %725 = vmatpush1.bf16.msra.mxu0 0
      %726 = vmatprep.subr.bf16.mxu0 0
      %727 = vmatpush1.bf16.msra.mxu0 0
      %728 = vmatprep.subr.bf16.mxu0 0
      %729 = vmatpush1.bf16.msra.mxu0 0
      %730 = vmatprep.subr.bf16.mxu0 0
      %731 = vmatpush1.bf16.msra.mxu0 0
      %732 = vmatprep.subr.bf16.mxu0 0
      %733 = vmatpush1.bf16.msra.mxu0 0
      %734 = vmatprep.subr.bf16.mxu0 0
      %735 = vmatpush1.bf16.msra.mxu0 0
      %736 = vmatprep.subr.bf16.mxu0 0
      %737 = vmatpush1.bf16.msra.mxu0 0
      %738 = vmatprep.subr.bf16.mxu0 0
      %739 = vmatpush1.bf16.msra.mxu0 0
      %740 = vmatprep.subr.bf16.mxu0 0
      %741 = vmatpush1.bf16.msra.mxu0 0
      %742 = vmatprep.subr.bf16.mxu0 0
      %743 = vmatpush1.bf16.msra.mxu0 0
      %744 = vmatprep.subr.bf16.mxu0 0
      %745 = vmatpush1.bf16.msra.mxu0 0
      %746 = vmatprep.subr.bf16.mxu0 0
      %747 = vmatpush1.bf16.msra.mxu0 0
      %748 = vmatprep.subr.bf16.mxu0 0
      %749 = vmatpush1.bf16.msra.mxu0 0
      %750 = vmatprep.subr.bf16.mxu0 0
      %751 = vmatpush1.bf16.msra.mxu0 0
      %752 = vmatprep.mubr.bf16.mxu0 0
      %753 = vmatmul.mubr.bf16.gmra.mrb[0].mxu0 %v353
      %v754 = vpop.f32.mrb[0].mxu0
      %v755 = vadd.f32 0.0, %v754
      %v756 = vpop.f32.mrb[0].mxu0
      %v757 = vpop.f32.mrb[0].mxu0
      %v758 = vpop.f32.mrb[0].mxu0
      %759 = vdwg.mxu0
      %v760 = vpack.c.bf16 %v281, %v280
      %v761 = vpack.c.bf16 %v283, %v282
      %v763 = vsel %vm288, %v760, 0
      %v766 = vsel %vm288, %v761, 0
      %768 = vmatprep.subr.bf16.mxu0 0
      %769 = vmatpush1.bf16.msra.mxu0 %v297
      %770 = vmatprep.subr.bf16.mxu0 0
      %771 = vmatpush1.bf16.msra.mxu0 0
      %772 = vmatprep.subr.bf16.mxu0 0
      %773 = vmatpush1.bf16.msra.mxu0 0
      %774 = vmatprep.subr.bf16.mxu0 0
      %775 = vmatpush1.bf16.msra.mxu0 0
      %776 = vmatprep.subr.bf16.mxu0 0
      %777 = vmatpush1.bf16.msra.mxu0 0
      %778 = vmatprep.subr.bf16.mxu0 0
      %779 = vmatpush1.bf16.msra.mxu0 0
      %780 = vmatprep.subr.bf16.mxu0 0
      %781 = vmatpush1.bf16.msra.mxu0 0
      %782 = vmatprep.subr.bf16.mxu0 0
      %783 = vmatpush1.bf16.msra.mxu0 0
      %784 = vmatprep.subr.bf16.mxu0 0
      %785 = vmatpush1.bf16.msra.mxu0 0
      %786 = vmatprep.subr.bf16.mxu0 0
      %787 = vmatpush1.bf16.msra.mxu0 0
      %788 = vmatprep.subr.bf16.mxu0 0
      %789 = vmatpush1.bf16.msra.mxu0 0
      %790 = vmatprep.subr.bf16.mxu0 0
      %791 = vmatpush1.bf16.msra.mxu0 0
      %792 = vmatprep.subr.bf16.mxu0 0
      %793 = vmatpush1.bf16.msra.mxu0 0
      %794 = vmatprep.subr.bf16.mxu0 0
      %795 = vmatpush1.bf16.msra.mxu0 0
      %796 = vmatprep.subr.bf16.mxu0 0
      %797 = vmatpush1.bf16.msra.mxu0 0
      %798 = vmatprep.subr.bf16.mxu0 0
      %799 = vmatpush1.bf16.msra.mxu0 0
      %800 = vmatprep.mubr.bf16.mxu0 0
      %801 = vmatmul.mubr.bf16.gmra.mrb[0].mxu0 %v763
      %v802 = vpop.f32.mrb[0].mxu0
      %v803 = vadd.f32 0.0, %v802
      %v804 = vpop.f32.mrb[0].mxu0
      %v805 = vpop.f32.mrb[0].mxu0
      %v806 = vadd.f32 0.0, %v805
      %v807 = vpop.f32.mrb[0].mxu0
      %808 = vmatprep.mubr.bf16.mxu0 0
      %809 = vmatmul.mubr.bf16.gmra.mrb[0].mxu0 %v766
      %v810 = vpop.f32.mrb[0].mxu0
      %v811 = vadd.f32 0.0, %v810
      %v812 = vpop.f32.mrb[0].mxu0
      %v813 = vpop.f32.mrb[0].mxu0
      %v814 = vadd.f32 0.0, %v813
      %v815 = vpop.f32.mrb[0].mxu0
      %816 = vdwg.mxu0
      %v817 = vpack.c.bf16 %v803, %v803
      %v818 = vpack.c.bf16 %v806, %v806
      %v819 = vpack.c.bf16 %v811, %v811
      %v820 = vpack.c.bf16 %v814, %v814
      %v822 = vsel %vm295, %v817, 0
      %824 = vmatprep.subr.bf16.mxu0 0
      %825 = vmatpush1.bf16.msra.mxu0 %v822
      %826 = vmatprep.subr.bf16.mxu0 0
      %827 = vmatpush1.bf16.msra.mxu0 0
      %828 = vmatprep.subr.bf16.mxu0 0
      %829 = vmatpush1.bf16.msra.mxu0 0
      %830 = vmatprep.subr.bf16.mxu0 0
      %831 = vmatpush1.bf16.msra.mxu0 0
      %832 = vmatprep.subr.bf16.mxu0 0
      %833 = vmatpush1.bf16.msra.mxu0 0
      %834 = vmatprep.subr.bf16.mxu0 0
      %835 = vmatpush1.bf16.msra.mxu0 0
      %836 = vmatprep.subr.bf16.mxu0 0
      %837 = vmatpush1.bf16.msra.mxu0 0
      %838 = vmatprep.subr.bf16.mxu0 0
      %839 = vmatpush1.bf16.msra.mxu0 0
      %840 = vmatprep.subr.bf16.mxu0 0
      %841 = vmatpush1.bf16.msra.mxu0 0
      %842 = vmatprep.subr.bf16.mxu0 0
      %843 = vmatpush1.bf16.msra.mxu0 0
      %844 = vmatprep.subr.bf16.mxu0 0
      %845 = vmatpush1.bf16.msra.mxu0 0
      %846 = vmatprep.subr.bf16.mxu0 0
      %847 = vmatpush1.bf16.msra.mxu0 0
      %848 = vmatprep.subr.bf16.mxu0 0
      %849 = vmatpush1.bf16.msra.mxu0 0
      %850 = vmatprep.subr.bf16.mxu0 0
      %851 = vmatpush1.bf16.msra.mxu0 0
      %852 = vmatprep.subr.bf16.mxu0 0
      %853 = vmatpush1.bf16.msra.mxu0 0
      %854 = vmatprep.subr.bf16.mxu0 0
      %855 = vmatpush1.bf16.msra.mxu0 0
      %856 = vmatprep.mubr.bf16.mxu0 0
      %857 = vmatmul.mubr.bf16.gmra.mrb[0].mxu0 %v353
      %v858 = vpop.f32.mrb[0].mxu0
      %v859 = vadd.f32 0.0, %v858
      %v860 = vpop.f32.mrb[0].mxu0
      %v861 = vpop.f32.mrb[0].mxu0
      %v862 = vpop.f32.mrb[0].mxu0
      %863 = vdwg.mxu0
      %v865 = vsel %vm295, %v818, 0
      %867 = vmatprep.subr.bf16.mxu0 0
      %868 = vmatpush1.bf16.msra.mxu0 %v865
      %869 = vmatprep.subr.bf16.mxu0 0
      %870 = vmatpush1.bf16.msra.mxu0 0
      %871 = vmatprep.subr.bf16.mxu0 0
      %872 = vmatpush1.bf16.msra.mxu0 0
      %873 = vmatprep.subr.bf16.mxu0 0
      %874 = vmatpush1.bf16.msra.mxu0 0
      %875 = vmatprep.subr.bf16.mxu0 0
      %876 = vmatpush1.bf16.msra.mxu0 0
      %877 = vmatprep.subr.bf16.mxu0 0
      %878 = vmatpush1.bf16.msra.mxu0 0
      %879 = vmatprep.subr.bf16.mxu0 0
      %880 = vmatpush1.bf16.msra.mxu0 0
      %881 = vmatprep.subr.bf16.mxu0 0
      %882 = vmatpush1.bf16.msra.mxu0 0
      %883 = vmatprep.subr.bf16.mxu0 0
      %884 = vmatpush1.bf16.msra.mxu0 0
      %885 = vmatprep.subr.bf16.mxu0 0
      %886 = vmatpush1.bf16.msra.mxu0 0
      %887 = vmatprep.subr.bf16.mxu0 0
      %888 = vmatpush1.bf16.msra.mxu0 0
      %889 = vmatprep.subr.bf16.mxu0 0
      %890 = vmatpush1.bf16.msra.mxu0 0
      %891 = vmatprep.subr.bf16.mxu0 0
      %892 = vmatpush1.bf16.msra.mxu0 0
      %893 = vmatprep.subr.bf16.mxu0 0
      %894 = vmatpush1.bf16.msra.mxu0 0
      %895 = vmatprep.subr.bf16.mxu0 0
      %896 = vmatpush1.bf16.msra.mxu0 0
      %897 = vmatprep.subr.bf16.mxu0 0
      %898 = vmatpush1.bf16.msra.mxu0 0
      %899 = vmatprep.mubr.bf16.mxu0 0
      %900 = vmatmul.mubr.bf16.gmra.mrb[0].mxu0 %v353
      %v901 = vpop.f32.mrb[0].mxu0
      %v902 = vadd.f32 0.0, %v901
      %v903 = vpop.f32.mrb[0].mxu0
      %v904 = vpop.f32.mrb[0].mxu0
      %v905 = vpop.f32.mrb[0].mxu0
      %906 = vdwg.mxu0
      %v908 = vsel %vm295, %v819, 0
      %910 = vmatprep.subr.bf16.mxu0 0
      %911 = vmatpush1.bf16.msra.mxu0 %v908
      %912 = vmatprep.subr.bf16.mxu0 0
      %913 = vmatpush1.bf16.msra.mxu0 0
      %914 = vmatprep.subr.bf16.mxu0 0
      %915 = vmatpush1.bf16.msra.mxu0 0
      %916 = vmatprep.subr.bf16.mxu0 0
      %917 = vmatpush1.bf16.msra.mxu0 0
      %918 = vmatprep.subr.bf16.mxu0 0
      %919 = vmatpush1.bf16.msra.mxu0 0
      %920 = vmatprep.subr.bf16.mxu0 0
      %921 = vmatpush1.bf16.msra.mxu0 0
      %922 = vmatprep.subr.bf16.mxu0 0
      %923 = vmatpush1.bf16.msra.mxu0 0
      %924 = vmatprep.subr.bf16.mxu0 0
      %925 = vmatpush1.bf16.msra.mxu0 0
      %926 = vmatprep.subr.bf16.mxu0 0
      %927 = vmatpush1.bf16.msra.mxu0 0
      %928 = vmatprep.subr.bf16.mxu0 0
      %929 = vmatpush1.bf16.msra.mxu0 0
      %930 = vmatprep.subr.bf16.mxu0 0
      %931 = vmatpush1.bf16.msra.mxu0 0
      %932 = vmatprep.subr.bf16.mxu0 0
      %933 = vmatpush1.bf16.msra.mxu0 0
      %934 = vmatprep.subr.bf16.mxu0 0
      %935 = vmatpush1.bf16.msra.mxu0 0
      %936 = vmatprep.subr.bf16.mxu0 0
      %937 = vmatpush1.bf16.msra.mxu0 0
      %938 = vmatprep.subr.bf16.mxu0 0
      %939 = vmatpush1.bf16.msra.mxu0 0
      %940 = vmatprep.subr.bf16.mxu0 0
      %941 = vmatpush1.bf16.msra.mxu0 0
      %942 = vmatprep.mubr.bf16.mxu0 0
      %943 = vmatmul.mubr.bf16.gmra.mrb[0].mxu0 %v353
      %v944 = vpop.f32.mrb[0].mxu0
      %v945 = vadd.f32 0.0, %v944
      %v946 = vpop.f32.mrb[0].mxu0
      %v947 = vpop.f32.mrb[0].mxu0
      %v948 = vpop.f32.mrb[0].mxu0
      %949 = vdwg.mxu0
      %v951 = vsel %vm295, %v820, 0
      %953 = vmatprep.subr.bf16.mxu0 0
      %954 = vmatpush1.bf16.msra.mxu0 %v951
      %955 = vmatprep.subr.bf16.mxu0 0
      %956 = vmatpush1.bf16.msra.mxu0 0
      %957 = vmatprep.subr.bf16.mxu0 0
      %958 = vmatpush1.bf16.msra.mxu0 0
      %959 = vmatprep.subr.bf16.mxu0 0
      %960 = vmatpush1.bf16.msra.mxu0 0
      %961 = vmatprep.subr.bf16.mxu0 0
      %962 = vmatpush1.bf16.msra.mxu0 0
      %963 = vmatprep.subr.bf16.mxu0 0
      %964 = vmatpush1.bf16.msra.mxu0 0
      %965 = vmatprep.subr.bf16.mxu0 0
      %966 = vmatpush1.bf16.msra.mxu0 0
      %967 = vmatprep.subr.bf16.mxu0 0
      %968 = vmatpush1.bf16.msra.mxu0 0
      %969 = vmatprep.subr.bf16.mxu0 0
      %970 = vmatpush1.bf16.msra.mxu0 0
      %971 = vmatprep.subr.bf16.mxu0 0
      %972 = vmatpush1.bf16.msra.mxu0 0
      %973 = vmatprep.subr.bf16.mxu0 0
      %974 = vmatpush1.bf16.msra.mxu0 0
      %975 = vmatprep.subr.bf16.mxu0 0
      %976 = vmatpush1.bf16.msra.mxu0 0
      %977 = vmatprep.subr.bf16.mxu0 0
      %978 = vmatpush1.bf16.msra.mxu0 0
      %979 = vmatprep.subr.bf16.mxu0 0
      %980 = vmatpush1.bf16.msra.mxu0 0
      %981 = vmatprep.subr.bf16.mxu0 0
      %982 = vmatpush1.bf16.msra.mxu0 0
      %983 = vmatprep.subr.bf16.mxu0 0
      %984 = vmatpush1.bf16.msra.mxu0 0
      %985 = vmatprep.mubr.bf16.mxu0 0
      %986 = vmatmul.mubr.bf16.gmra.mrb[0].mxu0 %v353
      %v987 = vpop.f32.mrb[0].mxu0
      %v988 = vadd.f32 0.0, %v987
      %v989 = vpop.f32.mrb[0].mxu0
      %v990 = vpop.f32.mrb[0].mxu0
      %v991 = vpop.f32.mrb[0].mxu0
      %992 = vdwg.mxu0
      %v993 = vmul.f32 %v272, %v272
      %v994 = vmul.f32 %v273, %v273
      %v995 = vmul.f32 %v274, %v274
      %v996 = vmul.f32 %v275, %v275
      %v998 = vsel %vm288, %v993, 0
      %v1001 = vsel %vm288, %v994, 0
      %v1004 = vsel %vm288, %v995, 0
      %v1007 = vsel %vm288, %v996, 0
      %1009 = vmatprep.subr.mxu0 0.0
      %1010 = vmatpush1.msra.mxu0 %v271
      %1011 = vmatprep.subr.mxu0 0.0
      %1012 = vmatpush1.msra.mxu0 0.0
      %1013 = vmatprep.subr.mxu0 0.0
      %1014 = vmatpush1.msra.mxu0 0.0
      %1015 = vmatprep.subr.mxu0 0.0
      %1016 = vmatpush1.msra.mxu0 0.0
      %1017 = vmatprep.subr.mxu0 0.0
      %1018 = vmatpush1.msra.mxu0 0.0
      %1019 = vmatprep.subr.mxu0 0.0
      %1020 = vmatpush1.msra.mxu0 0.0
      %1021 = vmatprep.subr.mxu0 0.0
      %1022 = vmatpush1.msra.mxu0 0.0
      %1023 = vmatprep.subr.mxu0 0.0
      %1024 = vmatpush1.msra.mxu0 0.0
      %1025 = vmatprep.subr.mxu0 0.0
      %1026 = vmatpush1.msra.mxu0 0.0
      %1027 = vmatprep.subr.mxu0 0.0
      %1028 = vmatpush1.msra.mxu0 0.0
      %1029 = vmatprep.subr.mxu0 0.0
      %1030 = vmatpush1.msra.mxu0 0.0
      %1031 = vmatprep.subr.mxu0 0.0
      %1032 = vmatpush1.msra.mxu0 0.0
      %1033 = vmatprep.subr.mxu0 0.0
      %1034 = vmatpush1.msra.mxu0 0.0
      %1035 = vmatprep.subr.mxu0 0.0
      %1036 = vmatpush1.msra.mxu0 0.0
      %1037 = vmatprep.subr.mxu0 0.0
      %1038 = vmatpush1.msra.mxu0 0.0
      %1039 = vmatprep.subr.mxu0 0.0
      %1040 = vmatpush1.msra.mxu0 0.0
      %1041 = vmatprep.subr.mxu0 0.0
      %1042 = vmatpush1.msra.mxu0 0.0
      %1043 = vmatprep.subr.mxu0 0.0
      %1044 = vmatpush1.msra.mxu0 0.0
      %1045 = vmatprep.subr.mxu0 0.0
      %1046 = vmatpush1.msra.mxu0 0.0
      %1047 = vmatprep.subr.mxu0 0.0
      %1048 = vmatpush1.msra.mxu0 0.0
      %1049 = vmatprep.subr.mxu0 0.0
      %1050 = vmatpush1.msra.mxu0 0.0
      %1051 = vmatprep.subr.mxu0 0.0
      %1052 = vmatpush1.msra.mxu0 0.0
      %1053 = vmatprep.subr.mxu0 0.0
      %1054 = vmatpush1.msra.mxu0 0.0
      %1055 = vmatprep.subr.mxu0 0.0
      %1056 = vmatpush1.msra.mxu0 0.0
      %1057 = vmatprep.subr.mxu0 0.0
      %1058 = vmatpush1.msra.mxu0 0.0
      %1059 = vmatprep.subr.mxu0 0.0
      %1060 = vmatpush1.msra.mxu0 0.0
      %1061 = vmatprep.subr.mxu0 0.0
      %1062 = vmatpush1.msra.mxu0 0.0
      %1063 = vmatprep.subr.mxu0 0.0
      %1064 = vmatpush1.msra.mxu0 0.0
      %1065 = vmatprep.subr.mxu0 0.0
      %1066 = vmatpush1.msra.mxu0 0.0
      %1067 = vmatprep.subr.mxu0 0.0
      %1068 = vmatpush1.msra.mxu0 0.0
      %1069 = vmatprep.subr.mxu0 0.0
      %1070 = vmatpush1.msra.mxu0 0.0
      %1071 = vmatprep.subr.mxu0 0.0
      %1072 = vmatpush1.msra.mxu0 0.0
      %1073 = vmatprep.mubr.f32.mxu0 0.0
      %1074 = vmatmul.mubr.f32.gmra.mrb[0].mxu0 %v998
      %v1075 = vpop.f32.mrb[0].mxu0
      %v1076 = vadd.f32 0.0, %v1075
      %v1077 = vpop.f32.mrb[0].mxu0
      %1078 = vmatprep.mubr.f32.mxu0 0.0
      %1079 = vmatmul.mubr.f32.gmra.mrb[0].mxu0 %v1001
      %v1080 = vpop.f32.mrb[0].mxu0
      %v1081 = vadd.f32 0.0, %v1080
      %v1082 = vpop.f32.mrb[0].mxu0
      %1083 = vmatprep.mubr.f32.mxu0 0.0
      %1084 = vmatmul.mubr.f32.gmra.mrb[0].mxu0 %v1004
      %v1085 = vpop.f32.mrb[0].mxu0
      %v1086 = vadd.f32 0.0, %v1085
      %v1087 = vpop.f32.mrb[0].mxu0
      %1088 = vmatprep.mubr.f32.mxu0 0.0
      %1089 = vmatmul.mubr.f32.gmra.mrb[0].mxu0 %v1007
      %v1090 = vpop.f32.mrb[0].mxu0
      %v1091 = vadd.f32 0.0, %v1090
      %v1092 = vpop.f32.mrb[0].mxu0
      %1093 = vdwg.mxu0
      %v1095 = vsel %vm288, %v270, 0
      %1097 = vmatprep.subr.mxu0 0.0
      %1098 = vmatpush1.msra.mxu0 %v1076
      %1099 = vmatprep.subr.mxu0 0.0
      %1100 = vmatpush1.msra.mxu0 0.0
      %1101 = vmatprep.subr.mxu0 0.0
      %1102 = vmatpush1.msra.mxu0 0.0
      %1103 = vmatprep.subr.mxu0 0.0
      %1104 = vmatpush1.msra.mxu0 0.0
      %1105 = vmatprep.subr.mxu0 0.0
      %1106 = vmatpush1.msra.mxu0 0.0
      %1107 = vmatprep.subr.mxu0 0.0
      %1108 = vmatpush1.msra.mxu0 0.0
      %1109 = vmatprep.subr.mxu0 0.0
      %1110 = vmatpush1.msra.mxu0 0.0
      %1111 = vmatprep.subr.mxu0 0.0
      %1112 = vmatpush1.msra.mxu0 0.0
      %1113 = vmatprep.subr.mxu0 0.0
      %1114 = vmatpush1.msra.mxu0 0.0
      %1115 = vmatprep.subr.mxu0 0.0
      %1116 = vmatpush1.msra.mxu0 0.0
      %1117 = vmatprep.subr.mxu0 0.0
      %1118 = vmatpush1.msra.mxu0 0.0
      %1119 = vmatprep.subr.mxu0 0.0
      %1120 = vmatpush1.msra.mxu0 0.0
      %1121 = vmatprep.subr.mxu0 0.0
      %1122 = vmatpush1.msra.mxu0 0.0
      %1123 = vmatprep.subr.mxu0 0.0
      %1124 = vmatpush1.msra.mxu0 0.0
      %1125 = vmatprep.subr.mxu0 0.0
      %1126 = vmatpush1.msra.mxu0 0.0
      %1127 = vmatprep.subr.mxu0 0.0
      %1128 = vmatpush1.msra.mxu0 0.0
      %1129 = vmatprep.subr.mxu0 0.0
      %1130 = vmatpush1.msra.mxu0 0.0
      %1131 = vmatprep.subr.mxu0 0.0
      %1132 = vmatpush1.msra.mxu0 0.0
      %1133 = vmatprep.subr.mxu0 0.0
      %1134 = vmatpush1.msra.mxu0 0.0
      %1135 = vmatprep.subr.mxu0 0.0
      %1136 = vmatpush1.msra.mxu0 0.0
      %1137 = vmatprep.subr.mxu0 0.0
      %1138 = vmatpush1.msra.mxu0 0.0
      %1139 = vmatprep.subr.mxu0 0.0
      %1140 = vmatpush1.msra.mxu0 0.0
      %1141 = vmatprep.subr.mxu0 0.0
      %1142 = vmatpush1.msra.mxu0 0.0
      %1143 = vmatprep.subr.mxu0 0.0
      %1144 = vmatpush1.msra.mxu0 0.0
      %1145 = vmatprep.subr.mxu0 0.0
      %1146 = vmatpush1.msra.mxu0 0.0
      %1147 = vmatprep.subr.mxu0 0.0
      %1148 = vmatpush1.msra.mxu0 0.0
      %1149 = vmatprep.subr.mxu0 0.0
      %1150 = vmatpush1.msra.mxu0 0.0
      %1151 = vmatprep.subr.mxu0 0.0
      %1152 = vmatpush1.msra.mxu0 0.0
      %1153 = vmatprep.subr.mxu0 0.0
      %1154 = vmatpush1.msra.mxu0 0.0
      %1155 = vmatprep.subr.mxu0 0.0
      %1156 = vmatpush1.msra.mxu0 0.0
      %1157 = vmatprep.subr.mxu0 0.0
      %1158 = vmatpush1.msra.mxu0 0.0
      %1159 = vmatprep.subr.mxu0 0.0
      %1160 = vmatpush1.msra.mxu0 0.0
      %1161 = vmatprep.mubr.f32.mxu0 0.0
      %1162 = vmatmul.mubr.f32.gmra.mrb[0].mxu0 %v1095
      %v1163 = vpop.f32.mrb[0].mxu0
      %v1164 = vadd.f32 0.0, %v1163
      %v1165 = vpop.f32.mrb[0].mxu0
      %1166 = vdwg.mxu0
      %1167 = vmatprep.subr.mxu0 0.0
      %1168 = vmatpush1.msra.mxu0 %v1081
      %1169 = vmatprep.subr.mxu0 0.0
      %1170 = vmatpush1.msra.mxu0 0.0
      %1171 = vmatprep.subr.mxu0 0.0
      %1172 = vmatpush1.msra.mxu0 0.0
      %1173 = vmatprep.subr.mxu0 0.0
      %1174 = vmatpush1.msra.mxu0 0.0
      %1175 = vmatprep.subr.mxu0 0.0
      %1176 = vmatpush1.msra.mxu0 0.0
      %1177 = vmatprep.subr.mxu0 0.0
      %1178 = vmatpush1.msra.mxu0 0.0
      %1179 = vmatprep.subr.mxu0 0.0
      %1180 = vmatpush1.msra.mxu0 0.0
      %1181 = vmatprep.subr.mxu0 0.0
      %1182 = vmatpush1.msra.mxu0 0.0
      %1183 = vmatprep.subr.mxu0 0.0
      %1184 = vmatpush1.msra.mxu0 0.0
      %1185 = vmatprep.subr.mxu0 0.0
      %1186 = vmatpush1.msra.mxu0 0.0
      %1187 = vmatprep.subr.mxu0 0.0
      %1188 = vmatpush1.msra.mxu0 0.0
      %1189 = vmatprep.subr.mxu0 0.0
      %1190 = vmatpush1.msra.mxu0 0.0
      %1191 = vmatprep.subr.mxu0 0.0
      %1192 = vmatpush1.msra.mxu0 0.0
      %1193 = vmatprep.subr.mxu0 0.0
      %1194 = vmatpush1.msra.mxu0 0.0
      %1195 = vmatprep.subr.mxu0 0.0
      %1196 = vmatpush1.msra.mxu0 0.0
      %1197 = vmatprep.subr.mxu0 0.0
      %1198 = vmatpush1.msra.mxu0 0.0
      %1199 = vmatprep.subr.mxu0 0.0
      %1200 = vmatpush1.msra.mxu0 0.0
      %1201 = vmatprep.subr.mxu0 0.0
      %1202 = vmatpush1.msra.mxu0 0.0
      %1203 = vmatprep.subr.mxu0 0.0
      %1204 = vmatpush1.msra.mxu0 0.0
      %1205 = vmatprep.subr.mxu0 0.0
      %1206 = vmatpush1.msra.mxu0 0.0
      %1207 = vmatprep.subr.mxu0 0.0
      %1208 = vmatpush1.msra.mxu0 0.0
      %1209 = vmatprep.subr.mxu0 0.0
      %1210 = vmatpush1.msra.mxu0 0.0
      %1211 = vmatprep.subr.mxu0 0.0
      %1212 = vmatpush1.msra.mxu0 0.0
      %1213 = vmatprep.subr.mxu0 0.0
      %1214 = vmatpush1.msra.mxu0 0.0
      %1215 = vmatprep.subr.mxu0 0.0
      %1216 = vmatpush1.msra.mxu0 0.0
      %1217 = vmatprep.subr.mxu0 0.0
      %1218 = vmatpush1.msra.mxu0 0.0
      %1219 = vmatprep.subr.mxu0 0.0
      %1220 = vmatpush1.msra.mxu0 0.0
      %1221 = vmatprep.subr.mxu0 0.0
      %1222 = vmatpush1.msra.mxu0 0.0
      %1223 = vmatprep.subr.mxu0 0.0
      %1224 = vmatpush1.msra.mxu0 0.0
      %1225 = vmatprep.subr.mxu0 0.0
      %1226 = vmatpush1.msra.mxu0 0.0
      %1227 = vmatprep.subr.mxu0 0.0
      %1228 = vmatpush1.msra.mxu0 0.0
      %1229 = vmatprep.subr.mxu0 0.0
      %1230 = vmatpush1.msra.mxu0 0.0
      %1231 = vmatprep.mubr.f32.mxu0 0.0
      %1232 = vmatmul.mubr.f32.gmra.mrb[0].mxu0 %v1095
      %v1233 = vpop.f32.mrb[0].mxu0
      %v1234 = vadd.f32 0.0, %v1233
      %v1235 = vpop.f32.mrb[0].mxu0
      %1236 = vdwg.mxu0
      %1237 = vmatprep.subr.mxu0 0.0
      %1238 = vmatpush1.msra.mxu0 %v1086
      %1239 = vmatprep.subr.mxu0 0.0
      %1240 = vmatpush1.msra.mxu0 0.0
      %1241 = vmatprep.subr.mxu0 0.0
      %1242 = vmatpush1.msra.mxu0 0.0
      %1243 = vmatprep.subr.mxu0 0.0
      %1244 = vmatpush1.msra.mxu0 0.0
      %1245 = vmatprep.subr.mxu0 0.0
      %1246 = vmatpush1.msra.mxu0 0.0
      %1247 = vmatprep.subr.mxu0 0.0
      %1248 = vmatpush1.msra.mxu0 0.0
      %1249 = vmatprep.subr.mxu0 0.0
      %1250 = vmatpush1.msra.mxu0 0.0
      %1251 = vmatprep.subr.mxu0 0.0
      %1252 = vmatpush1.msra.mxu0 0.0
      %1253 = vmatprep.subr.mxu0 0.0
      %1254 = vmatpush1.msra.mxu0 0.0
      %1255 = vmatprep.subr.mxu0 0.0
      %1256 = vmatpush1.msra.mxu0 0.0
      %1257 = vmatprep.subr.mxu0 0.0
      %1258 = vmatpush1.msra.mxu0 0.0
      %1259 = vmatprep.subr.mxu0 0.0
      %1260 = vmatpush1.msra.mxu0 0.0
      %1261 = vmatprep.subr.mxu0 0.0
      %1262 = vmatpush1.msra.mxu0 0.0
      %1263 = vmatprep.subr.mxu0 0.0
      %1264 = vmatpush1.msra.mxu0 0.0
      %1265 = vmatprep.subr.mxu0 0.0
      %1266 = vmatpush1.msra.mxu0 0.0
      %1267 = vmatprep.subr.mxu0 0.0
      %1268 = vmatpush1.msra.mxu0 0.0
      %1269 = vmatprep.subr.mxu0 0.0
      %1270 = vmatpush1.msra.mxu0 0.0
      %1271 = vmatprep.subr.mxu0 0.0
      %1272 = vmatpush1.msra.mxu0 0.0
      %1273 = vmatprep.subr.mxu0 0.0
      %1274 = vmatpush1.msra.mxu0 0.0
      %1275 = vmatprep.subr.mxu0 0.0
      %1276 = vmatpush1.msra.mxu0 0.0
      %1277 = vmatprep.subr.mxu0 0.0
      %1278 = vmatpush1.msra.mxu0 0.0
      %1279 = vmatprep.subr.mxu0 0.0
      %1280 = vmatpush1.msra.mxu0 0.0
      %1281 = vmatprep.subr.mxu0 0.0
      %1282 = vmatpush1.msra.mxu0 0.0
      %1283 = vmatprep.subr.mxu0 0.0
      %1284 = vmatpush1.msra.mxu0 0.0
      %1285 = vmatprep.subr.mxu0 0.0
      %1286 = vmatpush1.msra.mxu0 0.0
      %1287 = vmatprep.subr.mxu0 0.0
      %1288 = vmatpush1.msra.mxu0 0.0
      %1289 = vmatprep.subr.mxu0 0.0
      %1290 = vmatpush1.msra.mxu0 0.0
      %1291 = vmatprep.subr.mxu0 0.0
      %1292 = vmatpush1.msra.mxu0 0.0
      %1293 = vmatprep.subr.mxu0 0.0
      %1294 = vmatpush1.msra.mxu0 0.0
      %1295 = vmatprep.subr.mxu0 0.0
      %1296 = vmatpush1.msra.mxu0 0.0
      %1297 = vmatprep.subr.mxu0 0.0
      %1298 = vmatpush1.msra.mxu0 0.0
      %1299 = vmatprep.subr.mxu0 0.0
      %1300 = vmatpush1.msra.mxu0 0.0
      %1301 = vmatprep.mubr.f32.mxu0 0.0
      %1302 = vmatmul.mubr.f32.gmra.mrb[0].mxu0 %v1095
      %v1303 = vpop.f32.mrb[0].mxu0
      %v1304 = vadd.f32 0.0, %v1303
      %v1305 = vpop.f32.mrb[0].mxu0
      %1306 = vdwg.mxu0
      %1307 = vmatprep.subr.mxu0 0.0
      %1308 = vmatpush1.msra.mxu0 %v1091
      %1309 = vmatprep.subr.mxu0 0.0
      %1310 = vmatpush1.msra.mxu0 0.0
      %1311 = vmatprep.subr.mxu0 0.0
      %1312 = vmatpush1.msra.mxu0 0.0
      %1313 = vmatprep.subr.mxu0 0.0
      %1314 = vmatpush1.msra.mxu0 0.0
      %1315 = vmatprep.subr.mxu0 0.0
      %1316 = vmatpush1.msra.mxu0 0.0
      %1317 = vmatprep.subr.mxu0 0.0
      %1318 = vmatpush1.msra.mxu0 0.0
      %1319 = vmatprep.subr.mxu0 0.0
      %1320 = vmatpush1.msra.mxu0 0.0
      %1321 = vmatprep.subr.mxu0 0.0
      %1322 = vmatpush1.msra.mxu0 0.0
      %1323 = vmatprep.subr.mxu0 0.0
      %1324 = vmatpush1.msra.mxu0 0.0
      %1325 = vmatprep.subr.mxu0 0.0
      %1326 = vmatpush1.msra.mxu0 0.0
      %1327 = vmatprep.subr.mxu0 0.0
      %1328 = vmatpush1.msra.mxu0 0.0
      %1329 = vmatprep.subr.mxu0 0.0
      %1330 = vmatpush1.msra.mxu0 0.0
      %1331 = vmatprep.subr.mxu0 0.0
      %1332 = vmatpush1.msra.mxu0 0.0
      %1333 = vmatprep.subr.mxu0 0.0
      %1334 = vmatpush1.msra.mxu0 0.0
      %1335 = vmatprep.subr.mxu0 0.0
      %1336 = vmatpush1.msra.mxu0 0.0
      %1337 = vmatprep.subr.mxu0 0.0
      %1338 = vmatpush1.msra.mxu0 0.0
      %1339 = vmatprep.subr.mxu0 0.0
      %1340 = vmatpush1.msra.mxu0 0.0
      %1341 = vmatprep.subr.mxu0 0.0
      %1342 = vmatpush1.msra.mxu0 0.0
      %1343 = vmatprep.subr.mxu0 0.0
      %1344 = vmatpush1.msra.mxu0 0.0
      %1345 = vmatprep.subr.mxu0 0.0
      %1346 = vmatpush1.msra.mxu0 0.0
      %1347 = vmatprep.subr.mxu0 0.0
      %1348 = vmatpush1.msra.mxu0 0.0
      %1349 = vmatprep.subr.mxu0 0.0
      %1350 = vmatpush1.msra.mxu0 0.0
      %1351 = vmatprep.subr.mxu0 0.0
      %1352 = vmatpush1.msra.mxu0 0.0
      %1353 = vmatprep.subr.mxu0 0.0
      %1354 = vmatpush1.msra.mxu0 0.0
      %1355 = vmatprep.subr.mxu0 0.0
      %1356 = vmatpush1.msra.mxu0 0.0
      %1357 = vmatprep.subr.mxu0 0.0
      %1358 = vmatpush1.msra.mxu0 0.0
      %1359 = vmatprep.subr.mxu0 0.0
      %1360 = vmatpush1.msra.mxu0 0.0
      %1361 = vmatprep.subr.mxu0 0.0
      %1362 = vmatpush1.msra.mxu0 0.0
      %1363 = vmatprep.subr.mxu0 0.0
      %1364 = vmatpush1.msra.mxu0 0.0
      %1365 = vmatprep.subr.mxu0 0.0
      %1366 = vmatpush1.msra.mxu0 0.0
      %1367 = vmatprep.subr.mxu0 0.0
      %1368 = vmatpush1.msra.mxu0 0.0
      %1369 = vmatprep.subr.mxu0 0.0
      %1370 = vmatpush1.msra.mxu0 0.0
      %1371 = vmatprep.mubr.f32.mxu0 0.0
      %1372 = vmatmul.mubr.f32.gmra.mrb[0].mxu0 %v1095
      %v1373 = vpop.f32.mrb[0].mxu0
      %v1374 = vadd.f32 0.0, %v1373
      %v1375 = vpop.f32.mrb[0].mxu0
      %1376 = vdwg.mxu0
      %v1377 = vmul.f32 %v276, %v276
      %v1378 = vmul.f32 %v277, %v277
      %v1379 = vmul.f32 %v278, %v278
      %v1380 = vmul.f32 %v279, %v279
      %v1382 = vsel %vm288, %v1377, 0
      %v1385 = vsel %vm288, %v1378, 0
      %v1388 = vsel %vm288, %v1379, 0
      %v1391 = vsel %vm288, %v1380, 0
      %1393 = vmatprep.subr.mxu0 0.0
      %1394 = vmatpush1.msra.mxu0 %v271
      %1395 = vmatprep.subr.mxu0 0.0
      %1396 = vmatpush1.msra.mxu0 0.0
      %1397 = vmatprep.subr.mxu0 0.0
      %1398 = vmatpush1.msra.mxu0 0.0
      %1399 = vmatprep.subr.mxu0 0.0
      %1400 = vmatpush1.msra.mxu0 0.0
      %1401 = vmatprep.subr.mxu0 0.0
      %1402 = vmatpush1.msra.mxu0 0.0
      %1403 = vmatprep.subr.mxu0 0.0
      %1404 = vmatpush1.msra.mxu0 0.0
      %1405 = vmatprep.subr.mxu0 0.0
      %1406 = vmatpush1.msra.mxu0 0.0
      %1407 = vmatprep.subr.mxu0 0.0
      %1408 = vmatpush1.msra.mxu0 0.0
      %1409 = vmatprep.subr.mxu0 0.0
      %1410 = vmatpush1.msra.mxu0 0.0
      %1411 = vmatprep.subr.mxu0 0.0
      %1412 = vmatpush1.msra.mxu0 0.0
      %1413 = vmatprep.subr.mxu0 0.0
      %1414 = vmatpush1.msra.mxu0 0.0
      %1415 = vmatprep.subr.mxu0 0.0
      %1416 = vmatpush1.msra.mxu0 0.0
      %1417 = vmatprep.subr.mxu0 0.0
      %1418 = vmatpush1.msra.mxu0 0.0
      %1419 = vmatprep.subr.mxu0 0.0
      %1420 = vmatpush1.msra.mxu0 0.0
      %1421 = vmatprep.subr.mxu0 0.0
      %1422 = vmatpush1.msra.mxu0 0.0
      %1423 = vmatprep.subr.mxu0 0.0
      %1424 = vmatpush1.msra.mxu0 0.0
      %1425 = vmatprep.subr.mxu0 0.0
      %1426 = vmatpush1.msra.mxu0 0.0
      %1427 = vmatprep.subr.mxu0 0.0
      %1428 = vmatpush1.msra.mxu0 0.0
      %1429 = vmatprep.subr.mxu0 0.0
      %1430 = vmatpush1.msra.mxu0 0.0
      %1431 = vmatprep.subr.mxu0 0.0
      %1432 = vmatpush1.msra.mxu0 0.0
      %1433 = vmatprep.subr.mxu0 0.0
      %1434 = vmatpush1.msra.mxu0 0.0
      %1435 = vmatprep.subr.mxu0 0.0
      %1436 = vmatpush1.msra.mxu0 0.0
      %1437 = vmatprep.subr.mxu0 0.0
      %1438 = vmatpush1.msra.mxu0 0.0
      %1439 = vmatprep.subr.mxu0 0.0
      %1440 = vmatpush1.msra.mxu0 0.0
      %1441 = vmatprep.subr.mxu0 0.0
      %1442 = vmatpush1.msra.mxu0 0.0
      %1443 = vmatprep.subr.mxu0 0.0
      %1444 = vmatpush1.msra.mxu0 0.0
      %1445 = vmatprep.subr.mxu0 0.0
      %1446 = vmatpush1.msra.mxu0 0.0
      %1447 = vmatprep.subr.mxu0 0.0
      %1448 = vmatpush1.msra.mxu0 0.0
      %1449 = vmatprep.subr.mxu0 0.0
      %1450 = vmatpush1.msra.mxu0 0.0
      %1451 = vmatprep.subr.mxu0 0.0
      %1452 = vmatpush1.msra.mxu0 0.0
      %1453 = vmatprep.subr.mxu0 0.0
      %1454 = vmatpush1.msra.mxu0 0.0
      %1455 = vmatprep.subr.mxu0 0.0
      %1456 = vmatpush1.msra.mxu0 0.0
      %1457 = vmatprep.mubr.f32.mxu0 0.0
      %1458 = vmatmul.mubr.f32.gmra.mrb[0].mxu0 %v1382
      %v1459 = vpop.f32.mrb[0].mxu0
      %v1460 = vadd.f32 0.0, %v1459
      %v1461 = vpop.f32.mrb[0].mxu0
      %1462 = vmatprep.mubr.f32.mxu0 0.0
      %1463 = vmatmul.mubr.f32.gmra.mrb[0].mxu0 %v1385
      %v1464 = vpop.f32.mrb[0].mxu0
      %v1465 = vadd.f32 0.0, %v1464
      %v1466 = vpop.f32.mrb[0].mxu0
      %1467 = vmatprep.mubr.f32.mxu0 0.0
      %1468 = vmatmul.mubr.f32.gmra.mrb[0].mxu0 %v1388
      %v1469 = vpop.f32.mrb[0].mxu0
      %v1470 = vadd.f32 0.0, %v1469
      %v1471 = vpop.f32.mrb[0].mxu0
      %1472 = vmatprep.mubr.f32.mxu0 0.0
      %1473 = vmatmul.mubr.f32.gmra.mrb[0].mxu0 %v1391
      %v1474 = vpop.f32.mrb[0].mxu0
      %v1475 = vadd.f32 0.0, %v1474
      %v1476 = vpop.f32.mrb[0].mxu0
      %1477 = vdwg.mxu0
      %1478 = vmatprep.subr.mxu0 0.0
      %1479 = vmatpush1.msra.mxu0 %v1460
      %1480 = vmatprep.subr.mxu0 0.0
      %1481 = vmatpush1.msra.mxu0 0.0
      %1482 = vmatprep.subr.mxu0 0.0
      %1483 = vmatpush1.msra.mxu0 0.0
      %1484 = vmatprep.subr.mxu0 0.0
      %1485 = vmatpush1.msra.mxu0 0.0
      %1486 = vmatprep.subr.mxu0 0.0
      %1487 = vmatpush1.msra.mxu0 0.0
      %1488 = vmatprep.subr.mxu0 0.0
      %1489 = vmatpush1.msra.mxu0 0.0
      %1490 = vmatprep.subr.mxu0 0.0
      %1491 = vmatpush1.msra.mxu0 0.0
      %1492 = vmatprep.subr.mxu0 0.0
      %1493 = vmatpush1.msra.mxu0 0.0
      %1494 = vmatprep.subr.mxu0 0.0
      %1495 = vmatpush1.msra.mxu0 0.0
      %1496 = vmatprep.subr.mxu0 0.0
      %1497 = vmatpush1.msra.mxu0 0.0
      %1498 = vmatprep.subr.mxu0 0.0
      %1499 = vmatpush1.msra.mxu0 0.0
      %1500 = vmatprep.subr.mxu0 0.0
      %1501 = vmatpush1.msra.mxu0 0.0
      %1502 = vmatprep.subr.mxu0 0.0
      %1503 = vmatpush1.msra.mxu0 0.0
      %1504 = vmatprep.subr.mxu0 0.0
      %1505 = vmatpush1.msra.mxu0 0.0
      %1506 = vmatprep.subr.mxu0 0.0
      %1507 = vmatpush1.msra.mxu0 0.0
      %1508 = vmatprep.subr.mxu0 0.0
      %1509 = vmatpush1.msra.mxu0 0.0
      %1510 = vmatprep.subr.mxu0 0.0
      %1511 = vmatpush1.msra.mxu0 0.0
      %1512 = vmatprep.subr.mxu0 0.0
      %1513 = vmatpush1.msra.mxu0 0.0
      %1514 = vmatprep.subr.mxu0 0.0
      %1515 = vmatpush1.msra.mxu0 0.0
      %1516 = vmatprep.subr.mxu0 0.0
      %1517 = vmatpush1.msra.mxu0 0.0
      %1518 = vmatprep.subr.mxu0 0.0
      %1519 = vmatpush1.msra.mxu0 0.0
      %1520 = vmatprep.subr.mxu0 0.0
      %1521 = vmatpush1.msra.mxu0 0.0
      %1522 = vmatprep.subr.mxu0 0.0
      %1523 = vmatpush1.msra.mxu0 0.0
      %1524 = vmatprep.subr.mxu0 0.0
      %1525 = vmatpush1.msra.mxu0 0.0
      %1526 = vmatprep.subr.mxu0 0.0
      %1527 = vmatpush1.msra.mxu0 0.0
      %1528 = vmatprep.subr.mxu0 0.0
      %1529 = vmatpush1.msra.mxu0 0.0
      %1530 = vmatprep.subr.mxu0 0.0
      %1531 = vmatpush1.msra.mxu0 0.0
      %1532 = vmatprep.subr.mxu0 0.0
      %1533 = vmatpush1.msra.mxu0 0.0
      %1534 = vmatprep.subr.mxu0 0.0
      %1535 = vmatpush1.msra.mxu0 0.0
      %1536 = vmatprep.subr.mxu0 0.0
      %1537 = vmatpush1.msra.mxu0 0.0
      %1538 = vmatprep.subr.mxu0 0.0
      %1539 = vmatpush1.msra.mxu0 0.0
      %1540 = vmatprep.subr.mxu0 0.0
      %1541 = vmatpush1.msra.mxu0 0.0
      %1542 = vmatprep.mubr.f32.mxu0 0.0
      %1543 = vmatmul.mubr.f32.gmra.mrb[0].mxu0 %v1095
      %v1544 = vpop.f32.mrb[0].mxu0
      %v1545 = vadd.f32 0.0, %v1544
      %v1546 = vpop.f32.mrb[0].mxu0
      %1547 = vdwg.mxu0
      %1548 = vmatprep.subr.mxu0 0.0
      %1549 = vmatpush1.msra.mxu0 %v1465
      %1550 = vmatprep.subr.mxu0 0.0
      %1551 = vmatpush1.msra.mxu0 0.0
      %1552 = vmatprep.subr.mxu0 0.0
      %1553 = vmatpush1.msra.mxu0 0.0
      %1554 = vmatprep.subr.mxu0 0.0
      %1555 = vmatpush1.msra.mxu0 0.0
      %1556 = vmatprep.subr.mxu0 0.0
      %1557 = vmatpush1.msra.mxu0 0.0
      %1558 = vmatprep.subr.mxu0 0.0
      %1559 = vmatpush1.msra.mxu0 0.0
      %1560 = vmatprep.subr.mxu0 0.0
      %1561 = vmatpush1.msra.mxu0 0.0
      %1562 = vmatprep.subr.mxu0 0.0
      %1563 = vmatpush1.msra.mxu0 0.0
      %1564 = vmatprep.subr.mxu0 0.0
      %1565 = vmatpush1.msra.mxu0 0.0
      %1566 = vmatprep.subr.mxu0 0.0
      %1567 = vmatpush1.msra.mxu0 0.0
      %1568 = vmatprep.subr.mxu0 0.0
      %1569 = vmatpush1.msra.mxu0 0.0
      %1570 = vmatprep.subr.mxu0 0.0
      %1571 = vmatpush1.msra.mxu0 0.0
      %1572 = vmatprep.subr.mxu0 0.0
      %1573 = vmatpush1.msra.mxu0 0.0
      %1574 = vmatprep.subr.mxu0 0.0
      %1575 = vmatpush1.msra.mxu0 0.0
      %1576 = vmatprep.subr.mxu0 0.0
      %1577 = vmatpush1.msra.mxu0 0.0
      %1578 = vmatprep.subr.mxu0 0.0
      %1579 = vmatpush1.msra.mxu0 0.0
      %1580 = vmatprep.subr.mxu0 0.0
      %1581 = vmatpush1.msra.mxu0 0.0
      %1582 = vmatprep.subr.mxu0 0.0
      %1583 = vmatpush1.msra.mxu0 0.0
      %1584 = vmatprep.subr.mxu0 0.0
      %1585 = vmatpush1.msra.mxu0 0.0
      %1586 = vmatprep.subr.mxu0 0.0
      %1587 = vmatpush1.msra.mxu0 0.0
      %1588 = vmatprep.subr.mxu0 0.0
      %1589 = vmatpush1.msra.mxu0 0.0
      %1590 = vmatprep.subr.mxu0 0.0
      %1591 = vmatpush1.msra.mxu0 0.0
      %1592 = vmatprep.subr.mxu0 0.0
      %1593 = vmatpush1.msra.mxu0 0.0
      %1594 = vmatprep.subr.mxu0 0.0
      %1595 = vmatpush1.msra.mxu0 0.0
      %1596 = vmatprep.subr.mxu0 0.0
      %1597 = vmatpush1.msra.mxu0 0.0
      %1598 = vmatprep.subr.mxu0 0.0
      %1599 = vmatpush1.msra.mxu0 0.0
      %1600 = vmatprep.subr.mxu0 0.0
      %1601 = vmatpush1.msra.mxu0 0.0
      %1602 = vmatprep.subr.mxu0 0.0
      %1603 = vmatpush1.msra.mxu0 0.0
      %1604 = vmatprep.subr.mxu0 0.0
      %1605 = vmatpush1.msra.mxu0 0.0
      %1606 = vmatprep.subr.mxu0 0.0
      %1607 = vmatpush1.msra.mxu0 0.0
      %1608 = vmatprep.subr.mxu0 0.0
      %1609 = vmatpush1.msra.mxu0 0.0
      %1610 = vmatprep.subr.mxu0 0.0
      %1611 = vmatpush1.msra.mxu0 0.0
      %1612 = vmatprep.mubr.f32.mxu0 0.0
      %1613 = vmatmul.mubr.f32.gmra.mrb[0].mxu0 %v1095
      %v1614 = vpop.f32.mrb[0].mxu0
      %v1615 = vadd.f32 0.0, %v1614
      %v1616 = vpop.f32.mrb[0].mxu0
      %1617 = vdwg.mxu0
      %1618 = vmatprep.subr.mxu0 0.0
      %1619 = vmatpush1.msra.mxu0 %v1470
      %1620 = vmatprep.subr.mxu0 0.0
      %1621 = vmatpush1.msra.mxu0 0.0
      %1622 = vmatprep.subr.mxu0 0.0
      %1623 = vmatpush1.msra.mxu0 0.0
      %1624 = vmatprep.subr.mxu0 0.0
      %1625 = vmatpush1.msra.mxu0 0.0
      %1626 = vmatprep.subr.mxu0 0.0
      %1627 = vmatpush1.msra.mxu0 0.0
      %1628 = vmatprep.subr.mxu0 0.0
      %1629 = vmatpush1.msra.mxu0 0.0
      %1630 = vmatprep.subr.mxu0 0.0
      %1631 = vmatpush1.msra.mxu0 0.0
      %1632 = vmatprep.subr.mxu0 0.0
      %1633 = vmatpush1.msra.mxu0 0.0
      %1634 = vmatprep.subr.mxu0 0.0
      %1635 = vmatpush1.msra.mxu0 0.0
      %1636 = vmatprep.subr.mxu0 0.0
      %1637 = vmatpush1.msra.mxu0 0.0
      %1638 = vmatprep.subr.mxu0 0.0
      %1639 = vmatpush1.msra.mxu0 0.0
      %1640 = vmatprep.subr.mxu0 0.0
      %1641 = vmatpush1.msra.mxu0 0.0
      %1642 = vmatprep.subr.mxu0 0.0
      %1643 = vmatpush1.msra.mxu0 0.0
      %1644 = vmatprep.subr.mxu0 0.0
      %1645 = vmatpush1.msra.mxu0 0.0
      %1646 = vmatprep.subr.mxu0 0.0
      %1647 = vmatpush1.msra.mxu0 0.0
      %1648 = vmatprep.subr.mxu0 0.0
      %1649 = vmatpush1.msra.mxu0 0.0
      %1650 = vmatprep.subr.mxu0 0.0
      %1651 = vmatpush1.msra.mxu0 0.0
      %1652 = vmatprep.subr.mxu0 0.0
      %1653 = vmatpush1.msra.mxu0 0.0
      %1654 = vmatprep.subr.mxu0 0.0
      %1655 = vmatpush1.msra.mxu0 0.0
      %1656 = vmatprep.subr.mxu0 0.0
      %1657 = vmatpush1.msra.mxu0 0.0
      %1658 = vmatprep.subr.mxu0 0.0
      %1659 = vmatpush1.msra.mxu0 0.0
      %1660 = vmatprep.subr.mxu0 0.0
      %1661 = vmatpush1.msra.mxu0 0.0
      %1662 = vmatprep.subr.mxu0 0.0
      %1663 = vmatpush1.msra.mxu0 0.0
      %1664 = vmatprep.subr.mxu0 0.0
      %1665 = vmatpush1.msra.mxu0 0.0
      %1666 = vmatprep.subr.mxu0 0.0
      %1667 = vmatpush1.msra.mxu0 0.0
      %1668 = vmatprep.subr.mxu0 0.0
      %1669 = vmatpush1.msra.mxu0 0.0
      %1670 = vmatprep.subr.mxu0 0.0
      %1671 = vmatpush1.msra.mxu0 0.0
      %1672 = vmatprep.subr.mxu0 0.0
      %1673 = vmatpush1.msra.mxu0 0.0
      %1674 = vmatprep.subr.mxu0 0.0
      %1675 = vmatpush1.msra.mxu0 0.0
      %1676 = vmatprep.subr.mxu0 0.0
      %1677 = vmatpush1.msra.mxu0 0.0
      %1678 = vmatprep.subr.mxu0 0.0
      %1679 = vmatpush1.msra.mxu0 0.0
      %1680 = vmatprep.subr.mxu0 0.0
      %1681 = vmatpush1.msra.mxu0 0.0
      %1682 = vmatprep.mubr.f32.mxu0 0.0
      %1683 = vmatmul.mubr.f32.gmra.mrb[0].mxu0 %v1095
      %v1684 = vpop.f32.mrb[0].mxu0
      %v1685 = vadd.f32 0.0, %v1684
      %v1686 = vpop.f32.mrb[0].mxu0
      %1687 = vdwg.mxu0
      %1688 = vmatprep.subr.mxu0 0.0
      %1689 = vmatpush1.msra.mxu0 %v1475
      %1690 = vmatprep.subr.mxu0 0.0
      %1691 = vmatpush1.msra.mxu0 0.0
      %1692 = vmatprep.subr.mxu0 0.0
      %1693 = vmatpush1.msra.mxu0 0.0
      %1694 = vmatprep.subr.mxu0 0.0
      %1695 = vmatpush1.msra.mxu0 0.0
      %1696 = vmatprep.subr.mxu0 0.0
      %1697 = vmatpush1.msra.mxu0 0.0
      %1698 = vmatprep.subr.mxu0 0.0
      %1699 = vmatpush1.msra.mxu0 0.0
      %1700 = vmatprep.subr.mxu0 0.0
      %1701 = vmatpush1.msra.mxu0 0.0
      %1702 = vmatprep.subr.mxu0 0.0
      %1703 = vmatpush1.msra.mxu0 0.0
      %1704 = vmatprep.subr.mxu0 0.0
      %1705 = vmatpush1.msra.mxu0 0.0
      %1706 = vmatprep.subr.mxu0 0.0
      %1707 = vmatpush1.msra.mxu0 0.0
      %1708 = vmatprep.subr.mxu0 0.0
      %1709 = vmatpush1.msra.mxu0 0.0
      %1710 = vmatprep.subr.mxu0 0.0
      %1711 = vmatpush1.msra.mxu0 0.0
      %1712 = vmatprep.subr.mxu0 0.0
      %1713 = vmatpush1.msra.mxu0 0.0
      %1714 = vmatprep.subr.mxu0 0.0
      %1715 = vmatpush1.msra.mxu0 0.0
      %1716 = vmatprep.subr.mxu0 0.0
      %1717 = vmatpush1.msra.mxu0 0.0
      %1718 = vmatprep.subr.mxu0 0.0
      %1719 = vmatpush1.msra.mxu0 0.0
      %1720 = vmatprep.subr.mxu0 0.0
      %1721 = vmatpush1.msra.mxu0 0.0
      %1722 = vmatprep.subr.mxu0 0.0
      %1723 = vmatpush1.msra.mxu0 0.0
      %1724 = vmatprep.subr.mxu0 0.0
      %1725 = vmatpush1.msra.mxu0 0.0
      %1726 = vmatprep.subr.mxu0 0.0
      %1727 = vmatpush1.msra.mxu0 0.0
      %1728 = vmatprep.subr.mxu0 0.0
      %1729 = vmatpush1.msra.mxu0 0.0
      %1730 = vmatprep.subr.mxu0 0.0
      %1731 = vmatpush1.msra.mxu0 0.0
      %1732 = vmatprep.subr.mxu0 0.0
      %1733 = vmatpush1.msra.mxu0 0.0
      %1734 = vmatprep.subr.mxu0 0.0
      %1735 = vmatpush1.msra.mxu0 0.0
      %1736 = vmatprep.subr.mxu0 0.0
      %1737 = vmatpush1.msra.mxu0 0.0
      %1738 = vmatprep.subr.mxu0 0.0
      %1739 = vmatpush1.msra.mxu0 0.0
      %1740 = vmatprep.subr.mxu0 0.0
      %1741 = vmatpush1.msra.mxu0 0.0
      %1742 = vmatprep.subr.mxu0 0.0
      %1743 = vmatpush1.msra.mxu0 0.0
      %1744 = vmatprep.subr.mxu0 0.0
      %1745 = vmatpush1.msra.mxu0 0.0
      %1746 = vmatprep.subr.mxu0 0.0
      %1747 = vmatpush1.msra.mxu0 0.0
      %1748 = vmatprep.subr.mxu0 0.0
      %1749 = vmatpush1.msra.mxu0 0.0
      %1750 = vmatprep.subr.mxu0 0.0
      %1751 = vmatpush1.msra.mxu0 0.0
      %1752 = vmatprep.mubr.f32.mxu0 0.0
      %1753 = vmatmul.mubr.f32.gmra.mrb[0].mxu0 %v1095
      %v1754 = vpop.f32.mrb[0].mxu0
      %v1755 = vadd.f32 0.0, %v1754
      %v1756 = vpop.f32.mrb[0].mxu0
      %1757 = vdwg.mxu0
      %v1758 = vmul.f32 %v280, %v280
      %v1759 = vmul.f32 %v281, %v281
      %v1760 = vmul.f32 %v282, %v282
      %v1761 = vmul.f32 %v283, %v283
      %v1763 = vsel %vm288, %v1758, 0
      %v1766 = vsel %vm288, %v1759, 0
      %v1769 = vsel %vm288, %v1760, 0
      %v1772 = vsel %vm288, %v1761, 0
      %1774 = vmatprep.subr.mxu0 0.0
      %1775 = vmatpush1.msra.mxu0 %v271
      %1776 = vmatprep.subr.mxu0 0.0
      %1777 = vmatpush1.msra.mxu0 0.0
      %1778 = vmatprep.subr.mxu0 0.0
      %1779 = vmatpush1.msra.mxu0 0.0
      %1780 = vmatprep.subr.mxu0 0.0
      %1781 = vmatpush1.msra.mxu0 0.0
      %1782 = vmatprep.subr.mxu0 0.0
      %1783 = vmatpush1.msra.mxu0 0.0
      %1784 = vmatprep.subr.mxu0 0.0
      %1785 = vmatpush1.msra.mxu0 0.0
      %1786 = vmatprep.subr.mxu0 0.0
      %1787 = vmatpush1.msra.mxu0 0.0
      %1788 = vmatprep.subr.mxu0 0.0
      %1789 = vmatpush1.msra.mxu0 0.0
      %1790 = vmatprep.subr.mxu0 0.0
      %1791 = vmatpush1.msra.mxu0 0.0
      %1792 = vmatprep.subr.mxu0 0.0
      %1793 = vmatpush1.msra.mxu0 0.0
      %1794 = vmatprep.subr.mxu0 0.0
      %1795 = vmatpush1.msra.mxu0 0.0
      %1796 = vmatprep.subr.mxu0 0.0
      %1797 = vmatpush1.msra.mxu0 0.0
      %1798 = vmatprep.subr.mxu0 0.0
      %1799 = vmatpush1.msra.mxu0 0.0
      %1800 = vmatprep.subr.mxu0 0.0
      %1801 = vmatpush1.msra.mxu0 0.0
      %1802 = vmatprep.subr.mxu0 0.0
      %1803 = vmatpush1.msra.mxu0 0.0
      %1804 = vmatprep.subr.mxu0 0.0
      %1805 = vmatpush1.msra.mxu0 0.0
      %1806 = vmatprep.subr.mxu0 0.0
      %1807 = vmatpush1.msra.mxu0 0.0
      %1808 = vmatprep.subr.mxu0 0.0
      %1809 = vmatpush1.msra.mxu0 0.0
      %1810 = vmatprep.subr.mxu0 0.0
      %1811 = vmatpush1.msra.mxu0 0.0
      %1812 = vmatprep.subr.mxu0 0.0
      %1813 = vmatpush1.msra.mxu0 0.0
      %1814 = vmatprep.subr.mxu0 0.0
      %1815 = vmatpush1.msra.mxu0 0.0
      %1816 = vmatprep.subr.mxu0 0.0
      %1817 = vmatpush1.msra.mxu0 0.0
      %1818 = vmatprep.subr.mxu0 0.0
      %1819 = vmatpush1.msra.mxu0 0.0
      %1820 = vmatprep.subr.mxu0 0.0
      %1821 = vmatpush1.msra.mxu0 0.0
      %1822 = vmatprep.subr.mxu0 0.0
      %1823 = vmatpush1.msra.mxu0 0.0
      %1824 = vmatprep.subr.mxu0 0.0
      %1825 = vmatpush1.msra.mxu0 0.0
      %1826 = vmatprep.subr.mxu0 0.0
      %1827 = vmatpush1.msra.mxu0 0.0
      %1828 = vmatprep.subr.mxu0 0.0
      %1829 = vmatpush1.msra.mxu0 0.0
      %1830 = vmatprep.subr.mxu0 0.0
      %1831 = vmatpush1.msra.mxu0 0.0
      %1832 = vmatprep.subr.mxu0 0.0
      %1833 = vmatpush1.msra.mxu0 0.0
      %1834 = vmatprep.subr.mxu0 0.0
      %1835 = vmatpush1.msra.mxu0 0.0
      %1836 = vmatprep.subr.mxu0 0.0
      %1837 = vmatpush1.msra.mxu0 0.0
      %1838 = vmatprep.mubr.f32.mxu0 0.0
      %1839 = vmatmul.mubr.f32.gmra.mrb[0].mxu0 %v1763
      %v1840 = vpop.f32.mrb[0].mxu0
      %v1841 = vadd.f32 0.0, %v1840
      %v1842 = vpop.f32.mrb[0].mxu0
      %1843 = vmatprep.mubr.f32.mxu0 0.0
      %1844 = vmatmul.mubr.f32.gmra.mrb[0].mxu0 %v1766
      %v1845 = vpop.f32.mrb[0].mxu0
      %v1846 = vadd.f32 0.0, %v1845
      %v1847 = vpop.f32.mrb[0].mxu0
      %1848 = vmatprep.mubr.f32.mxu0 0.0
      %1849 = vmatmul.mubr.f32.gmra.mrb[0].mxu0 %v1769
      %v1850 = vpop.f32.mrb[0].mxu0
      %v1851 = vadd.f32 0.0, %v1850
      %v1852 = vpop.f32.mrb[0].mxu0
      %1853 = vmatprep.mubr.f32.mxu0 0.0
      %1854 = vmatmul.mubr.f32.gmra.mrb[0].mxu0 %v1772
      %v1855 = vpop.f32.mrb[0].mxu0
      %v1856 = vadd.f32 0.0, %v1855
      %v1857 = vpop.f32.mrb[0].mxu0
      %1858 = vdwg.mxu0
      %1859 = vmatprep.subr.mxu0 0.0
      %1860 = vmatpush1.msra.mxu0 %v1841
      %1861 = vmatprep.subr.mxu0 0.0
      %1862 = vmatpush1.msra.mxu0 0.0
      %1863 = vmatprep.subr.mxu0 0.0
      %1864 = vmatpush1.msra.mxu0 0.0
      %1865 = vmatprep.subr.mxu0 0.0
      %1866 = vmatpush1.msra.mxu0 0.0
      %1867 = vmatprep.subr.mxu0 0.0
      %1868 = vmatpush1.msra.mxu0 0.0
      %1869 = vmatprep.subr.mxu0 0.0
      %1870 = vmatpush1.msra.mxu0 0.0
      %1871 = vmatprep.subr.mxu0 0.0
      %1872 = vmatpush1.msra.mxu0 0.0
      %1873 = vmatprep.subr.mxu0 0.0
      %1874 = vmatpush1.msra.mxu0 0.0
      %1875 = vmatprep.subr.mxu0 0.0
      %1876 = vmatpush1.msra.mxu0 0.0
      %1877 = vmatprep.subr.mxu0 0.0
      %1878 = vmatpush1.msra.mxu0 0.0
      %1879 = vmatprep.subr.mxu0 0.0
      %1880 = vmatpush1.msra.mxu0 0.0
      %1881 = vmatprep.subr.mxu0 0.0
      %1882 = vmatpush1.msra.mxu0 0.0
      %1883 = vmatprep.subr.mxu0 0.0
      %1884 = vmatpush1.msra.mxu0 0.0
      %1885 = vmatprep.subr.mxu0 0.0
      %1886 = vmatpush1.msra.mxu0 0.0
      %1887 = vmatprep.subr.mxu0 0.0
      %1888 = vmatpush1.msra.mxu0 0.0
      %1889 = vmatprep.subr.mxu0 0.0
      %1890 = vmatpush1.msra.mxu0 0.0
      %1891 = vmatprep.subr.mxu0 0.0
      %1892 = vmatpush1.msra.mxu0 0.0
      %1893 = vmatprep.subr.mxu0 0.0
      %1894 = vmatpush1.msra.mxu0 0.0
      %1895 = vmatprep.subr.mxu0 0.0
      %1896 = vmatpush1.msra.mxu0 0.0
      %1897 = vmatprep.subr.mxu0 0.0
      %1898 = vmatpush1.msra.mxu0 0.0
      %1899 = vmatprep.subr.mxu0 0.0
      %1900 = vmatpush1.msra.mxu0 0.0
      %1901 = vmatprep.subr.mxu0 0.0
      %1902 = vmatpush1.msra.mxu0 0.0
      %1903 = vmatprep.subr.mxu0 0.0
      %1904 = vmatpush1.msra.mxu0 0.0
      %1905 = vmatprep.subr.mxu0 0.0
      %1906 = vmatpush1.msra.mxu0 0.0
      %1907 = vmatprep.subr.mxu0 0.0
      %1908 = vmatpush1.msra.mxu0 0.0
      %1909 = vmatprep.subr.mxu0 0.0
      %1910 = vmatpush1.msra.mxu0 0.0
      %1911 = vmatprep.subr.mxu0 0.0
      %1912 = vmatpush1.msra.mxu0 0.0
      %1913 = vmatprep.subr.mxu0 0.0
      %1914 = vmatpush1.msra.mxu0 0.0
      %1915 = vmatprep.subr.mxu0 0.0
      %1916 = vmatpush1.msra.mxu0 0.0
      %1917 = vmatprep.subr.mxu0 0.0
      %1918 = vmatpush1.msra.mxu0 0.0
      %1919 = vmatprep.subr.mxu0 0.0
      %1920 = vmatpush1.msra.mxu0 0.0
      %1921 = vmatprep.subr.mxu0 0.0
      %1922 = vmatpush1.msra.mxu0 0.0
      %1923 = vmatprep.mubr.f32.mxu0 0.0
      %1924 = vmatmul.mubr.f32.gmra.mrb[0].mxu0 %v1095
      %v1925 = vpop.f32.mrb[0].mxu0
      %v1926 = vadd.f32 0.0, %v1925
      %v1927 = vpop.f32.mrb[0].mxu0
      %1928 = vdwg.mxu0
      %1929 = vmatprep.subr.mxu0 0.0
      %1930 = vmatpush1.msra.mxu0 %v1846
      %1931 = vmatprep.subr.mxu0 0.0
      %1932 = vmatpush1.msra.mxu0 0.0
      %1933 = vmatprep.subr.mxu0 0.0
      %1934 = vmatpush1.msra.mxu0 0.0
      %1935 = vmatprep.subr.mxu0 0.0
      %1936 = vmatpush1.msra.mxu0 0.0
      %1937 = vmatprep.subr.mxu0 0.0
      %1938 = vmatpush1.msra.mxu0 0.0
      %1939 = vmatprep.subr.mxu0 0.0
      %1940 = vmatpush1.msra.mxu0 0.0
      %1941 = vmatprep.subr.mxu0 0.0
      %1942 = vmatpush1.msra.mxu0 0.0
      %1943 = vmatprep.subr.mxu0 0.0
      %1944 = vmatpush1.msra.mxu0 0.0
      %1945 = vmatprep.subr.mxu0 0.0
      %1946 = vmatpush1.msra.mxu0 0.0
      %1947 = vmatprep.subr.mxu0 0.0
      %1948 = vmatpush1.msra.mxu0 0.0
      %1949 = vmatprep.subr.mxu0 0.0
      %1950 = vmatpush1.msra.mxu0 0.0
      %1951 = vmatprep.subr.mxu0 0.0
      %1952 = vmatpush1.msra.mxu0 0.0
      %1953 = vmatprep.subr.mxu0 0.0
      %1954 = vmatpush1.msra.mxu0 0.0
      %1955 = vmatprep.subr.mxu0 0.0
      %1956 = vmatpush1.msra.mxu0 0.0
      %1957 = vmatprep.subr.mxu0 0.0
      %1958 = vmatpush1.msra.mxu0 0.0
      %1959 = vmatprep.subr.mxu0 0.0
      %1960 = vmatpush1.msra.mxu0 0.0
      %1961 = vmatprep.subr.mxu0 0.0
      %1962 = vmatpush1.msra.mxu0 0.0
      %1963 = vmatprep.subr.mxu0 0.0
      %1964 = vmatpush1.msra.mxu0 0.0
      %1965 = vmatprep.subr.mxu0 0.0
      %1966 = vmatpush1.msra.mxu0 0.0
      %1967 = vmatprep.subr.mxu0 0.0
      %1968 = vmatpush1.msra.mxu0 0.0
      %1969 = vmatprep.subr.mxu0 0.0
      %1970 = vmatpush1.msra.mxu0 0.0
      %1971 = vmatprep.subr.mxu0 0.0
      %1972 = vmatpush1.msra.mxu0 0.0
      %1973 = vmatprep.subr.mxu0 0.0
      %1974 = vmatpush1.msra.mxu0 0.0
      %1975 = vmatprep.subr.mxu0 0.0
      %1976 = vmatpush1.msra.mxu0 0.0
      %1977 = vmatprep.subr.mxu0 0.0
      %1978 = vmatpush1.msra.mxu0 0.0
      %1979 = vmatprep.subr.mxu0 0.0
      %1980 = vmatpush1.msra.mxu0 0.0
      %1981 = vmatprep.subr.mxu0 0.0
      %1982 = vmatpush1.msra.mxu0 0.0
      %1983 = vmatprep.subr.mxu0 0.0
      %1984 = vmatpush1.msra.mxu0 0.0
      %1985 = vmatprep.subr.mxu0 0.0
      %1986 = vmatpush1.msra.mxu0 0.0
      %1987 = vmatprep.subr.mxu0 0.0
      %1988 = vmatpush1.msra.mxu0 0.0
      %1989 = vmatprep.subr.mxu0 0.0
      %1990 = vmatpush1.msra.mxu0 0.0
      %1991 = vmatprep.subr.mxu0 0.0
      %1992 = vmatpush1.msra.mxu0 0.0
      %1993 = vmatprep.mubr.f32.mxu0 0.0
      %1994 = vmatmul.mubr.f32.gmra.mrb[0].mxu0 %v1095
      %v1995 = vpop.f32.mrb[0].mxu0
      %v1996 = vadd.f32 0.0, %v1995
      %v1997 = vpop.f32.mrb[0].mxu0
      %1998 = vdwg.mxu0
      %1999 = vmatprep.subr.mxu0 0.0
      %2000 = vmatpush1.msra.mxu0 %v1851
      %2001 = vmatprep.subr.mxu0 0.0
      %2002 = vmatpush1.msra.mxu0 0.0
      %2003 = vmatprep.subr.mxu0 0.0
      %2004 = vmatpush1.msra.mxu0 0.0
      %2005 = vmatprep.subr.mxu0 0.0
      %2006 = vmatpush1.msra.mxu0 0.0
      %2007 = vmatprep.subr.mxu0 0.0
      %2008 = vmatpush1.msra.mxu0 0.0
      %2009 = vmatprep.subr.mxu0 0.0
      %2010 = vmatpush1.msra.mxu0 0.0
      %2011 = vmatprep.subr.mxu0 0.0
      %2012 = vmatpush1.msra.mxu0 0.0
      %2013 = vmatprep.subr.mxu0 0.0
      %2014 = vmatpush1.msra.mxu0 0.0
      %2015 = vmatprep.subr.mxu0 0.0
      %2016 = vmatpush1.msra.mxu0 0.0
      %2017 = vmatprep.subr.mxu0 0.0
      %2018 = vmatpush1.msra.mxu0 0.0
      %2019 = vmatprep.subr.mxu0 0.0
      %2020 = vmatpush1.msra.mxu0 0.0
      %2021 = vmatprep.subr.mxu0 0.0
      %2022 = vmatpush1.msra.mxu0 0.0
      %2023 = vmatprep.subr.mxu0 0.0
      %2024 = vmatpush1.msra.mxu0 0.0
      %2025 = vmatprep.subr.mxu0 0.0
      %2026 = vmatpush1.msra.mxu0 0.0
      %2027 = vmatprep.subr.mxu0 0.0
      %2028 = vmatpush1.msra.mxu0 0.0
      %2029 = vmatprep.subr.mxu0 0.0
      %2030 = vmatpush1.msra.mxu0 0.0
      %2031 = vmatprep.subr.mxu0 0.0
      %2032 = vmatpush1.msra.mxu0 0.0
      %2033 = vmatprep.subr.mxu0 0.0
      %2034 = vmatpush1.msra.mxu0 0.0
      %2035 = vmatprep.subr.mxu0 0.0
      %2036 = vmatpush1.msra.mxu0 0.0
      %2037 = vmatprep.subr.mxu0 0.0
      %2038 = vmatpush1.msra.mxu0 0.0
      %2039 = vmatprep.subr.mxu0 0.0
      %2040 = vmatpush1.msra.mxu0 0.0
      %2041 = vmatprep.subr.mxu0 0.0
      %2042 = vmatpush1.msra.mxu0 0.0
      %2043 = vmatprep.subr.mxu0 0.0
      %2044 = vmatpush1.msra.mxu0 0.0
      %2045 = vmatprep.subr.mxu0 0.0
      %2046 = vmatpush1.msra.mxu0 0.0
      %2047 = vmatprep.subr.mxu0 0.0
      %2048 = vmatpush1.msra.mxu0 0.0
      %2049 = vmatprep.subr.mxu0 0.0
      %2050 = vmatpush1.msra.mxu0 0.0
      %2051 = vmatprep.subr.mxu0 0.0
      %2052 = vmatpush1.msra.mxu0 0.0
      %2053 = vmatprep.subr.mxu0 0.0
      %2054 = vmatpush1.msra.mxu0 0.0
      %2055 = vmatprep.subr.mxu0 0.0
      %2056 = vmatpush1.msra.mxu0 0.0
      %2057 = vmatprep.subr.mxu0 0.0
      %2058 = vmatpush1.msra.mxu0 0.0
      %2059 = vmatprep.subr.mxu0 0.0
      %2060 = vmatpush1.msra.mxu0 0.0
      %2061 = vmatprep.subr.mxu0 0.0
      %2062 = vmatpush1.msra.mxu0 0.0
      %2063 = vmatprep.mubr.f32.mxu0 0.0
      %2064 = vmatmul.mubr.f32.gmra.mrb[0].mxu0 %v1095
      %v2065 = vpop.f32.mrb[0].mxu0
      %v2066 = vadd.f32 0.0, %v2065
      %v2067 = vpop.f32.mrb[0].mxu0
      %2068 = vdwg.mxu0
      %2069 = vmatprep.subr.mxu0 0.0
      %2070 = vmatpush1.msra.mxu0 %v1856
      %2071 = vmatprep.subr.mxu0 0.0
      %2072 = vmatpush1.msra.mxu0 0.0
      %2073 = vmatprep.subr.mxu0 0.0
      %2074 = vmatpush1.msra.mxu0 0.0
      %2075 = vmatprep.subr.mxu0 0.0
      %2076 = vmatpush1.msra.mxu0 0.0
      %2077 = vmatprep.subr.mxu0 0.0
      %2078 = vmatpush1.msra.mxu0 0.0
      %2079 = vmatprep.subr.mxu0 0.0
      %2080 = vmatpush1.msra.mxu0 0.0
      %2081 = vmatprep.subr.mxu0 0.0
      %2082 = vmatpush1.msra.mxu0 0.0
      %2083 = vmatprep.subr.mxu0 0.0
      %2084 = vmatpush1.msra.mxu0 0.0
      %2085 = vmatprep.subr.mxu0 0.0
      %2086 = vmatpush1.msra.mxu0 0.0
      %2087 = vmatprep.subr.mxu0 0.0
      %2088 = vmatpush1.msra.mxu0 0.0
      %2089 = vmatprep.subr.mxu0 0.0
      %2090 = vmatpush1.msra.mxu0 0.0
      %2091 = vmatprep.subr.mxu0 0.0
      %2092 = vmatpush1.msra.mxu0 0.0
      %2093 = vmatprep.subr.mxu0 0.0
      %2094 = vmatpush1.msra.mxu0 0.0
      %2095 = vmatprep.subr.mxu0 0.0
      %2096 = vmatpush1.msra.mxu0 0.0
      %2097 = vmatprep.subr.mxu0 0.0
      %2098 = vmatpush1.msra.mxu0 0.0
      %2099 = vmatprep.subr.mxu0 0.0
      %2100 = vmatpush1.msra.mxu0 0.0
      %2101 = vmatprep.subr.mxu0 0.0
      %2102 = vmatpush1.msra.mxu0 0.0
      %2103 = vmatprep.subr.mxu0 0.0
      %2104 = vmatpush1.msra.mxu0 0.0
      %2105 = vmatprep.subr.mxu0 0.0
      %2106 = vmatpush1.msra.mxu0 0.0
      %2107 = vmatprep.subr.mxu0 0.0
      %2108 = vmatpush1.msra.mxu0 0.0
      %2109 = vmatprep.subr.mxu0 0.0
      %2110 = vmatpush1.msra.mxu0 0.0
      %2111 = vmatprep.subr.mxu0 0.0
      %2112 = vmatpush1.msra.mxu0 0.0
      %2113 = vmatprep.subr.mxu0 0.0
      %2114 = vmatpush1.msra.mxu0 0.0
      %2115 = vmatprep.subr.mxu0 0.0
      %2116 = vmatpush1.msra.mxu0 0.0
      %2117 = vmatprep.subr.mxu0 0.0
      %2118 = vmatpush1.msra.mxu0 0.0
      %2119 = vmatprep.subr.mxu0 0.0
      %2120 = vmatpush1.msra.mxu0 0.0
      %2121 = vmatprep.subr.mxu0 0.0
      %2122 = vmatpush1.msra.mxu0 0.0
      %2123 = vmatprep.subr.mxu0 0.0
      %2124 = vmatpush1.msra.mxu0 0.0
      %2125 = vmatprep.subr.mxu0 0.0
      %2126 = vmatpush1.msra.mxu0 0.0
      %2127 = vmatprep.subr.mxu0 0.0
      %2128 = vmatpush1.msra.mxu0 0.0
      %2129 = vmatprep.subr.mxu0 0.0
      %2130 = vmatpush1.msra.mxu0 0.0
      %2131 = vmatprep.subr.mxu0 0.0
      %2132 = vmatpush1.msra.mxu0 0.0
      %2133 = vmatprep.mubr.f32.mxu0 0.0
      %2134 = vmatmul.mubr.f32.gmra.mrb[0].mxu0 %v1095
      %v2135 = vpop.f32.mrb[0].mxu0
      %v2136 = vadd.f32 0.0, %v2135
      %v2137 = vpop.f32.mrb[0].mxu0
      %2138 = vdwg.mxu0
      %v2139 = vmul.f32 %v272, %v276
      %v2140 = vmul.f32 %v273, %v277
      %v2141 = vmul.f32 %v274, %v278
      %v2142 = vmul.f32 %v275, %v279
      %v2144 = vsel %vm288, %v2139, 0
      %v2147 = vsel %vm288, %v2140, 0
      %v2150 = vsel %vm288, %v2141, 0
      %v2153 = vsel %vm288, %v2142, 0
      %2155 = vmatprep.subr.mxu0 0.0
      %2156 = vmatpush1.msra.mxu0 %v271
      %2157 = vmatprep.subr.mxu0 0.0
      %2158 = vmatpush1.msra.mxu0 0.0
      %2159 = vmatprep.subr.mxu0 0.0
      %2160 = vmatpush1.msra.mxu0 0.0
      %2161 = vmatprep.subr.mxu0 0.0
      %2162 = vmatpush1.msra.mxu0 0.0
      %2163 = vmatprep.subr.mxu0 0.0
      %2164 = vmatpush1.msra.mxu0 0.0
      %2165 = vmatprep.subr.mxu0 0.0
      %2166 = vmatpush1.msra.mxu0 0.0
      %2167 = vmatprep.subr.mxu0 0.0
      %2168 = vmatpush1.msra.mxu0 0.0
      %2169 = vmatprep.subr.mxu0 0.0
      %2170 = vmatpush1.msra.mxu0 0.0
      %2171 = vmatprep.subr.mxu0 0.0
      %2172 = vmatpush1.msra.mxu0 0.0
      %2173 = vmatprep.subr.mxu0 0.0
      %2174 = vmatpush1.msra.mxu0 0.0
      %2175 = vmatprep.subr.mxu0 0.0
      %2176 = vmatpush1.msra.mxu0 0.0
      %2177 = vmatprep.subr.mxu0 0.0
      %2178 = vmatpush1.msra.mxu0 0.0
      %2179 = vmatprep.subr.mxu0 0.0
      %2180 = vmatpush1.msra.mxu0 0.0
      %2181 = vmatprep.subr.mxu0 0.0
      %2182 = vmatpush1.msra.mxu0 0.0
      %2183 = vmatprep.subr.mxu0 0.0
      %2184 = vmatpush1.msra.mxu0 0.0
      %2185 = vmatprep.subr.mxu0 0.0
      %2186 = vmatpush1.msra.mxu0 0.0
      %2187 = vmatprep.subr.mxu0 0.0
      %2188 = vmatpush1.msra.mxu0 0.0
      %2189 = vmatprep.subr.mxu0 0.0
      %2190 = vmatpush1.msra.mxu0 0.0
      %2191 = vmatprep.subr.mxu0 0.0
      %2192 = vmatpush1.msra.mxu0 0.0
      %2193 = vmatprep.subr.mxu0 0.0
      %2194 = vmatpush1.msra.mxu0 0.0
      %2195 = vmatprep.subr.mxu0 0.0
      %2196 = vmatpush1.msra.mxu0 0.0
      %2197 = vmatprep.subr.mxu0 0.0
      %2198 = vmatpush1.msra.mxu0 0.0
      %2199 = vmatprep.subr.mxu0 0.0
      %2200 = vmatpush1.msra.mxu0 0.0
      %2201 = vmatprep.subr.mxu0 0.0
      %2202 = vmatpush1.msra.mxu0 0.0
      %2203 = vmatprep.subr.mxu0 0.0
      %2204 = vmatpush1.msra.mxu0 0.0
      %2205 = vmatprep.subr.mxu0 0.0
      %2206 = vmatpush1.msra.mxu0 0.0
      %2207 = vmatprep.subr.mxu0 0.0
      %2208 = vmatpush1.msra.mxu0 0.0
      %2209 = vmatprep.subr.mxu0 0.0
      %2210 = vmatpush1.msra.mxu0 0.0
      %2211 = vmatprep.subr.mxu0 0.0
      %2212 = vmatpush1.msra.mxu0 0.0
      %2213 = vmatprep.subr.mxu0 0.0
      %2214 = vmatpush1.msra.mxu0 0.0
      %2215 = vmatprep.subr.mxu0 0.0
      %2216 = vmatpush1.msra.mxu0 0.0
      %2217 = vmatprep.subr.mxu0 0.0
      %2218 = vmatpush1.msra.mxu0 0.0
      %2219 = vmatprep.mubr.f32.mxu0 0.0
      %2220 = vmatmul.mubr.f32.gmra.mrb[0].mxu0 %v2144
      %v2221 = vpop.f32.mrb[0].mxu0
      %v2222 = vadd.f32 0.0, %v2221
      %v2223 = vpop.f32.mrb[0].mxu0
      %2224 = vmatprep.mubr.f32.mxu0 0.0
      %2225 = vmatmul.mubr.f32.gmra.mrb[0].mxu0 %v2147
      %v2226 = vpop.f32.mrb[0].mxu0
      %v2227 = vadd.f32 0.0, %v2226
      %v2228 = vpop.f32.mrb[0].mxu0
      %2229 = vmatprep.mubr.f32.mxu0 0.0
      %2230 = vmatmul.mubr.f32.gmra.mrb[0].mxu0 %v2150
      %v2231 = vpop.f32.mrb[0].mxu0
      %v2232 = vadd.f32 0.0, %v2231
      %v2233 = vpop.f32.mrb[0].mxu0
      %2234 = vmatprep.mubr.f32.mxu0 0.0
      %2235 = vmatmul.mubr.f32.gmra.mrb[0].mxu0 %v2153
      %v2236 = vpop.f32.mrb[0].mxu0
      %v2237 = vadd.f32 0.0, %v2236
      %v2238 = vpop.f32.mrb[0].mxu0
      %2239 = vdwg.mxu0
      %2240 = vmatprep.subr.mxu0 0.0
      %2241 = vmatpush1.msra.mxu0 %v2222
      %2242 = vmatprep.subr.mxu0 0.0
      %2243 = vmatpush1.msra.mxu0 0.0
      %2244 = vmatprep.subr.mxu0 0.0
      %2245 = vmatpush1.msra.mxu0 0.0
      %2246 = vmatprep.subr.mxu0 0.0
      %2247 = vmatpush1.msra.mxu0 0.0
      %2248 = vmatprep.subr.mxu0 0.0
      %2249 = vmatpush1.msra.mxu0 0.0
      %2250 = vmatprep.subr.mxu0 0.0
      %2251 = vmatpush1.msra.mxu0 0.0
      %2252 = vmatprep.subr.mxu0 0.0
      %2253 = vmatpush1.msra.mxu0 0.0
      %2254 = vmatprep.subr.mxu0 0.0
      %2255 = vmatpush1.msra.mxu0 0.0
      %2256 = vmatprep.subr.mxu0 0.0
      %2257 = vmatpush1.msra.mxu0 0.0
      %2258 = vmatprep.subr.mxu0 0.0
      %2259 = vmatpush1.msra.mxu0 0.0
      %2260 = vmatprep.subr.mxu0 0.0
      %2261 = vmatpush1.msra.mxu0 0.0
      %2262 = vmatprep.subr.mxu0 0.0
      %2263 = vmatpush1.msra.mxu0 0.0
      %2264 = vmatprep.subr.mxu0 0.0
      %2265 = vmatpush1.msra.mxu0 0.0
      %2266 = vmatprep.subr.mxu0 0.0
      %2267 = vmatpush1.msra.mxu0 0.0
      %2268 = vmatprep.subr.mxu0 0.0
      %2269 = vmatpush1.msra.mxu0 0.0
      %2270 = vmatprep.subr.mxu0 0.0
      %2271 = vmatpush1.msra.mxu0 0.0
      %2272 = vmatprep.subr.mxu0 0.0
      %2273 = vmatpush1.msra.mxu0 0.0
      %2274 = vmatprep.subr.mxu0 0.0
      %2275 = vmatpush1.msra.mxu0 0.0
      %2276 = vmatprep.subr.mxu0 0.0
      %2277 = vmatpush1.msra.mxu0 0.0
      %2278 = vmatprep.subr.mxu0 0.0
      %2279 = vmatpush1.msra.mxu0 0.0
      %2280 = vmatprep.subr.mxu0 0.0
      %2281 = vmatpush1.msra.mxu0 0.0
      %2282 = vmatprep.subr.mxu0 0.0
      %2283 = vmatpush1.msra.mxu0 0.0
      %2284 = vmatprep.subr.mxu0 0.0
      %2285 = vmatpush1.msra.mxu0 0.0
      %2286 = vmatprep.subr.mxu0 0.0
      %2287 = vmatpush1.msra.mxu0 0.0
      %2288 = vmatprep.subr.mxu0 0.0
      %2289 = vmatpush1.msra.mxu0 0.0
      %2290 = vmatprep.subr.mxu0 0.0
      %2291 = vmatpush1.msra.mxu0 0.0
      %2292 = vmatprep.subr.mxu0 0.0
      %2293 = vmatpush1.msra.mxu0 0.0
      %2294 = vmatprep.subr.mxu0 0.0
      %2295 = vmatpush1.msra.mxu0 0.0
      %2296 = vmatprep.subr.mxu0 0.0
      %2297 = vmatpush1.msra.mxu0 0.0
      %2298 = vmatprep.subr.mxu0 0.0
      %2299 = vmatpush1.msra.mxu0 0.0
      %2300 = vmatprep.subr.mxu0 0.0
      %2301 = vmatpush1.msra.mxu0 0.0
      %2302 = vmatprep.subr.mxu0 0.0
      %2303 = vmatpush1.msra.mxu0 0.0
      %2304 = vmatprep.mubr.f32.mxu0 0.0
      %2305 = vmatmul.mubr.f32.gmra.mrb[0].mxu0 %v1095
      %v2306 = vpop.f32.mrb[0].mxu0
      %v2307 = vadd.f32 0.0, %v2306
      %v2308 = vpop.f32.mrb[0].mxu0
      %2309 = vdwg.mxu0
      %2310 = vmatprep.subr.mxu0 0.0
      %2311 = vmatpush1.msra.mxu0 %v2227
      %2312 = vmatprep.subr.mxu0 0.0
      %2313 = vmatpush1.msra.mxu0 0.0
      %2314 = vmatprep.subr.mxu0 0.0
      %2315 = vmatpush1.msra.mxu0 0.0
      %2316 = vmatprep.subr.mxu0 0.0
      %2317 = vmatpush1.msra.mxu0 0.0
      %2318 = vmatprep.subr.mxu0 0.0
      %2319 = vmatpush1.msra.mxu0 0.0
      %2320 = vmatprep.subr.mxu0 0.0
      %2321 = vmatpush1.msra.mxu0 0.0
      %2322 = vmatprep.subr.mxu0 0.0
      %2323 = vmatpush1.msra.mxu0 0.0
      %2324 = vmatprep.subr.mxu0 0.0
      %2325 = vmatpush1.msra.mxu0 0.0
      %2326 = vmatprep.subr.mxu0 0.0
      %2327 = vmatpush1.msra.mxu0 0.0
      %2328 = vmatprep.subr.mxu0 0.0
      %2329 = vmatpush1.msra.mxu0 0.0
      %2330 = vmatprep.subr.mxu0 0.0
      %2331 = vmatpush1.msra.mxu0 0.0
      %2332 = vmatprep.subr.mxu0 0.0
      %2333 = vmatpush1.msra.mxu0 0.0
      %2334 = vmatprep.subr.mxu0 0.0
      %2335 = vmatpush1.msra.mxu0 0.0
      %2336 = vmatprep.subr.mxu0 0.0
      %2337 = vmatpush1.msra.mxu0 0.0
      %2338 = vmatprep.subr.mxu0 0.0
      %2339 = vmatpush1.msra.mxu0 0.0
      %2340 = vmatprep.subr.mxu0 0.0
      %2341 = vmatpush1.msra.mxu0 0.0
      %2342 = vmatprep.subr.mxu0 0.0
      %2343 = vmatpush1.msra.mxu0 0.0
      %2344 = vmatprep.subr.mxu0 0.0
      %2345 = vmatpush1.msra.mxu0 0.0
      %2346 = vmatprep.subr.mxu0 0.0
      %2347 = vmatpush1.msra.mxu0 0.0
      %2348 = vmatprep.subr.mxu0 0.0
      %2349 = vmatpush1.msra.mxu0 0.0
      %2350 = vmatprep.subr.mxu0 0.0
      %2351 = vmatpush1.msra.mxu0 0.0
      %2352 = vmatprep.subr.mxu0 0.0
      %2353 = vmatpush1.msra.mxu0 0.0
      %2354 = vmatprep.subr.mxu0 0.0
      %2355 = vmatpush1.msra.mxu0 0.0
      %2356 = vmatprep.subr.mxu0 0.0
      %2357 = vmatpush1.msra.mxu0 0.0
      %2358 = vmatprep.subr.mxu0 0.0
      %2359 = vmatpush1.msra.mxu0 0.0
      %2360 = vmatprep.subr.mxu0 0.0
      %2361 = vmatpush1.msra.mxu0 0.0
      %2362 = vmatprep.subr.mxu0 0.0
      %2363 = vmatpush1.msra.mxu0 0.0
      %2364 = vmatprep.subr.mxu0 0.0
      %2365 = vmatpush1.msra.mxu0 0.0
      %2366 = vmatprep.subr.mxu0 0.0
      %2367 = vmatpush1.msra.mxu0 0.0
      %2368 = vmatprep.subr.mxu0 0.0
      %2369 = vmatpush1.msra.mxu0 0.0
      %2370 = vmatprep.subr.mxu0 0.0
      %2371 = vmatpush1.msra.mxu0 0.0
      %2372 = vmatprep.subr.mxu0 0.0
      %2373 = vmatpush1.msra.mxu0 0.0
      %2374 = vmatprep.mubr.f32.mxu0 0.0
      %2375 = vmatmul.mubr.f32.gmra.mrb[0].mxu0 %v1095
      %v2376 = vpop.f32.mrb[0].mxu0
      %v2377 = vadd.f32 0.0, %v2376
      %v2378 = vpop.f32.mrb[0].mxu0
      %2379 = vdwg.mxu0
      %2380 = vmatprep.subr.mxu0 0.0
      %2381 = vmatpush1.msra.mxu0 %v2232
      %2382 = vmatprep.subr.mxu0 0.0
      %2383 = vmatpush1.msra.mxu0 0.0
      %2384 = vmatprep.subr.mxu0 0.0
      %2385 = vmatpush1.msra.mxu0 0.0
      %2386 = vmatprep.subr.mxu0 0.0
      %2387 = vmatpush1.msra.mxu0 0.0
      %2388 = vmatprep.subr.mxu0 0.0
      %2389 = vmatpush1.msra.mxu0 0.0
      %2390 = vmatprep.subr.mxu0 0.0
      %2391 = vmatpush1.msra.mxu0 0.0
      %2392 = vmatprep.subr.mxu0 0.0
      %2393 = vmatpush1.msra.mxu0 0.0
      %2394 = vmatprep.subr.mxu0 0.0
      %2395 = vmatpush1.msra.mxu0 0.0
      %2396 = vmatprep.subr.mxu0 0.0
      %2397 = vmatpush1.msra.mxu0 0.0
      %2398 = vmatprep.subr.mxu0 0.0
      %2399 = vmatpush1.msra.mxu0 0.0
      %2400 = vmatprep.subr.mxu0 0.0
      %2401 = vmatpush1.msra.mxu0 0.0
      %2402 = vmatprep.subr.mxu0 0.0
      %2403 = vmatpush1.msra.mxu0 0.0
      %2404 = vmatprep.subr.mxu0 0.0
      %2405 = vmatpush1.msra.mxu0 0.0
      %2406 = vmatprep.subr.mxu0 0.0
      %2407 = vmatpush1.msra.mxu0 0.0
      %2408 = vmatprep.subr.mxu0 0.0
      %2409 = vmatpush1.msra.mxu0 0.0
      %2410 = vmatprep.subr.mxu0 0.0
      %2411 = vmatpush1.msra.mxu0 0.0
      %2412 = vmatprep.subr.mxu0 0.0
      %2413 = vmatpush1.msra.mxu0 0.0
      %2414 = vmatprep.subr.mxu0 0.0
      %2415 = vmatpush1.msra.mxu0 0.0
      %2416 = vmatprep.subr.mxu0 0.0
      %2417 = vmatpush1.msra.mxu0 0.0
      %2418 = vmatprep.subr.mxu0 0.0
      %2419 = vmatpush1.msra.mxu0 0.0
      %2420 = vmatprep.subr.mxu0 0.0
      %2421 = vmatpush1.msra.mxu0 0.0
      %2422 = vmatprep.subr.mxu0 0.0
      %2423 = vmatpush1.msra.mxu0 0.0
      %2424 = vmatprep.subr.mxu0 0.0
      %2425 = vmatpush1.msra.mxu0 0.0
      %2426 = vmatprep.subr.mxu0 0.0
      %2427 = vmatpush1.msra.mxu0 0.0
      %2428 = vmatprep.subr.mxu0 0.0
      %2429 = vmatpush1.msra.mxu0 0.0
      %2430 = vmatprep.subr.mxu0 0.0
      %2431 = vmatpush1.msra.mxu0 0.0
      %2432 = vmatprep.subr.mxu0 0.0
      %2433 = vmatpush1.msra.mxu0 0.0
      %2434 = vmatprep.subr.mxu0 0.0
      %2435 = vmatpush1.msra.mxu0 0.0
      %2436 = vmatprep.subr.mxu0 0.0
      %2437 = vmatpush1.msra.mxu0 0.0
      %2438 = vmatprep.subr.mxu0 0.0
      %2439 = vmatpush1.msra.mxu0 0.0
      %2440 = vmatprep.subr.mxu0 0.0
      %2441 = vmatpush1.msra.mxu0 0.0
      %2442 = vmatprep.subr.mxu0 0.0
      %2443 = vmatpush1.msra.mxu0 0.0
      %2444 = vmatprep.mubr.f32.mxu0 0.0
      %2445 = vmatmul.mubr.f32.gmra.mrb[0].mxu0 %v1095
      %v2446 = vpop.f32.mrb[0].mxu0
      %v2447 = vadd.f32 0.0, %v2446
      %v2448 = vpop.f32.mrb[0].mxu0
      %2449 = vdwg.mxu0
      %2450 = vmatprep.subr.mxu0 0.0
      %2451 = vmatpush1.msra.mxu0 %v2237
      %2452 = vmatprep.subr.mxu0 0.0
      %2453 = vmatpush1.msra.mxu0 0.0
      %2454 = vmatprep.subr.mxu0 0.0
      %2455 = vmatpush1.msra.mxu0 0.0
      %2456 = vmatprep.subr.mxu0 0.0
      %2457 = vmatpush1.msra.mxu0 0.0
      %2458 = vmatprep.subr.mxu0 0.0
      %2459 = vmatpush1.msra.mxu0 0.0
      %2460 = vmatprep.subr.mxu0 0.0
      %2461 = vmatpush1.msra.mxu0 0.0
      %2462 = vmatprep.subr.mxu0 0.0
      %2463 = vmatpush1.msra.mxu0 0.0
      %2464 = vmatprep.subr.mxu0 0.0
      %2465 = vmatpush1.msra.mxu0 0.0
      %2466 = vmatprep.subr.mxu0 0.0
      %2467 = vmatpush1.msra.mxu0 0.0
      %2468 = vmatprep.subr.mxu0 0.0
      %2469 = vmatpush1.msra.mxu0 0.0
      %2470 = vmatprep.subr.mxu0 0.0
      %2471 = vmatpush1.msra.mxu0 0.0
      %2472 = vmatprep.subr.mxu0 0.0
      %2473 = vmatpush1.msra.mxu0 0.0
      %2474 = vmatprep.subr.mxu0 0.0
      %2475 = vmatpush1.msra.mxu0 0.0
      %2476 = vmatprep.subr.mxu0 0.0
      %2477 = vmatpush1.msra.mxu0 0.0
      %2478 = vmatprep.subr.mxu0 0.0
      %2479 = vmatpush1.msra.mxu0 0.0
      %2480 = vmatprep.subr.mxu0 0.0
      %2481 = vmatpush1.msra.mxu0 0.0
      %2482 = vmatprep.subr.mxu0 0.0
      %2483 = vmatpush1.msra.mxu0 0.0
      %2484 = vmatprep.subr.mxu0 0.0
      %2485 = vmatpush1.msra.mxu0 0.0
      %2486 = vmatprep.subr.mxu0 0.0
      %2487 = vmatpush1.msra.mxu0 0.0
      %2488 = vmatprep.subr.mxu0 0.0
      %2489 = vmatpush1.msra.mxu0 0.0
      %2490 = vmatprep.subr.mxu0 0.0
      %2491 = vmatpush1.msra.mxu0 0.0
      %2492 = vmatprep.subr.mxu0 0.0
      %2493 = vmatpush1.msra.mxu0 0.0
      %2494 = vmatprep.subr.mxu0 0.0
      %2495 = vmatpush1.msra.mxu0 0.0
      %2496 = vmatprep.subr.mxu0 0.0
      %2497 = vmatpush1.msra.mxu0 0.0
      %2498 = vmatprep.subr.mxu0 0.0
      %2499 = vmatpush1.msra.mxu0 0.0
      %2500 = vmatprep.subr.mxu0 0.0
      %2501 = vmatpush1.msra.mxu0 0.0
      %2502 = vmatprep.subr.mxu0 0.0
      %2503 = vmatpush1.msra.mxu0 0.0
      %2504 = vmatprep.subr.mxu0 0.0
      %2505 = vmatpush1.msra.mxu0 0.0
      %2506 = vmatprep.subr.mxu0 0.0
      %2507 = vmatpush1.msra.mxu0 0.0
      %2508 = vmatprep.subr.mxu0 0.0
      %2509 = vmatpush1.msra.mxu0 0.0
      %2510 = vmatprep.subr.mxu0 0.0
      %2511 = vmatpush1.msra.mxu0 0.0
      %2512 = vmatprep.subr.mxu0 0.0
      %2513 = vmatpush1.msra.mxu0 0.0
      %2514 = vmatprep.mubr.f32.mxu0 0.0
      %2515 = vmatmul.mubr.f32.gmra.mrb[0].mxu0 %v1095
      %v2516 = vpop.f32.mrb[0].mxu0
      %v2517 = vadd.f32 0.0, %v2516
      %v2518 = vpop.f32.mrb[0].mxu0
      %2519 = vdwg.mxu0
      %v2520 = vmul.f32 %v272, %v280
      %v2521 = vmul.f32 %v273, %v281
      %v2522 = vmul.f32 %v274, %v282
      %v2523 = vmul.f32 %v275, %v283
      %v2525 = vsel %vm288, %v2520, 0
      %v2528 = vsel %vm288, %v2521, 0
      %v2531 = vsel %vm288, %v2522, 0
      %v2534 = vsel %vm288, %v2523, 0
      %2536 = vmatprep.subr.mxu0 0.0
      %2537 = vmatpush1.msra.mxu0 %v271
      %2538 = vmatprep.subr.mxu0 0.0
      %2539 = vmatpush1.msra.mxu0 0.0
      %2540 = vmatprep.subr.mxu0 0.0
      %2541 = vmatpush1.msra.mxu0 0.0
      %2542 = vmatprep.subr.mxu0 0.0
      %2543 = vmatpush1.msra.mxu0 0.0
      %2544 = vmatprep.subr.mxu0 0.0
      %2545 = vmatpush1.msra.mxu0 0.0
      %2546 = vmatprep.subr.mxu0 0.0
      %2547 = vmatpush1.msra.mxu0 0.0
      %2548 = vmatprep.subr.mxu0 0.0
      %2549 = vmatpush1.msra.mxu0 0.0
      %2550 = vmatprep.subr.mxu0 0.0
      %2551 = vmatpush1.msra.mxu0 0.0
      %2552 = vmatprep.subr.mxu0 0.0
      %2553 = vmatpush1.msra.mxu0 0.0
      %2554 = vmatprep.subr.mxu0 0.0
      %2555 = vmatpush1.msra.mxu0 0.0
      %2556 = vmatprep.subr.mxu0 0.0
      %2557 = vmatpush1.msra.mxu0 0.0
      %2558 = vmatprep.subr.mxu0 0.0
      %2559 = vmatpush1.msra.mxu0 0.0
      %2560 = vmatprep.subr.mxu0 0.0
      %2561 = vmatpush1.msra.mxu0 0.0
      %2562 = vmatprep.subr.mxu0 0.0
      %2563 = vmatpush1.msra.mxu0 0.0
      %2564 = vmatprep.subr.mxu0 0.0
      %2565 = vmatpush1.msra.mxu0 0.0
      %2566 = vmatprep.subr.mxu0 0.0
      %2567 = vmatpush1.msra.mxu0 0.0
      %2568 = vmatprep.subr.mxu0 0.0
      %2569 = vmatpush1.msra.mxu0 0.0
      %2570 = vmatprep.subr.mxu0 0.0
      %2571 = vmatpush1.msra.mxu0 0.0
      %2572 = vmatprep.subr.mxu0 0.0
      %2573 = vmatpush1.msra.mxu0 0.0
      %2574 = vmatprep.subr.mxu0 0.0
      %2575 = vmatpush1.msra.mxu0 0.0
      %2576 = vmatprep.subr.mxu0 0.0
      %2577 = vmatpush1.msra.mxu0 0.0
      %2578 = vmatprep.subr.mxu0 0.0
      %2579 = vmatpush1.msra.mxu0 0.0
      %2580 = vmatprep.subr.mxu0 0.0
      %2581 = vmatpush1.msra.mxu0 0.0
      %2582 = vmatprep.subr.mxu0 0.0
      %2583 = vmatpush1.msra.mxu0 0.0
      %2584 = vmatprep.subr.mxu0 0.0
      %2585 = vmatpush1.msra.mxu0 0.0
      %2586 = vmatprep.subr.mxu0 0.0
      %2587 = vmatpush1.msra.mxu0 0.0
      %2588 = vmatprep.subr.mxu0 0.0
      %2589 = vmatpush1.msra.mxu0 0.0
      %2590 = vmatprep.subr.mxu0 0.0
      %2591 = vmatpush1.msra.mxu0 0.0
      %2592 = vmatprep.subr.mxu0 0.0
      %2593 = vmatpush1.msra.mxu0 0.0
      %2594 = vmatprep.subr.mxu0 0.0
      %2595 = vmatpush1.msra.mxu0 0.0
      %2596 = vmatprep.subr.mxu0 0.0
      %2597 = vmatpush1.msra.mxu0 0.0
      %2598 = vmatprep.subr.mxu0 0.0
      %2599 = vmatpush1.msra.mxu0 0.0
      %2600 = vmatprep.mubr.f32.mxu0 0.0
      %2601 = vmatmul.mubr.f32.gmra.mrb[0].mxu0 %v2525
      %v2602 = vpop.f32.mrb[0].mxu0
      %v2603 = vadd.f32 0.0, %v2602
      %v2604 = vpop.f32.mrb[0].mxu0
      %2605 = vmatprep.mubr.f32.mxu0 0.0
      %2606 = vmatmul.mubr.f32.gmra.mrb[0].mxu0 %v2528
      %v2607 = vpop.f32.mrb[0].mxu0
      %v2608 = vadd.f32 0.0, %v2607
      %v2609 = vpop.f32.mrb[0].mxu0
      %2610 = vmatprep.mubr.f32.mxu0 0.0
      %2611 = vmatmul.mubr.f32.gmra.mrb[0].mxu0 %v2531
      %v2612 = vpop.f32.mrb[0].mxu0
      %v2613 = vadd.f32 0.0, %v2612
      %v2614 = vpop.f32.mrb[0].mxu0
      %2615 = vmatprep.mubr.f32.mxu0 0.0
      %2616 = vmatmul.mubr.f32.gmra.mrb[0].mxu0 %v2534
      %v2617 = vpop.f32.mrb[0].mxu0
      %v2618 = vadd.f32 0.0, %v2617
      %v2619 = vpop.f32.mrb[0].mxu0
      %2620 = vdwg.mxu0
      %2621 = vmatprep.subr.mxu0 0.0
      %2622 = vmatpush1.msra.mxu0 %v2603
      %2623 = vmatprep.subr.mxu0 0.0
      %2624 = vmatpush1.msra.mxu0 0.0
      %2625 = vmatprep.subr.mxu0 0.0
      %2626 = vmatpush1.msra.mxu0 0.0
      %2627 = vmatprep.subr.mxu0 0.0
      %2628 = vmatpush1.msra.mxu0 0.0
      %2629 = vmatprep.subr.mxu0 0.0
      %2630 = vmatpush1.msra.mxu0 0.0
      %2631 = vmatprep.subr.mxu0 0.0
      %2632 = vmatpush1.msra.mxu0 0.0
      %2633 = vmatprep.subr.mxu0 0.0
      %2634 = vmatpush1.msra.mxu0 0.0
      %2635 = vmatprep.subr.mxu0 0.0
      %2636 = vmatpush1.msra.mxu0 0.0
      %2637 = vmatprep.subr.mxu0 0.0
      %2638 = vmatpush1.msra.mxu0 0.0
      %2639 = vmatprep.subr.mxu0 0.0
      %2640 = vmatpush1.msra.mxu0 0.0
      %2641 = vmatprep.subr.mxu0 0.0
      %2642 = vmatpush1.msra.mxu0 0.0
      %2643 = vmatprep.subr.mxu0 0.0
      %2644 = vmatpush1.msra.mxu0 0.0
      %2645 = vmatprep.subr.mxu0 0.0
      %2646 = vmatpush1.msra.mxu0 0.0
      %2647 = vmatprep.subr.mxu0 0.0
      %2648 = vmatpush1.msra.mxu0 0.0
      %2649 = vmatprep.subr.mxu0 0.0
      %2650 = vmatpush1.msra.mxu0 0.0
      %2651 = vmatprep.subr.mxu0 0.0
      %2652 = vmatpush1.msra.mxu0 0.0
      %2653 = vmatprep.subr.mxu0 0.0
      %2654 = vmatpush1.msra.mxu0 0.0
      %2655 = vmatprep.subr.mxu0 0.0
      %2656 = vmatpush1.msra.mxu0 0.0
      %2657 = vmatprep.subr.mxu0 0.0
      %2658 = vmatpush1.msra.mxu0 0.0
      %2659 = vmatprep.subr.mxu0 0.0
      %2660 = vmatpush1.msra.mxu0 0.0
      %2661 = vmatprep.subr.mxu0 0.0
      %2662 = vmatpush1.msra.mxu0 0.0
      %2663 = vmatprep.subr.mxu0 0.0
      %2664 = vmatpush1.msra.mxu0 0.0
      %2665 = vmatprep.subr.mxu0 0.0
      %2666 = vmatpush1.msra.mxu0 0.0
      %2667 = vmatprep.subr.mxu0 0.0
      %2668 = vmatpush1.msra.mxu0 0.0
      %2669 = vmatprep.subr.mxu0 0.0
      %2670 = vmatpush1.msra.mxu0 0.0
      %2671 = vmatprep.subr.mxu0 0.0
      %2672 = vmatpush1.msra.mxu0 0.0
      %2673 = vmatprep.subr.mxu0 0.0
      %2674 = vmatpush1.msra.mxu0 0.0
      %2675 = vmatprep.subr.mxu0 0.0
      %2676 = vmatpush1.msra.mxu0 0.0
      %2677 = vmatprep.subr.mxu0 0.0
      %2678 = vmatpush1.msra.mxu0 0.0
      %2679 = vmatprep.subr.mxu0 0.0
      %2680 = vmatpush1.msra.mxu0 0.0
      %2681 = vmatprep.subr.mxu0 0.0
      %2682 = vmatpush1.msra.mxu0 0.0
      %2683 = vmatprep.subr.mxu0 0.0
      %2684 = vmatpush1.msra.mxu0 0.0
      %2685 = vmatprep.mubr.f32.mxu0 0.0
      %2686 = vmatmul.mubr.f32.gmra.mrb[0].mxu0 %v1095
      %v2687 = vpop.f32.mrb[0].mxu0
      %v2688 = vadd.f32 0.0, %v2687
      %v2689 = vpop.f32.mrb[0].mxu0
      %2690 = vdwg.mxu0
      %2691 = vmatprep.subr.mxu0 0.0
      %2692 = vmatpush1.msra.mxu0 %v2608
      %2693 = vmatprep.subr.mxu0 0.0
      %2694 = vmatpush1.msra.mxu0 0.0
      %2695 = vmatprep.subr.mxu0 0.0
      %2696 = vmatpush1.msra.mxu0 0.0
      %2697 = vmatprep.subr.mxu0 0.0
      %2698 = vmatpush1.msra.mxu0 0.0
      %2699 = vmatprep.subr.mxu0 0.0
      %2700 = vmatpush1.msra.mxu0 0.0
      %2701 = vmatprep.subr.mxu0 0.0
      %2702 = vmatpush1.msra.mxu0 0.0
      %2703 = vmatprep.subr.mxu0 0.0
      %2704 = vmatpush1.msra.mxu0 0.0
      %2705 = vmatprep.subr.mxu0 0.0
      %2706 = vmatpush1.msra.mxu0 0.0
      %2707 = vmatprep.subr.mxu0 0.0
      %2708 = vmatpush1.msra.mxu0 0.0
      %2709 = vmatprep.subr.mxu0 0.0
      %2710 = vmatpush1.msra.mxu0 0.0
      %2711 = vmatprep.subr.mxu0 0.0
      %2712 = vmatpush1.msra.mxu0 0.0
      %2713 = vmatprep.subr.mxu0 0.0
      %2714 = vmatpush1.msra.mxu0 0.0
      %2715 = vmatprep.subr.mxu0 0.0
      %2716 = vmatpush1.msra.mxu0 0.0
      %2717 = vmatprep.subr.mxu0 0.0
      %2718 = vmatpush1.msra.mxu0 0.0
      %2719 = vmatprep.subr.mxu0 0.0
      %2720 = vmatpush1.msra.mxu0 0.0
      %2721 = vmatprep.subr.mxu0 0.0
      %2722 = vmatpush1.msra.mxu0 0.0
      %2723 = vmatprep.subr.mxu0 0.0
      %2724 = vmatpush1.msra.mxu0 0.0
      %2725 = vmatprep.subr.mxu0 0.0
      %2726 = vmatpush1.msra.mxu0 0.0
      %2727 = vmatprep.subr.mxu0 0.0
      %2728 = vmatpush1.msra.mxu0 0.0
      %2729 = vmatprep.subr.mxu0 0.0
      %2730 = vmatpush1.msra.mxu0 0.0
      %2731 = vmatprep.subr.mxu0 0.0
      %2732 = vmatpush1.msra.mxu0 0.0
      %2733 = vmatprep.subr.mxu0 0.0
      %2734 = vmatpush1.msra.mxu0 0.0
      %2735 = vmatprep.subr.mxu0 0.0
      %2736 = vmatpush1.msra.mxu0 0.0
      %2737 = vmatprep.subr.mxu0 0.0
      %2738 = vmatpush1.msra.mxu0 0.0
      %2739 = vmatprep.subr.mxu0 0.0
      %2740 = vmatpush1.msra.mxu0 0.0
      %2741 = vmatprep.subr.mxu0 0.0
      %2742 = vmatpush1.msra.mxu0 0.0
      %2743 = vmatprep.subr.mxu0 0.0
      %2744 = vmatpush1.msra.mxu0 0.0
      %2745 = vmatprep.subr.mxu0 0.0
      %2746 = vmatpush1.msra.mxu0 0.0
      %2747 = vmatprep.subr.mxu0 0.0
      %2748 = vmatpush1.msra.mxu0 0.0
      %2749 = vmatprep.subr.mxu0 0.0
      %2750 = vmatpush1.msra.mxu0 0.0
      %2751 = vmatprep.subr.mxu0 0.0
      %2752 = vmatpush1.msra.mxu0 0.0
      %2753 = vmatprep.subr.mxu0 0.0
      %2754 = vmatpush1.msra.mxu0 0.0
      %2755 = vmatprep.mubr.f32.mxu0 0.0
      %2756 = vmatmul.mubr.f32.gmra.mrb[0].mxu0 %v1095
      %v2757 = vpop.f32.mrb[0].mxu0
      %v2758 = vadd.f32 0.0, %v2757
      %v2759 = vpop.f32.mrb[0].mxu0
      %2760 = vdwg.mxu0
      %2761 = vmatprep.subr.mxu0 0.0
      %2762 = vmatpush1.msra.mxu0 %v2613
      %2763 = vmatprep.subr.mxu0 0.0
      %2764 = vmatpush1.msra.mxu0 0.0
      %2765 = vmatprep.subr.mxu0 0.0
      %2766 = vmatpush1.msra.mxu0 0.0
      %2767 = vmatprep.subr.mxu0 0.0
      %2768 = vmatpush1.msra.mxu0 0.0
      %2769 = vmatprep.subr.mxu0 0.0
      %2770 = vmatpush1.msra.mxu0 0.0
      %2771 = vmatprep.subr.mxu0 0.0
      %2772 = vmatpush1.msra.mxu0 0.0
      %2773 = vmatprep.subr.mxu0 0.0
      %2774 = vmatpush1.msra.mxu0 0.0
      %2775 = vmatprep.subr.mxu0 0.0
      %2776 = vmatpush1.msra.mxu0 0.0
      %2777 = vmatprep.subr.mxu0 0.0
      %2778 = vmatpush1.msra.mxu0 0.0
      %2779 = vmatprep.subr.mxu0 0.0
      %2780 = vmatpush1.msra.mxu0 0.0
      %2781 = vmatprep.subr.mxu0 0.0
      %2782 = vmatpush1.msra.mxu0 0.0
      %2783 = vmatprep.subr.mxu0 0.0
      %2784 = vmatpush1.msra.mxu0 0.0
      %2785 = vmatprep.subr.mxu0 0.0
      %2786 = vmatpush1.msra.mxu0 0.0
      %2787 = vmatprep.subr.mxu0 0.0
      %2788 = vmatpush1.msra.mxu0 0.0
      %2789 = vmatprep.subr.mxu0 0.0
      %2790 = vmatpush1.msra.mxu0 0.0
      %2791 = vmatprep.subr.mxu0 0.0
      %2792 = vmatpush1.msra.mxu0 0.0
      %2793 = vmatprep.subr.mxu0 0.0
      %2794 = vmatpush1.msra.mxu0 0.0
      %2795 = vmatprep.subr.mxu0 0.0
      %2796 = vmatpush1.msra.mxu0 0.0
      %2797 = vmatprep.subr.mxu0 0.0
      %2798 = vmatpush1.msra.mxu0 0.0
      %2799 = vmatprep.subr.mxu0 0.0
      %2800 = vmatpush1.msra.mxu0 0.0
      %2801 = vmatprep.subr.mxu0 0.0
      %2802 = vmatpush1.msra.mxu0 0.0
      %2803 = vmatprep.subr.mxu0 0.0
      %2804 = vmatpush1.msra.mxu0 0.0
      %2805 = vmatprep.subr.mxu0 0.0
      %2806 = vmatpush1.msra.mxu0 0.0
      %2807 = vmatprep.subr.mxu0 0.0
      %2808 = vmatpush1.msra.mxu0 0.0
      %2809 = vmatprep.subr.mxu0 0.0
      %2810 = vmatpush1.msra.mxu0 0.0
      %2811 = vmatprep.subr.mxu0 0.0
      %2812 = vmatpush1.msra.mxu0 0.0
      %2813 = vmatprep.subr.mxu0 0.0
      %2814 = vmatpush1.msra.mxu0 0.0
      %2815 = vmatprep.subr.mxu0 0.0
      %2816 = vmatpush1.msra.mxu0 0.0
      %2817 = vmatprep.subr.mxu0 0.0
      %2818 = vmatpush1.msra.mxu0 0.0
      %2819 = vmatprep.subr.mxu0 0.0
      %2820 = vmatpush1.msra.mxu0 0.0
      %2821 = vmatprep.subr.mxu0 0.0
      %2822 = vmatpush1.msra.mxu0 0.0
      %2823 = vmatprep.subr.mxu0 0.0
      %2824 = vmatpush1.msra.mxu0 0.0
      %2825 = vmatprep.mubr.f32.mxu0 0.0
      %2826 = vmatmul.mubr.f32.gmra.mrb[0].mxu0 %v1095
      %v2827 = vpop.f32.mrb[0].mxu0
      %v2828 = vadd.f32 0.0, %v2827
      %v2829 = vpop.f32.mrb[0].mxu0
      %2830 = vdwg.mxu0
      %2831 = vmatprep.subr.mxu0 0.0
      %2832 = vmatpush1.msra.mxu0 %v2618
      %2833 = vmatprep.subr.mxu0 0.0
      %2834 = vmatpush1.msra.mxu0 0.0
      %2835 = vmatprep.subr.mxu0 0.0
      %2836 = vmatpush1.msra.mxu0 0.0
      %2837 = vmatprep.subr.mxu0 0.0
      %2838 = vmatpush1.msra.mxu0 0.0
      %2839 = vmatprep.subr.mxu0 0.0
      %2840 = vmatpush1.msra.mxu0 0.0
      %2841 = vmatprep.subr.mxu0 0.0
      %2842 = vmatpush1.msra.mxu0 0.0
      %2843 = vmatprep.subr.mxu0 0.0
      %2844 = vmatpush1.msra.mxu0 0.0
      %2845 = vmatprep.subr.mxu0 0.0
      %2846 = vmatpush1.msra.mxu0 0.0
      %2847 = vmatprep.subr.mxu0 0.0
      %2848 = vmatpush1.msra.mxu0 0.0
      %2849 = vmatprep.subr.mxu0 0.0
      %2850 = vmatpush1.msra.mxu0 0.0
      %2851 = vmatprep.subr.mxu0 0.0
      %2852 = vmatpush1.msra.mxu0 0.0
      %2853 = vmatprep.subr.mxu0 0.0
      %2854 = vmatpush1.msra.mxu0 0.0
      %2855 = vmatprep.subr.mxu0 0.0
      %2856 = vmatpush1.msra.mxu0 0.0
      %2857 = vmatprep.subr.mxu0 0.0
      %2858 = vmatpush1.msra.mxu0 0.0
      %2859 = vmatprep.subr.mxu0 0.0
      %2860 = vmatpush1.msra.mxu0 0.0
      %2861 = vmatprep.subr.mxu0 0.0
      %2862 = vmatpush1.msra.mxu0 0.0
      %2863 = vmatprep.subr.mxu0 0.0
      %2864 = vmatpush1.msra.mxu0 0.0
      %2865 = vmatprep.subr.mxu0 0.0
      %2866 = vmatpush1.msra.mxu0 0.0
      %2867 = vmatprep.subr.mxu0 0.0
      %2868 = vmatpush1.msra.mxu0 0.0
      %2869 = vmatprep.subr.mxu0 0.0
      %2870 = vmatpush1.msra.mxu0 0.0
      %2871 = vmatprep.subr.mxu0 0.0
      %2872 = vmatpush1.msra.mxu0 0.0
      %2873 = vmatprep.subr.mxu0 0.0
      %2874 = vmatpush1.msra.mxu0 0.0
      %2875 = vmatprep.subr.mxu0 0.0
      %2876 = vmatpush1.msra.mxu0 0.0
      %2877 = vmatprep.subr.mxu0 0.0
      %2878 = vmatpush1.msra.mxu0 0.0
      %2879 = vmatprep.subr.mxu0 0.0
      %2880 = vmatpush1.msra.mxu0 0.0
      %2881 = vmatprep.subr.mxu0 0.0
      %2882 = vmatpush1.msra.mxu0 0.0
      %2883 = vmatprep.subr.mxu0 0.0
      %2884 = vmatpush1.msra.mxu0 0.0
      %2885 = vmatprep.subr.mxu0 0.0
      %2886 = vmatpush1.msra.mxu0 0.0
      %2887 = vmatprep.subr.mxu0 0.0
      %2888 = vmatpush1.msra.mxu0 0.0
      %2889 = vmatprep.subr.mxu0 0.0
      %2890 = vmatpush1.msra.mxu0 0.0
      %2891 = vmatprep.subr.mxu0 0.0
      %2892 = vmatpush1.msra.mxu0 0.0
      %2893 = vmatprep.subr.mxu0 0.0
      %2894 = vmatpush1.msra.mxu0 0.0
      %2895 = vmatprep.mubr.f32.mxu0 0.0
      %2896 = vmatmul.mubr.f32.gmra.mrb[0].mxu0 %v1095
      %v2897 = vpop.f32.mrb[0].mxu0
      %v2898 = vadd.f32 0.0, %v2897
      %v2899 = vpop.f32.mrb[0].mxu0
      %2900 = vdwg.mxu0
      %v2901 = vmul.f32 %v393, %v393
      %v2902 = vmul.f32 %v436, %v436
      %v2903 = vmul.f32 %v479, %v479
      %v2904 = vmul.f32 %v522, %v522
      %v2905 = vmul.f32 %v626, %v626
      %v2906 = vmul.f32 %v669, %v669
      %v2907 = vmul.f32 %v712, %v712
      %v2908 = vmul.f32 %v755, %v755
      %v2909 = vmul.f32 %v393, %v626
      %v2910 = vmul.f32 %v436, %v669
      %v2911 = vmul.f32 %v479, %v712
      %v2912 = vmul.f32 %v522, %v755
      %v2913 = vsub.f32 %v1164, %v2901
      %v2914 = vsub.f32 %v1234, %v2902
      %v2915 = vsub.f32 %v1304, %v2903
      %v2916 = vsub.f32 %v1374, %v2904
      %v2917 = vsub.f32 %v1545, %v2905
      %v2918 = vsub.f32 %v1615, %v2906
      %v2919 = vsub.f32 %v1685, %v2907
      %v2920 = vsub.f32 %v1755, %v2908
      %v2921 = vsub.f32 %v2307, %v2909
      %v2922 = vsub.f32 %v2377, %v2910
      %v2923 = vsub.f32 %v2447, %v2911
      %v2924 = vsub.f32 %v2517, %v2912
      %v2925 = vmul.f32 %v2909, 2.0
      %v2926 = vmul.f32 %v2910, 2.0
      %v2927 = vmul.f32 %v2911, 2.0
      %v2928 = vmul.f32 %v2912, 2.0
      %v2929 = vadd.f32 %v2925, 6.5025
      %v2930 = vadd.f32 %v2926, 6.5025
      %v2931 = vadd.f32 %v2927, 6.5025
      %v2932 = vadd.f32 %v2928, 6.5025
      %v2933 = vmul.f32 %v2921, 2.0
      %v2934 = vmul.f32 %v2922, 2.0
      %v2935 = vmul.f32 %v2923, 2.0
      %v2936 = vmul.f32 %v2924, 2.0
      %v2937 = vadd.f32 %v2933, 58.5225
      %v2938 = vadd.f32 %v2934, 58.5225
      %v2939 = vadd.f32 %v2935, 58.5225
      %v2940 = vadd.f32 %v2936, 58.5225
      %v2941 = vmul.f32 %v2929, %v2937
      %v2942 = vmul.f32 %v2930, %v2938
      %v2943 = vmul.f32 %v2931, %v2939
      %v2944 = vmul.f32 %v2932, %v2940
      %v2945 = vadd.f32 %v2901, %v2905
      %v2946 = vadd.f32 %v2902, %v2906
      %v2947 = vadd.f32 %v2903, %v2907
      %v2948 = vadd.f32 %v2904, %v2908
      %v2949 = vadd.f32 %v2945, 6.5025
      %v2950 = vadd.f32 %v2946, 6.5025
      %v2951 = vadd.f32 %v2947, 6.5025
      %v2952 = vadd.f32 %v2948, 6.5025
      %v2953 = vadd.f32 %v2913, %v2917
      %v2954 = vadd.f32 %v2914, %v2918
      %v2955 = vadd.f32 %v2915, %v2919
      %v2956 = vadd.f32 %v2916, %v2920
      %v2957 = vadd.f32 %v2953, 58.5225
      %v2958 = vadd.f32 %v2954, 58.5225
      %v2959 = vadd.f32 %v2955, 58.5225
      %v2960 = vadd.f32 %v2956, 58.5225
      %v2961 = vmul.f32 %v2949, %v2957
      %v2962 = vmul.f32 %v2950, %v2958
      %v2963 = vmul.f32 %v2951, %v2959
      %v2964 = vmul.f32 %v2952, %v2960
      %v2965 = vrcp.pop %v2961
      %v2966 = vrcp.pop %v2962
      %v2967 = vrcp.pop %v2963
      %v2968 = vrcp.pop %v2964
      %v2969 = vmul.f32 %v2961, %v2965
      %v2970 = vmul.f32 %v2962, %v2966
      %v2971 = vmul.f32 %v2963, %v2967
      %v2972 = vmul.f32 %v2964, %v2968
      %v2973 = vsub.f32 2.0, %v2969
      %v2974 = vsub.f32 2.0, %v2970
      %v2975 = vsub.f32 2.0, %v2971
      %v2976 = vsub.f32 2.0, %v2972
      %v2977 = vmul.f32 %v2965, %v2973
      %v2978 = vmul.f32 %v2966, %v2974
      %v2979 = vmul.f32 %v2967, %v2975
      %v2980 = vmul.f32 %v2968, %v2976
      %v2981 = vmul.f32 %v2941, %v2977
      %v2982 = vmul.f32 %v2942, %v2978
      %v2983 = vmul.f32 %v2943, %v2979
      %v2984 = vmul.f32 %v2944, %v2980
      %v2985 = vsel %vm288, %v2981, 0.0
      %v2986 = vsel %vm288, %v2982, 0.0
      %v2987 = vadd.f32 %v2985, %v2986
      %v2988 = vsel %vm288, %v2983, 0.0
      %v2989 = vadd.f32 %v2987, %v2988
      %v2990 = vsel %vm288, %v2984, 0.0
      %v2991 = vadd.f32 %v2989, %v2990
      %2992 = vadd.xlane.f32.xlu0 %v2991
      %v2993 = vpop.xlane.xlu0 %2992
      %v2994 = vrot.slane %v2993, 4
      %v2995 = vadd.f32 %v2993, %v2994
      %v2996 = vrot.slane %v2995, 2
      %v2997 = vadd.f32 %v2995, %v2996
      %v2998 = vrot.slane %v2997, 1
      %v2999 = vadd.f32 %v2997, %v2998
      %s3000 = vtos %v2999
      %v3001 = vmul.f32 %v859, %v859
      %v3002 = vmul.f32 %v902, %v902
      %v3003 = vmul.f32 %v945, %v945
      %v3004 = vmul.f32 %v988, %v988
      %v3005 = vmul.f32 %v393, %v859
      %v3006 = vmul.f32 %v436, %v902
      %v3007 = vmul.f32 %v479, %v945
      %v3008 = vmul.f32 %v522, %v988
      %v3009 = vsub.f32 %v1926, %v3001
      %v3010 = vsub.f32 %v1996, %v3002
      %v3011 = vsub.f32 %v2066, %v3003
      %v3012 = vsub.f32 %v2136, %v3004
      %v3013 = vsub.f32 %v2688, %v3005
      %v3014 = vsub.f32 %v2758, %v3006
      %v3015 = vsub.f32 %v2828, %v3007
      %v3016 = vsub.f32 %v2898, %v3008
      %v3017 = vmul.f32 %v3005, 2.0
      %v3018 = vmul.f32 %v3006, 2.0
      %v3019 = vmul.f32 %v3007, 2.0
      %v3020 = vmul.f32 %v3008, 2.0
      %v3021 = vadd.f32 %v3017, 6.5025
      %v3022 = vadd.f32 %v3018, 6.5025
      %v3023 = vadd.f32 %v3019, 6.5025
      %v3024 = vadd.f32 %v3020, 6.5025
      %v3025 = vmul.f32 %v3013, 2.0
      %v3026 = vmul.f32 %v3014, 2.0
      %v3027 = vmul.f32 %v3015, 2.0
      %v3028 = vmul.f32 %v3016, 2.0
      %v3029 = vadd.f32 %v3025, 58.5225
      %v3030 = vadd.f32 %v3026, 58.5225
      %v3031 = vadd.f32 %v3027, 58.5225
      %v3032 = vadd.f32 %v3028, 58.5225
      %v3033 = vmul.f32 %v3021, %v3029
      %v3034 = vmul.f32 %v3022, %v3030
      %v3035 = vmul.f32 %v3023, %v3031
      %v3036 = vmul.f32 %v3024, %v3032
      %v3037 = vadd.f32 %v2901, %v3001
      %v3038 = vadd.f32 %v2902, %v3002
      %v3039 = vadd.f32 %v2903, %v3003
      %v3040 = vadd.f32 %v2904, %v3004
      %v3041 = vadd.f32 %v3037, 6.5025
      %v3042 = vadd.f32 %v3038, 6.5025
      %v3043 = vadd.f32 %v3039, 6.5025
      %v3044 = vadd.f32 %v3040, 6.5025
      %v3045 = vadd.f32 %v2913, %v3009
      %v3046 = vadd.f32 %v2914, %v3010
      %v3047 = vadd.f32 %v2915, %v3011
      %v3048 = vadd.f32 %v2916, %v3012
      %v3049 = vadd.f32 %v3045, 58.5225
      %v3050 = vadd.f32 %v3046, 58.5225
      %v3051 = vadd.f32 %v3047, 58.5225
      %v3052 = vadd.f32 %v3048, 58.5225
      %v3053 = vmul.f32 %v3041, %v3049
      %v3054 = vmul.f32 %v3042, %v3050
      %v3055 = vmul.f32 %v3043, %v3051
      %v3056 = vmul.f32 %v3044, %v3052
      %v3057 = vrcp.pop %v3053
      %v3058 = vrcp.pop %v3054
      %v3059 = vrcp.pop %v3055
      %v3060 = vrcp.pop %v3056
      %v3061 = vmul.f32 %v3053, %v3057
      %v3062 = vmul.f32 %v3054, %v3058
      %v3063 = vmul.f32 %v3055, %v3059
      %v3064 = vmul.f32 %v3056, %v3060
      %v3065 = vsub.f32 2.0, %v3061
      %v3066 = vsub.f32 2.0, %v3062
      %v3067 = vsub.f32 2.0, %v3063
      %v3068 = vsub.f32 2.0, %v3064
      %v3069 = vmul.f32 %v3057, %v3065
      %v3070 = vmul.f32 %v3058, %v3066
      %v3071 = vmul.f32 %v3059, %v3067
      %v3072 = vmul.f32 %v3060, %v3068
      %v3073 = vmul.f32 %v3033, %v3069
      %v3074 = vmul.f32 %v3034, %v3070
      %v3075 = vmul.f32 %v3035, %v3071
      %v3076 = vmul.f32 %v3036, %v3072
      %v3077 = vsel %vm288, %v3073, 0.0
      %v3078 = vsel %vm288, %v3074, 0.0
      %v3079 = vadd.f32 %v3077, %v3078
      %v3080 = vsel %vm288, %v3075, 0.0
      %v3081 = vadd.f32 %v3079, %v3080
      %v3082 = vsel %vm288, %v3076, 0.0
      %v3083 = vadd.f32 %v3081, %v3082
      %3084 = vadd.xlane.f32.xlu0 %v3083
      %v3085 = vpop.xlane.xlu0 %3084
      %v3086 = vrot.slane %v3085, 4
      %v3087 = vadd.f32 %v3085, %v3086
      %v3088 = vrot.slane %v3087, 2
      %v3089 = vadd.f32 %v3087, %v3088
      %v3090 = vrot.slane %v3089, 1
      %v3091 = vadd.f32 %v3089, %v3090
      %s3092 = vtos %v3091
      %v3093 = vsub.f32 %v272, %v276
      %v3094 = vsub.f32 %v273, %v277
      %v3095 = vsub.f32 %v274, %v278
      %v3096 = vsub.f32 %v275, %v279
      %v3097 = vand.u32 2147483647, %v3093
      %v3098 = vand.u32 2147483647, %v3094
      %v3099 = vand.u32 2147483647, %v3095
      %v3100 = vand.u32 2147483647, %v3096
      %v3101 = vsel %vm288, %v3097, 0.0
      %v3102 = vsel %vm288, %v3098, 0.0
      %v3103 = vadd.f32 %v3101, %v3102
      %v3104 = vsel %vm288, %v3099, 0.0
      %v3105 = vadd.f32 %v3103, %v3104
      %v3106 = vsel %vm288, %v3100, 0.0
      %v3107 = vadd.f32 %v3105, %v3106
      %3108 = vadd.xlane.f32.xlu0 %v3107
      %v3109 = vpop.xlane.xlu0 %3108
      %v3110 = vrot.slane %v3109, 4
      %v3111 = vadd.f32 %v3109, %v3110
      %v3112 = vrot.slane %v3111, 2
      %v3113 = vadd.f32 %v3111, %v3112
      %v3114 = vrot.slane %v3113, 1
      %v3115 = vadd.f32 %v3113, %v3114
      %s3116 = vtos %v3115
      %v3117 = vlaneseq
      %v3118 = vand.u32 %v3117, 127
      %vm3119 = vcmp.eq.s32.totalorder %v3118, 0
      %v3120 = vstv %s3000
      %v3121 = vsel %vm3119, %v3120, 0.0
      %vm3122 = vcmp.eq.s32.totalorder %v3118, 1
      %v3123 = vstv %s3116
      %v3124 = vsel %vm3122, %v3123, 0.0
      %v3125 = vadd.f32 %v3121, %v3124
      %vm3126 = vcmp.eq.s32.totalorder %v3118, 2
      %v3127 = vstv %s3092
      %v3128 = vsel %vm3126, %v3127, 0.0
      %v3129 = vadd.f32 %v3125, %v3128
      %vm3130 = vcmp.eq.s32.totalorder %v3118, 3
      %v3131 = vsub.f32 %v272, %v280
      %v3132 = vsub.f32 %v273, %v281
      %v3133 = vsub.f32 %v274, %v282
      %v3134 = vsub.f32 %v275, %v283
      %v3135 = vand.u32 2147483647, %v3131
      %v3136 = vand.u32 2147483647, %v3132
      %v3137 = vand.u32 2147483647, %v3133
      %v3138 = vand.u32 2147483647, %v3134
      %v3139 = vsel %vm288, %v3135, 0.0
      %v3140 = vsel %vm288, %v3136, 0.0
      %v3141 = vadd.f32 %v3139, %v3140
      %v3142 = vsel %vm288, %v3137, 0.0
      %v3143 = vadd.f32 %v3141, %v3142
      %v3144 = vsel %vm288, %v3138, 0.0
      %v3145 = vadd.f32 %v3143, %v3144
      %3146 = vadd.xlane.f32.xlu0 %v3145
      %v3147 = vpop.xlane.xlu0 %3146
      %v3148 = vrot.slane %v3147, 4
      %v3149 = vadd.f32 %v3147, %v3148
      %v3150 = vrot.slane %v3149, 2
      %v3151 = vadd.f32 %v3149, %v3150
      %v3152 = vrot.slane %v3151, 1
      %v3153 = vadd.f32 %v3151, %v3152
      %s3154 = vtos %v3153
      %v3155 = vstv %s3154
      %v3156 = vsel %vm3130, %v3155, 0.0
      %v3157 = vadd.f32 %v3129, %v3156
      %3158 = vst [vmem:[%s268] sm:$0xff] %v3157
      %p3159 = scmp.lt.s32.totalorder %s16, 1
      %s3160 = scalar_select %p3159, %s16, 1
      %s3161 = smul.addr %s3160, 8
      %s3162 = scalar_lea.vmem %s5, %s3161
      // Predicated region
      $region41: #{fus_loss.2} parent=39 // pred_check
        %p3163 = pneg %p154
      $region42: #{fus_loss.2} parent=39 // pred_check_branch
        %3165 = sbr.rel (%p3163) target = $region44
      $region43: #{fus_loss.2} parent=39 // pred_region
        _
      $region44: #{fus_loss.2} parent=39 // pred_fallthru
        _
    $region40: #{fus_loss.2} parent=5 // pred_fallthru
      _
    %p3166 = scmp.le.s32.totalorder 2, %s11
    // Predicated region
    $region45: #{fus_loss.2} parent=5 // pred_check
      %p3167 = pneg %p3166
    $region46: #{fus_loss.2} parent=5 // pred_check_branch
      %3169 = sbr.rel (%p3167) target = $region48
    $region47: #{fus_loss.2} parent=5 // pred_region
      %s3170 = ssub.s32 %s11, 2
      // Predicated region
      $region49: #{fus_loss.2} parent=47 // pred_check
        %p3171 = pneg %p160
      $region50: #{fus_loss.2} parent=47 // pred_check_branch
        %3173 = sbr.rel (%p3171) target = $region52
      $region51: #{fus_loss.2} parent=47 // pred_region
        %p3174 = scmp.lt.s32.totalorder %s17, 1
        %s3175 = scalar_select %p3174, %s17, 1
        %s3176 = smul.addr %s3175, 8
        %s3177 = scalar_lea.vmem %s5, %s3176
      $region52: #{fus_loss.2} parent=47 // pred_fallthru
        _
    $region48: #{fus_loss.2} parent=5 // pred_fallthru
      _
  $region6: #{fus_loss.2} parent=0 // loop_footer
    %s15 = sadd.s32 1, %s11
  $region7: #{fus_loss.2} parent=0 // loop_footer_branch
    %10 = sbr.rel target = $region3
  $region8: #{fus_loss.2} parent=0 // loop_exit
    _

</llo_original>
